<compile_context>
chip_gen: v7x
topology: tpu7x:2x2x1
jax: 0.10.0
libtpu: 0.0.40
codegen_flags: <defaults>
</compile_context>

<pallas_src>
import functools
import math

import jax
import jax.numpy as jnp
from jax.experimental import pallas as pl
from jax.experimental.pallas import tpu as pltpu


# -----------------------------------------------------------------------------
# helpers
# -----------------------------------------------------------------------------
def _round_up(x, m):
    return ((x + m - 1) // m) * m


def _pick_tile(dim, max_tile, align):
    """Return (tile, padded_dim) with padded_dim % tile == 0."""
    if dim <= max_tile:
        p = _round_up(dim, align)
        return p, p
    return max_tile, _round_up(dim, max_tile)


@functools.lru_cache(maxsize=1)
def _vmem_limit():
    """Scoped-VMEM limit: half the physical VMEM, clamped to [32, 96] MiB."""
    cap = 128 * 1024 * 1024
    try:
        cap = int(pltpu.get_tpu_info().vmem_capacity_bytes)
    except Exception:
        pass
    return int(min(96 * 1024 * 1024, max(32 * 1024 * 1024, cap // 2)))


@functools.lru_cache(maxsize=1)
def _buffered_supported():
    """Probe once whether pipeline_mode=pl.Buffered(1) lowers on this jax."""
    if not hasattr(pl, "Buffered"):
        return False
    try:
        spec = pl.BlockSpec((8, 128), lambda i: (0, 0),
                            pipeline_mode=pl.Buffered(1))

        def _k(x_ref, o_ref):
            o_ref[...] = x_ref[...]

        x = jnp.zeros((8, 128), jnp.float32)
        out = pl.pallas_call(
            _k, out_shape=jax.ShapeDtypeStruct((8, 128), jnp.float32),
            grid=(1,), in_specs=[spec],
            out_specs=pl.BlockSpec((8, 128), lambda i: (0, 0)))(x)
        jax.block_until_ready(out)
        return True
    except Exception:
        return False


def _const_spec(block_shape):
    """BlockSpec for a grid-invariant block; single-buffered when supported."""
    zeros = (0,) * len(block_shape)
    index_map = lambda *args: zeros
    if _buffered_supported():
        return pl.BlockSpec(block_shape, index_map,
                            pipeline_mode=pl.Buffered(1))
    return pl.BlockSpec(block_shape, index_map)


def _ln(x, g, b, eps=1e-5):
    """LayerNorm in f32 (x: (rows, D) f32, g/b: (1, D) f32)."""
    mu = jnp.mean(x, axis=-1, keepdims=True)
    var = jnp.mean(jnp.square(x - mu), axis=-1, keepdims=True)
    return (x - mu) * jax.lax.rsqrt(var + eps) * g + b


# -----------------------------------------------------------------------------
# Kernel 1: tiled matmul + bias  (y = x @ w + b)
# -----------------------------------------------------------------------------
def _matmul_kernel(x_ref, w_ref, b_ref, o_ref, acc_ref):
    @pl.when(pl.program_id(2) == 0)
    def _init():
        acc_ref[...] = jnp.zeros_like(acc_ref)

    acc_ref[...] += jnp.dot(x_ref[...], w_ref[...],
                            preferred_element_type=jnp.float32)

    @pl.when(pl.program_id(2) == pl.num_programs(2) - 1)
    def _done():
        o_ref[...] = (acc_ref[...] + b_ref[...]).astype(o_ref.dtype)


def linear(x, w, b, out_dtype=jnp.bfloat16, tm_max=512, tn_max=512, tk_max=512):
    lead = x.shape[:-1]
    K = x.shape[-1]
    N = w.shape[-1]
    M = max(1, math.prod(lead))
    x2 = x.reshape(M, K).astype(jnp.bfloat16)
    w2 = w.astype(jnp.bfloat16)
    b2 = b.astype(jnp.float32)

    tm, Mp = _pick_tile(M, tm_max, 8)        # sublane-aligned rows
    tk, Kp = _pick_tile(K, tk_max, 128)      # lane-aligned MXU K
    tn, Np = _pick_tile(N, tn_max, 128)      # lane-dense output stores

    if Mp > M or Kp > K:
        x2 = jnp.pad(x2, ((0, Mp - M), (0, Kp - K)))
    if Kp > K or Np > N:
        w2 = jnp.pad(w2, ((0, Kp - K), (0, Np - N)))
    if Np > N:
        b2 = jnp.pad(b2, (0, Np - N))
    b2 = b2.reshape(1, Np)

    out = pl.pallas_call(
        _matmul_kernel,
        out_shape=jax.ShapeDtypeStruct((Mp, Np), out_dtype),
        grid=(Mp // tm, Np // tn, Kp // tk),
        in_specs=[pl.BlockSpec((tm, tk), lambda i, j, k: (i, k)),
                  pl.BlockSpec((tk, tn), lambda i, j, k: (k, j)),
                  pl.BlockSpec((1, tn), lambda i, j, k: (0, j))],
        out_specs=pl.BlockSpec((tm, tn), lambda i, j, k: (i, j)),
        scratch_shapes=[pltpu.VMEM((tm, tn), jnp.float32)],
        compiler_params=pltpu.CompilerParams(
            dimension_semantics=("parallel", "parallel", "arbitrary"),
            vmem_limit_bytes=_vmem_limit()),
    )(x2, w2, b2)
    return out[:M, :N].reshape(*lead, N)


# -----------------------------------------------------------------------------
# Kernel 2: fused LayerNorm + Linear (y = LN(x) @ w + b), LN cached per row tile
# -----------------------------------------------------------------------------
def _ln_linear_kernel(x_ref, g_ref, b_ref, w_ref, bb_ref, o_ref, h_ref):
    @pl.when(pl.program_id(1) == 0)
    def _ln_once():
        x = x_ref[...].astype(jnp.float32)
        h_ref[...] = _ln(x, g_ref[...], b_ref[...]).astype(jnp.bfloat16)

    o_ref[...] = (jnp.dot(h_ref[...], w_ref[...],
                          preferred_element_type=jnp.float32)
                  + bb_ref[...]).astype(o_ref.dtype)


def ln_linear(x, g, b, w, bb, out_dtype=jnp.bfloat16, tm_max=512, tn_max=512,
              n_out=None):
    lead = x.shape[:-1]
    D = x.shape[-1]
    N = w.shape[-1]
    M = max(1, math.prod(lead))
    x2 = x.reshape(M, D)
    tm, Mp = _pick_tile(M, tm_max, 8)
    tn, Np = _pick_tile(N, tn_max, 128)
    if Mp > M:
        x2 = jnp.pad(x2, ((0, Mp - M), (0, 0)))
    w2 = w.astype(jnp.bfloat16)
    bb2 = bb.astype(jnp.float32).reshape(1, -1)
    if Np > N:   # fallback only; heavy weights are pre-padded at init
        w2 = jnp.pad(w2, ((0, 0), (0, Np - N)))
        bb2 = jnp.pad(bb2, ((0, 0), (0, Np - N)))

    out = pl.pallas_call(
        _ln_linear_kernel,
        out_shape=jax.ShapeDtypeStruct((Mp, Np), out_dtype),
        grid=(Mp // tm, Np // tn),
        in_specs=[pl.BlockSpec((tm, D), lambda i, j: (i, 0)),
                  _const_spec((1, D)),
                  _const_spec((1, D)),
                  pl.BlockSpec((D, tn), lambda i, j: (0, j)),
                  pl.BlockSpec((1, tn), lambda i, j: (0, j))],
        out_specs=pl.BlockSpec((tm, tn), lambda i, j: (i, j)),
        scratch_shapes=[pltpu.VMEM((tm, D), jnp.bfloat16)],
        compiler_params=pltpu.CompilerParams(
            dimension_semantics=("parallel", "arbitrary"),
            vmem_limit_bytes=_vmem_limit()),
    )(x2, g, b, w2, bb2)
    n_keep = N if n_out is None else n_out
    return out[:M, :n_keep].reshape(*lead, n_keep)


# -----------------------------------------------------------------------------
# Kernel 3: fused self-attention block (fused QKV / output projections)
#   out = x + AttnOut( MHA( LN(x) ) )   -- one grid step per batch row
# -----------------------------------------------------------------------------
def _make_self_attn_kernel(heads, causal, use_mask):
    def _attn(x_ref, g_ref, b_ref, wqkv_ref, bqkv_ref, wo_ref, bo_ref,
              m_ref, o_ref):
        x = x_ref[0].astype(jnp.float32)                 # (S, D)
        S, D = x.shape
        dh = D // heads
        scale = 1.0 / math.sqrt(dh)

        h = _ln(x, g_ref[...], b_ref[...]).astype(jnp.bfloat16)
        # fused QKV projection: (S, 3D) on the full-width MXU
        qkv = (jnp.dot(h, wqkv_ref[...], preferred_element_type=jnp.float32)
               + bqkv_ref[...])
        q_all = qkv[:, 0 * D:1 * D]
        k_all = qkv[:, 1 * D:2 * D]
        v_all = qkv[:, 2 * D:3 * D]

        mask = None
        if m_ref is not None:
            mask = m_ref[0]                              # (1, S) additive, f32
        if causal:
            row = jax.lax.broadcasted_iota(jnp.int32, (S, S), 0)
            col = jax.lax.broadcasted_iota(jnp.int32, (S, S), 1)
            cm = jnp.where(row >= col, 0.0, -1e9).astype(jnp.float32)
            mask = cm if mask is None else mask + cm

        ctx = []
        for hh in range(heads):                          # only softmax math per head
            sl = slice(hh * dh, (hh + 1) * dh)
            q = q_all[:, sl].astype(jnp.bfloat16)
            k = k_all[:, sl].astype(jnp.bfloat16)
            v = v_all[:, sl].astype(jnp.bfloat16)
            s = jnp.dot(q, k.T, preferred_element_type=jnp.float32) * scale
            if mask is not None:
                s = s + mask
            s = s - jnp.max(s, axis=-1, keepdims=True)
            p = jnp.exp(s)
            p = p * pl.reciprocal(jnp.sum(p, axis=-1, keepdims=True), approx=True)
            ctx.append(jnp.dot(p.astype(jnp.bfloat16), v,
                               preferred_element_type=jnp.float32))
        ctx = jnp.concatenate(ctx, axis=-1).astype(jnp.bfloat16)   # (S, D)
        # fused output projection
        out = (jnp.dot(ctx, wo_ref[...], preferred_element_type=jnp.float32)
               + bo_ref[...])
        o_ref[0] = (x + out).astype(o_ref.dtype)

    if use_mask:
        return _attn

    def kern(x_ref, g_ref, b_ref, wqkv_ref, bqkv_ref, wo_ref, bo_ref, o_ref):
        _attn(x_ref, g_ref, b_ref, wqkv_ref, bqkv_ref, wo_ref, bo_ref,
              None, o_ref)
    return kern


def self_attn_block(x, ln, attn, heads, key_pad_add=None, causal=False):
    # TODO(synk): add a query-row tile grid axis for long S / small B (v7x
    # dual-TC); at the demo/caption sizes grid=(B,) with full (1,S,D) blocks
    # is both correct and smaller than one VMEM tile.
    B, S, D = x.shape
    use_mask = key_pad_add is not None
    kern = _make_self_attn_kernel(heads, causal, use_mask)
    in_specs = [pl.BlockSpec((1, S, D), lambda i: (i, 0, 0)),
                _const_spec((1, D)),
                _const_spec((1, D)),
                _const_spec((D, 3 * D)),
                _const_spec((1, 3 * D)),
                _const_spec((D, D)),
                _const_spec((1, D))]
    args = [x, ln["g"], ln["b"], attn["wqkv"], attn["bqkv"],
            attn["wo"], attn["bo"]]
    if use_mask:
        in_specs.append(pl.BlockSpec((1, 1, S), lambda i: (i, 0, 0)))
        args.append(key_pad_add)
    return pl.pallas_call(
        kern,
        out_shape=jax.ShapeDtypeStruct((B, S, D), jnp.bfloat16),
        grid=(B,),
        in_specs=in_specs,
        out_specs=pl.BlockSpec((1, S, D), lambda i: (i, 0, 0)),
        compiler_params=pltpu.CompilerParams(
            dimension_semantics=("parallel",),
            vmem_limit_bytes=_vmem_limit()),
    )(*args)


# -----------------------------------------------------------------------------
# Kernel 4: fused cross-attention block (fused Q and KV projections)
#   out = x + AttnOut( MHA( q=LN(x), k/v=img_enc ) )
# -----------------------------------------------------------------------------
def _make_cross_attn_kernel(heads):
    def kern(x_ref, e_ref, g_ref, b_ref, wq_ref, bq_ref, wkv_ref, bkv_ref,
             wo_ref, bo_ref, o_ref):
        x = x_ref[0].astype(jnp.float32)                 # (S, D)
        e = e_ref[0]                                     # (Nk, D) bf16
        S, D = x.shape
        dh = D // heads
        scale = 1.0 / math.sqrt(dh)

        h = _ln(x, g_ref[...], b_ref[...]).astype(jnp.bfloat16)
        q_all = (jnp.dot(h, wq_ref[...], preferred_element_type=jnp.float32)
                 + bq_ref[...])
        kv = (jnp.dot(e, wkv_ref[...], preferred_element_type=jnp.float32)
              + bkv_ref[...])
        k_all = kv[:, :D]
        v_all = kv[:, D:]

        ctx = []
        for hh in range(heads):
            sl = slice(hh * dh, (hh + 1) * dh)
            q = q_all[:, sl].astype(jnp.bfloat16)
            k = k_all[:, sl].astype(jnp.bfloat16)
            v = v_all[:, sl].astype(jnp.bfloat16)
            s = jnp.dot(q, k.T, preferred_element_type=jnp.float32) * scale
            s = s - jnp.max(s, axis=-1, keepdims=True)
            p = jnp.exp(s)
            p = p * pl.reciprocal(jnp.sum(p, axis=-1, keepdims=True), approx=True)
            ctx.append(jnp.dot(p.astype(jnp.bfloat16), v,
                               preferred_element_type=jnp.float32))
        ctx = jnp.concatenate(ctx, axis=-1).astype(jnp.bfloat16)
        out = (jnp.dot(ctx, wo_ref[...], preferred_element_type=jnp.float32)
               + bo_ref[...])
        o_ref[0] = (x + out).astype(o_ref.dtype)
    return kern


def cross_attn_block(x, enc, ln, attn, heads):
    B, S, D = x.shape
    Nk = enc.shape[1]
    kern = _make_cross_attn_kernel(heads)
    return pl.pallas_call(
        kern,
        out_shape=jax.ShapeDtypeStruct((B, S, D), jnp.bfloat16),
        grid=(B,),
        in_specs=[pl.BlockSpec((1, S, D), lambda i: (i, 0, 0)),
                  pl.BlockSpec((1, Nk, D), lambda i: (i, 0, 0)),
                  _const_spec((1, D)),
                  _const_spec((1, D)),
                  _const_spec((D, D)),
                  _const_spec((1, D)),
                  _const_spec((D, 2 * D)),
                  _const_spec((1, 2 * D)),
                  _const_spec((D, D)),
                  _const_spec((1, D))],
        out_specs=pl.BlockSpec((1, S, D), lambda i: (i, 0, 0)),
        compiler_params=pltpu.CompilerParams(
            dimension_semantics=("parallel",),
            vmem_limit_bytes=_vmem_limit()),
    )(x, enc, ln["g"], ln["b"], attn["wq"], attn["bq"], attn["wkv"],
      attn["bkv"], attn["wo"], attn["bo"])


# -----------------------------------------------------------------------------
# Kernel 5: fused LayerNorm + MLP + residual, row-tiled
# -----------------------------------------------------------------------------
def _ln_mlp_kernel(x_ref, g_ref, b_ref, w1_ref, b1_ref, w2_ref, b2_ref, o_ref):
    x = x_ref[...].astype(jnp.float32)
    h = _ln(x, g_ref[...], b_ref[...]).astype(jnp.bfloat16)
    h1 = jnp.dot(h, w1_ref[...], preferred_element_type=jnp.float32) + b1_ref[...]
    # TODO(synk): PyTorch nn.GELU defaults to exact erf; tanh approximation is
    # used here (erf has no guaranteed Mosaic lowering) -- tiny numeric delta.
    h1 = jax.nn.gelu(h1, approximate=True).astype(jnp.bfloat16)
    out = jnp.dot(h1, w2_ref[...], preferred_element_type=jnp.float32) + b2_ref[...]
    o_ref[...] = (x + out).astype(o_ref.dtype)


def ln_mlp_block(x, g, b, w1, b1, w2, b2, tm_max=512):
    # TODO(synk): for production sizes (D>=1024, H=4D) add an H-tile grid axis
    # with an f32 fc2 accumulator; at demo sizes the single-buffered weight
    # blocks (pl.Buffered(1)) keep VMEM well under the v7x budget.
    B, S, D = x.shape
    H = w1.shape[-1]
    M = B * S
    x2 = x.reshape(M, D)
    tm, Mp = _pick_tile(M, tm_max, 8)
    if Mp > M:
        x2 = jnp.pad(x2, ((0, Mp - M), (0, 0)))
    out = pl.pallas_call(
        _ln_mlp_kernel,
        out_shape=jax.ShapeDtypeStruct((Mp, D), jnp.bfloat16),
        grid=(Mp // tm,),
        in_specs=[pl.BlockSpec((tm, D), lambda i: (i, 0)),
                  _const_spec((1, D)),
                  _const_spec((1, D)),
                  _const_spec((D, H)),
                  _const_spec((1, H)),
                  _const_spec((H, D)),
                  _const_spec((1, D))],
        out_specs=pl.BlockSpec((tm, D), lambda i: (i, 0)),
        compiler_params=pltpu.CompilerParams(
            dimension_semantics=("parallel",),
            vmem_limit_bytes=_vmem_limit()),
    )(x2, g, b, w1, b1, w2, b2)
    return out[:M].reshape(B, S, D)


# -----------------------------------------------------------------------------
# Parameter initialization (synthetic, deterministic; lane-dense 2D slabs,
# weights pre-cast to bf16 and heavy projections pre-padded to 128 lanes)
# -----------------------------------------------------------------------------
def _w(key, shape):
    return (0.02 * jax.random.normal(key, shape, jnp.float32)).astype(jnp.bfloat16)


def _ln_init(d):
    return {"g": jnp.ones((1, d), jnp.float32), "b": jnp.zeros((1, d), jnp.float32)}


def _mha_self_init(key, d):
    kqkv, ko = jax.random.split(key, 2)
    return {"wqkv": _w(kqkv, (d, 3 * d)),
            "bqkv": jnp.zeros((1, 3 * d), jnp.float32),
            "wo": _w(ko, (d, d)),
            "bo": jnp.zeros((1, d), jnp.float32)}


def _mha_cross_init(key, d_q, d_kv):
    kq, kkv, ko = jax.random.split(key, 3)
    return {"wq": _w(kq, (d_q, d_q)),
            "bq": jnp.zeros((1, d_q), jnp.float32),
            "wkv": _w(kkv, (d_kv, 2 * d_q)),
            "bkv": jnp.zeros((1, 2 * d_q), jnp.float32),
            "wo": _w(ko, (d_q, d_q)),
            "bo": jnp.zeros((1, d_q), jnp.float32)}


def _block_init(key, d, mlp_ratio, cross=False):
    ks = jax.random.split(key, 4)
    H = mlp_ratio * d
    p = {"ln1": _ln_init(d),
         "attn": _mha_self_init(ks[0], d),
         "ln2": _ln_init(d),
         "fc1_w": _w(ks[1], (d, H)), "fc1_b": jnp.zeros((1, H), jnp.float32),
         "fc2_w": _w(ks[2], (H, d)), "fc2_b": jnp.zeros((1, d), jnp.float32)}
    if cross:
        p["ln_x"] = _ln_init(d)
        p["xattn"] = _mha_cross_init(ks[3], d, d)
    return p


def init_params(key, cfg):
    enc, dec = cfg["enc_kwargs"], cfg["dec_kwargs"]
    n_patch = (enc["img_size"] // enc["patch"]) ** 2
    patch_dim = enc["in_chans"] * enc["patch"] ** 2
    d_e, d_d = enc["embed_dim"], dec["embed_dim"]
    keys = list(jax.random.split(key, 8 + enc["depth"] + dec["depth"]))
    nk = iter(keys).__next__

    vocab_p = _round_up(dec["vocab"], 128)
    dec_p = _round_up(d_d, 128)
    head_w = jnp.pad(_w(nk(), (d_d, dec["vocab"])),
                     ((0, 0), (0, vocab_p - dec["vocab"])))
    map_w = jnp.pad(_w(nk(), (d_e, d_d)), ((0, 0), (0, dec_p - d_d)))

    return {
        "enc": {
            "patch_w": _w(nk(), (patch_dim, d_e)),
            "patch_b": jnp.zeros((d_e,), jnp.float32),
            "pos": 0.02 * jax.random.normal(nk(), (1, n_patch, d_e), jnp.float32),
            "blocks": [_block_init(nk(), d_e, enc["mlp_ratio"])
                       for _ in range(enc["depth"])],
            "ln_f": _ln_init(d_e),
        },
        "map_w": map_w,
        "map_b": jnp.zeros((dec_p,), jnp.float32),
        "dec": {
            "tok_emb": 0.02 * jax.random.normal(nk(), (dec["vocab"], d_d),
                                                jnp.float32),
            "pos": 0.02 * jax.random.normal(nk(), (1, dec["max_len"], d_d),
                                            jnp.float32),
            "blocks": [_block_init(nk(), d_d, dec["mlp_ratio"], cross=True)
                       for _ in range(dec["depth"])],
            "ln_f": _ln_init(d_d),
            "head_w": head_w,
            "head_b": jnp.zeros((vocab_p,), jnp.float32),
        },
    }


# -----------------------------------------------------------------------------
# Model forward (ImageCaptionModel.forward)
# -----------------------------------------------------------------------------
def patchify(img, patch):
    # img: (B, C, H, W) NCHW -> (B, num_patches, C*P*P)  (== Conv2d(P, stride=P))
    B, C, H, W = img.shape
    x = img.reshape(B, C, H // patch, patch, W // patch, patch)
    x = x.transpose(0, 2, 4, 1, 3, 5)
    return x.reshape(B, (H // patch) * (W // patch), C * patch * patch)


def vit_encoder(img, p, cfg):
    x = patchify(img, cfg["patch"])
    x = linear(x, p["patch_w"], p["patch_b"], out_dtype=jnp.float32)
    x = (x + p["pos"]).astype(jnp.bfloat16)
    for blk in p["blocks"]:
        # encoder has no padding mask: mask path compiled out entirely
        x = self_attn_block(x, blk["ln1"], blk["attn"], cfg["heads"],
                            key_pad_add=None, causal=False)
        x = ln_mlp_block(x, blk["ln2"]["g"], blk["ln2"]["b"],
                         blk["fc1_w"], blk["fc1_b"], blk["fc2_w"], blk["fc2_b"])
    return x   # final LN is fused into the mapping projection


def gpt_decoder(tokens, img_enc, attn_mask, p, cfg):
    B, S = tokens.shape
    # NOTE: assumes S <= max_len (no guard, matching the reference usage).
    x = (jnp.take(p["tok_emb"], tokens, axis=0) + p["pos"][:, :S, :]
         ).astype(jnp.bfloat16)
    # additive key-padding row (0 keep / -1e9 drop); causal mask built in-kernel.
    key_pad = ((attn_mask.astype(jnp.float32) - 1.0) * 1e9).reshape(B, 1, S)
    for blk in p["blocks"]:
        x = self_attn_block(x, blk["ln1"], blk["attn"], cfg["heads"],
                            key_pad_add=key_pad, causal=True)
        x = cross_attn_block(x, img_enc, blk["ln_x"], blk["xattn"], cfg["heads"])
        x = ln_mlp_block(x, blk["ln2"]["g"], blk["ln2"]["b"],
                         blk["fc1_w"], blk["fc1_b"], blk["fc2_w"], blk["fc2_b"])
    # fused final LN + LM head (weights pre-padded to 128-lane multiple)
    return ln_linear(x, p["ln_f"]["g"], p["ln_f"]["b"], p["head_w"], p["head_b"],
                     out_dtype=jnp.float32, n_out=cfg["vocab"])


def image_caption_forward(params, cfg, img, tokens, attn_mask):
    enc_cfg, dec_cfg = cfg["enc_kwargs"], cfg["dec_kwargs"]
    x = vit_encoder(img, params["enc"], enc_cfg)
    # fused: encoder final LN + mapping Linear (enc_dim -> dec_dim)
    img_encoding = ln_linear(x, params["enc"]["ln_f"]["g"],
                             params["enc"]["ln_f"]["b"],
                             params["map_w"], params["map_b"],
                             out_dtype=jnp.bfloat16,
                             n_out=dec_cfg["embed_dim"])
    return gpt_decoder(tokens, img_encoding, attn_mask, params["dec"], dec_cfg)


# TODO(synk): generate() (greedy autoregressive decode) is host-side,
# tokenizer-driven control flow; not implemented as a kernel.

# -----------------------------------------------------------------------------
if __name__ == "__main__":
    cfg = {
        "enc_kwargs": dict(img_size=16, patch=4, in_chans=3, embed_dim=32,
                           heads=4, depth=2, mlp_ratio=4),
        "dec_kwargs": dict(vocab=64, embed_dim=48, heads=4, depth=2,
                           max_len=8, mlp_ratio=4),
    }
    key = jax.random.PRNGKey(0)
    k_param, k_img, k_tok = jax.random.split(key, 3)

    _buffered_supported()   # warm the single-buffering probe outside jit
    params = init_params(k_param, cfg)

    img = jax.random.normal(k_img, (2, 3, 16, 16), jnp.float32)   # NCHW
    tokens = jax.random.randint(k_tok, (2, 8), 0, cfg["dec_kwargs"]["vocab"],
                                dtype=jnp.int32)
    attn_mask = jnp.array([[1, 1, 1, 1, 1, 1, 1, 1],
                           [1, 1, 1, 1, 1, 1, 0, 0]], dtype=jnp.int32)

    fwd = jax.jit(lambda p, i, t, m: image_caption_forward(p, cfg, i, t, m))
    logits = fwd(params, img, tokens, attn_mask)
    jax.block_until_ready(logits)

    assert logits.shape == (2, 8, cfg["dec_kwargs"]["vocab"])
    assert logits.dtype == jnp.float32
    assert bool(jnp.all(jnp.isfinite(logits)))
    print("KERNEL_OK")
</pallas_src>

<mosaic_0001>
module attributes {stable_mosaic.version = 11 : i64} {
  func.func @_k(%arg0: i32, %arg1: memref<8x128xf32, #tpu.memory_space<vmem>>, %arg2: memref<8x128xf32, #tpu.memory_space<vmem>>) attributes {dimension_semantics = [#tpu.dimension_semantics<arbitrary>], iteration_bounds = array<i64: 1>, scalar_prefetch = 0 : i64, scratch_operands = 0 : i64, tpu.core_type = #tpu.core_type<tc>, window_params = [{pipeline_mode = #tpu.pipeline_mode<synchronous>, transform_indices = @transform_0, window_bounds = array<i64: 8, 128>}, {pipeline_mode = #tpu.pipeline_mode<synchronous>, transform_indices = @transform_1, window_bounds = array<i64: 8, 128>}]} {
    %c0 = arith.constant 0 : index
    %c0_0 = arith.constant 0 : index
    %0 = vector.load %arg1[%c0, %c0_0] : memref<8x128xf32, #tpu.memory_space<vmem>>, vector<8x128xf32>
    %c0_1 = arith.constant 0 : index
    %c0_2 = arith.constant 0 : index
    %1 = vector.load %arg2[%c0_1, %c0_2] : memref<8x128xf32, #tpu.memory_space<vmem>>, vector<8x128xf32>
    tpu.vector_store %arg2[%c0_1, %c0_2], %0 {strides = array<i32>} : memref<8x128xf32, #tpu.memory_space<vmem>>, vector<8x128xf32>,
    return
  }
  func.func @transform_0(%arg0: i32) -> (i32, i32) {
    %c0_i32 = arith.constant 0 : i32
    %c0_i32_0 = arith.constant 0 : i32
    %c0_i32_1 = arith.constant 0 : i32
    return %c0_i32, %c0_i32_0 : i32, i32
  }
  func.func @transform_1(%arg0: i32) -> (i32, i32) {
    %c0_i32 = arith.constant 0 : i32
    %c0_i32_0 = arith.constant 0 : i32
    %c0_i32_1 = arith.constant 0 : i32
    return %c0_i32, %c0_i32_0 : i32, i32
  }
}

module attributes {stable_mosaic.version = 11 : i64} {
  func.func @_ln_mlp_kernel(%arg0: i32, %arg1: memref<32x32xbf16, #tpu.memory_space<vmem>>, %arg2: memref<1x32xf32, #tpu.memory_space<vmem>>, %arg3: memref<1x32xf32, #tpu.memory_space<vmem>>, %arg4: memref<32x128xbf16, #tpu.memory_space<vmem>>, %arg5: memref<1x128xf32, #tpu.memory_space<vmem>>, %arg6: memref<128x32xbf16, #tpu.memory_space<vmem>>, %arg7: memref<1x32xf32, #tpu.memory_space<vmem>>, %arg8: memref<32x32xbf16, #tpu.memory_space<vmem>>) attributes {dimension_semantics = [#tpu.dimension_semantics<parallel>], iteration_bounds = array<i64: 1>, scalar_prefetch = 0 : i64, scratch_operands = 0 : i64, tpu.core_type = #tpu.core_type<tc>, window_params = [{transform_indices = @transform_0, window_bounds = array<i64: 32, 32>}, {pipeline_mode = #tpu.pipeline_mode<synchronous>, transform_indices = @transform_1, window_bounds = array<i64: 1, 32>}, {pipeline_mode = #tpu.pipeline_mode<synchronous>, transform_indices = @transform_2, window_bounds = array<i64: 1, 32>}, {pipeline_mode = #tpu.pipeline_mode<synchronous>, transform_indices = @transform_3, window_bounds = array<i64: 32, 128>}, {pipeline_mode = #tpu.pipeline_mode<synchronous>, transform_indices = @transform_4, window_bounds = array<i64: 1, 128>}, {pipeline_mode = #tpu.pipeline_mode<synchronous>, transform_indices = @transform_5, window_bounds = array<i64: 128, 32>}, {pipeline_mode = #tpu.pipeline_mode<synchronous>, transform_indices = @transform_6, window_bounds = array<i64: 1, 32>}, {transform_indices = @transform_7, window_bounds = array<i64: 32, 32>}]} {
    %c0 = arith.constant 0 : index
    %c0_0 = arith.constant 0 : index
    %0 = vector.load %arg1[%c0, %c0_0] : memref<32x32xbf16, #tpu.memory_space<vmem>>, vector<32x32xbf16>
    %1 = arith.extf %0 : vector<32x32xbf16> to vector<32x32xf32>
    %c0_1 = arith.constant 0 : index
    %c0_2 = arith.constant 0 : index
    %2 = vector.load %arg2[%c0_1, %c0_2] : memref<1x32xf32, #tpu.memory_space<vmem>>, vector<1x32xf32>
    %c0_3 = arith.constant 0 : index
    %c0_4 = arith.constant 0 : index
    %3 = vector.load %arg3[%c0_3, %c0_4] : memref<1x32xf32, #tpu.memory_space<vmem>>, vector<1x32xf32>
    %cst = arith.constant dense<0.000000e+00> : vector<32xf32>
    %4 = vector.multi_reduction <add>, %1, %cst [1] : vector<32x32xf32> to vector<32xf32>
    %5 = vector.shape_cast %4 : vector<32xf32> to vector<32x1xf32>
    %cst_5 = arith.constant 3.200000e+01 : f32
    %6 = vector.broadcast %cst_5 : f32 to vector<32x1xf32>
    %7 = arith.divf %5, %6 : vector<32x1xf32>
    %8 = vector.broadcast %7 : vector<32x1xf32> to vector<32x32xf32>
    %9 = arith.subf %1, %8 : vector<32x32xf32>
    %10 = arith.mulf %9, %9 : vector<32x32xf32>
    %cst_6 = arith.constant dense<0.000000e+00> : vector<32xf32>
    %11 = vector.multi_reduction <add>, %10, %cst_6 [1] : vector<32x32xf32> to vector<32xf32>
    %12 = vector.shape_cast %11 : vector<32xf32> to vector<32x1xf32>
    %cst_7 = arith.constant 3.200000e+01 : f32
    %13 = vector.broadcast %cst_7 : f32 to vector<32x1xf32>
    %14 = arith.divf %12, %13 : vector<32x1xf32>
    %15 = vector.broadcast %7 : vector<32x1xf32> to vector<32x32xf32>
    %16 = arith.subf %1, %15 : vector<32x32xf32>
    %cst_8 = arith.constant 9.99999974E-6 : f32
    %17 = vector.broadcast %cst_8 : f32 to vector<32x1xf32>
    %18 = arith.addf %14, %17 : vector<32x1xf32>
    %19 = math.rsqrt %18 : vector<32x1xf32>
    %20 = vector.broadcast %19 : vector<32x1xf32> to vector<32x32xf32>
    %21 = arith.mulf %16, %20 : vector<32x32xf32>
    %22 = vector.broadcast %2 : vector<1x32xf32> to vector<32x32xf32>
    %23 = arith.mulf %21, %22 : vector<32x32xf32>
    %24 = vector.broadcast %3 : vector<1x32xf32> to vector<32x32xf32>
    %25 = arith.addf %23, %24 : vector<32x32xf32>
    %26 = arith.truncf %25 : vector<32x32xf32> to vector<32x32xbf16>
    %c0_9 = arith.constant 0 : index
    %c0_10 = arith.constant 0 : index
    %27 = vector.load %arg4[%c0_9, %c0_10] : memref<32x128xbf16, #tpu.memory_space<vmem>>, vector<32x128xbf16>
    %cst_11 = arith.constant dense<0.000000e+00> : vector<32x128xf32>
    %28 = tpu.matmul %26, %27, %cst_11 {dimension_numbers = #tpu.dot_dimension_numbers<[1], [0], [0], [1], [0, 0, 1, 1], [], []>} : vector<32x32xbf16>, vector<32x128xbf16>, vector<32x128xf32> -> vector<32x128xf32>
    %c0_12 = arith.constant 0 : index
    %c0_13 = arith.constant 0 : index
    %29 = vector.load %arg5[%c0_12, %c0_13] : memref<1x128xf32, #tpu.memory_space<vmem>>, vector<1x128xf32>
    %30 = vector.broadcast %29 : vector<1x128xf32> to vector<32x128xf32>
    %31 = arith.addf %28, %30 : vector<32x128xf32>
    %32 = arith.mulf %31, %31 : vector<32x128xf32>
    %33 = arith.mulf %31, %32 : vector<32x128xf32>
    %cst_14 = arith.constant 4.471500e-02 : f32
    %34 = vector.broadcast %cst_14 : f32 to vector<32x128xf32>
    %35 = arith.mulf %34, %33 : vector<32x128xf32>
    %36 = arith.addf %31, %35 : vector<32x128xf32>
    %cst_15 = arith.constant 0.797884583 : f32
    %37 = vector.broadcast %cst_15 : f32 to vector<32x128xf32>
    %38 = arith.mulf %37, %36 : vector<32x128xf32>
    %39 = math.tanh %38 : vector<32x128xf32>
    %cst_16 = arith.constant 1.000000e+00 : f32
    %40 = vector.broadcast %cst_16 : f32 to vector<32x128xf32>
    %41 = arith.addf %40, %39 : vector<32x128xf32>
    %cst_17 = arith.constant 5.000000e-01 : f32
    %42 = vector.broadcast %cst_17 : f32 to vector<32x128xf32>
    %43 = arith.mulf %42, %41 : vector<32x128xf32>
    %44 = arith.mulf %31, %43 : vector<32x128xf32>
    %45 = arith.truncf %44 : vector<32x128xf32> to vector<32x128xbf16>
    %c0_18 = arith.constant 0 : index
    %c0_19 = arith.constant 0 : index
    %46 = vector.load %arg6[%c0_18, %c0_19] : memref<128x32xbf16, #tpu.memory_space<vmem>>, vector<128x32xbf16>
    %cst_20 = arith.constant dense<0.000000e+00> : vector<32x32xf32>
    %47 = tpu.matmul %45, %46, %cst_20 {dimension_numbers = #tpu.dot_dimension_numbers<[1], [0], [0], [1], [0, 0, 1, 1], [], []>} : vector<32x128xbf16>, vector<128x32xbf16>, vector<32x32xf32> -> vector<32x32xf32>
    %c0_21 = arith.constant 0 : index
    %c0_22 = arith.constant 0 : index
    %48 = vector.load %arg7[%c0_21, %c0_22] : memref<1x32xf32, #tpu.memory_space<vmem>>, vector<1x32xf32>
    %49 = vector.broadcast %48 : vector<1x32xf32> to vector<32x32xf32>
    %50 = arith.addf %47, %49 : vector<32x32xf32>
    %51 = arith.addf %1, %50 : vector<32x32xf32>
    %52 = arith.truncf %51 : vector<32x32xf32> to vector<32x32xbf16>
    %c0_23 = arith.constant 0 : index
    %c0_24 = arith.constant 0 : index
    %53 = vector.load %arg8[%c0_23, %c0_24] : memref<32x32xbf16, #tpu.memory_space<vmem>>, vector<32x32xbf16>
    tpu.vector_store %arg8[%c0_23, %c0_24], %52 {strides = array<i32>} : memref<32x32xbf16, #tpu.memory_space<vmem>>, vector<32x32xbf16>,
    return
  }
  func.func @transform_0(%arg0: i32) -> (i32, i32) {
    %c0_i32 = arith.constant 0 : i32
    %c0_i32_0 = arith.constant 0 : i32
    return %arg0, %c0_i32 : i32, i32
  }
  func.func @transform_1(%arg0: i32) -> (i32, i32) {
    %c0_i32 = arith.constant 0 : i32
    %c0_i32_0 = arith.constant 0 : i32
    %c0_i32_1 = arith.constant 0 : i32
    return %c0_i32, %c0_i32_0 : i32, i32
  }
  func.func @transform_2(%arg0: i32) -> (i32, i32) {
    %c0_i32 = arith.constant 0 : i32
    %c0_i32_0 = arith.constant 0 : i32
    %c0_i32_1 = arith.constant 0 : i32
    return %c0_i32, %c0_i32_0 : i32, i32
  }
  func.func @transform_3(%arg0: i32) -> (i32, i32) {
    %c0_i32 = arith.constant 0 : i32
    %c0_i32_0 = arith.constant 0 : i32
    %c0_i32_1 = arith.constant 0 : i32
    return %c0_i32, %c0_i32_0 : i32, i32
  }
  func.func @transform_4(%arg0: i32) -> (i32, i32) {
    %c0_i32 = arith.constant 0 : i32
    %c0_i32_0 = arith.constant 0 : i32
    %c0_i32_1 = arith.constant 0 : i32
    return %c0_i32, %c0_i32_0 : i32, i32
  }
  func.func @transform_5(%arg0: i32) -> (i32, i32) {
    %c0_i32 = arith.constant 0 : i32
    %c0_i32_0 = arith.constant 0 : i32
    %c0_i32_1 = arith.constant 0 : i32
    return %c0_i32, %c0_i32_0 : i32, i32
  }
  func.func @transform_6(%arg0: i32) -> (i32, i32) {
    %c0_i32 = arith.constant 0 : i32
    %c0_i32_0 = arith.constant 0 : i32
    %c0_i32_1 = arith.constant 0 : i32
    return %c0_i32, %c0_i32_0 : i32, i32
  }
  func.func @transform_7(%arg0: i32) -> (i32, i32) {
    %c0_i32 = arith.constant 0 : i32
    %c0_i32_0 = arith.constant 0 : i32
    return %arg0, %c0_i32 : i32, i32
  }
}

module attributes {stable_mosaic.version = 11 : i64} {
  func.func @_matmul_kernel(%arg0: i32, %arg1: i32, %arg2: i32, %arg3: memref<32x128xbf16, #tpu.memory_space<vmem>>, %arg4: memref<128x128xbf16, #tpu.memory_space<vmem>>, %arg5: memref<1x128xf32, #tpu.memory_space<vmem>>, %arg6: memref<32x128xf32, #tpu.memory_space<vmem>>, %arg7: memref<32x128xf32, #tpu.memory_space<vmem>>) attributes {dimension_semantics = [#tpu.dimension_semantics<parallel>, #tpu.dimension_semantics<parallel>, #tpu.dimension_semantics<arbitrary>], iteration_bounds = array<i64: 1, 1, 1>, scalar_prefetch = 0 : i64, scratch_operands = 1 : i64, tpu.core_type = #tpu.core_type<tc>, window_params = [{transform_indices = @transform_0, window_bounds = array<i64: 32, 128>}, {transform_indices = @transform_1, window_bounds = array<i64: 128, 128>}, {transform_indices = @transform_2, window_bounds = array<i64: 1, 128>}, {transform_indices = @transform_3, window_bounds = array<i64: 32, 128>}]} {
    %c0_i32 = arith.constant 0 : i32
    %0 = arith.cmpi eq, %arg2, %c0_i32 : i32
    %1 = arith.extui %0 : i1 to i32
    %c0_i32_0 = arith.constant 0 : i32
    %2 = arith.cmpi ne, %1, %c0_i32_0 : i32
    scf.if %2 {
      %cst_10 = arith.constant 0.000000e+00 : f32
      %12 = vector.broadcast %cst_10 : f32 to vector<32x128xf32>
      %c0_11 = arith.constant 0 : index
      %c0_12 = arith.constant 0 : index
      %13 = vector.load %arg7[%c0_11, %c0_12] : memref<32x128xf32, #tpu.memory_space<vmem>>, vector<32x128xf32>
      tpu.vector_store %arg7[%c0_11, %c0_12], %12 {strides = array<i32>} : memref<32x128xf32, #tpu.memory_space<vmem>>, vector<32x128xf32>,
    } else {
    }
    %c0 = arith.constant 0 : index
    %c0_1 = arith.constant 0 : index
    %3 = vector.load %arg7[%c0, %c0_1] : memref<32x128xf32, #tpu.memory_space<vmem>>, vector<32x128xf32>
    %c0_2 = arith.constant 0 : index
    %c0_3 = arith.constant 0 : index
    %4 = vector.load %arg3[%c0_2, %c0_3] : memref<32x128xbf16, #tpu.memory_space<vmem>>, vector<32x128xbf16>
    %c0_4 = arith.constant 0 : index
    %c0_5 = arith.constant 0 : index
    %5 = vector.load %arg4[%c0_4, %c0_5] : memref<128x128xbf16, #tpu.memory_space<vmem>>, vector<128x128xbf16>
    %cst = arith.constant dense<0.000000e+00> : vector<32x128xf32>
    %6 = tpu.matmul %4, %5, %cst {dimension_numbers = #tpu.dot_dimension_numbers<[1], [0], [0], [1], [0, 0, 1, 1], [], []>} : vector<32x128xbf16>, vector<128x128xbf16>, vector<32x128xf32> -> vector<32x128xf32>
    %7 = arith.addf %3, %6 : vector<32x128xf32>
    %c0_6 = arith.constant 0 : index
    %c0_7 = arith.constant 0 : index
    %8 = vector.load %arg7[%c0_6, %c0_7] : memref<32x128xf32, #tpu.memory_space<vmem>>, vector<32x128xf32>
    tpu.vector_store %arg7[%c0_6, %c0_7], %7 {strides = array<i32>} : memref<32x128xf32, #tpu.memory_space<vmem>>, vector<32x128xf32>,
    %c0_i32_8 = arith.constant 0 : i32
    %9 = arith.cmpi eq, %arg2, %c0_i32_8 : i32
    %10 = arith.extui %9 : i1 to i32
    %c0_i32_9 = arith.constant 0 : i32
    %11 = arith.cmpi ne, %10, %c0_i32_9 : i32
    scf.if %11 {
      %c0_10 = arith.constant 0 : index
      %c0_11 = arith.constant 0 : index
      %12 = vector.load %arg7[%c0_10, %c0_11] : memref<32x128xf32, #tpu.memory_space<vmem>>, vector<32x128xf32>
      %c0_12 = arith.constant 0 : index
      %c0_13 = arith.constant 0 : index
      %13 = vector.load %arg5[%c0_12, %c0_13] : memref<1x128xf32, #tpu.memory_space<vmem>>, vector<1x128xf32>
      %14 = vector.broadcast %13 : vector<1x128xf32> to vector<32x128xf32>
      %15 = arith.addf %12, %14 : vector<32x128xf32>
      %c0_14 = arith.constant 0 : index
      %c0_15 = arith.constant 0 : index
      %16 = vector.load %arg6[%c0_14, %c0_15] : memref<32x128xf32, #tpu.memory_space<vmem>>, vector<32x128xf32>
      tpu.vector_store %arg6[%c0_14, %c0_15], %15 {strides = array<i32>} : memref<32x128xf32, #tpu.memory_space<vmem>>, vector<32x128xf32>,
    } else {
    }
    return
  }
  func.func @transform_0(%arg0: i32, %arg1: i32, %arg2: i32) -> (i32, i32) {
    %c0_i32 = arith.constant 0 : i32
    return %arg0, %arg2 : i32, i32
  }
  func.func @transform_1(%arg0: i32, %arg1: i32, %arg2: i32) -> (i32, i32) {
    %c0_i32 = arith.constant 0 : i32
    return %arg2, %arg1 : i32, i32
  }
  func.func @transform_2(%arg0: i32, %arg1: i32, %arg2: i32) -> (i32, i32) {
    %c0_i32 = arith.constant 0 : i32
    %c0_i32_0 = arith.constant 0 : i32
    return %c0_i32, %arg1 : i32, i32
  }
  func.func @transform_3(%arg0: i32, %arg1: i32, %arg2: i32) -> (i32, i32) {
    %c0_i32 = arith.constant 0 : i32
    return %arg0, %arg1 : i32, i32
  }
}

module attributes {stable_mosaic.version = 11 : i64} {
  func.func @kern(%arg0: i32, %arg1: memref<1x16x32xbf16, #tpu.memory_space<vmem>>, %arg2: memref<1x32xf32, #tpu.memory_space<vmem>>, %arg3: memref<1x32xf32, #tpu.memory_space<vmem>>, %arg4: memref<32x96xbf16, #tpu.memory_space<vmem>>, %arg5: memref<1x96xf32, #tpu.memory_space<vmem>>, %arg6: memref<32x32xbf16, #tpu.memory_space<vmem>>, %arg7: memref<1x32xf32, #tpu.memory_space<vmem>>, %arg8: memref<1x16x32xbf16, #tpu.memory_space<vmem>>) attributes {dimension_semantics = [#tpu.dimension_semantics<parallel>], iteration_bounds = array<i64: 2>, scalar_prefetch = 0 : i64, scratch_operands = 0 : i64, tpu.core_type = #tpu.core_type<tc>, window_params = [{transform_indices = @transform_0, window_bounds = array<i64: 1, 16, 32>}, {pipeline_mode = #tpu.pipeline_mode<synchronous>, transform_indices = @transform_1, window_bounds = array<i64: 1, 32>}, {pipeline_mode = #tpu.pipeline_mode<synchronous>, transform_indices = @transform_2, window_bounds = array<i64: 1, 32>}, {pipeline_mode = #tpu.pipeline_mode<synchronous>, transform_indices = @transform_3, window_bounds = array<i64: 32, 96>}, {pipeline_mode = #tpu.pipeline_mode<synchronous>, transform_indices = @transform_4, window_bounds = array<i64: 1, 96>}, {pipeline_mode = #tpu.pipeline_mode<synchronous>, transform_indices = @transform_5, window_bounds = array<i64: 32, 32>}, {pipeline_mode = #tpu.pipeline_mode<synchronous>, transform_indices = @transform_6, window_bounds = array<i64: 1, 32>}, {transform_indices = @transform_7, window_bounds = array<i64: 1, 16, 32>}]} {
    %c0 = arith.constant 0 : index
    %c0_0 = arith.constant 0 : index
    %c0_1 = arith.constant 0 : index
    %0 = vector.load %arg1[%c0, %c0_0, %c0_1] : memref<1x16x32xbf16, #tpu.memory_space<vmem>>, vector<1x16x32xbf16>
    %1 = vector.shape_cast %0 : vector<1x16x32xbf16> to vector<16x32xbf16>
    %2 = arith.extf %1 : vector<16x32xbf16> to vector<16x32xf32>
    %c0_2 = arith.constant 0 : index
    %c0_3 = arith.constant 0 : index
    %3 = vector.load %arg2[%c0_2, %c0_3] : memref<1x32xf32, #tpu.memory_space<vmem>>, vector<1x32xf32>
    %c0_4 = arith.constant 0 : index
    %c0_5 = arith.constant 0 : index
    %4 = vector.load %arg3[%c0_4, %c0_5] : memref<1x32xf32, #tpu.memory_space<vmem>>, vector<1x32xf32>
    %cst = arith.constant dense<0.000000e+00> : vector<16xf32>
    %5 = vector.multi_reduction <add>, %2, %cst [1] : vector<16x32xf32> to vector<16xf32>
    %6 = vector.shape_cast %5 : vector<16xf32> to vector<16x1xf32>
    %cst_6 = arith.constant 3.200000e+01 : f32
    %7 = vector.broadcast %cst_6 : f32 to vector<16x1xf32>
    %8 = arith.divf %6, %7 : vector<16x1xf32>
    %9 = vector.broadcast %8 : vector<16x1xf32> to vector<16x32xf32>
    %10 = arith.subf %2, %9 : vector<16x32xf32>
    %11 = arith.mulf %10, %10 : vector<16x32xf32>
    %cst_7 = arith.constant dense<0.000000e+00> : vector<16xf32>
    %12 = vector.multi_reduction <add>, %11, %cst_7 [1] : vector<16x32xf32> to vector<16xf32>
    %13 = vector.shape_cast %12 : vector<16xf32> to vector<16x1xf32>
    %cst_8 = arith.constant 3.200000e+01 : f32
    %14 = vector.broadcast %cst_8 : f32 to vector<16x1xf32>
    %15 = arith.divf %13, %14 : vector<16x1xf32>
    %16 = vector.broadcast %8 : vector<16x1xf32> to vector<16x32xf32>
    %17 = arith.subf %2, %16 : vector<16x32xf32>
    %cst_9 = arith.constant 9.99999974E-6 : f32
    %18 = vector.broadcast %cst_9 : f32 to vector<16x1xf32>
    %19 = arith.addf %15, %18 : vector<16x1xf32>
    %20 = math.rsqrt %19 : vector<16x1xf32>
    %21 = vector.broadcast %20 : vector<16x1xf32> to vector<16x32xf32>
    %22 = arith.mulf %17, %21 : vector<16x32xf32>
    %23 = vector.broadcast %3 : vector<1x32xf32> to vector<16x32xf32>
    %24 = arith.mulf %22, %23 : vector<16x32xf32>
    %25 = vector.broadcast %4 : vector<1x32xf32> to vector<16x32xf32>
    %26 = arith.addf %24, %25 : vector<16x32xf32>
    %27 = arith.truncf %26 : vector<16x32xf32> to vector<16x32xbf16>
    %c0_10 = arith.constant 0 : index
    %c0_11 = arith.constant 0 : index
    %28 = vector.load %arg4[%c0_10, %c0_11] : memref<32x96xbf16, #tpu.memory_space<vmem>>, vector<32x96xbf16>
    %cst_12 = arith.constant dense<0.000000e+00> : vector<16x96xf32>
    %29 = tpu.matmul %27, %28, %cst_12 {dimension_numbers = #tpu.dot_dimension_numbers<[1], [0], [0], [1], [0, 0, 1, 1], [], []>} : vector<16x32xbf16>, vector<32x96xbf16>, vector<16x96xf32> -> vector<16x96xf32>
    %c0_13 = arith.constant 0 : index
    %c0_14 = arith.constant 0 : index
    %30 = vector.load %arg5[%c0_13, %c0_14] : memref<1x96xf32, #tpu.memory_space<vmem>>, vector<1x96xf32>
    %31 = vector.broadcast %30 : vector<1x96xf32> to vector<16x96xf32>
    %32 = arith.addf %29, %31 : vector<16x96xf32>
    %33 = vector.extract_strided_slice %32 {offsets = [0, 0], sizes = [16, 32], strides = [1, 1]} : vector<16x96xf32> to vector<16x32xf32>
    %34 = vector.extract_strided_slice %32 {offsets = [0, 32], sizes = [16, 32], strides = [1, 1]} : vector<16x96xf32> to vector<16x32xf32>
    %35 = vector.extract_strided_slice %32 {offsets = [0, 64], sizes = [16, 32], strides = [1, 1]} : vector<16x96xf32> to vector<16x32xf32>
    %36 = vector.extract_strided_slice %33 {offsets = [0, 0], sizes = [16, 8], strides = [1, 1]} : vector<16x32xf32> to vector<16x8xf32>
    %37 = arith.truncf %36 : vector<16x8xf32> to vector<16x8xbf16>
    %38 = vector.extract_strided_slice %34 {offsets = [0, 0], sizes = [16, 8], strides = [1, 1]} : vector<16x32xf32> to vector<16x8xf32>
    %39 = arith.truncf %38 : vector<16x8xf32> to vector<16x8xbf16>
    %40 = vector.extract_strided_slice %35 {offsets = [0, 0], sizes = [16, 8], strides = [1, 1]} : vector<16x32xf32> to vector<16x8xf32>
    %41 = arith.truncf %40 : vector<16x8xf32> to vector<16x8xbf16>
    %42 = tpu.transpose %39, [1, 0] : vector<16x8xbf16> -> vector<8x16xbf16>
    %cst_15 = arith.constant dense<0.000000e+00> : vector<16x16xf32>
    %43 = tpu.matmul %37, %42, %cst_15 {dimension_numbers = #tpu.dot_dimension_numbers<[1], [0], [0], [1], [0, 0, 1, 1], [], []>} : vector<16x8xbf16>, vector<8x16xbf16>, vector<16x16xf32> -> vector<16x16xf32>
    %cst_16 = arith.constant 0.353553385 : f32
    %44 = vector.broadcast %cst_16 : f32 to vector<16x16xf32>
    %45 = arith.mulf %43, %44 : vector<16x16xf32>
    %cst_17 = arith.constant dense<0xFF800000> : vector<16xf32>
    %46 = vector.multi_reduction <maximumf>, %45, %cst_17 [1] : vector<16x16xf32> to vector<16xf32>
    %47 = vector.shape_cast %46 : vector<16xf32> to vector<16x1xf32>
    %48 = vector.broadcast %47 : vector<16x1xf32> to vector<16x16xf32>
    %49 = arith.subf %45, %48 : vector<16x16xf32>
    %50 = math.exp %49 : vector<16x16xf32>
    %cst_18 = arith.constant dense<0.000000e+00> : vector<16xf32>
    %51 = vector.multi_reduction <add>, %50, %cst_18 [1] : vector<16x16xf32> to vector<16xf32>
    %52 = vector.shape_cast %51 : vector<16xf32> to vector<16x1xf32>
    %53 = tpu.reciprocal %52 {approx = true} : vector<16x1xf32> -> vector<16x1xf32>
    %54 = vector.broadcast %53 : vector<16x1xf32> to vector<16x16xf32>
    %55 = arith.mulf %50, %54 : vector<16x16xf32>
    %56 = arith.truncf %55 : vector<16x16xf32> to vector<16x16xbf16>
    %cst_19 = arith.constant dense<0.000000e+00> : vector<16x8xf32>
    %57 = tpu.matmul %56, %41, %cst_19 {dimension_numbers = #tpu.dot_dimension_numbers<[1], [0], [0], [1], [0, 0, 1, 1], [], []>} : vector<16x16xbf16>, vector<16x8xbf16>, vector<16x8xf32> -> vector<16x8xf32>
    %58 = vector.extract_strided_slice %33 {offsets = [0, 8], sizes = [16, 8], strides = [1, 1]} : vector<16x32xf32> to vector<16x8xf32>
    %59 = arith.truncf %58 : vector<16x8xf32> to vector<16x8xbf16>
    %60 = vector.extract_strided_slice %34 {offsets = [0, 8], sizes = [16, 8], strides = [1, 1]} : vector<16x32xf32> to vector<16x8xf32>
    %61 = arith.truncf %60 : vector<16x8xf32> to vector<16x8xbf16>
    %62 = vector.extract_strided_slice %35 {offsets = [0, 8], sizes = [16, 8], strides = [1, 1]} : vector<16x32xf32> to vector<16x8xf32>
    %63 = arith.truncf %62 : vector<16x8xf32> to vector<16x8xbf16>
    %64 = tpu.transpose %61, [1, 0] : vector<16x8xbf16> -> vector<8x16xbf16>
    %cst_20 = arith.constant dense<0.000000e+00> : vector<16x16xf32>
    %65 = tpu.matmul %59, %64, %cst_20 {dimension_numbers = #tpu.dot_dimension_numbers<[1], [0], [0], [1], [0, 0, 1, 1], [], []>} : vector<16x8xbf16>, vector<8x16xbf16>, vector<16x16xf32> -> vector<16x16xf32>
    %cst_21 = arith.constant 0.353553385 : f32
    %66 = vector.broadcast %cst_21 : f32 to vector<16x16xf32>
    %67 = arith.mulf %65, %66 : vector<16x16xf32>
    %cst_22 = arith.constant dense<0xFF800000> : vector<16xf32>
    %68 = vector.multi_reduction <maximumf>, %67, %cst_22 [1] : vector<16x16xf32> to vector<16xf32>
    %69 = vector.shape_cast %68 : vector<16xf32> to vector<16x1xf32>
    %70 = vector.broadcast %69 : vector<16x1xf32> to vector<16x16xf32>
    %71 = arith.subf %67, %70 : vector<16x16xf32>
    %72 = math.exp %71 : vector<16x16xf32>
    %cst_23 = arith.constant dense<0.000000e+00> : vector<16xf32>
    %73 = vector.multi_reduction <add>, %72, %cst_23 [1] : vector<16x16xf32> to vector<16xf32>
    %74 = vector.shape_cast %73 : vector<16xf32> to vector<16x1xf32>
    %75 = tpu.reciprocal %74 {approx = true} : vector<16x1xf32> -> vector<16x1xf32>
    %76 = vector.broadcast %75 : vector<16x1xf32> to vector<16x16xf32>
    %77 = arith.mulf %72, %76 : vector<16x16xf32>
    %78 = arith.truncf %77 : vector<16x16xf32> to vector<16x16xbf16>
    %cst_24 = arith.constant dense<0.000000e+00> : vector<16x8xf32>
    %79 = tpu.matmul %78, %63, %cst_24 {dimension_numbers = #tpu.dot_dimension_numbers<[1], [0], [0], [1], [0, 0, 1, 1], [], []>} : vector<16x16xbf16>, vector<16x8xbf16>, vector<16x8xf32> -> vector<16x8xf32>
    %80 = vector.extract_strided_slice %33 {offsets = [0, 16], sizes = [16, 8], strides = [1, 1]} : vector<16x32xf32> to vector<16x8xf32>
    %81 = arith.truncf %80 : vector<16x8xf32> to vector<16x8xbf16>
    %82 = vector.extract_strided_slice %34 {offsets = [0, 16], sizes = [16, 8], strides = [1, 1]} : vector<16x32xf32> to vector<16x8xf32>
    %83 = arith.truncf %82 : vector<16x8xf32> to vector<16x8xbf16>
    %84 = vector.extract_strided_slice %35 {offsets = [0, 16], sizes = [16, 8], strides = [1, 1]} : vector<16x32xf32> to vector<16x8xf32>
    %85 = arith.truncf %84 : vector<16x8xf32> to vector<16x8xbf16>
    %86 = tpu.transpose %83, [1, 0] : vector<16x8xbf16> -> vector<8x16xbf16>
    %cst_25 = arith.constant dense<0.000000e+00> : vector<16x16xf32>
    %87 = tpu.matmul %81, %86, %cst_25 {dimension_numbers = #tpu.dot_dimension_numbers<[1], [0], [0], [1], [0, 0, 1, 1], [], []>} : vector<16x8xbf16>, vector<8x16xbf16>, vector<16x16xf32> -> vector<16x16xf32>
    %cst_26 = arith.constant 0.353553385 : f32
    %88 = vector.broadcast %cst_26 : f32 to vector<16x16xf32>
    %89 = arith.mulf %87, %88 : vector<16x16xf32>
    %cst_27 = arith.constant dense<0xFF800000> : vector<16xf32>
    %90 = vector.multi_reduction <maximumf>, %89, %cst_27 [1] : vector<16x16xf32> to vector<16xf32>
    %91 = vector.shape_cast %90 : vector<16xf32> to vector<16x1xf32>
    %92 = vector.broadcast %91 : vector<16x1xf32> to vector<16x16xf32>
    %93 = arith.subf %89, %92 : vector<16x16xf32>
    %94 = math.exp %93 : vector<16x16xf32>
    %cst_28 = arith.constant dense<0.000000e+00> : vector<16xf32>
    %95 = vector.multi_reduction <add>, %94, %cst_28 [1] : vector<16x16xf32> to vector<16xf32>
    %96 = vector.shape_cast %95 : vector<16xf32> to vector<16x1xf32>
    %97 = tpu.reciprocal %96 {approx = true} : vector<16x1xf32> -> vector<16x1xf32>
    %98 = vector.broadcast %97 : vector<16x1xf32> to vector<16x16xf32>
    %99 = arith.mulf %94, %98 : vector<16x16xf32>
    %100 = arith.truncf %99 : vector<16x16xf32> to vector<16x16xbf16>
    %cst_29 = arith.constant dense<0.000000e+00> : vector<16x8xf32>
    %101 = tpu.matmul %100, %85, %cst_29 {dimension_numbers = #tpu.dot_dimension_numbers<[1], [0], [0], [1], [0, 0, 1, 1], [], []>} : vector<16x16xbf16>, vector<16x8xbf16>, vector<16x8xf32> -> vector<16x8xf32>
    %102 = vector.extract_strided_slice %33 {offsets = [0, 24], sizes = [16, 8], strides = [1, 1]} : vector<16x32xf32> to vector<16x8xf32>
    %103 = arith.truncf %102 : vector<16x8xf32> to vector<16x8xbf16>
    %104 = vector.extract_strided_slice %34 {offsets = [0, 24], sizes = [16, 8], strides = [1, 1]} : vector<16x32xf32> to vector<16x8xf32>
    %105 = arith.truncf %104 : vector<16x8xf32> to vector<16x8xbf16>
    %106 = vector.extract_strided_slice %35 {offsets = [0, 24], sizes = [16, 8], strides = [1, 1]} : vector<16x32xf32> to vector<16x8xf32>
    %107 = arith.truncf %106 : vector<16x8xf32> to vector<16x8xbf16>
    %108 = tpu.transpose %105, [1, 0] : vector<16x8xbf16> -> vector<8x16xbf16>
    %cst_30 = arith.constant dense<0.000000e+00> : vector<16x16xf32>
    %109 = tpu.matmul %103, %108, %cst_30 {dimension_numbers = #tpu.dot_dimension_numbers<[1], [0], [0], [1], [0, 0, 1, 1], [], []>} : vector<16x8xbf16>, vector<8x16xbf16>, vector<16x16xf32> -> vector<16x16xf32>
    %cst_31 = arith.constant 0.353553385 : f32
    %110 = vector.broadcast %cst_31 : f32 to vector<16x16xf32>
    %111 = arith.mulf %109, %110 : vector<16x16xf32>
    %cst_32 = arith.constant dense<0xFF800000> : vector<16xf32>
    %112 = vector.multi_reduction <maximumf>, %111, %cst_32 [1] : vector<16x16xf32> to vector<16xf32>
    %113 = vector.shape_cast %112 : vector<16xf32> to vector<16x1xf32>
    %114 = vector.broadcast %113 : vector<16x1xf32> to vector<16x16xf32>
    %115 = arith.subf %111, %114 : vector<16x16xf32>
    %116 = math.exp %115 : vector<16x16xf32>
    %cst_33 = arith.constant dense<0.000000e+00> : vector<16xf32>
    %117 = vector.multi_reduction <add>, %116, %cst_33 [1] : vector<16x16xf32> to vector<16xf32>
    %118 = vector.shape_cast %117 : vector<16xf32> to vector<16x1xf32>
    %119 = tpu.reciprocal %118 {approx = true} : vector<16x1xf32> -> vector<16x1xf32>
    %120 = vector.broadcast %119 : vector<16x1xf32> to vector<16x16xf32>
    %121 = arith.mulf %116, %120 : vector<16x16xf32>
    %122 = arith.truncf %121 : vector<16x16xf32> to vector<16x16xbf16>
    %cst_34 = arith.constant dense<0.000000e+00> : vector<16x8xf32>
    %123 = tpu.matmul %122, %107, %cst_34 {dimension_numbers = #tpu.dot_dimension_numbers<[1], [0], [0], [1], [0, 0, 1, 1], [], []>} : vector<16x16xbf16>, vector<16x8xbf16>, vector<16x8xf32> -> vector<16x8xf32>
    %124 = tpu.concatenate %57, %79, %101, %123 in 1 : vector<16x8xf32>, vector<16x8xf32>, vector<16x8xf32>, vector<16x8xf32> -> vector<16x32xf32>
    %125 = arith.truncf %124 : vector<16x32xf32> to vector<16x32xbf16>
    %c0_35 = arith.constant 0 : index
    %c0_36 = arith.constant 0 : index
    %126 = vector.load %arg6[%c0_35, %c0_36] : memref<32x32xbf16, #tpu.memory_space<vmem>>, vector<32x32xbf16>
    %cst_37 = arith.constant dense<0.000000e+00> : vector<16x32xf32>
    %127 = tpu.matmul %125, %126, %cst_37 {dimension_numbers = #tpu.dot_dimension_numbers<[1], [0], [0], [1], [0, 0, 1, 1], [], []>} : vector<16x32xbf16>, vector<32x32xbf16>, vector<16x32xf32> -> vector<16x32xf32>
    %c0_38 = arith.constant 0 : index
    %c0_39 = arith.constant 0 : index
    %128 = vector.load %arg7[%c0_38, %c0_39] : memref<1x32xf32, #tpu.memory_space<vmem>>, vector<1x32xf32>
    %129 = vector.broadcast %128 : vector<1x32xf32> to vector<16x32xf32>
    %130 = arith.addf %127, %129 : vector<16x32xf32>
    %131 = arith.addf %2, %130 : vector<16x32xf32>
    %132 = arith.truncf %131 : vector<16x32xf32> to vector<16x32xbf16>
    %c0_40 = arith.constant 0 : index
    %c0_41 = arith.constant 0 : index
    %c0_42 = arith.constant 0 : index
    %133 = vector.load %arg8[%c0_40, %c0_41, %c0_42] : memref<1x16x32xbf16, #tpu.memory_space<vmem>>, vector<1x16x32xbf16>
    %134 = vector.shape_cast %133 : vector<1x16x32xbf16> to vector<16x32xbf16>
    %135 = vector.shape_cast %132 : vector<16x32xbf16> to vector<1x16x32xbf16>
    tpu.vector_store %arg8[%c0_40, %c0_41, %c0_42], %135 {strides = array<i32>} : memref<1x16x32xbf16, #tpu.memory_space<vmem>>, vector<1x16x32xbf16>,
    return
  }
  func.func @transform_0(%arg0: i32) -> (i32, i32, i32) {
    %c0_i32 = arith.constant 0 : i32
    %c0_i32_0 = arith.constant 0 : i32
    %c0_i32_1 = arith.constant 0 : i32
    return %arg0, %c0_i32, %c0_i32_0 : i32, i32, i32
  }
  func.func @transform_1(%arg0: i32) -> (i32, i32) {
    %c0_i32 = arith.constant 0 : i32
    %c0_i32_0 = arith.constant 0 : i32
    %c0_i32_1 = arith.constant 0 : i32
    return %c0_i32, %c0_i32_0 : i32, i32
  }
  func.func @transform_2(%arg0: i32) -> (i32, i32) {
    %c0_i32 = arith.constant 0 : i32
    %c0_i32_0 = arith.constant 0 : i32
    %c0_i32_1 = arith.constant 0 : i32
    return %c0_i32, %c0_i32_0 : i32, i32
  }
  func.func @transform_3(%arg0: i32) -> (i32, i32) {
    %c0_i32 = arith.constant 0 : i32
    %c0_i32_0 = arith.constant 0 : i32
    %c0_i32_1 = arith.constant 0 : i32
    return %c0_i32, %c0_i32_0 : i32, i32
  }
  func.func @transform_4(%arg0: i32) -> (i32, i32) {
    %c0_i32 = arith.constant 0 : i32
    %c0_i32_0 = arith.constant 0 : i32
    %c0_i32_1 = arith.constant 0 : i32
    return %c0_i32, %c0_i32_0 : i32, i32
  }
  func.func @transform_5(%arg0: i32) -> (i32, i32) {
    %c0_i32 = arith.constant 0 : i32
    %c0_i32_0 = arith.constant 0 : i32
    %c0_i32_1 = arith.constant 0 : i32
    return %c0_i32, %c0_i32_0 : i32, i32
  }
  func.func @transform_6(%arg0: i32) -> (i32, i32) {
    %c0_i32 = arith.constant 0 : i32
    %c0_i32_0 = arith.constant 0 : i32
    %c0_i32_1 = arith.constant 0 : i32
    return %c0_i32, %c0_i32_0 : i32, i32
  }
  func.func @transform_7(%arg0: i32) -> (i32, i32, i32) {
    %c0_i32 = arith.constant 0 : i32
    %c0_i32_0 = arith.constant 0 : i32
    %c0_i32_1 = arith.constant 0 : i32
    return %arg0, %c0_i32, %c0_i32_0 : i32, i32, i32
  }
}

module attributes {stable_mosaic.version = 11 : i64} {
  func.func @_ln_linear_kernel(%arg0: i32, %arg1: i32, %arg2: memref<32x32xbf16, #tpu.memory_space<vmem>>, %arg3: memref<1x32xf32, #tpu.memory_space<vmem>>, %arg4: memref<1x32xf32, #tpu.memory_space<vmem>>, %arg5: memref<32x128xbf16, #tpu.memory_space<vmem>>, %arg6: memref<1x128xf32, #tpu.memory_space<vmem>>, %arg7: memref<32x128xbf16, #tpu.memory_space<vmem>>, %arg8: memref<32x32xbf16, #tpu.memory_space<vmem>>) attributes {dimension_semantics = [#tpu.dimension_semantics<parallel>, #tpu.dimension_semantics<arbitrary>], iteration_bounds = array<i64: 1, 1>, scalar_prefetch = 0 : i64, scratch_operands = 1 : i64, tpu.core_type = #tpu.core_type<tc>, window_params = [{transform_indices = @transform_0, window_bounds = array<i64: 32, 32>}, {pipeline_mode = #tpu.pipeline_mode<synchronous>, transform_indices = @transform_1, window_bounds = array<i64: 1, 32>}, {pipeline_mode = #tpu.pipeline_mode<synchronous>, transform_indices = @transform_2, window_bounds = array<i64: 1, 32>}, {transform_indices = @transform_3, window_bounds = array<i64: 32, 128>}, {transform_indices = @transform_4, window_bounds = array<i64: 1, 128>}, {transform_indices = @transform_5, window_bounds = array<i64: 32, 128>}]} {
    %c0_i32 = arith.constant 0 : i32
    %0 = arith.cmpi eq, %arg1, %c0_i32 : i32
    %1 = arith.extui %0 : i1 to i32
    %c0_i32_0 = arith.constant 0 : i32
    %2 = arith.cmpi ne, %1, %c0_i32_0 : i32
    scf.if %2 {
      %c0_8 = arith.constant 0 : index
      %c0_9 = arith.constant 0 : index
      %11 = vector.load %arg2[%c0_8, %c0_9] : memref<32x32xbf16, #tpu.memory_space<vmem>>, vector<32x32xbf16>
      %12 = arith.extf %11 : vector<32x32xbf16> to vector<32x32xf32>
      %c0_10 = arith.constant 0 : index
      %c0_11 = arith.constant 0 : index
      %13 = vector.load %arg3[%c0_10, %c0_11] : memref<1x32xf32, #tpu.memory_space<vmem>>, vector<1x32xf32>
      %c0_12 = arith.constant 0 : index
      %c0_13 = arith.constant 0 : index
      %14 = vector.load %arg4[%c0_12, %c0_13] : memref<1x32xf32, #tpu.memory_space<vmem>>, vector<1x32xf32>
      %cst_14 = arith.constant dense<0.000000e+00> : vector<32xf32>
      %15 = vector.multi_reduction <add>, %12, %cst_14 [1] : vector<32x32xf32> to vector<32xf32>
      %16 = vector.shape_cast %15 : vector<32xf32> to vector<32x1xf32>
      %cst_15 = arith.constant 3.200000e+01 : f32
      %17 = vector.broadcast %cst_15 : f32 to vector<32x1xf32>
      %18 = arith.divf %16, %17 : vector<32x1xf32>
      %19 = vector.broadcast %18 : vector<32x1xf32> to vector<32x32xf32>
      %20 = arith.subf %12, %19 : vector<32x32xf32>
      %21 = arith.mulf %20, %20 : vector<32x32xf32>
      %cst_16 = arith.constant dense<0.000000e+00> : vector<32xf32>
      %22 = vector.multi_reduction <add>, %21, %cst_16 [1] : vector<32x32xf32> to vector<32xf32>
      %23 = vector.shape_cast %22 : vector<32xf32> to vector<32x1xf32>
      %cst_17 = arith.constant 3.200000e+01 : f32
      %24 = vector.broadcast %cst_17 : f32 to vector<32x1xf32>
      %25 = arith.divf %23, %24 : vector<32x1xf32>
      %26 = vector.broadcast %18 : vector<32x1xf32> to vector<32x32xf32>
      %27 = arith.subf %12, %26 : vector<32x32xf32>
      %cst_18 = arith.constant 9.99999974E-6 : f32
      %28 = vector.broadcast %cst_18 : f32 to vector<32x1xf32>
      %29 = arith.addf %25, %28 : vector<32x1xf32>
      %30 = math.rsqrt %29 : vector<32x1xf32>
      %31 = vector.broadcast %30 : vector<32x1xf32> to vector<32x32xf32>
      %32 = arith.mulf %27, %31 : vector<32x32xf32>
      %33 = vector.broadcast %13 : vector<1x32xf32> to vector<32x32xf32>
      %34 = arith.mulf %32, %33 : vector<32x32xf32>
      %35 = vector.broadcast %14 : vector<1x32xf32> to vector<32x32xf32>
      %36 = arith.addf %34, %35 : vector<32x32xf32>
      %37 = arith.truncf %36 : vector<32x32xf32> to vector<32x32xbf16>
      %c0_19 = arith.constant 0 : index
      %c0_20 = arith.constant 0 : index
      %38 = vector.load %arg8[%c0_19, %c0_20] : memref<32x32xbf16, #tpu.memory_space<vmem>>, vector<32x32xbf16>
      tpu.vector_store %arg8[%c0_19, %c0_20], %37 {strides = array<i32>} : memref<32x32xbf16, #tpu.memory_space<vmem>>, vector<32x32xbf16>,
    } else {
    }
    %c0 = arith.constant 0 : index
    %c0_1 = arith.constant 0 : index
    %3 = vector.load %arg8[%c0, %c0_1] : memref<32x32xbf16, #tpu.memory_space<vmem>>, vector<32x32xbf16>
    %c0_2 = arith.constant 0 : index
    %c0_3 = arith.constant 0 : index
    %4 = vector.load %arg5[%c0_2, %c0_3] : memref<32x128xbf16, #tpu.memory_space<vmem>>, vector<32x128xbf16>
    %cst = arith.constant dense<0.000000e+00> : vector<32x128xf32>
    %5 = tpu.matmul %3, %4, %cst {dimension_numbers = #tpu.dot_dimension_numbers<[1], [0], [0], [1], [0, 0, 1, 1], [], []>} : vector<32x32xbf16>, vector<32x128xbf16>, vector<32x128xf32> -> vector<32x128xf32>
    %c0_4 = arith.constant 0 : index
    %c0_5 = arith.constant 0 : index
    %6 = vector.load %arg6[%c0_4, %c0_5] : memref<1x128xf32, #tpu.memory_space<vmem>>, vector<1x128xf32>
    %7 = vector.broadcast %6 : vector<1x128xf32> to vector<32x128xf32>
    %8 = arith.addf %5, %7 : vector<32x128xf32>
    %9 = arith.truncf %8 : vector<32x128xf32> to vector<32x128xbf16>
    %c0_6 = arith.constant 0 : index
    %c0_7 = arith.constant 0 : index
    %10 = vector.load %arg7[%c0_6, %c0_7] : memref<32x128xbf16, #tpu.memory_space<vmem>>, vector<32x128xbf16>
    tpu.vector_store %arg7[%c0_6, %c0_7], %9 {strides = array<i32>} : memref<32x128xbf16, #tpu.memory_space<vmem>>, vector<32x128xbf16>,
    return
  }
  func.func @transform_0(%arg0: i32, %arg1: i32) -> (i32, i32) {
    %c0_i32 = arith.constant 0 : i32
    %c0_i32_0 = arith.constant 0 : i32
    return %arg0, %c0_i32 : i32, i32
  }
  func.func @transform_1(%arg0: i32, %arg1: i32) -> (i32, i32) {
    %c0_i32 = arith.constant 0 : i32
    %c0_i32_0 = arith.constant 0 : i32
    %c0_i32_1 = arith.constant 0 : i32
    return %c0_i32, %c0_i32_0 : i32, i32
  }
  func.func @transform_2(%arg0: i32, %arg1: i32) -> (i32, i32) {
    %c0_i32 = arith.constant 0 : i32
    %c0_i32_0 = arith.constant 0 : i32
    %c0_i32_1 = arith.constant 0 : i32
    return %c0_i32, %c0_i32_0 : i32, i32
  }
  func.func @transform_3(%arg0: i32, %arg1: i32) -> (i32, i32) {
    %c0_i32 = arith.constant 0 : i32
    %c0_i32_0 = arith.constant 0 : i32
    return %c0_i32, %arg1 : i32, i32
  }
  func.func @transform_4(%arg0: i32, %arg1: i32) -> (i32, i32) {
    %c0_i32 = arith.constant 0 : i32
    %c0_i32_0 = arith.constant 0 : i32
    return %c0_i32, %arg1 : i32, i32
  }
  func.func @transform_5(%arg0: i32, %arg1: i32) -> (i32, i32) {
    %c0_i32 = arith.constant 0 : i32
    return %arg0, %arg1 : i32, i32
  }
}

module attributes {stable_mosaic.version = 11 : i64} {
  func.func @kern(%arg0: i32, %arg1: memref<1x8x48xbf16, #tpu.memory_space<vmem>>, %arg2: memref<1x16x48xbf16, #tpu.memory_space<vmem>>, %arg3: memref<1x48xf32, #tpu.memory_space<vmem>>, %arg4: memref<1x48xf32, #tpu.memory_space<vmem>>, %arg5: memref<48x48xbf16, #tpu.memory_space<vmem>>, %arg6: memref<1x48xf32, #tpu.memory_space<vmem>>, %arg7: memref<48x96xbf16, #tpu.memory_space<vmem>>, %arg8: memref<1x96xf32, #tpu.memory_space<vmem>>, %arg9: memref<48x48xbf16, #tpu.memory_space<vmem>>, %arg10: memref<1x48xf32, #tpu.memory_space<vmem>>, %arg11: memref<1x8x48xbf16, #tpu.memory_space<vmem>>) attributes {dimension_semantics = [#tpu.dimension_semantics<parallel>], iteration_bounds = array<i64: 2>, scalar_prefetch = 0 : i64, scratch_operands = 0 : i64, tpu.core_type = #tpu.core_type<tc>, window_params = [{transform_indices = @transform_0, window_bounds = array<i64: 1, 8, 48>}, {transform_indices = @transform_1, window_bounds = array<i64: 1, 16, 48>}, {pipeline_mode = #tpu.pipeline_mode<synchronous>, transform_indices = @transform_2, window_bounds = array<i64: 1, 48>}, {pipeline_mode = #tpu.pipeline_mode<synchronous>, transform_indices = @transform_3, window_bounds = array<i64: 1, 48>}, {pipeline_mode = #tpu.pipeline_mode<synchronous>, transform_indices = @transform_4, window_bounds = array<i64: 48, 48>}, {pipeline_mode = #tpu.pipeline_mode<synchronous>, transform_indices = @transform_5, window_bounds = array<i64: 1, 48>}, {pipeline_mode = #tpu.pipeline_mode<synchronous>, transform_indices = @transform_6, window_bounds = array<i64: 48, 96>}, {pipeline_mode = #tpu.pipeline_mode<synchronous>, transform_indices = @transform_7, window_bounds = array<i64: 1, 96>}, {pipeline_mode = #tpu.pipeline_mode<synchronous>, transform_indices = @transform_8, window_bounds = array<i64: 48, 48>}, {pipeline_mode = #tpu.pipeline_mode<synchronous>, transform_indices = @transform_9, window_bounds = array<i64: 1, 48>}, {transform_indices = @transform_10, window_bounds = array<i64: 1, 8, 48>}]} {
    %c0 = arith.constant 0 : index
    %c0_0 = arith.constant 0 : index
    %c0_1 = arith.constant 0 : index
    %0 = vector.load %arg1[%c0, %c0_0, %c0_1] : memref<1x8x48xbf16, #tpu.memory_space<vmem>>, vector<1x8x48xbf16>
    %1 = vector.shape_cast %0 : vector<1x8x48xbf16> to vector<8x48xbf16>
    %2 = arith.extf %1 : vector<8x48xbf16> to vector<8x48xf32>
    %c0_2 = arith.constant 0 : index
    %c0_3 = arith.constant 0 : index
    %c0_4 = arith.constant 0 : index
    %3 = vector.load %arg2[%c0_2, %c0_3, %c0_4] : memref<1x16x48xbf16, #tpu.memory_space<vmem>>, vector<1x16x48xbf16>
    %4 = vector.shape_cast %3 : vector<1x16x48xbf16> to vector<16x48xbf16>
    %c0_5 = arith.constant 0 : index
    %c0_6 = arith.constant 0 : index
    %5 = vector.load %arg3[%c0_5, %c0_6] : memref<1x48xf32, #tpu.memory_space<vmem>>, vector<1x48xf32>
    %c0_7 = arith.constant 0 : index
    %c0_8 = arith.constant 0 : index
    %6 = vector.load %arg4[%c0_7, %c0_8] : memref<1x48xf32, #tpu.memory_space<vmem>>, vector<1x48xf32>
    %cst = arith.constant dense<0.000000e+00> : vector<8xf32>
    %7 = vector.multi_reduction <add>, %2, %cst [1] : vector<8x48xf32> to vector<8xf32>
    %8 = vector.shape_cast %7 : vector<8xf32> to vector<8x1xf32>
    %cst_9 = arith.constant 4.800000e+01 : f32
    %9 = vector.broadcast %cst_9 : f32 to vector<8x1xf32>
    %10 = arith.divf %8, %9 : vector<8x1xf32>
    %11 = vector.broadcast %10 : vector<8x1xf32> to vector<8x48xf32>
    %12 = arith.subf %2, %11 : vector<8x48xf32>
    %13 = arith.mulf %12, %12 : vector<8x48xf32>
    %cst_10 = arith.constant dense<0.000000e+00> : vector<8xf32>
    %14 = vector.multi_reduction <add>, %13, %cst_10 [1] : vector<8x48xf32> to vector<8xf32>
    %15 = vector.shape_cast %14 : vector<8xf32> to vector<8x1xf32>
    %cst_11 = arith.constant 4.800000e+01 : f32
    %16 = vector.broadcast %cst_11 : f32 to vector<8x1xf32>
    %17 = arith.divf %15, %16 : vector<8x1xf32>
    %18 = vector.broadcast %10 : vector<8x1xf32> to vector<8x48xf32>
    %19 = arith.subf %2, %18 : vector<8x48xf32>
    %cst_12 = arith.constant 9.99999974E-6 : f32
    %20 = vector.broadcast %cst_12 : f32 to vector<8x1xf32>
    %21 = arith.addf %17, %20 : vector<8x1xf32>
    %22 = math.rsqrt %21 : vector<8x1xf32>
    %23 = vector.broadcast %22 : vector<8x1xf32> to vector<8x48xf32>
    %24 = arith.mulf %19, %23 : vector<8x48xf32>
    %25 = vector.broadcast %5 : vector<1x48xf32> to vector<8x48xf32>
    %26 = arith.mulf %24, %25 : vector<8x48xf32>
    %27 = vector.broadcast %6 : vector<1x48xf32> to vector<8x48xf32>
    %28 = arith.addf %26, %27 : vector<8x48xf32>
    %29 = arith.truncf %28 : vector<8x48xf32> to vector<8x48xbf16>
    %c0_13 = arith.constant 0 : index
    %c0_14 = arith.constant 0 : index
    %30 = vector.load %arg5[%c0_13, %c0_14] : memref<48x48xbf16, #tpu.memory_space<vmem>>, vector<48x48xbf16>
    %cst_15 = arith.constant dense<0.000000e+00> : vector<8x48xf32>
    %31 = tpu.matmul %29, %30, %cst_15 {dimension_numbers = #tpu.dot_dimension_numbers<[1], [0], [0], [1], [0, 0, 1, 1], [], []>} : vector<8x48xbf16>, vector<48x48xbf16>, vector<8x48xf32> -> vector<8x48xf32>
    %c0_16 = arith.constant 0 : index
    %c0_17 = arith.constant 0 : index
    %32 = vector.load %arg6[%c0_16, %c0_17] : memref<1x48xf32, #tpu.memory_space<vmem>>, vector<1x48xf32>
    %33 = vector.broadcast %32 : vector<1x48xf32> to vector<8x48xf32>
    %34 = arith.addf %31, %33 : vector<8x48xf32>
    %c0_18 = arith.constant 0 : index
    %c0_19 = arith.constant 0 : index
    %35 = vector.load %arg7[%c0_18, %c0_19] : memref<48x96xbf16, #tpu.memory_space<vmem>>, vector<48x96xbf16>
    %cst_20 = arith.constant dense<0.000000e+00> : vector<16x96xf32>
    %36 = tpu.matmul %4, %35, %cst_20 {dimension_numbers = #tpu.dot_dimension_numbers<[1], [0], [0], [1], [0, 0, 1, 1], [], []>} : vector<16x48xbf16>, vector<48x96xbf16>, vector<16x96xf32> -> vector<16x96xf32>
    %c0_21 = arith.constant 0 : index
    %c0_22 = arith.constant 0 : index
    %37 = vector.load %arg8[%c0_21, %c0_22] : memref<1x96xf32, #tpu.memory_space<vmem>>, vector<1x96xf32>
    %38 = vector.broadcast %37 : vector<1x96xf32> to vector<16x96xf32>
    %39 = arith.addf %36, %38 : vector<16x96xf32>
    %40 = vector.extract_strided_slice %39 {offsets = [0, 0], sizes = [16, 48], strides = [1, 1]} : vector<16x96xf32> to vector<16x48xf32>
    %41 = vector.extract_strided_slice %39 {offsets = [0, 48], sizes = [16, 48], strides = [1, 1]} : vector<16x96xf32> to vector<16x48xf32>
    %42 = vector.extract_strided_slice %34 {offsets = [0, 0], sizes = [8, 12], strides = [1, 1]} : vector<8x48xf32> to vector<8x12xf32>
    %43 = arith.truncf %42 : vector<8x12xf32> to vector<8x12xbf16>
    %44 = vector.extract_strided_slice %40 {offsets = [0, 0], sizes = [16, 12], strides = [1, 1]} : vector<16x48xf32> to vector<16x12xf32>
    %45 = arith.truncf %44 : vector<16x12xf32> to vector<16x12xbf16>
    %46 = vector.extract_strided_slice %41 {offsets = [0, 0], sizes = [16, 12], strides = [1, 1]} : vector<16x48xf32> to vector<16x12xf32>
    %47 = arith.truncf %46 : vector<16x12xf32> to vector<16x12xbf16>
    %48 = tpu.transpose %45, [1, 0] : vector<16x12xbf16> -> vector<12x16xbf16>
    %cst_23 = arith.constant dense<0.000000e+00> : vector<8x16xf32>
    %49 = tpu.matmul %43, %48, %cst_23 {dimension_numbers = #tpu.dot_dimension_numbers<[1], [0], [0], [1], [0, 0, 1, 1], [], []>} : vector<8x12xbf16>, vector<12x16xbf16>, vector<8x16xf32> -> vector<8x16xf32>
    %cst_24 = arith.constant 0.288675129 : f32
    %50 = vector.broadcast %cst_24 : f32 to vector<8x16xf32>
    %51 = arith.mulf %49, %50 : vector<8x16xf32>
    %cst_25 = arith.constant dense<0xFF800000> : vector<8xf32>
    %52 = vector.multi_reduction <maximumf>, %51, %cst_25 [1] : vector<8x16xf32> to vector<8xf32>
    %53 = vector.shape_cast %52 : vector<8xf32> to vector<8x1xf32>
    %54 = vector.broadcast %53 : vector<8x1xf32> to vector<8x16xf32>
    %55 = arith.subf %51, %54 : vector<8x16xf32>
    %56 = math.exp %55 : vector<8x16xf32>
    %cst_26 = arith.constant dense<0.000000e+00> : vector<8xf32>
    %57 = vector.multi_reduction <add>, %56, %cst_26 [1] : vector<8x16xf32> to vector<8xf32>
    %58 = vector.shape_cast %57 : vector<8xf32> to vector<8x1xf32>
    %59 = tpu.reciprocal %58 {approx = true} : vector<8x1xf32> -> vector<8x1xf32>
    %60 = vector.broadcast %59 : vector<8x1xf32> to vector<8x16xf32>
    %61 = arith.mulf %56, %60 : vector<8x16xf32>
    %62 = arith.truncf %61 : vector<8x16xf32> to vector<8x16xbf16>
    %cst_27 = arith.constant dense<0.000000e+00> : vector<8x12xf32>
    %63 = tpu.matmul %62, %47, %cst_27 {dimension_numbers = #tpu.dot_dimension_numbers<[1], [0], [0], [1], [0, 0, 1, 1], [], []>} : vector<8x16xbf16>, vector<16x12xbf16>, vector<8x12xf32> -> vector<8x12xf32>
    %64 = vector.extract_strided_slice %34 {offsets = [0, 12], sizes = [8, 12], strides = [1, 1]} : vector<8x48xf32> to vector<8x12xf32>
    %65 = arith.truncf %64 : vector<8x12xf32> to vector<8x12xbf16>
    %66 = vector.extract_strided_slice %40 {offsets = [0, 12], sizes = [16, 12], strides = [1, 1]} : vector<16x48xf32> to vector<16x12xf32>
    %67 = arith.truncf %66 : vector<16x12xf32> to vector<16x12xbf16>
    %68 = vector.extract_strided_slice %41 {offsets = [0, 12], sizes = [16, 12], strides = [1, 1]} : vector<16x48xf32> to vector<16x12xf32>
    %69 = arith.truncf %68 : vector<16x12xf32> to vector<16x12xbf16>
    %70 = tpu.transpose %67, [1, 0] : vector<16x12xbf16> -> vector<12x16xbf16>
    %cst_28 = arith.constant dense<0.000000e+00> : vector<8x16xf32>
    %71 = tpu.matmul %65, %70, %cst_28 {dimension_numbers = #tpu.dot_dimension_numbers<[1], [0], [0], [1], [0, 0, 1, 1], [], []>} : vector<8x12xbf16>, vector<12x16xbf16>, vector<8x16xf32> -> vector<8x16xf32>
    %cst_29 = arith.constant 0.288675129 : f32
    %72 = vector.broadcast %cst_29 : f32 to vector<8x16xf32>
    %73 = arith.mulf %71, %72 : vector<8x16xf32>
    %cst_30 = arith.constant dense<0xFF800000> : vector<8xf32>
    %74 = vector.multi_reduction <maximumf>, %73, %cst_30 [1] : vector<8x16xf32> to vector<8xf32>
    %75 = vector.shape_cast %74 : vector<8xf32> to vector<8x1xf32>
    %76 = vector.broadcast %75 : vector<8x1xf32> to vector<8x16xf32>
    %77 = arith.subf %73, %76 : vector<8x16xf32>
    %78 = math.exp %77 : vector<8x16xf32>
    %cst_31 = arith.constant dense<0.000000e+00> : vector<8xf32>
    %79 = vector.multi_reduction <add>, %78, %cst_31 [1] : vector<8x16xf32> to vector<8xf32>
    %80 = vector.shape_cast %79 : vector<8xf32> to vector<8x1xf32>
    %81 = tpu.reciprocal %80 {approx = true} : vector<8x1xf32> -> vector<8x1xf32>
    %82 = vector.broadcast %81 : vector<8x1xf32> to vector<8x16xf32>
    %83 = arith.mulf %78, %82 : vector<8x16xf32>
    %84 = arith.truncf %83 : vector<8x16xf32> to vector<8x16xbf16>
    %cst_32 = arith.constant dense<0.000000e+00> : vector<8x12xf32>
    %85 = tpu.matmul %84, %69, %cst_32 {dimension_numbers = #tpu.dot_dimension_numbers<[1], [0], [0], [1], [0, 0, 1, 1], [], []>} : vector<8x16xbf16>, vector<16x12xbf16>, vector<8x12xf32> -> vector<8x12xf32>
    %86 = vector.extract_strided_slice %34 {offsets = [0, 24], sizes = [8, 12], strides = [1, 1]} : vector<8x48xf32> to vector<8x12xf32>
    %87 = arith.truncf %86 : vector<8x12xf32> to vector<8x12xbf16>
    %88 = vector.extract_strided_slice %40 {offsets = [0, 24], sizes = [16, 12], strides = [1, 1]} : vector<16x48xf32> to vector<16x12xf32>
    %89 = arith.truncf %88 : vector<16x12xf32> to vector<16x12xbf16>
    %90 = vector.extract_strided_slice %41 {offsets = [0, 24], sizes = [16, 12], strides = [1, 1]} : vector<16x48xf32> to vector<16x12xf32>
    %91 = arith.truncf %90 : vector<16x12xf32> to vector<16x12xbf16>
    %92 = tpu.transpose %89, [1, 0] : vector<16x12xbf16> -> vector<12x16xbf16>
    %cst_33 = arith.constant dense<0.000000e+00> : vector<8x16xf32>
    %93 = tpu.matmul %87, %92, %cst_33 {dimension_numbers = #tpu.dot_dimension_numbers<[1], [0], [0], [1], [0, 0, 1, 1], [], []>} : vector<8x12xbf16>, vector<12x16xbf16>, vector<8x16xf32> -> vector<8x16xf32>
    %cst_34 = arith.constant 0.288675129 : f32
    %94 = vector.broadcast %cst_34 : f32 to vector<8x16xf32>
    %95 = arith.mulf %93, %94 : vector<8x16xf32>
    %cst_35 = arith.constant dense<0xFF800000> : vector<8xf32>
    %96 = vector.multi_reduction <maximumf>, %95, %cst_35 [1] : vector<8x16xf32> to vector<8xf32>
    %97 = vector.shape_cast %96 : vector<8xf32> to vector<8x1xf32>
    %98 = vector.broadcast %97 : vector<8x1xf32> to vector<8x16xf32>
    %99 = arith.subf %95, %98 : vector<8x16xf32>
    %100 = math.exp %99 : vector<8x16xf32>
    %cst_36 = arith.constant dense<0.000000e+00> : vector<8xf32>
    %101 = vector.multi_reduction <add>, %100, %cst_36 [1] : vector<8x16xf32> to vector<8xf32>
    %102 = vector.shape_cast %101 : vector<8xf32> to vector<8x1xf32>
    %103 = tpu.reciprocal %102 {approx = true} : vector<8x1xf32> -> vector<8x1xf32>
    %104 = vector.broadcast %103 : vector<8x1xf32> to vector<8x16xf32>
    %105 = arith.mulf %100, %104 : vector<8x16xf32>
    %106 = arith.truncf %105 : vector<8x16xf32> to vector<8x16xbf16>
    %cst_37 = arith.constant dense<0.000000e+00> : vector<8x12xf32>
    %107 = tpu.matmul %106, %91, %cst_37 {dimension_numbers = #tpu.dot_dimension_numbers<[1], [0], [0], [1], [0, 0, 1, 1], [], []>} : vector<8x16xbf16>, vector<16x12xbf16>, vector<8x12xf32> -> vector<8x12xf32>
    %108 = vector.extract_strided_slice %34 {offsets = [0, 36], sizes = [8, 12], strides = [1, 1]} : vector<8x48xf32> to vector<8x12xf32>
    %109 = arith.truncf %108 : vector<8x12xf32> to vector<8x12xbf16>
    %110 = vector.extract_strided_slice %40 {offsets = [0, 36], sizes = [16, 12], strides = [1, 1]} : vector<16x48xf32> to vector<16x12xf32>
    %111 = arith.truncf %110 : vector<16x12xf32> to vector<16x12xbf16>
    %112 = vector.extract_strided_slice %41 {offsets = [0, 36], sizes = [16, 12], strides = [1, 1]} : vector<16x48xf32> to vector<16x12xf32>
    %113 = arith.truncf %112 : vector<16x12xf32> to vector<16x12xbf16>
    %114 = tpu.transpose %111, [1, 0] : vector<16x12xbf16> -> vector<12x16xbf16>
    %cst_38 = arith.constant dense<0.000000e+00> : vector<8x16xf32>
    %115 = tpu.matmul %109, %114, %cst_38 {dimension_numbers = #tpu.dot_dimension_numbers<[1], [0], [0], [1], [0, 0, 1, 1], [], []>} : vector<8x12xbf16>, vector<12x16xbf16>, vector<8x16xf32> -> vector<8x16xf32>
    %cst_39 = arith.constant 0.288675129 : f32
    %116 = vector.broadcast %cst_39 : f32 to vector<8x16xf32>
    %117 = arith.mulf %115, %116 : vector<8x16xf32>
    %cst_40 = arith.constant dense<0xFF800000> : vector<8xf32>
    %118 = vector.multi_reduction <maximumf>, %117, %cst_40 [1] : vector<8x16xf32> to vector<8xf32>
    %119 = vector.shape_cast %118 : vector<8xf32> to vector<8x1xf32>
    %120 = vector.broadcast %119 : vector<8x1xf32> to vector<8x16xf32>
    %121 = arith.subf %117, %120 : vector<8x16xf32>
    %122 = math.exp %121 : vector<8x16xf32>
    %cst_41 = arith.constant dense<0.000000e+00> : vector<8xf32>
    %123 = vector.multi_reduction <add>, %122, %cst_41 [1] : vector<8x16xf32> to vector<8xf32>
    %124 = vector.shape_cast %123 : vector<8xf32> to vector<8x1xf32>
    %125 = tpu.reciprocal %124 {approx = true} : vector<8x1xf32> -> vector<8x1xf32>
    %126 = vector.broadcast %125 : vector<8x1xf32> to vector<8x16xf32>
    %127 = arith.mulf %122, %126 : vector<8x16xf32>
    %128 = arith.truncf %127 : vector<8x16xf32> to vector<8x16xbf16>
    %cst_42 = arith.constant dense<0.000000e+00> : vector<8x12xf32>
    %129 = tpu.matmul %128, %113, %cst_42 {dimension_numbers = #tpu.dot_dimension_numbers<[1], [0], [0], [1], [0, 0, 1, 1], [], []>} : vector<8x16xbf16>, vector<16x12xbf16>, vector<8x12xf32> -> vector<8x12xf32>
    %130 = tpu.concatenate %63, %85, %107, %129 in 1 : vector<8x12xf32>, vector<8x12xf32>, vector<8x12xf32>, vector<8x12xf32> -> vector<8x48xf32>
    %131 = arith.truncf %130 : vector<8x48xf32> to vector<8x48xbf16>
    %c0_43 = arith.constant 0 : index
    %c0_44 = arith.constant 0 : index
    %132 = vector.load %arg9[%c0_43, %c0_44] : memref<48x48xbf16, #tpu.memory_space<vmem>>, vector<48x48xbf16>
    %cst_45 = arith.constant dense<0.000000e+00> : vector<8x48xf32>
    %133 = tpu.matmul %131, %132, %cst_45 {dimension_numbers = #tpu.dot_dimension_numbers<[1], [0], [0], [1], [0, 0, 1, 1], [], []>} : vector<8x48xbf16>, vector<48x48xbf16>, vector<8x48xf32> -> vector<8x48xf32>
    %c0_46 = arith.constant 0 : index
    %c0_47 = arith.constant 0 : index
    %134 = vector.load %arg10[%c0_46, %c0_47] : memref<1x48xf32, #tpu.memory_space<vmem>>, vector<1x48xf32>
    %135 = vector.broadcast %134 : vector<1x48xf32> to vector<8x48xf32>
    %136 = arith.addf %133, %135 : vector<8x48xf32>
    %137 = arith.addf %2, %136 : vector<8x48xf32>
    %138 = arith.truncf %137 : vector<8x48xf32> to vector<8x48xbf16>
    %c0_48 = arith.constant 0 : index
    %c0_49 = arith.constant 0 : index
    %c0_50 = arith.constant 0 : index
    %139 = vector.load %arg11[%c0_48, %c0_49, %c0_50] : memref<1x8x48xbf16, #tpu.memory_space<vmem>>, vector<1x8x48xbf16>
    %140 = vector.shape_cast %139 : vector<1x8x48xbf16> to vector<8x48xbf16>
    %141 = vector.shape_cast %138 : vector<8x48xbf16> to vector<1x8x48xbf16>
    tpu.vector_store %arg11[%c0_48, %c0_49, %c0_50], %141 {strides = array<i32>} : memref<1x8x48xbf16, #tpu.memory_space<vmem>>, vector<1x8x48xbf16>,
    return
  }
  func.func @transform_0(%arg0: i32) -> (i32, i32, i32) {
    %c0_i32 = arith.constant 0 : i32
    %c0_i32_0 = arith.constant 0 : i32
    %c0_i32_1 = arith.constant 0 : i32
    return %arg0, %c0_i32, %c0_i32_0 : i32, i32, i32
  }
  func.func @transform_1(%arg0: i32) -> (i32, i32, i32) {
    %c0_i32 = arith.constant 0 : i32
    %c0_i32_0 = arith.constant 0 : i32
    %c0_i32_1 = arith.constant 0 : i32
    return %arg0, %c0_i32, %c0_i32_0 : i32, i32, i32
  }
  func.func @transform_2(%arg0: i32) -> (i32, i32) {
    %c0_i32 = arith.constant 0 : i32
    %c0_i32_0 = arith.constant 0 : i32
    %c0_i32_1 = arith.constant 0 : i32
    return %c0_i32, %c0_i32_0 : i32, i32
  }
  func.func @transform_3(%arg0: i32) -> (i32, i32) {
    %c0_i32 = arith.constant 0 : i32
    %c0_i32_0 = arith.constant 0 : i32
    %c0_i32_1 = arith.constant 0 : i32
    return %c0_i32, %c0_i32_0 : i32, i32
  }
  func.func @transform_4(%arg0: i32) -> (i32, i32) {
    %c0_i32 = arith.constant 0 : i32
    %c0_i32_0 = arith.constant 0 : i32
    %c0_i32_1 = arith.constant 0 : i32
    return %c0_i32, %c0_i32_0 : i32, i32
  }
  func.func @transform_5(%arg0: i32) -> (i32, i32) {
    %c0_i32 = arith.constant 0 : i32
    %c0_i32_0 = arith.constant 0 : i32
    %c0_i32_1 = arith.constant 0 : i32
    return %c0_i32, %c0_i32_0 : i32, i32
  }
  func.func @transform_6(%arg0: i32) -> (i32, i32) {
    %c0_i32 = arith.constant 0 : i32
    %c0_i32_0 = arith.constant 0 : i32
    %c0_i32_1 = arith.constant 0 : i32
    return %c0_i32, %c0_i32_0 : i32, i32
  }
  func.func @transform_7(%arg0: i32) -> (i32, i32) {
    %c0_i32 = arith.constant 0 : i32
    %c0_i32_0 = arith.constant 0 : i32
    %c0_i32_1 = arith.constant 0 : i32
    return %c0_i32, %c0_i32_0 : i32, i32
  }
  func.func @transform_8(%arg0: i32) -> (i32, i32) {
    %c0_i32 = arith.constant 0 : i32
    %c0_i32_0 = arith.constant 0 : i32
    %c0_i32_1 = arith.constant 0 : i32
    return %c0_i32, %c0_i32_0 : i32, i32
  }
  func.func @transform_9(%arg0: i32) -> (i32, i32) {
    %c0_i32 = arith.constant 0 : i32
    %c0_i32_0 = arith.constant 0 : i32
    %c0_i32_1 = arith.constant 0 : i32
    return %c0_i32, %c0_i32_0 : i32, i32
  }
  func.func @transform_10(%arg0: i32) -> (i32, i32, i32) {
    %c0_i32 = arith.constant 0 : i32
    %c0_i32_0 = arith.constant 0 : i32
    %c0_i32_1 = arith.constant 0 : i32
    return %arg0, %c0_i32, %c0_i32_0 : i32, i32, i32
  }
}

module attributes {stable_mosaic.version = 11 : i64} {
  func.func @_attn(%arg0: i32, %arg1: memref<1x8x48xbf16, #tpu.memory_space<vmem>>, %arg2: memref<1x48xf32, #tpu.memory_space<vmem>>, %arg3: memref<1x48xf32, #tpu.memory_space<vmem>>, %arg4: memref<48x144xbf16, #tpu.memory_space<vmem>>, %arg5: memref<1x144xf32, #tpu.memory_space<vmem>>, %arg6: memref<48x48xbf16, #tpu.memory_space<vmem>>, %arg7: memref<1x48xf32, #tpu.memory_space<vmem>>, %arg8: memref<1x1x8xf32, #tpu.memory_space<vmem>>, %arg9: memref<1x8x48xbf16, #tpu.memory_space<vmem>>) attributes {dimension_semantics = [#tpu.dimension_semantics<parallel>], iteration_bounds = array<i64: 2>, scalar_prefetch = 0 : i64, scratch_operands = 0 : i64, tpu.core_type = #tpu.core_type<tc>, window_params = [{transform_indices = @transform_0, window_bounds = array<i64: 1, 8, 48>}, {pipeline_mode = #tpu.pipeline_mode<synchronous>, transform_indices = @transform_1, window_bounds = array<i64: 1, 48>}, {pipeline_mode = #tpu.pipeline_mode<synchronous>, transform_indices = @transform_2, window_bounds = array<i64: 1, 48>}, {pipeline_mode = #tpu.pipeline_mode<synchronous>, transform_indices = @transform_3, window_bounds = array<i64: 48, 144>}, {pipeline_mode = #tpu.pipeline_mode<synchronous>, transform_indices = @transform_4, window_bounds = array<i64: 1, 144>}, {pipeline_mode = #tpu.pipeline_mode<synchronous>, transform_indices = @transform_5, window_bounds = array<i64: 48, 48>}, {pipeline_mode = #tpu.pipeline_mode<synchronous>, transform_indices = @transform_6, window_bounds = array<i64: 1, 48>}, {transform_indices = @transform_7, window_bounds = array<i64: 1, 1, 8>}, {transform_indices = @transform_8, window_bounds = array<i64: 1, 8, 48>}]} {
    %c0 = arith.constant 0 : index
    %c0_0 = arith.constant 0 : index
    %c0_1 = arith.constant 0 : index
    %0 = vector.load %arg1[%c0, %c0_0, %c0_1] : memref<1x8x48xbf16, #tpu.memory_space<vmem>>, vector<1x8x48xbf16>
    %1 = vector.shape_cast %0 : vector<1x8x48xbf16> to vector<8x48xbf16>
    %2 = arith.extf %1 : vector<8x48xbf16> to vector<8x48xf32>
    %c0_2 = arith.constant 0 : index
    %c0_3 = arith.constant 0 : index
    %3 = vector.load %arg2[%c0_2, %c0_3] : memref<1x48xf32, #tpu.memory_space<vmem>>, vector<1x48xf32>
    %c0_4 = arith.constant 0 : index
    %c0_5 = arith.constant 0 : index
    %4 = vector.load %arg3[%c0_4, %c0_5] : memref<1x48xf32, #tpu.memory_space<vmem>>, vector<1x48xf32>
    %cst = arith.constant dense<0.000000e+00> : vector<8xf32>
    %5 = vector.multi_reduction <add>, %2, %cst [1] : vector<8x48xf32> to vector<8xf32>
    %6 = vector.shape_cast %5 : vector<8xf32> to vector<8x1xf32>
    %cst_6 = arith.constant 4.800000e+01 : f32
    %7 = vector.broadcast %cst_6 : f32 to vector<8x1xf32>
    %8 = arith.divf %6, %7 : vector<8x1xf32>
    %9 = vector.broadcast %8 : vector<8x1xf32> to vector<8x48xf32>
    %10 = arith.subf %2, %9 : vector<8x48xf32>
    %11 = arith.mulf %10, %10 : vector<8x48xf32>
    %cst_7 = arith.constant dense<0.000000e+00> : vector<8xf32>
    %12 = vector.multi_reduction <add>, %11, %cst_7 [1] : vector<8x48xf32> to vector<8xf32>
    %13 = vector.shape_cast %12 : vector<8xf32> to vector<8x1xf32>
    %cst_8 = arith.constant 4.800000e+01 : f32
    %14 = vector.broadcast %cst_8 : f32 to vector<8x1xf32>
    %15 = arith.divf %13, %14 : vector<8x1xf32>
    %16 = vector.broadcast %8 : vector<8x1xf32> to vector<8x48xf32>
    %17 = arith.subf %2, %16 : vector<8x48xf32>
    %cst_9 = arith.constant 9.99999974E-6 : f32
    %18 = vector.broadcast %cst_9 : f32 to vector<8x1xf32>
    %19 = arith.addf %15, %18 : vector<8x1xf32>
    %20 = math.rsqrt %19 : vector<8x1xf32>
    %21 = vector.broadcast %20 : vector<8x1xf32> to vector<8x48xf32>
    %22 = arith.mulf %17, %21 : vector<8x48xf32>
    %23 = vector.broadcast %3 : vector<1x48xf32> to vector<8x48xf32>
    %24 = arith.mulf %22, %23 : vector<8x48xf32>
    %25 = vector.broadcast %4 : vector<1x48xf32> to vector<8x48xf32>
    %26 = arith.addf %24, %25 : vector<8x48xf32>
    %27 = arith.truncf %26 : vector<8x48xf32> to vector<8x48xbf16>
    %c0_10 = arith.constant 0 : index
    %c0_11 = arith.constant 0 : index
    %28 = vector.load %arg4[%c0_10, %c0_11] : memref<48x144xbf16, #tpu.memory_space<vmem>>, vector<48x144xbf16>
    %cst_12 = arith.constant dense<0.000000e+00> : vector<8x144xf32>
    %29 = tpu.matmul %27, %28, %cst_12 {dimension_numbers = #tpu.dot_dimension_numbers<[1], [0], [0], [1], [0, 0, 1, 1], [], []>} : vector<8x48xbf16>, vector<48x144xbf16>, vector<8x144xf32> -> vector<8x144xf32>
    %c0_13 = arith.constant 0 : index
    %c0_14 = arith.constant 0 : index
    %30 = vector.load %arg5[%c0_13, %c0_14] : memref<1x144xf32, #tpu.memory_space<vmem>>, vector<1x144xf32>
    %31 = vector.broadcast %30 : vector<1x144xf32> to vector<8x144xf32>
    %32 = arith.addf %29, %31 : vector<8x144xf32>
    %33 = vector.extract_strided_slice %32 {offsets = [0, 0], sizes = [8, 48], strides = [1, 1]} : vector<8x144xf32> to vector<8x48xf32>
    %34 = vector.extract_strided_slice %32 {offsets = [0, 48], sizes = [8, 48], strides = [1, 1]} : vector<8x144xf32> to vector<8x48xf32>
    %35 = vector.extract_strided_slice %32 {offsets = [0, 96], sizes = [8, 48], strides = [1, 1]} : vector<8x144xf32> to vector<8x48xf32>
    %c0_15 = arith.constant 0 : index
    %c0_16 = arith.constant 0 : index
    %c0_17 = arith.constant 0 : index
    %36 = vector.load %arg8[%c0_15, %c0_16, %c0_17] : memref<1x1x8xf32, #tpu.memory_space<vmem>>, vector<1x1x8xf32>
    %37 = vector.shape_cast %36 : vector<1x1x8xf32> to vector<1x8xf32>
    %38 = tpu.iota {dimensions = array<i32: 0>} : vector<8x8xi32>
    %39 = tpu.iota {dimensions = array<i32: 1>} : vector<8x8xi32>
    %40 = arith.cmpi sge, %38, %39 : vector<8x8xi32>
    %cst_18 = arith.constant 0.000000e+00 : f32
    %cst_19 = arith.constant -1.000000e+09 : f32
    %41 = vector.broadcast %cst_18 : f32 to vector<8x8xf32>
    %42 = vector.broadcast %cst_19 : f32 to vector<8x8xf32>
    %43 = arith.select %40, %41, %42 : vector<8x8xi1>, vector<8x8xf32>
    %44 = vector.broadcast %37 : vector<1x8xf32> to vector<8x8xf32>
    %45 = arith.addf %44, %43 : vector<8x8xf32>
    %46 = vector.extract_strided_slice %33 {offsets = [0, 0], sizes = [8, 12], strides = [1, 1]} : vector<8x48xf32> to vector<8x12xf32>
    %47 = arith.truncf %46 : vector<8x12xf32> to vector<8x12xbf16>
    %48 = vector.extract_strided_slice %34 {offsets = [0, 0], sizes = [8, 12], strides = [1, 1]} : vector<8x48xf32> to vector<8x12xf32>
    %49 = arith.truncf %48 : vector<8x12xf32> to vector<8x12xbf16>
    %50 = vector.extract_strided_slice %35 {offsets = [0, 0], sizes = [8, 12], strides = [1, 1]} : vector<8x48xf32> to vector<8x12xf32>
    %51 = arith.truncf %50 : vector<8x12xf32> to vector<8x12xbf16>
    %52 = tpu.transpose %49, [1, 0] : vector<8x12xbf16> -> vector<12x8xbf16>
    %cst_20 = arith.constant dense<0.000000e+00> : vector<8x8xf32>
    %53 = tpu.matmul %47, %52, %cst_20 {dimension_numbers = #tpu.dot_dimension_numbers<[1], [0], [0], [1], [0, 0, 1, 1], [], []>} : vector<8x12xbf16>, vector<12x8xbf16>, vector<8x8xf32> -> vector<8x8xf32>
    %cst_21 = arith.constant 0.288675129 : f32
    %54 = vector.broadcast %cst_21 : f32 to vector<8x8xf32>
    %55 = arith.mulf %53, %54 : vector<8x8xf32>
    %56 = arith.addf %55, %45 : vector<8x8xf32>
    %cst_22 = arith.constant dense<0xFF800000> : vector<8xf32>
    %57 = vector.multi_reduction <maximumf>, %56, %cst_22 [1] : vector<8x8xf32> to vector<8xf32>
    %58 = vector.shape_cast %57 : vector<8xf32> to vector<8x1xf32>
    %59 = vector.broadcast %58 : vector<8x1xf32> to vector<8x8xf32>
    %60 = arith.subf %56, %59 : vector<8x8xf32>
    %61 = math.exp %60 : vector<8x8xf32>
    %cst_23 = arith.constant dense<0.000000e+00> : vector<8xf32>
    %62 = vector.multi_reduction <add>, %61, %cst_23 [1] : vector<8x8xf32> to vector<8xf32>
    %63 = vector.shape_cast %62 : vector<8xf32> to vector<8x1xf32>
    %64 = tpu.reciprocal %63 {approx = true} : vector<8x1xf32> -> vector<8x1xf32>
    %65 = vector.broadcast %64 : vector<8x1xf32> to vector<8x8xf32>
    %66 = arith.mulf %61, %65 : vector<8x8xf32>
    %67 = arith.truncf %66 : vector<8x8xf32> to vector<8x8xbf16>
    %cst_24 = arith.constant dense<0.000000e+00> : vector<8x12xf32>
    %68 = tpu.matmul %67, %51, %cst_24 {dimension_numbers = #tpu.dot_dimension_numbers<[1], [0], [0], [1], [0, 0, 1, 1], [], []>} : vector<8x8xbf16>, vector<8x12xbf16>, vector<8x12xf32> -> vector<8x12xf32>
    %69 = vector.extract_strided_slice %33 {offsets = [0, 12], sizes = [8, 12], strides = [1, 1]} : vector<8x48xf32> to vector<8x12xf32>
    %70 = arith.truncf %69 : vector<8x12xf32> to vector<8x12xbf16>
    %71 = vector.extract_strided_slice %34 {offsets = [0, 12], sizes = [8, 12], strides = [1, 1]} : vector<8x48xf32> to vector<8x12xf32>
    %72 = arith.truncf %71 : vector<8x12xf32> to vector<8x12xbf16>
    %73 = vector.extract_strided_slice %35 {offsets = [0, 12], sizes = [8, 12], strides = [1, 1]} : vector<8x48xf32> to vector<8x12xf32>
    %74 = arith.truncf %73 : vector<8x12xf32> to vector<8x12xbf16>
    %75 = tpu.transpose %72, [1, 0] : vector<8x12xbf16> -> vector<12x8xbf16>
    %cst_25 = arith.constant dense<0.000000e+00> : vector<8x8xf32>
    %76 = tpu.matmul %70, %75, %cst_25 {dimension_numbers = #tpu.dot_dimension_numbers<[1], [0], [0], [1], [0, 0, 1, 1], [], []>} : vector<8x12xbf16>, vector<12x8xbf16>, vector<8x8xf32> -> vector<8x8xf32>
    %cst_26 = arith.constant 0.288675129 : f32
    %77 = vector.broadcast %cst_26 : f32 to vector<8x8xf32>
    %78 = arith.mulf %76, %77 : vector<8x8xf32>
    %79 = arith.addf %78, %45 : vector<8x8xf32>
    %cst_27 = arith.constant dense<0xFF800000> : vector<8xf32>
    %80 = vector.multi_reduction <maximumf>, %79, %cst_27 [1] : vector<8x8xf32> to vector<8xf32>
    %81 = vector.shape_cast %80 : vector<8xf32> to vector<8x1xf32>
    %82 = vector.broadcast %81 : vector<8x1xf32> to vector<8x8xf32>
    %83 = arith.subf %79, %82 : vector<8x8xf32>
    %84 = math.exp %83 : vector<8x8xf32>
    %cst_28 = arith.constant dense<0.000000e+00> : vector<8xf32>
    %85 = vector.multi_reduction <add>, %84, %cst_28 [1] : vector<8x8xf32> to vector<8xf32>
    %86 = vector.shape_cast %85 : vector<8xf32> to vector<8x1xf32>
    %87 = tpu.reciprocal %86 {approx = true} : vector<8x1xf32> -> vector<8x1xf32>
    %88 = vector.broadcast %87 : vector<8x1xf32> to vector<8x8xf32>
    %89 = arith.mulf %84, %88 : vector<8x8xf32>
    %90 = arith.truncf %89 : vector<8x8xf32> to vector<8x8xbf16>
    %cst_29 = arith.constant dense<0.000000e+00> : vector<8x12xf32>
    %91 = tpu.matmul %90, %74, %cst_29 {dimension_numbers = #tpu.dot_dimension_numbers<[1], [0], [0], [1], [0, 0, 1, 1], [], []>} : vector<8x8xbf16>, vector<8x12xbf16>, vector<8x12xf32> -> vector<8x12xf32>
    %92 = vector.extract_strided_slice %33 {offsets = [0, 24], sizes = [8, 12], strides = [1, 1]} : vector<8x48xf32> to vector<8x12xf32>
    %93 = arith.truncf %92 : vector<8x12xf32> to vector<8x12xbf16>
    %94 = vector.extract_strided_slice %34 {offsets = [0, 24], sizes = [8, 12], strides = [1, 1]} : vector<8x48xf32> to vector<8x12xf32>
    %95 = arith.truncf %94 : vector<8x12xf32> to vector<8x12xbf16>
    %96 = vector.extract_strided_slice %35 {offsets = [0, 24], sizes = [8, 12], strides = [1, 1]} : vector<8x48xf32> to vector<8x12xf32>
    %97 = arith.truncf %96 : vector<8x12xf32> to vector<8x12xbf16>
    %98 = tpu.transpose %95, [1, 0] : vector<8x12xbf16> -> vector<12x8xbf16>
    %cst_30 = arith.constant dense<0.000000e+00> : vector<8x8xf32>
    %99 = tpu.matmul %93, %98, %cst_30 {dimension_numbers = #tpu.dot_dimension_numbers<[1], [0], [0], [1], [0, 0, 1, 1], [], []>} : vector<8x12xbf16>, vector<12x8xbf16>, vector<8x8xf32> -> vector<8x8xf32>
    %cst_31 = arith.constant 0.288675129 : f32
    %100 = vector.broadcast %cst_31 : f32 to vector<8x8xf32>
    %101 = arith.mulf %99, %100 : vector<8x8xf32>
    %102 = arith.addf %101, %45 : vector<8x8xf32>
    %cst_32 = arith.constant dense<0xFF800000> : vector<8xf32>
    %103 = vector.multi_reduction <maximumf>, %102, %cst_32 [1] : vector<8x8xf32> to vector<8xf32>
    %104 = vector.shape_cast %103 : vector<8xf32> to vector<8x1xf32>
    %105 = vector.broadcast %104 : vector<8x1xf32> to vector<8x8xf32>
    %106 = arith.subf %102, %105 : vector<8x8xf32>
    %107 = math.exp %106 : vector<8x8xf32>
    %cst_33 = arith.constant dense<0.000000e+00> : vector<8xf32>
    %108 = vector.multi_reduction <add>, %107, %cst_33 [1] : vector<8x8xf32> to vector<8xf32>
    %109 = vector.shape_cast %108 : vector<8xf32> to vector<8x1xf32>
    %110 = tpu.reciprocal %109 {approx = true} : vector<8x1xf32> -> vector<8x1xf32>
    %111 = vector.broadcast %110 : vector<8x1xf32> to vector<8x8xf32>
    %112 = arith.mulf %107, %111 : vector<8x8xf32>
    %113 = arith.truncf %112 : vector<8x8xf32> to vector<8x8xbf16>
    %cst_34 = arith.constant dense<0.000000e+00> : vector<8x12xf32>
    %114 = tpu.matmul %113, %97, %cst_34 {dimension_numbers = #tpu.dot_dimension_numbers<[1], [0], [0], [1], [0, 0, 1, 1], [], []>} : vector<8x8xbf16>, vector<8x12xbf16>, vector<8x12xf32> -> vector<8x12xf32>
    %115 = vector.extract_strided_slice %33 {offsets = [0, 36], sizes = [8, 12], strides = [1, 1]} : vector<8x48xf32> to vector<8x12xf32>
    %116 = arith.truncf %115 : vector<8x12xf32> to vector<8x12xbf16>
    %117 = vector.extract_strided_slice %34 {offsets = [0, 36], sizes = [8, 12], strides = [1, 1]} : vector<8x48xf32> to vector<8x12xf32>
    %118 = arith.truncf %117 : vector<8x12xf32> to vector<8x12xbf16>
    %119 = vector.extract_strided_slice %35 {offsets = [0, 36], sizes = [8, 12], strides = [1, 1]} : vector<8x48xf32> to vector<8x12xf32>
    %120 = arith.truncf %119 : vector<8x12xf32> to vector<8x12xbf16>
    %121 = tpu.transpose %118, [1, 0] : vector<8x12xbf16> -> vector<12x8xbf16>
    %cst_35 = arith.constant dense<0.000000e+00> : vector<8x8xf32>
    %122 = tpu.matmul %116, %121, %cst_35 {dimension_numbers = #tpu.dot_dimension_numbers<[1], [0], [0], [1], [0, 0, 1, 1], [], []>} : vector<8x12xbf16>, vector<12x8xbf16>, vector<8x8xf32> -> vector<8x8xf32>
    %cst_36 = arith.constant 0.288675129 : f32
    %123 = vector.broadcast %cst_36 : f32 to vector<8x8xf32>
    %124 = arith.mulf %122, %123 : vector<8x8xf32>
    %125 = arith.addf %124, %45 : vector<8x8xf32>
    %cst_37 = arith.constant dense<0xFF800000> : vector<8xf32>
    %126 = vector.multi_reduction <maximumf>, %125, %cst_37 [1] : vector<8x8xf32> to vector<8xf32>
    %127 = vector.shape_cast %126 : vector<8xf32> to vector<8x1xf32>
    %128 = vector.broadcast %127 : vector<8x1xf32> to vector<8x8xf32>
    %129 = arith.subf %125, %128 : vector<8x8xf32>
    %130 = math.exp %129 : vector<8x8xf32>
    %cst_38 = arith.constant dense<0.000000e+00> : vector<8xf32>
    %131 = vector.multi_reduction <add>, %130, %cst_38 [1] : vector<8x8xf32> to vector<8xf32>
    %132 = vector.shape_cast %131 : vector<8xf32> to vector<8x1xf32>
    %133 = tpu.reciprocal %132 {approx = true} : vector<8x1xf32> -> vector<8x1xf32>
    %134 = vector.broadcast %133 : vector<8x1xf32> to vector<8x8xf32>
    %135 = arith.mulf %130, %134 : vector<8x8xf32>
    %136 = arith.truncf %135 : vector<8x8xf32> to vector<8x8xbf16>
    %cst_39 = arith.constant dense<0.000000e+00> : vector<8x12xf32>
    %137 = tpu.matmul %136, %120, %cst_39 {dimension_numbers = #tpu.dot_dimension_numbers<[1], [0], [0], [1], [0, 0, 1, 1], [], []>} : vector<8x8xbf16>, vector<8x12xbf16>, vector<8x12xf32> -> vector<8x12xf32>
    %138 = tpu.concatenate %68, %91, %114, %137 in 1 : vector<8x12xf32>, vector<8x12xf32>, vector<8x12xf32>, vector<8x12xf32> -> vector<8x48xf32>
    %139 = arith.truncf %138 : vector<8x48xf32> to vector<8x48xbf16>
    %c0_40 = arith.constant 0 : index
    %c0_41 = arith.constant 0 : index
    %140 = vector.load %arg6[%c0_40, %c0_41] : memref<48x48xbf16, #tpu.memory_space<vmem>>, vector<48x48xbf16>
    %cst_42 = arith.constant dense<0.000000e+00> : vector<8x48xf32>
    %141 = tpu.matmul %139, %140, %cst_42 {dimension_numbers = #tpu.dot_dimension_numbers<[1], [0], [0], [1], [0, 0, 1, 1], [], []>} : vector<8x48xbf16>, vector<48x48xbf16>, vector<8x48xf32> -> vector<8x48xf32>
    %c0_43 = arith.constant 0 : index
    %c0_44 = arith.constant 0 : index
    %142 = vector.load %arg7[%c0_43, %c0_44] : memref<1x48xf32, #tpu.memory_space<vmem>>, vector<1x48xf32>
    %143 = vector.broadcast %142 : vector<1x48xf32> to vector<8x48xf32>
    %144 = arith.addf %141, %143 : vector<8x48xf32>
    %145 = arith.addf %2, %144 : vector<8x48xf32>
    %146 = arith.truncf %145 : vector<8x48xf32> to vector<8x48xbf16>
    %c0_45 = arith.constant 0 : index
    %c0_46 = arith.constant 0 : index
    %c0_47 = arith.constant 0 : index
    %147 = vector.load %arg9[%c0_45, %c0_46, %c0_47] : memref<1x8x48xbf16, #tpu.memory_space<vmem>>, vector<1x8x48xbf16>
    %148 = vector.shape_cast %147 : vector<1x8x48xbf16> to vector<8x48xbf16>
    %149 = vector.shape_cast %146 : vector<8x48xbf16> to vector<1x8x48xbf16>
    tpu.vector_store %arg9[%c0_45, %c0_46, %c0_47], %149 {strides = array<i32>} : memref<1x8x48xbf16, #tpu.memory_space<vmem>>, vector<1x8x48xbf16>,
    return
  }
  func.func @transform_0(%arg0: i32) -> (i32, i32, i32) {
    %c0_i32 = arith.constant 0 : i32
    %c0_i32_0 = arith.constant 0 : i32
    %c0_i32_1 = arith.constant 0 : i32
    return %arg0, %c0_i32, %c0_i32_0 : i32, i32, i32
  }
  func.func @transform_1(%arg0: i32) -> (i32, i32) {
    %c0_i32 = arith.constant 0 : i32
    %c0_i32_0 = arith.constant 0 : i32
    %c0_i32_1 = arith.constant 0 : i32
    return %c0_i32, %c0_i32_0 : i32, i32
  }
  func.func @transform_2(%arg0: i32) -> (i32, i32) {
    %c0_i32 = arith.constant 0 : i32
    %c0_i32_0 = arith.constant 0 : i32
    %c0_i32_1 = arith.constant 0 : i32
    return %c0_i32, %c0_i32_0 : i32, i32
  }
  func.func @transform_3(%arg0: i32) -> (i32, i32) {
    %c0_i32 = arith.constant 0 : i32
    %c0_i32_0 = arith.constant 0 : i32
    %c0_i32_1 = arith.constant 0 : i32
    return %c0_i32, %c0_i32_0 : i32, i32
  }
  func.func @transform_4(%arg0: i32) -> (i32, i32) {
    %c0_i32 = arith.constant 0 : i32
    %c0_i32_0 = arith.constant 0 : i32
    %c0_i32_1 = arith.constant 0 : i32
    return %c0_i32, %c0_i32_0 : i32, i32
  }
  func.func @transform_5(%arg0: i32) -> (i32, i32) {
    %c0_i32 = arith.constant 0 : i32
    %c0_i32_0 = arith.constant 0 : i32
    %c0_i32_1 = arith.constant 0 : i32
    return %c0_i32, %c0_i32_0 : i32, i32
  }
  func.func @transform_6(%arg0: i32) -> (i32, i32) {
    %c0_i32 = arith.constant 0 : i32
    %c0_i32_0 = arith.constant 0 : i32
    %c0_i32_1 = arith.constant 0 : i32
    return %c0_i32, %c0_i32_0 : i32, i32
  }
  func.func @transform_7(%arg0: i32) -> (i32, i32, i32) {
    %c0_i32 = arith.constant 0 : i32
    %c0_i32_0 = arith.constant 0 : i32
    %c0_i32_1 = arith.constant 0 : i32
    return %arg0, %c0_i32, %c0_i32_0 : i32, i32, i32
  }
  func.func @transform_8(%arg0: i32) -> (i32, i32, i32) {
    %c0_i32 = arith.constant 0 : i32
    %c0_i32_0 = arith.constant 0 : i32
    %c0_i32_1 = arith.constant 0 : i32
    return %arg0, %c0_i32, %c0_i32_0 : i32, i32, i32
  }
}

module attributes {stable_mosaic.version = 11 : i64} {
  func.func @_ln_linear_kernel(%arg0: i32, %arg1: i32, %arg2: memref<16x48xbf16, #tpu.memory_space<vmem>>, %arg3: memref<1x48xf32, #tpu.memory_space<vmem>>, %arg4: memref<1x48xf32, #tpu.memory_space<vmem>>, %arg5: memref<48x128xbf16, #tpu.memory_space<vmem>>, %arg6: memref<1x128xf32, #tpu.memory_space<vmem>>, %arg7: memref<16x128xf32, #tpu.memory_space<vmem>>, %arg8: memref<16x48xbf16, #tpu.memory_space<vmem>>) attributes {dimension_semantics = [#tpu.dimension_semantics<parallel>, #tpu.dimension_semantics<arbitrary>], iteration_bounds = array<i64: 1, 1>, scalar_prefetch = 0 : i64, scratch_operands = 1 : i64, tpu.core_type = #tpu.core_type<tc>, window_params = [{transform_indices = @transform_0, window_bounds = array<i64: 16, 48>}, {pipeline_mode = #tpu.pipeline_mode<synchronous>, transform_indices = @transform_1, window_bounds = array<i64: 1, 48>}, {pipeline_mode = #tpu.pipeline_mode<synchronous>, transform_indices = @transform_2, window_bounds = array<i64: 1, 48>}, {transform_indices = @transform_3, window_bounds = array<i64: 48, 128>}, {transform_indices = @transform_4, window_bounds = array<i64: 1, 128>}, {transform_indices = @transform_5, window_bounds = array<i64: 16, 128>}]} {
    %c0_i32 = arith.constant 0 : i32
    %0 = arith.cmpi eq, %arg1, %c0_i32 : i32
    %1 = arith.extui %0 : i1 to i32
    %c0_i32_0 = arith.constant 0 : i32
    %2 = arith.cmpi ne, %1, %c0_i32_0 : i32
    scf.if %2 {
      %c0_8 = arith.constant 0 : index
      %c0_9 = arith.constant 0 : index
      %10 = vector.load %arg2[%c0_8, %c0_9] : memref<16x48xbf16, #tpu.memory_space<vmem>>, vector<16x48xbf16>
      %11 = arith.extf %10 : vector<16x48xbf16> to vector<16x48xf32>
      %c0_10 = arith.constant 0 : index
      %c0_11 = arith.constant 0 : index
      %12 = vector.load %arg3[%c0_10, %c0_11] : memref<1x48xf32, #tpu.memory_space<vmem>>, vector<1x48xf32>
      %c0_12 = arith.constant 0 : index
      %c0_13 = arith.constant 0 : index
      %13 = vector.load %arg4[%c0_12, %c0_13] : memref<1x48xf32, #tpu.memory_space<vmem>>, vector<1x48xf32>
      %cst_14 = arith.constant dense<0.000000e+00> : vector<16xf32>
      %14 = vector.multi_reduction <add>, %11, %cst_14 [1] : vector<16x48xf32> to vector<16xf32>
      %15 = vector.shape_cast %14 : vector<16xf32> to vector<16x1xf32>
      %cst_15 = arith.constant 4.800000e+01 : f32
      %16 = vector.broadcast %cst_15 : f32 to vector<16x1xf32>
      %17 = arith.divf %15, %16 : vector<16x1xf32>
      %18 = vector.broadcast %17 : vector<16x1xf32> to vector<16x48xf32>
      %19 = arith.subf %11, %18 : vector<16x48xf32>
      %20 = arith.mulf %19, %19 : vector<16x48xf32>
      %cst_16 = arith.constant dense<0.000000e+00> : vector<16xf32>
      %21 = vector.multi_reduction <add>, %20, %cst_16 [1] : vector<16x48xf32> to vector<16xf32>
      %22 = vector.shape_cast %21 : vector<16xf32> to vector<16x1xf32>
      %cst_17 = arith.constant 4.800000e+01 : f32
      %23 = vector.broadcast %cst_17 : f32 to vector<16x1xf32>
      %24 = arith.divf %22, %23 : vector<16x1xf32>
      %25 = vector.broadcast %17 : vector<16x1xf32> to vector<16x48xf32>
      %26 = arith.subf %11, %25 : vector<16x48xf32>
      %cst_18 = arith.constant 9.99999974E-6 : f32
      %27 = vector.broadcast %cst_18 : f32 to vector<16x1xf32>
      %28 = arith.addf %24, %27 : vector<16x1xf32>
      %29 = math.rsqrt %28 : vector<16x1xf32>
      %30 = vector.broadcast %29 : vector<16x1xf32> to vector<16x48xf32>
      %31 = arith.mulf %26, %30 : vector<16x48xf32>
      %32 = vector.broadcast %12 : vector<1x48xf32> to vector<16x48xf32>
      %33 = arith.mulf %31, %32 : vector<16x48xf32>
      %34 = vector.broadcast %13 : vector<1x48xf32> to vector<16x48xf32>
      %35 = arith.addf %33, %34 : vector<16x48xf32>
      %36 = arith.truncf %35 : vector<16x48xf32> to vector<16x48xbf16>
      %c0_19 = arith.constant 0 : index
      %c0_20 = arith.constant 0 : index
      %37 = vector.load %arg8[%c0_19, %c0_20] : memref<16x48xbf16, #tpu.memory_space<vmem>>, vector<16x48xbf16>
      tpu.vector_store %arg8[%c0_19, %c0_20], %36 {strides = array<i32>} : memref<16x48xbf16, #tpu.memory_space<vmem>>, vector<16x48xbf16>,
    } else {
    }
    %c0 = arith.constant 0 : index
    %c0_1 = arith.constant 0 : index
    %3 = vector.load %arg8[%c0, %c0_1] : memref<16x48xbf16, #tpu.memory_space<vmem>>, vector<16x48xbf16>
    %c0_2 = arith.constant 0 : index
    %c0_3 = arith.constant 0 : index
    %4 = vector.load %arg5[%c0_2, %c0_3] : memref<48x128xbf16, #tpu.memory_space<vmem>>, vector<48x128xbf16>
    %cst = arith.constant dense<0.000000e+00> : vector<16x128xf32>
    %5 = tpu.matmul %3, %4, %cst {dimension_numbers = #tpu.dot_dimension_numbers<[1], [0], [0], [1], [0, 0, 1, 1], [], []>} : vector<16x48xbf16>, vector<48x128xbf16>, vector<16x128xf32> -> vector<16x128xf32>
    %c0_4 = arith.constant 0 : index
    %c0_5 = arith.constant 0 : index
    %6 = vector.load %arg6[%c0_4, %c0_5] : memref<1x128xf32, #tpu.memory_space<vmem>>, vector<1x128xf32>
    %7 = vector.broadcast %6 : vector<1x128xf32> to vector<16x128xf32>
    %8 = arith.addf %5, %7 : vector<16x128xf32>
    %c0_6 = arith.constant 0 : index
    %c0_7 = arith.constant 0 : index
    %9 = vector.load %arg7[%c0_6, %c0_7] : memref<16x128xf32, #tpu.memory_space<vmem>>, vector<16x128xf32>
    tpu.vector_store %arg7[%c0_6, %c0_7], %8 {strides = array<i32>} : memref<16x128xf32, #tpu.memory_space<vmem>>, vector<16x128xf32>,
    return
  }
  func.func @transform_0(%arg0: i32, %arg1: i32) -> (i32, i32) {
    %c0_i32 = arith.constant 0 : i32
    %c0_i32_0 = arith.constant 0 : i32
    return %arg0, %c0_i32 : i32, i32
  }
  func.func @transform_1(%arg0: i32, %arg1: i32) -> (i32, i32) {
    %c0_i32 = arith.constant 0 : i32
    %c0_i32_0 = arith.constant 0 : i32
    %c0_i32_1 = arith.constant 0 : i32
    return %c0_i32, %c0_i32_0 : i32, i32
  }
  func.func @transform_2(%arg0: i32, %arg1: i32) -> (i32, i32) {
    %c0_i32 = arith.constant 0 : i32
    %c0_i32_0 = arith.constant 0 : i32
    %c0_i32_1 = arith.constant 0 : i32
    return %c0_i32, %c0_i32_0 : i32, i32
  }
  func.func @transform_3(%arg0: i32, %arg1: i32) -> (i32, i32) {
    %c0_i32 = arith.constant 0 : i32
    %c0_i32_0 = arith.constant 0 : i32
    return %c0_i32, %arg1 : i32, i32
  }
  func.func @transform_4(%arg0: i32, %arg1: i32) -> (i32, i32) {
    %c0_i32 = arith.constant 0 : i32
    %c0_i32_0 = arith.constant 0 : i32
    return %c0_i32, %arg1 : i32, i32
  }
  func.func @transform_5(%arg0: i32, %arg1: i32) -> (i32, i32) {
    %c0_i32 = arith.constant 0 : i32
    return %arg0, %arg1 : i32, i32
  }
}

module attributes {stable_mosaic.version = 11 : i64} {
  func.func @_ln_mlp_kernel(%arg0: i32, %arg1: memref<16x48xbf16, #tpu.memory_space<vmem>>, %arg2: memref<1x48xf32, #tpu.memory_space<vmem>>, %arg3: memref<1x48xf32, #tpu.memory_space<vmem>>, %arg4: memref<48x192xbf16, #tpu.memory_space<vmem>>, %arg5: memref<1x192xf32, #tpu.memory_space<vmem>>, %arg6: memref<192x48xbf16, #tpu.memory_space<vmem>>, %arg7: memref<1x48xf32, #tpu.memory_space<vmem>>, %arg8: memref<16x48xbf16, #tpu.memory_space<vmem>>) attributes {dimension_semantics = [#tpu.dimension_semantics<parallel>], iteration_bounds = array<i64: 1>, scalar_prefetch = 0 : i64, scratch_operands = 0 : i64, tpu.core_type = #tpu.core_type<tc>, window_params = [{transform_indices = @transform_0, window_bounds = array<i64: 16, 48>}, {pipeline_mode = #tpu.pipeline_mode<synchronous>, transform_indices = @transform_1, window_bounds = array<i64: 1, 48>}, {pipeline_mode = #tpu.pipeline_mode<synchronous>, transform_indices = @transform_2, window_bounds = array<i64: 1, 48>}, {pipeline_mode = #tpu.pipeline_mode<synchronous>, transform_indices = @transform_3, window_bounds = array<i64: 48, 192>}, {pipeline_mode = #tpu.pipeline_mode<synchronous>, transform_indices = @transform_4, window_bounds = array<i64: 1, 192>}, {pipeline_mode = #tpu.pipeline_mode<synchronous>, transform_indices = @transform_5, window_bounds = array<i64: 192, 48>}, {pipeline_mode = #tpu.pipeline_mode<synchronous>, transform_indices = @transform_6, window_bounds = array<i64: 1, 48>}, {transform_indices = @transform_7, window_bounds = array<i64: 16, 48>}]} {
    %c0 = arith.constant 0 : index
    %c0_0 = arith.constant 0 : index
    %0 = vector.load %arg1[%c0, %c0_0] : memref<16x48xbf16, #tpu.memory_space<vmem>>, vector<16x48xbf16>
    %1 = arith.extf %0 : vector<16x48xbf16> to vector<16x48xf32>
    %c0_1 = arith.constant 0 : index
    %c0_2 = arith.constant 0 : index
    %2 = vector.load %arg2[%c0_1, %c0_2] : memref<1x48xf32, #tpu.memory_space<vmem>>, vector<1x48xf32>
    %c0_3 = arith.constant 0 : index
    %c0_4 = arith.constant 0 : index
    %3 = vector.load %arg3[%c0_3, %c0_4] : memref<1x48xf32, #tpu.memory_space<vmem>>, vector<1x48xf32>
    %cst = arith.constant dense<0.000000e+00> : vector<16xf32>
    %4 = vector.multi_reduction <add>, %1, %cst [1] : vector<16x48xf32> to vector<16xf32>
    %5 = vector.shape_cast %4 : vector<16xf32> to vector<16x1xf32>
    %cst_5 = arith.constant 4.800000e+01 : f32
    %6 = vector.broadcast %cst_5 : f32 to vector<16x1xf32>
    %7 = arith.divf %5, %6 : vector<16x1xf32>
    %8 = vector.broadcast %7 : vector<16x1xf32> to vector<16x48xf32>
    %9 = arith.subf %1, %8 : vector<16x48xf32>
    %10 = arith.mulf %9, %9 : vector<16x48xf32>
    %cst_6 = arith.constant dense<0.000000e+00> : vector<16xf32>
    %11 = vector.multi_reduction <add>, %10, %cst_6 [1] : vector<16x48xf32> to vector<16xf32>
    %12 = vector.shape_cast %11 : vector<16xf32> to vector<16x1xf32>
    %cst_7 = arith.constant 4.800000e+01 : f32
    %13 = vector.broadcast %cst_7 : f32 to vector<16x1xf32>
    %14 = arith.divf %12, %13 : vector<16x1xf32>
    %15 = vector.broadcast %7 : vector<16x1xf32> to vector<16x48xf32>
    %16 = arith.subf %1, %15 : vector<16x48xf32>
    %cst_8 = arith.constant 9.99999974E-6 : f32
    %17 = vector.broadcast %cst_8 : f32 to vector<16x1xf32>
    %18 = arith.addf %14, %17 : vector<16x1xf32>
    %19 = math.rsqrt %18 : vector<16x1xf32>
    %20 = vector.broadcast %19 : vector<16x1xf32> to vector<16x48xf32>
    %21 = arith.mulf %16, %20 : vector<16x48xf32>
    %22 = vector.broadcast %2 : vector<1x48xf32> to vector<16x48xf32>
    %23 = arith.mulf %21, %22 : vector<16x48xf32>
    %24 = vector.broadcast %3 : vector<1x48xf32> to vector<16x48xf32>
    %25 = arith.addf %23, %24 : vector<16x48xf32>
    %26 = arith.truncf %25 : vector<16x48xf32> to vector<16x48xbf16>
    %c0_9 = arith.constant 0 : index
    %c0_10 = arith.constant 0 : index
    %27 = vector.load %arg4[%c0_9, %c0_10] : memref<48x192xbf16, #tpu.memory_space<vmem>>, vector<48x192xbf16>
    %cst_11 = arith.constant dense<0.000000e+00> : vector<16x192xf32>
    %28 = tpu.matmul %26, %27, %cst_11 {dimension_numbers = #tpu.dot_dimension_numbers<[1], [0], [0], [1], [0, 0, 1, 1], [], []>} : vector<16x48xbf16>, vector<48x192xbf16>, vector<16x192xf32> -> vector<16x192xf32>
    %c0_12 = arith.constant 0 : index
    %c0_13 = arith.constant 0 : index
    %29 = vector.load %arg5[%c0_12, %c0_13] : memref<1x192xf32, #tpu.memory_space<vmem>>, vector<1x192xf32>
    %30 = vector.broadcast %29 : vector<1x192xf32> to vector<16x192xf32>
    %31 = arith.addf %28, %30 : vector<16x192xf32>
    %32 = arith.mulf %31, %31 : vector<16x192xf32>
    %33 = arith.mulf %31, %32 : vector<16x192xf32>
    %cst_14 = arith.constant 4.471500e-02 : f32
    %34 = vector.broadcast %cst_14 : f32 to vector<16x192xf32>
    %35 = arith.mulf %34, %33 : vector<16x192xf32>
    %36 = arith.addf %31, %35 : vector<16x192xf32>
    %cst_15 = arith.constant 0.797884583 : f32
    %37 = vector.broadcast %cst_15 : f32 to vector<16x192xf32>
    %38 = arith.mulf %37, %36 : vector<16x192xf32>
    %39 = math.tanh %38 : vector<16x192xf32>
    %cst_16 = arith.constant 1.000000e+00 : f32
    %40 = vector.broadcast %cst_16 : f32 to vector<16x192xf32>
    %41 = arith.addf %40, %39 : vector<16x192xf32>
    %cst_17 = arith.constant 5.000000e-01 : f32
    %42 = vector.broadcast %cst_17 : f32 to vector<16x192xf32>
    %43 = arith.mulf %42, %41 : vector<16x192xf32>
    %44 = arith.mulf %31, %43 : vector<16x192xf32>
    %45 = arith.truncf %44 : vector<16x192xf32> to vector<16x192xbf16>
    %c0_18 = arith.constant 0 : index
    %c0_19 = arith.constant 0 : index
    %46 = vector.load %arg6[%c0_18, %c0_19] : memref<192x48xbf16, #tpu.memory_space<vmem>>, vector<192x48xbf16>
    %cst_20 = arith.constant dense<0.000000e+00> : vector<16x48xf32>
    %47 = tpu.matmul %45, %46, %cst_20 {dimension_numbers = #tpu.dot_dimension_numbers<[1], [0], [0], [1], [0, 0, 1, 1], [], []>} : vector<16x192xbf16>, vector<192x48xbf16>, vector<16x48xf32> -> vector<16x48xf32>
    %c0_21 = arith.constant 0 : index
    %c0_22 = arith.constant 0 : index
    %48 = vector.load %arg7[%c0_21, %c0_22] : memref<1x48xf32, #tpu.memory_space<vmem>>, vector<1x48xf32>
    %49 = vector.broadcast %48 : vector<1x48xf32> to vector<16x48xf32>
    %50 = arith.addf %47, %49 : vector<16x48xf32>
    %51 = arith.addf %1, %50 : vector<16x48xf32>
    %52 = arith.truncf %51 : vector<16x48xf32> to vector<16x48xbf16>
    %c0_23 = arith.constant 0 : index
    %c0_24 = arith.constant 0 : index
    %53 = vector.load %arg8[%c0_23, %c0_24] : memref<16x48xbf16, #tpu.memory_space<vmem>>, vector<16x48xbf16>
    tpu.vector_store %arg8[%c0_23, %c0_24], %52 {strides = array<i32>} : memref<16x48xbf16, #tpu.memory_space<vmem>>, vector<16x48xbf16>,
    return
  }
  func.func @transform_0(%arg0: i32) -> (i32, i32) {
    %c0_i32 = arith.constant 0 : i32
    %c0_i32_0 = arith.constant 0 : i32
    return %arg0, %c0_i32 : i32, i32
  }
  func.func @transform_1(%arg0: i32) -> (i32, i32) {
    %c0_i32 = arith.constant 0 : i32
    %c0_i32_0 = arith.constant 0 : i32
    %c0_i32_1 = arith.constant 0 : i32
    return %c0_i32, %c0_i32_0 : i32, i32
  }
  func.func @transform_2(%arg0: i32) -> (i32, i32) {
    %c0_i32 = arith.constant 0 : i32
    %c0_i32_0 = arith.constant 0 : i32
    %c0_i32_1 = arith.constant 0 : i32
    return %c0_i32, %c0_i32_0 : i32, i32
  }
  func.func @transform_3(%arg0: i32) -> (i32, i32) {
    %c0_i32 = arith.constant 0 : i32
    %c0_i32_0 = arith.constant 0 : i32
    %c0_i32_1 = arith.constant 0 : i32
    return %c0_i32, %c0_i32_0 : i32, i32
  }
  func.func @transform_4(%arg0: i32) -> (i32, i32) {
    %c0_i32 = arith.constant 0 : i32
    %c0_i32_0 = arith.constant 0 : i32
    %c0_i32_1 = arith.constant 0 : i32
    return %c0_i32, %c0_i32_0 : i32, i32
  }
  func.func @transform_5(%arg0: i32) -> (i32, i32) {
    %c0_i32 = arith.constant 0 : i32
    %c0_i32_0 = arith.constant 0 : i32
    %c0_i32_1 = arith.constant 0 : i32
    return %c0_i32, %c0_i32_0 : i32, i32
  }
  func.func @transform_6(%arg0: i32) -> (i32, i32) {
    %c0_i32 = arith.constant 0 : i32
    %c0_i32_0 = arith.constant 0 : i32
    %c0_i32_1 = arith.constant 0 : i32
    return %c0_i32, %c0_i32_0 : i32, i32
  }
  func.func @transform_7(%arg0: i32) -> (i32, i32) {
    %c0_i32 = arith.constant 0 : i32
    %c0_i32_0 = arith.constant 0 : i32
    return %arg0, %c0_i32 : i32, i32
  }
}

</mosaic_0001>

<llo_original>
// kernel: tpu_custom_call.1
$region0: #{tpu_custom_call.1}
  #allocation0 [shape = 'u32[]', space=smem, size = 0x4, offset = 0x4, fixed_abs, tag = 'smem constant byte address 0x4 - core index']
  #allocation1 [shape = 'u32[144,128]{1,0:T(1,128)}', space=vmem, size = 0x12000, scoped, tag = 'internal scratch']
  %s0 = inlined_call_operand.hbm [shape: f32[8,128], index: 0, kind: input, shape index: {}]
  %s1 = inlined_call_operand.hbm [shape: f32[8,128], index: 1, kind: output, shape index: {}]
  %s2 = sld [smem:[#allocation0]]
  $region18: #{tpu_custom_call.1} parent=0
    _
  %s4 = ssub.s32 1, %s2
  %s5 = scalar_select 0, %s4, %s2
  $region1: #{tpu_custom_call.1} parent=0
    #allocation2 [shape = 'u8[4096]{0}', space=vmem, size = 0x1000, scoped, tag = 'input window, operand 0, single buffered']
    #allocation3 [shape = 's32[1]{0}', space=sflag, size = 0x4, scoped, tag = 'scoped memory for tpu_custom_call.1']
    #allocation4 [shape = 's32[1]{0}', space=sflag, size = 0x4, scoped, tag = 'scoped memory for tpu_custom_call.1']
    #allocation5 [shape = 'u8[4096]{0}', space=vmem, size = 0x1000, scoped, tag = 'output window, operand 0, single buffered']
    %6 = vsyncpa [#allocation3], 0
    %7 = vsyncpa [#allocation4], 0
    // Predicated region
    $region2: #{tpu_custom_call.1} parent=1 // pred_check
      _
    $region3: #{tpu_custom_call.1} parent=1 // pred_check_branch
      %9 = sbr.rel (0) target = $region5
    $region4: #{tpu_custom_call.1} parent=1 // pred_region
      %s11 = ssub.s32 128, 128
      %12 = vsyncadd [#allocation3], %s11
      %s14 = sshll.u32 [#allocation2], 4
      %s15 = int_to_ptr.vmem [resolvable:$true] %s14
      %17 = dma.hbm_to_vmem [thread:$0]  %s0, 128, %s15, [#allocation3]
    $region5: #{tpu_custom_call.1} parent=1 // pred_fallthru
      _
    // Predicated region
    $region6: #{tpu_custom_call.1} parent=1 // pred_check
      _
    $region7: #{tpu_custom_call.1} parent=1 // pred_check_branch
      %19 = sbr.rel (0) target = $region9
    $region8: #{tpu_custom_call.1} parent=1 // pred_region
      %20 = dma.done [#allocation3], 128
    $region9: #{tpu_custom_call.1} parent=1 // pred_fallthru
      _
    %v21 = vld [vmem:[#allocation2] sm:$0xff]
    %22 = vst [vmem:[#allocation5] sm:$0xff] %v21
    // Predicated region
    $region10: #{tpu_custom_call.1} parent=1 // pred_check
      _
    $region11: #{tpu_custom_call.1} parent=1 // pred_check_branch
      %24 = sbr.rel (0) target = $region13
    $region12: #{tpu_custom_call.1} parent=1 // pred_region
      %s26 = ssub.s32 128, 128
      %27 = vsyncadd [#allocation4], %s26
      %s29 = sshll.u32 [#allocation5], 4
      %s30 = int_to_ptr.vmem [resolvable:$true] %s29
      %32 = dma.vmem_to_hbm [thread:$0]  %s30, 128, %s1, [#allocation4]
    $region13: #{tpu_custom_call.1} parent=1 // pred_fallthru
      _
    // Predicated region
    $region14: #{tpu_custom_call.1} parent=1 // pred_check
      _
    $region15: #{tpu_custom_call.1} parent=1 // pred_check_branch
      %34 = sbr.rel (0) target = $region17
    $region16: #{tpu_custom_call.1} parent=1 // pred_region
      %35 = dma.done [#allocation4], 128
    $region17: #{tpu_custom_call.1} parent=1 // pred_fallthru
      _
    %36 = vsyncpa [#allocation3], 1
    %37 = vsyncpa [#allocation4], 1

// kernel: _lambda_.13
$region0: #{_lambda_.13}
  #allocation0 [shape = 'u32[]', space=smem, size = 0x4, offset = 0x4, fixed_abs, tag = 'smem constant byte address 0x4 - core index']
  #allocation1 [shape = 'u32[144,128]{1,0:T(1,128)}', space=vmem, size = 0x12000, scoped, tag = 'internal scratch']
  #allocation2 [shape = 'f32[32,128]{1,0:T(8,128)}', space=vmem, size = 0x4000, scoped, tag = 'scratch operand']
  %s0 = inlined_call_operand.hbm [shape: bf16[32,128], index: 0, kind: input, shape index: {}]
  %s1 = inlined_call_operand.hbm [shape: bf16[128,128], index: 1, kind: input, shape index: {}]
  %s2 = inlined_call_operand.hbm [shape: f32[1,128], index: 2, kind: input, shape index: {}]
  %s3 = inlined_call_operand.hbm [shape: f32[32,128], index: 3, kind: output, shape index: {}]
  %s4 = sld [smem:[#allocation0]]
  $region42: #{_lambda_.13} parent=0
    _
  %s6 = ssub.s32 1, %s4
  %s7 = scalar_select 0, %s6, %s4
  $region1: #{_lambda_.13} parent=0
    #allocation3 [shape = 'u8[8192]{0}', space=vmem, size = 0x2000, scoped, tag = 'input window, operand 0, single buffered']
    #allocation4 [shape = 's32[1]{0}', space=sflag, size = 0x4, scoped, tag = 'scoped memory for _lambda_.13']
    #allocation5 [shape = 's32[1]{0}', space=sflag, size = 0x4, scoped, tag = 'scoped memory for _lambda_.13']
    #allocation6 [shape = 'u8[32768]{0}', space=vmem, size = 0x8000, scoped, tag = 'input window, operand 1, single buffered']
    #allocation7 [shape = 's32[1]{0}', space=sflag, size = 0x4, scoped, tag = 'scoped memory for _lambda_.13']
    #allocation8 [shape = 'u8[512]{0}', space=vmem, size = 0x400, scoped, tag = 'input window, operand 2, single buffered']
    #allocation9 [shape = 'u8[16384]{0}', space=vmem, size = 0x4000, scoped, tag = 'output window, operand 0, single buffered']
    %8 = vsyncpa [#allocation4], 0
    %9 = vsyncpa [#allocation7], 0
    %10 = vsyncpa [#allocation5], 0
    // Predicated region
    $region2: #{_lambda_.13} parent=1 // pred_check
      _
    $region3: #{_lambda_.13} parent=1 // pred_check_branch
      %12 = sbr.rel (0) target = $region5
    $region4: #{_lambda_.13} parent=1 // pred_region
      %s14 = ssub.s32 256, 256
      %15 = vsyncadd [#allocation4], %s14
      %s16 = sshll.u32 [#allocation3], 4
      %s17 = int_to_ptr.vmem [resolvable:$true] %s16
      %22 = dma.hbm_to_vmem [thread:$0]  %s0, 256, %s17, [#allocation4], 64, 64, 4
    $region5: #{_lambda_.13} parent=1 // pred_fallthru
      _
    // Predicated region
    $region6: #{_lambda_.13} parent=1 // pred_check
      _
    $region7: #{_lambda_.13} parent=1 // pred_check_branch
      %24 = sbr.rel (0) target = $region9
    $region8: #{_lambda_.13} parent=1 // pred_region
      %s26 = ssub.s32 1024, 1024
      %27 = vsyncadd [#allocation7], %s26
      %s28 = sshll.u32 [#allocation6], 4
      %s29 = int_to_ptr.vmem [resolvable:$true] %s28
      %34 = dma.hbm_to_vmem [thread:$0]  %s1, 1024, %s29, [#allocation7], 64, 64, 4
    $region9: #{_lambda_.13} parent=1 // pred_fallthru
      _
    // Predicated region
    $region10: #{_lambda_.13} parent=1 // pred_check
      _
    $region11: #{_lambda_.13} parent=1 // pred_check_branch
      %36 = sbr.rel (0) target = $region13
    $region12: #{_lambda_.13} parent=1 // pred_region
      %s38 = ssub.s32 16, 16
      %39 = vsyncadd [#allocation7], %s38
      %s41 = sshll.u32 [#allocation8], 4
      %s42 = int_to_ptr.vmem [resolvable:$true] %s41
      %44 = dma.hbm_to_vmem [thread:$0]  %s2, 16, %s42, [#allocation7]
    $region13: #{_lambda_.13} parent=1 // pred_fallthru
      _
    // Predicated region
    $region14: #{_lambda_.13} parent=1 // pred_check
      _
    $region15: #{_lambda_.13} parent=1 // pred_check_branch
      %46 = sbr.rel (0) target = $region17
    $region16: #{_lambda_.13} parent=1 // pred_region
      %47 = dma.done [#allocation4], 256
    $region17: #{_lambda_.13} parent=1 // pred_fallthru
      _
    // Predicated region
    $region18: #{_lambda_.13} parent=1 // pred_check
      _
    $region19: #{_lambda_.13} parent=1 // pred_check_branch
      %49 = sbr.rel (0) target = $region21
    $region20: #{_lambda_.13} parent=1 // pred_region
      %50 = dma.done [#allocation7], 1024
    $region21: #{_lambda_.13} parent=1 // pred_fallthru
      _
    // Predicated region
    $region22: #{_lambda_.13} parent=1 // pred_check
      _
    $region23: #{_lambda_.13} parent=1 // pred_check_branch
      %52 = sbr.rel (0) target = $region25
    $region24: #{_lambda_.13} parent=1 // pred_region
      %53 = dma.done [#allocation7], 16
    $region25: #{_lambda_.13} parent=1 // pred_fallthru
      _
    %p55 = scmp.eq.s32.totalorder 0, 0
    // Predicated region
    $region26: #{_lambda_.13} parent=1 // pred_check
      %p56 = pneg %p55
    $region27: #{_lambda_.13} parent=1 // pred_check_branch
      %58 = sbr.rel (%p56) target = $region29
    $region28: #{_lambda_.13} parent=1 // pred_region
      %59 = vst [vmem:[#allocation2] sm:$0xff] 0.0
      %60 = vst [vmem:[#allocation2 + $0x8] sm:$0xff] 0.0
      %61 = vst [vmem:[#allocation2 + $0x10] sm:$0xff] 0.0
      %62 = vst [vmem:[#allocation2 + $0x18] sm:$0xff] 0.0
    $region29: #{_lambda_.13} parent=1 // pred_fallthru
      _
    %v63 = vld [vmem:[#allocation2] sm:$0xff]
    %v64 = vld [vmem:[#allocation2 + $0x8] sm:$0xff]
    %v65 = vld [vmem:[#allocation2 + $0x10] sm:$0xff]
    %v66 = vld [vmem:[#allocation2 + $0x18] sm:$0xff]
    %v67 = vld [vmem:[#allocation3] sm:$0xf]
    %v68 = vld [vmem:[#allocation3 + $0x4] sm:$0xf]
    %v69 = vld [vmem:[#allocation3 + $0x8] sm:$0xf]
    %v70 = vld [vmem:[#allocation3 + $0xc] sm:$0xf]
    %v71 = vld [vmem:[#allocation6] sm:$0xf]
    %v72 = vld [vmem:[#allocation6 + $0x4] sm:$0xf]
    %v73 = vld [vmem:[#allocation6 + $0x8] sm:$0xf]
    %v74 = vld [vmem:[#allocation6 + $0xc] sm:$0xf]
    %v75 = vld [vmem:[#allocation6 + $0x10] sm:$0xf]
    %v76 = vld [vmem:[#allocation6 + $0x14] sm:$0xf]
    %v77 = vld [vmem:[#allocation6 + $0x18] sm:$0xf]
    %v78 = vld [vmem:[#allocation6 + $0x1c] sm:$0xf]
    %v79 = vld [vmem:[#allocation6 + $0x20] sm:$0xf]
    %v80 = vld [vmem:[#allocation6 + $0x24] sm:$0xf]
    %v81 = vld [vmem:[#allocation6 + $0x28] sm:$0xf]
    %v82 = vld [vmem:[#allocation6 + $0x2c] sm:$0xf]
    %v83 = vld [vmem:[#allocation6 + $0x30] sm:$0xf]
    %v84 = vld [vmem:[#allocation6 + $0x34] sm:$0xf]
    %v85 = vld [vmem:[#allocation6 + $0x38] sm:$0xf]
    %v86 = vld [vmem:[#allocation6 + $0x3c] sm:$0xf]
    %v91 = vunpack.c.l.b16 %v67
    %v92 = vunpack.c.l.b16 %v68
    %v93 = vunpack.c.l.b16 %v69
    %v94 = vunpack.c.l.b16 %v70
    %v95 = vpack.c.b16 %v92, %v91
    %v96 = vpack.c.b16 %v94, %v93
    %v115 = vunpack.c.l.b16 %v71
    %v116 = vunpack.c.l.b16 %v72
    %v117 = vunpack.c.l.b16 %v73
    %v118 = vunpack.c.l.b16 %v74
    %v119 = vunpack.c.l.b16 %v75
    %v120 = vunpack.c.l.b16 %v76
    %v121 = vunpack.c.l.b16 %v77
    %v122 = vunpack.c.l.b16 %v78
    %v123 = vunpack.c.l.b16 %v79
    %v124 = vunpack.c.l.b16 %v80
    %v125 = vunpack.c.l.b16 %v81
    %v126 = vunpack.c.l.b16 %v82
    %v127 = vunpack.c.l.b16 %v83
    %v128 = vunpack.c.l.b16 %v84
    %v129 = vunpack.c.l.b16 %v85
    %v130 = vunpack.c.l.b16 %v86
    %v131 = vpack.c.b16 %v116, %v115
    %v132 = vpack.c.b16 %v118, %v117
    %v133 = vpack.c.b16 %v120, %v119
    %v134 = vpack.c.b16 %v122, %v121
    %v135 = vpack.c.b16 %v124, %v123
    %v136 = vpack.c.b16 %v126, %v125
    %v137 = vpack.c.b16 %v128, %v127
    %v138 = vpack.c.b16 %v130, %v129
    %147 = vmatprep.subr.bf16.mxu0 0
    %148 = vmatpush1.bf16.msra.mxu0 %v131
    %149 = vmatprep.subr.bf16.mxu0 0
    %150 = vmatpush1.bf16.msra.mxu0 %v132
    %151 = vmatprep.subr.bf16.mxu0 0
    %152 = vmatpush1.bf16.msra.mxu0 %v133
    %153 = vmatprep.subr.bf16.mxu0 0
    %154 = vmatpush1.bf16.msra.mxu0 %v134
    %155 = vmatprep.subr.bf16.mxu0 0
    %156 = vmatpush1.bf16.msra.mxu0 %v135
    %157 = vmatprep.subr.bf16.mxu0 0
    %158 = vmatpush1.bf16.msra.mxu0 %v136
    %159 = vmatprep.subr.bf16.mxu0 0
    %160 = vmatpush1.bf16.msra.mxu0 %v137
    %161 = vmatprep.subr.bf16.mxu0 0
    %162 = vmatpush1.bf16.msra.mxu0 %v138
    %163 = vmatprep.subr.bf16.mxu0 0
    %164 = vmatpush1.bf16.msra.mxu0 0
    %165 = vmatprep.subr.bf16.mxu0 0
    %166 = vmatpush1.bf16.msra.mxu0 0
    %167 = vmatprep.subr.bf16.mxu0 0
    %168 = vmatpush1.bf16.msra.mxu0 0
    %169 = vmatprep.subr.bf16.mxu0 0
    %170 = vmatpush1.bf16.msra.mxu0 0
    %171 = vmatprep.subr.bf16.mxu0 0
    %172 = vmatpush1.bf16.msra.mxu0 0
    %173 = vmatprep.subr.bf16.mxu0 0
    %174 = vmatpush1.bf16.msra.mxu0 0
    %175 = vmatprep.subr.bf16.mxu0 0
    %176 = vmatpush1.bf16.msra.mxu0 0
    %177 = vmatprep.subr.bf16.mxu0 0
    %178 = vmatpush1.bf16.msra.mxu0 0
    %179 = vmatprep.mubr.bf16.mxu0 0
    %180 = vmatmul.mubr.bf16.gmra.mrb[0].mxu0 %v95
    %v181 = vpop.f32.mrb[0].mxu0
    %v182 = vadd.f32 0.0, %v181
    %v183 = vpop.f32.mrb[0].mxu0
    %v184 = vpop.f32.mrb[0].mxu0
    %v185 = vadd.f32 0.0, %v184
    %v186 = vpop.f32.mrb[0].mxu0
    %187 = vmatprep.mubr.bf16.mxu0 0
    %188 = vmatmul.mubr.bf16.gmra.mrb[0].mxu0 %v96
    %v189 = vpop.f32.mrb[0].mxu0
    %v190 = vadd.f32 0.0, %v189
    %v191 = vpop.f32.mrb[0].mxu0
    %v192 = vpop.f32.mrb[0].mxu0
    %v193 = vadd.f32 0.0, %v192
    %v194 = vpop.f32.mrb[0].mxu0
    %195 = vdwg.mxu0
    %v196 = vadd.f32 %v63, %v182
    %v197 = vadd.f32 %v64, %v185
    %v198 = vadd.f32 %v65, %v190
    %v199 = vadd.f32 %v66, %v193
    %200 = vst [vmem:[#allocation2] sm:$0xff] %v196
    %201 = vst [vmem:[#allocation2 + $0x8] sm:$0xff] %v197
    %202 = vst [vmem:[#allocation2 + $0x10] sm:$0xff] %v198
    %203 = vst [vmem:[#allocation2 + $0x18] sm:$0xff] %v199
    // Predicated region
    $region30: #{_lambda_.13} parent=1 // pred_check
      %p204 = pneg %p55
    $region31: #{_lambda_.13} parent=1 // pred_check_branch
      %206 = sbr.rel (%p204) target = $region33
    $region32: #{_lambda_.13} parent=1 // pred_region
      %v207 = vld [vmem:[#allocation2] sm:$0xff]
      %v208 = vld [vmem:[#allocation2 + $0x8] sm:$0xff]
      %v209 = vld [vmem:[#allocation2 + $0x10] sm:$0xff]
      %v210 = vld [vmem:[#allocation2 + $0x18] sm:$0xff]
      %v211 = vld [vmem:[#allocation8] sm:$0x1]
      %v213 = vlaneseq
      %v214 = vshrl.u32 %v213, 7
      %v215 = vsub.s32 0, %v214
      %v216 = vrot.slane %v211, %v215
      %v218 = vadd.f32 %v207, %v216
      %v219 = vadd.f32 %v208, %v216
      %v220 = vadd.f32 %v209, %v216
      %v221 = vadd.f32 %v210, %v216
      %222 = vst [vmem:[#allocation9] sm:$0xff] %v218
      %223 = vst [vmem:[#allocation9 + $0x8] sm:$0xff] %v219
      %224 = vst [vmem:[#allocation9 + $0x10] sm:$0xff] %v220
      %225 = vst [vmem:[#allocation9 + $0x18] sm:$0xff] %v221
    $region33: #{_lambda_.13} parent=1 // pred_fallthru
      _
    // Predicated region
    $region34: #{_lambda_.13} parent=1 // pred_check
      _
    $region35: #{_lambda_.13} parent=1 // pred_check_branch
      %227 = sbr.rel (0) target = $region37
    $region36: #{_lambda_.13} parent=1 // pred_region
      %s229 = ssub.s32 512, 512
      %230 = vsyncadd [#allocation5], %s229
      %s231 = sshll.u32 [#allocation9], 4
      %s232 = int_to_ptr.vmem [resolvable:$true] %s231
      %237 = dma.vmem_to_hbm [thread:$0]  %s232, 512, %s3, [#allocation5], 128, 128, 8
    $region37: #{_lambda_.13} parent=1 // pred_fallthru
      _
    // Predicated region
    $region38: #{_lambda_.13} parent=1 // pred_check
      _
    $region39: #{_lambda_.13} parent=1 // pred_check_branch
      %239 = sbr.rel (0) target = $region41
    $region40: #{_lambda_.13} parent=1 // pred_region
      %240 = dma.done [#allocation5], 512
    $region41: #{_lambda_.13} parent=1 // pred_fallthru
      _
    %241 = vsyncpa [#allocation4], 1
    %242 = vsyncpa [#allocation7], 1
    %243 = vsyncpa [#allocation5], 1

// kernel: _lambda_.15
$region0: #{_lambda_.15}
  #allocation0 [shape = 'u32[]', space=smem, size = 0x4, offset = 0x4, fixed_abs, tag = 'smem constant byte address 0x4 - core index']
  #allocation1 [shape = 'u32[144,128]{1,0:T(1,128)}', space=vmem, size = 0x12000, scoped, tag = 'internal scratch']
  %s0 = inlined_call_operand.hbm [shape: bf16[32,32], index: 0, kind: input, shape index: {}]
  %s1 = inlined_call_operand.hbm [shape: f32[1,32], index: 1, kind: input, shape index: {}]
  %s2 = inlined_call_operand.hbm [shape: f32[1,32], index: 2, kind: input, shape index: {}]
  %s3 = inlined_call_operand.hbm [shape: bf16[32,128], index: 3, kind: input, shape index: {}]
  %s4 = inlined_call_operand.hbm [shape: f32[1,128], index: 4, kind: input, shape index: {}]
  %s5 = inlined_call_operand.hbm [shape: bf16[128,32], index: 5, kind: input, shape index: {}]
  %s6 = inlined_call_operand.hbm [shape: f32[1,32], index: 6, kind: input, shape index: {}]
  %s7 = inlined_call_operand.hbm [shape: bf16[32,32], index: 7, kind: output, shape index: {}]
  %s8 = sld [smem:[#allocation0]]
  $region66: #{_lambda_.15} parent=0
    _
  %s10 = ssub.s32 1, %s8
  %s11 = scalar_select 0, %s10, %s8
  $region1: #{_lambda_.15} parent=0
    #allocation2 [shape = 'u8[8192]{0}', space=vmem, size = 0x2000, scoped, tag = 'input window, operand 0, single buffered']
    #allocation3 [shape = 's32[1]{0}', space=sflag, size = 0x4, scoped, tag = 'scoped memory for _lambda_.15']
    #allocation4 [shape = 's32[1]{0}', space=sflag, size = 0x4, scoped, tag = 'scoped memory for _lambda_.15']
    #allocation5 [shape = 'u8[512]{0}', space=vmem, size = 0x400, scoped, tag = 'input window, operand 1, single buffered']
    #allocation6 [shape = 's32[1]{0}', space=sflag, size = 0x4, scoped, tag = 'scoped memory for _lambda_.15']
    #allocation7 [shape = 'u8[512]{0}', space=vmem, size = 0x400, scoped, tag = 'input window, operand 2, single buffered']
    #allocation8 [shape = 'u8[8192]{0}', space=vmem, size = 0x2000, scoped, tag = 'input window, operand 3, single buffered']
    #allocation9 [shape = 's32[1]{0}', space=sflag, size = 0x4, scoped, tag = 'scoped memory for _lambda_.15']
    #allocation10 [shape = 'u8[512]{0}', space=vmem, size = 0x400, scoped, tag = 'input window, operand 4, single buffered']
    #allocation11 [shape = 'u8[32768]{0}', space=vmem, size = 0x8000, scoped, tag = 'input window, operand 5, single buffered']
    #allocation12 [shape = 's32[1]{0}', space=sflag, size = 0x4, scoped, tag = 'scoped memory for _lambda_.15']
    #allocation13 [shape = 'u8[512]{0}', space=vmem, size = 0x400, scoped, tag = 'input window, operand 6, single buffered']
    #allocation14 [shape = 'u8[8192]{0}', space=vmem, size = 0x2000, scoped, tag = 'output window, operand 0, single buffered']
    %12 = vsyncpa [#allocation3], 0
    %13 = vsyncpa [#allocation6], 0
    %14 = vsyncpa [#allocation9], 0
    %15 = vsyncpa [#allocation12], 0
    %16 = vsyncpa [#allocation4], 0
    // Predicated region
    $region2: #{_lambda_.15} parent=1 // pred_check
      _
    $region3: #{_lambda_.15} parent=1 // pred_check_branch
      %18 = sbr.rel (0) target = $region5
    $region4: #{_lambda_.15} parent=1 // pred_region
      %s20 = ssub.s32 256, 256
      %21 = vsyncadd [#allocation3], %s20
      %s22 = sshll.u32 [#allocation2], 4
      %s23 = int_to_ptr.vmem [resolvable:$true] %s22
      %28 = dma.hbm_to_vmem [thread:$0]  %s0, 256, %s23, [#allocation3], 64, 64, 4
    $region5: #{_lambda_.15} parent=1 // pred_fallthru
      _
    // Predicated region
    $region6: #{_lambda_.15} parent=1 // pred_check
      _
    $region7: #{_lambda_.15} parent=1 // pred_check_branch
      %30 = sbr.rel (0) target = $region9
    $region8: #{_lambda_.15} parent=1 // pred_region
      %s32 = ssub.s32 16, 16
      %33 = vsyncadd [#allocation6], %s32
      %s35 = sshll.u32 [#allocation5], 4
      %s36 = int_to_ptr.vmem [resolvable:$true] %s35
      %38 = dma.hbm_to_vmem [thread:$0]  %s1, 16, %s36, [#allocation6]
    $region9: #{_lambda_.15} parent=1 // pred_fallthru
      _
    // Predicated region
    $region10: #{_lambda_.15} parent=1 // pred_check
      _
    $region11: #{_lambda_.15} parent=1 // pred_check_branch
      %40 = sbr.rel (0) target = $region13
    $region12: #{_lambda_.15} parent=1 // pred_region
      %s42 = ssub.s32 16, 16
      %43 = vsyncadd [#allocation6], %s42
      %s45 = sshll.u32 [#allocation7], 4
      %s46 = int_to_ptr.vmem [resolvable:$true] %s45
      %48 = dma.hbm_to_vmem [thread:$0]  %s2, 16, %s46, [#allocation6]
    $region13: #{_lambda_.15} parent=1 // pred_fallthru
      _
    // Predicated region
    $region14: #{_lambda_.15} parent=1 // pred_check
      _
    $region15: #{_lambda_.15} parent=1 // pred_check_branch
      %50 = sbr.rel (0) target = $region17
    $region16: #{_lambda_.15} parent=1 // pred_region
      %s52 = ssub.s32 256, 256
      %53 = vsyncadd [#allocation9], %s52
      %s54 = sshll.u32 [#allocation8], 4
      %s55 = int_to_ptr.vmem [resolvable:$true] %s54
      %60 = dma.hbm_to_vmem [thread:$0]  %s3, 256, %s55, [#allocation9], 64, 64, 4
    $region17: #{_lambda_.15} parent=1 // pred_fallthru
      _
    // Predicated region
    $region18: #{_lambda_.15} parent=1 // pred_check
      _
    $region19: #{_lambda_.15} parent=1 // pred_check_branch
      %62 = sbr.rel (0) target = $region21
    $region20: #{_lambda_.15} parent=1 // pred_region
      %s64 = ssub.s32 16, 16
      %65 = vsyncadd [#allocation9], %s64
      %s67 = sshll.u32 [#allocation10], 4
      %s68 = int_to_ptr.vmem [resolvable:$true] %s67
      %70 = dma.hbm_to_vmem [thread:$0]  %s4, 16, %s68, [#allocation9]
    $region21: #{_lambda_.15} parent=1 // pred_fallthru
      _
    // Predicated region
    $region22: #{_lambda_.15} parent=1 // pred_check
      _
    $region23: #{_lambda_.15} parent=1 // pred_check_branch
      %72 = sbr.rel (0) target = $region25
    $region24: #{_lambda_.15} parent=1 // pred_region
      %s74 = ssub.s32 1024, 1024
      %75 = vsyncadd [#allocation12], %s74
      %s76 = sshll.u32 [#allocation11], 4
      %s77 = int_to_ptr.vmem [resolvable:$true] %s76
      %82 = dma.hbm_to_vmem [thread:$0]  %s5, 1024, %s77, [#allocation12], 64, 64, 4
    $region25: #{_lambda_.15} parent=1 // pred_fallthru
      _
    // Predicated region
    $region26: #{_lambda_.15} parent=1 // pred_check
      _
    $region27: #{_lambda_.15} parent=1 // pred_check_branch
      %84 = sbr.rel (0) target = $region29
    $region28: #{_lambda_.15} parent=1 // pred_region
      %s86 = ssub.s32 16, 16
      %87 = vsyncadd [#allocation12], %s86
      %s89 = sshll.u32 [#allocation13], 4
      %s90 = int_to_ptr.vmem [resolvable:$true] %s89
      %92 = dma.hbm_to_vmem [thread:$0]  %s6, 16, %s90, [#allocation12]
    $region29: #{_lambda_.15} parent=1 // pred_fallthru
      _
    // Predicated region
    $region30: #{_lambda_.15} parent=1 // pred_check
      _
    $region31: #{_lambda_.15} parent=1 // pred_check_branch
      %94 = sbr.rel (0) target = $region33
    $region32: #{_lambda_.15} parent=1 // pred_region
      %95 = dma.done [#allocation3], 256
    $region33: #{_lambda_.15} parent=1 // pred_fallthru
      _
    // Predicated region
    $region34: #{_lambda_.15} parent=1 // pred_check
      _
    $region35: #{_lambda_.15} parent=1 // pred_check_branch
      %97 = sbr.rel (0) target = $region37
    $region36: #{_lambda_.15} parent=1 // pred_region
      %98 = dma.done [#allocation6], 16
    $region37: #{_lambda_.15} parent=1 // pred_fallthru
      _
    // Predicated region
    $region38: #{_lambda_.15} parent=1 // pred_check
      _
    $region39: #{_lambda_.15} parent=1 // pred_check_branch
      %100 = sbr.rel (0) target = $region41
    $region40: #{_lambda_.15} parent=1 // pred_region
      %101 = dma.done [#allocation6], 16
    $region41: #{_lambda_.15} parent=1 // pred_fallthru
      _
    // Predicated region
    $region42: #{_lambda_.15} parent=1 // pred_check
      _
    $region43: #{_lambda_.15} parent=1 // pred_check_branch
      %103 = sbr.rel (0) target = $region45
    $region44: #{_lambda_.15} parent=1 // pred_region
      %104 = dma.done [#allocation9], 256
    $region45: #{_lambda_.15} parent=1 // pred_fallthru
      _
    // Predicated region
    $region46: #{_lambda_.15} parent=1 // pred_check
      _
    $region47: #{_lambda_.15} parent=1 // pred_check_branch
      %106 = sbr.rel (0) target = $region49
    $region48: #{_lambda_.15} parent=1 // pred_region
      %107 = dma.done [#allocation9], 16
    $region49: #{_lambda_.15} parent=1 // pred_fallthru
      _
    // Predicated region
    $region50: #{_lambda_.15} parent=1 // pred_check
      _
    $region51: #{_lambda_.15} parent=1 // pred_check_branch
      %109 = sbr.rel (0) target = $region53
    $region52: #{_lambda_.15} parent=1 // pred_region
      %110 = dma.done [#allocation12], 1024
    $region53: #{_lambda_.15} parent=1 // pred_fallthru
      _
    // Predicated region
    $region54: #{_lambda_.15} parent=1 // pred_check
      _
    $region55: #{_lambda_.15} parent=1 // pred_check_branch
      %112 = sbr.rel (0) target = $region57
    $region56: #{_lambda_.15} parent=1 // pred_region
      %113 = dma.done [#allocation12], 16
    $region57: #{_lambda_.15} parent=1 // pred_fallthru
      _
    %v115 = vld [vmem:[#allocation2] sm:$0xf]
    %v116 = vld [vmem:[#allocation2 + $0x4] sm:$0xf]
    %v117 = vld [vmem:[#allocation2 + $0x8] sm:$0xf]
    %v118 = vld [vmem:[#allocation2 + $0xc] sm:$0xf]
    %v119 = vunpack.c.l.bf16 %v115
    %v120 = vunpack.c.l.bf16 %v116
    %v121 = vunpack.c.l.bf16 %v117
    %v122 = vunpack.c.l.bf16 %v118
    %v123 = vld [vmem:[#allocation5] sm:$0x1]
    %v124 = vld [vmem:[#allocation7] sm:$0x1]
    %vm125 = vcmask 261120
    %v126 = vsel %vm125, %v119, 0.0
    %127 = vadd.xlane.f32.xlu0 %v126
    %v128 = vpop.xlane.xlu0 %127
    %v129 = vsel %vm125, %v120, 0.0
    %130 = vadd.xlane.f32.xlu0 %v129
    %v131 = vpop.xlane.xlu0 %130
    %v132 = vsel %vm125, %v121, 0.0
    %133 = vadd.xlane.f32.xlu0 %v132
    %v134 = vpop.xlane.xlu0 %133
    %v135 = vsel %vm125, %v122, 0.0
    %136 = vadd.xlane.f32.xlu0 %v135
    %v137 = vpop.xlane.xlu0 %136
    %v138 = vrcp.pop 32.0
    %v139 = vmul.f32 %v128, %v138
    %v140 = vmul.f32 %v131, %v138
    %v141 = vmul.f32 %v134, %v138
    %v142 = vmul.f32 %v137, %v138
    %v143 = vsub.f32 %v119, %v139
    %v144 = vsub.f32 %v120, %v140
    %v145 = vsub.f32 %v121, %v141
    %v146 = vsub.f32 %v122, %v142
    %v147 = vmul.f32 %v143, %v143
    %v148 = vmul.f32 %v144, %v144
    %v149 = vmul.f32 %v145, %v145
    %v150 = vmul.f32 %v146, %v146
    %v151 = vsel %vm125, %v147, 0.0
    %152 = vadd.xlane.f32.xlu0 %v151
    %v153 = vpop.xlane.xlu0 %152
    %v154 = vsel %vm125, %v148, 0.0
    %155 = vadd.xlane.f32.xlu0 %v154
    %v156 = vpop.xlane.xlu0 %155
    %v157 = vsel %vm125, %v149, 0.0
    %158 = vadd.xlane.f32.xlu0 %v157
    %v159 = vpop.xlane.xlu0 %158
    %v160 = vsel %vm125, %v150, 0.0
    %161 = vadd.xlane.f32.xlu0 %v160
    %v162 = vpop.xlane.xlu0 %161
    %v163 = vmul.f32 %v153, %v138
    %v164 = vmul.f32 %v156, %v138
    %v165 = vmul.f32 %v159, %v138
    %v166 = vmul.f32 %v162, %v138
    %v167 = vadd.f32 %v163, 1e-05
    %v168 = vadd.f32 %v164, 1e-05
    %v169 = vadd.f32 %v165, 1e-05
    %v170 = vadd.f32 %v166, 1e-05
    %v171 = vrsqrt.pop %v167
    %v172 = vrsqrt.pop %v168
    %v173 = vrsqrt.pop %v169
    %v174 = vrsqrt.pop %v170
    %v175 = vmul.f32 %v143, %v171
    %v176 = vmul.f32 %v144, %v172
    %v177 = vmul.f32 %v145, %v173
    %v178 = vmul.f32 %v146, %v174
    %v180 = vlaneseq
    %v181 = vshrl.u32 %v180, 7
    %v182 = vsub.s32 0, %v181
    %v183 = vrot.slane %v123, %v182
    %v185 = vmul.f32 %v175, %v183
    %v186 = vmul.f32 %v176, %v183
    %v187 = vmul.f32 %v177, %v183
    %v188 = vmul.f32 %v178, %v183
    %v190 = vlaneseq
    %v191 = vshrl.u32 %v190, 7
    %v192 = vsub.s32 0, %v191
    %v193 = vrot.slane %v124, %v192
    %v195 = vadd.f32 %v185, %v193
    %v196 = vadd.f32 %v186, %v193
    %v197 = vadd.f32 %v187, %v193
    %v198 = vadd.f32 %v188, %v193
    %v199 = vpack.c.bf16 %v196, %v195
    %v200 = vpack.c.bf16 %v198, %v197
    %v201 = vld [vmem:[#allocation8] sm:$0xf]
    %v202 = vld [vmem:[#allocation8 + $0x4] sm:$0xf]
    %v203 = vld [vmem:[#allocation8 + $0x8] sm:$0xf]
    %v204 = vld [vmem:[#allocation8 + $0xc] sm:$0xf]
    %v205 = vld [vmem:[#allocation10] sm:$0x1]
    %v207 = vlaneseq
    %v208 = vshrl.u32 %v207, 7
    %v209 = vsub.s32 0, %v208
    %v210 = vrot.slane %v205, %v209
    %v216 = vunpack.c.l.b16 %v201
    %v217 = vunpack.c.l.b16 %v202
    %v218 = vunpack.c.l.b16 %v203
    %v219 = vunpack.c.l.b16 %v204
    %v220 = vpack.c.b16 %v217, %v216
    %v221 = vpack.c.b16 %v219, %v218
    %v225 = vsel %vm125, %v199, 0
    %v228 = vsel %vm125, %v200, 0
    %230 = vmatprep.subr.bf16.mxu0 0
    %231 = vmatpush1.bf16.msra.mxu0 %v220
    %232 = vmatprep.subr.bf16.mxu0 0
    %233 = vmatpush1.bf16.msra.mxu0 %v221
    %234 = vmatprep.subr.bf16.mxu0 0
    %235 = vmatpush1.bf16.msra.mxu0 0
    %236 = vmatprep.subr.bf16.mxu0 0
    %237 = vmatpush1.bf16.msra.mxu0 0
    %238 = vmatprep.subr.bf16.mxu0 0
    %239 = vmatpush1.bf16.msra.mxu0 0
    %240 = vmatprep.subr.bf16.mxu0 0
    %241 = vmatpush1.bf16.msra.mxu0 0
    %242 = vmatprep.subr.bf16.mxu0 0
    %243 = vmatpush1.bf16.msra.mxu0 0
    %244 = vmatprep.subr.bf16.mxu0 0
    %245 = vmatpush1.bf16.msra.mxu0 0
    %246 = vmatprep.subr.bf16.mxu0 0
    %247 = vmatpush1.bf16.msra.mxu0 0
    %248 = vmatprep.subr.bf16.mxu0 0
    %249 = vmatpush1.bf16.msra.mxu0 0
    %250 = vmatprep.subr.bf16.mxu0 0
    %251 = vmatpush1.bf16.msra.mxu0 0
    %252 = vmatprep.subr.bf16.mxu0 0
    %253 = vmatpush1.bf16.msra.mxu0 0
    %254 = vmatprep.subr.bf16.mxu0 0
    %255 = vmatpush1.bf16.msra.mxu0 0
    %256 = vmatprep.subr.bf16.mxu0 0
    %257 = vmatpush1.bf16.msra.mxu0 0
    %258 = vmatprep.subr.bf16.mxu0 0
    %259 = vmatpush1.bf16.msra.mxu0 0
    %260 = vmatprep.subr.bf16.mxu0 0
    %261 = vmatpush1.bf16.msra.mxu0 0
    %262 = vmatprep.mubr.bf16.mxu0 0
    %263 = vmatmul.mubr.bf16.gmra.mrb[0].mxu0 %v225
    %v264 = vpop.f32.mrb[0].mxu0
    %v265 = vadd.f32 %v210, %v264
    %v266 = vpop.f32.mrb[0].mxu0
    %v267 = vpop.f32.mrb[0].mxu0
    %v268 = vadd.f32 %v210, %v267
    %v269 = vpop.f32.mrb[0].mxu0
    %270 = vmatprep.mubr.bf16.mxu0 0
    %271 = vmatmul.mubr.bf16.gmra.mrb[0].mxu0 %v228
    %v272 = vpop.f32.mrb[0].mxu0
    %v273 = vadd.f32 %v210, %v272
    %v274 = vpop.f32.mrb[0].mxu0
    %v275 = vpop.f32.mrb[0].mxu0
    %v276 = vadd.f32 %v210, %v275
    %v277 = vpop.f32.mrb[0].mxu0
    %278 = vdwg.mxu0
    %v279 = vmul.f32 %v265, %v265
    %v280 = vmul.f32 %v268, %v268
    %v281 = vmul.f32 %v273, %v273
    %v282 = vmul.f32 %v276, %v276
    %v283 = vmul.f32 %v265, %v279
    %v284 = vmul.f32 %v268, %v280
    %v285 = vmul.f32 %v273, %v281
    %v286 = vmul.f32 %v276, %v282
    %v287 = vmul.f32 %v283, 0.044715
    %v288 = vmul.f32 %v284, 0.044715
    %v289 = vmul.f32 %v285, 0.044715
    %v290 = vmul.f32 %v286, 0.044715
    %v291 = vadd.f32 %v265, %v287
    %v292 = vadd.f32 %v268, %v288
    %v293 = vadd.f32 %v273, %v289
    %v294 = vadd.f32 %v276, %v290
    %v295 = vmul.f32 %v291, 0.7978846
    %v296 = vmul.f32 %v292, 0.7978846
    %v297 = vmul.f32 %v293, 0.7978846
    %v298 = vmul.f32 %v294, 0.7978846
    %v299 = vtanh.pop %v295
    %v300 = vtanh.pop %v296
    %v301 = vtanh.pop %v297
    %v302 = vtanh.pop %v298
    %v303 = vadd.f32 %v299, 1.0
    %v304 = vadd.f32 %v300, 1.0
    %v305 = vadd.f32 %v301, 1.0
    %v306 = vadd.f32 %v302, 1.0
    %v307 = vmul.f32 %v303, 0.5
    %v308 = vmul.f32 %v304, 0.5
    %v309 = vmul.f32 %v305, 0.5
    %v310 = vmul.f32 %v306, 0.5
    %v311 = vmul.f32 %v265, %v307
    %v312 = vmul.f32 %v268, %v308
    %v313 = vmul.f32 %v273, %v309
    %v314 = vmul.f32 %v276, %v310
    %v315 = vpack.c.bf16 %v312, %v311
    %v316 = vpack.c.bf16 %v314, %v313
    %v317 = vld [vmem:[#allocation11] sm:$0xf]
    %v318 = vld [vmem:[#allocation11 + $0x4] sm:$0xf]
    %v319 = vld [vmem:[#allocation11 + $0x8] sm:$0xf]
    %v320 = vld [vmem:[#allocation11 + $0xc] sm:$0xf]
    %v321 = vld [vmem:[#allocation11 + $0x10] sm:$0xf]
    %v322 = vld [vmem:[#allocation11 + $0x14] sm:$0xf]
    %v323 = vld [vmem:[#allocation11 + $0x18] sm:$0xf]
    %v324 = vld [vmem:[#allocation11 + $0x1c] sm:$0xf]
    %v325 = vld [vmem:[#allocation11 + $0x20] sm:$0xf]
    %v326 = vld [vmem:[#allocation11 + $0x24] sm:$0xf]
    %v327 = vld [vmem:[#allocation11 + $0x28] sm:$0xf]
    %v328 = vld [vmem:[#allocation11 + $0x2c] sm:$0xf]
    %v329 = vld [vmem:[#allocation11 + $0x30] sm:$0xf]
    %v330 = vld [vmem:[#allocation11 + $0x34] sm:$0xf]
    %v331 = vld [vmem:[#allocation11 + $0x38] sm:$0xf]
    %v332 = vld [vmem:[#allocation11 + $0x3c] sm:$0xf]
    %v333 = vld [vmem:[#allocation13] sm:$0x1]
    %v335 = vlaneseq
    %v336 = vshrl.u32 %v335, 7
    %v337 = vsub.s32 0, %v336
    %v338 = vrot.slane %v333, %v337
    %v356 = vunpack.c.l.b16 %v317
    %v357 = vunpack.c.l.b16 %v318
    %v358 = vunpack.c.l.b16 %v319
    %v359 = vunpack.c.l.b16 %v320
    %v360 = vunpack.c.l.b16 %v321
    %v361 = vunpack.c.l.b16 %v322
    %v362 = vunpack.c.l.b16 %v323
    %v363 = vunpack.c.l.b16 %v324
    %v364 = vunpack.c.l.b16 %v325
    %v365 = vunpack.c.l.b16 %v326
    %v366 = vunpack.c.l.b16 %v327
    %v367 = vunpack.c.l.b16 %v328
    %v368 = vunpack.c.l.b16 %v329
    %v369 = vunpack.c.l.b16 %v330
    %v370 = vunpack.c.l.b16 %v331
    %v371 = vunpack.c.l.b16 %v332
    %v372 = vpack.c.b16 %v357, %v356
    %v373 = vpack.c.b16 %v359, %v358
    %v374 = vpack.c.b16 %v361, %v360
    %v375 = vpack.c.b16 %v363, %v362
    %v376 = vpack.c.b16 %v365, %v364
    %v377 = vpack.c.b16 %v367, %v366
    %v378 = vpack.c.b16 %v369, %v368
    %v379 = vpack.c.b16 %v371, %v370
    %388 = vmatprep.subr.bf16.mxu0 0
    %389 = vmatpush1.bf16.msra.mxu0 %v372
    %390 = vmatprep.subr.bf16.mxu0 0
    %391 = vmatpush1.bf16.msra.mxu0 %v373
    %392 = vmatprep.subr.bf16.mxu0 0
    %393 = vmatpush1.bf16.msra.mxu0 %v374
    %394 = vmatprep.subr.bf16.mxu0 0
    %395 = vmatpush1.bf16.msra.mxu0 %v375
    %396 = vmatprep.subr.bf16.mxu0 0
    %397 = vmatpush1.bf16.msra.mxu0 %v376
    %398 = vmatprep.subr.bf16.mxu0 0
    %399 = vmatpush1.bf16.msra.mxu0 %v377
    %400 = vmatprep.subr.bf16.mxu0 0
    %401 = vmatpush1.bf16.msra.mxu0 %v378
    %402 = vmatprep.subr.bf16.mxu0 0
    %403 = vmatpush1.bf16.msra.mxu0 %v379
    %404 = vmatprep.subr.bf16.mxu0 0
    %405 = vmatpush1.bf16.msra.mxu0 0
    %406 = vmatprep.subr.bf16.mxu0 0
    %407 = vmatpush1.bf16.msra.mxu0 0
    %408 = vmatprep.subr.bf16.mxu0 0
    %409 = vmatpush1.bf16.msra.mxu0 0
    %410 = vmatprep.subr.bf16.mxu0 0
    %411 = vmatpush1.bf16.msra.mxu0 0
    %412 = vmatprep.subr.bf16.mxu0 0
    %413 = vmatpush1.bf16.msra.mxu0 0
    %414 = vmatprep.subr.bf16.mxu0 0
    %415 = vmatpush1.bf16.msra.mxu0 0
    %416 = vmatprep.subr.bf16.mxu0 0
    %417 = vmatpush1.bf16.msra.mxu0 0
    %418 = vmatprep.subr.bf16.mxu0 0
    %419 = vmatpush1.bf16.msra.mxu0 0
    %420 = vmatprep.mubr.bf16.mxu0 0
    %421 = vmatmul.mubr.bf16.gmra.mrb[0].mxu0 %v315
    %v422 = vpop.f32.mrb[0].mxu0
    %v423 = vadd.f32 %v338, %v422
    %v424 = vpop.f32.mrb[0].mxu0
    %v425 = vpop.f32.mrb[0].mxu0
    %v426 = vadd.f32 %v338, %v425
    %v427 = vpop.f32.mrb[0].mxu0
    %428 = vmatprep.mubr.bf16.mxu0 0
    %429 = vmatmul.mubr.bf16.gmra.mrb[0].mxu0 %v316
    %v430 = vpop.f32.mrb[0].mxu0
    %v431 = vadd.f32 %v338, %v430
    %v432 = vpop.f32.mrb[0].mxu0
    %v433 = vpop.f32.mrb[0].mxu0
    %v434 = vadd.f32 %v338, %v433
    %v435 = vpop.f32.mrb[0].mxu0
    %436 = vdwg.mxu0
    %v437 = vadd.f32 %v119, %v423
    %v438 = vadd.f32 %v120, %v426
    %v439 = vadd.f32 %v121, %v431
    %v440 = vadd.f32 %v122, %v434
    %v441 = vpack.c.bf16 %v438, %v437
    %v442 = vpack.c.bf16 %v440, %v439
    %v445 = vunpack.c.l.b16 %v441
    %v446 = vunpack.c.h.b16 %v441
    %v447 = vunpack.c.l.b16 %v442
    %v448 = vunpack.c.h.b16 %v442
    %v449 = vpack.c.b16 %v445, %v445
    %v450 = vpack.c.b16 %v446, %v446
    %v451 = vpack.c.b16 %v447, %v447
    %v452 = vpack.c.b16 %v448, %v448
    %vm457 = vcmask 257024
    %458 = vst.msk [vmem:[#allocation14] sm:$0xf] %vm457, %v449
    %459 = vst.msk [vmem:[#allocation14 + $0x4] sm:$0xf] %vm457, %v450
    %460 = vst.msk [vmem:[#allocation14 + $0x8] sm:$0xf] %vm457, %v451
    %461 = vst.msk [vmem:[#allocation14 + $0xc] sm:$0xf] %vm457, %v452
    // Predicated region
    $region58: #{_lambda_.15} parent=1 // pred_check
      _
    $region59: #{_lambda_.15} parent=1 // pred_check_branch
      %463 = sbr.rel (0) target = $region61
    $region60: #{_lambda_.15} parent=1 // pred_region
      %s465 = ssub.s32 256, 256
      %466 = vsyncadd [#allocation4], %s465
      %s467 = sshll.u32 [#allocation14], 4
      %s468 = int_to_ptr.vmem [resolvable:$true] %s467
      %473 = dma.vmem_to_hbm [thread:$0]  %s468, 256, %s7, [#allocation4], 64, 64, 4
    $region61: #{_lambda_.15} parent=1 // pred_fallthru
      _
    // Predicated region
    $region62: #{_lambda_.15} parent=1 // pred_check
      _
    $region63: #{_lambda_.15} parent=1 // pred_check_branch
      %475 = sbr.rel (0) target = $region65
    $region64: #{_lambda_.15} parent=1 // pred_region
      %476 = dma.done [#allocation4], 256
    $region65: #{_lambda_.15} parent=1 // pred_fallthru
      _
    %477 = vsyncpa [#allocation3], 1
    %478 = vsyncpa [#allocation6], 1
    %479 = vsyncpa [#allocation9], 1
    %480 = vsyncpa [#allocation12], 1
    %481 = vsyncpa [#allocation4], 1

// kernel: _lambda_.18
$region0: #{_lambda_.18}
  #allocation0 [shape = 'u32[]', space=smem, size = 0x4, offset = 0x4, fixed_abs, tag = 'smem constant byte address 0x4 - core index']
  #allocation1 [shape = 'u32[144,128]{1,0:T(1,128)}', space=vmem, size = 0x12000, scoped, tag = 'internal scratch']
  #allocation2 [shape = 'bf16[32,32]{1,0:T(16,128)(2,1)}', space=vmem, size = 0x2000, scoped, tag = 'scratch operand']
  %s0 = inlined_call_operand.hbm [shape: bf16[32,32], index: 0, kind: input, shape index: {}]
  %s1 = inlined_call_operand.hbm [shape: f32[1,32], index: 1, kind: input, shape index: {}]
  %s2 = inlined_call_operand.hbm [shape: f32[1,32], index: 2, kind: input, shape index: {}]
  %s3 = inlined_call_operand.hbm [shape: bf16[32,128], index: 3, kind: input, shape index: {}]
  %s4 = inlined_call_operand.hbm [shape: f32[1,128], index: 4, kind: input, shape index: {}]
  %s5 = inlined_call_operand.hbm [shape: bf16[32,128], index: 5, kind: output, shape index: {}]
  %s6 = sld [smem:[#allocation0]]
  $region54: #{_lambda_.18} parent=0
    _
  %s8 = ssub.s32 1, %s6
  %s9 = scalar_select 0, %s8, %s6
  $region1: #{_lambda_.18} parent=0
    #allocation3 [shape = 'u8[8192]{0}', space=vmem, size = 0x2000, scoped, tag = 'input window, operand 0, single buffered']
    #allocation4 [shape = 's32[1]{0}', space=sflag, size = 0x4, scoped, tag = 'scoped memory for _lambda_.18']
    #allocation5 [shape = 's32[1]{0}', space=sflag, size = 0x4, scoped, tag = 'scoped memory for _lambda_.18']
    #allocation6 [shape = 'u8[512]{0}', space=vmem, size = 0x400, scoped, tag = 'input window, operand 1, single buffered']
    #allocation7 [shape = 's32[1]{0}', space=sflag, size = 0x4, scoped, tag = 'scoped memory for _lambda_.18']
    #allocation8 [shape = 'u8[512]{0}', space=vmem, size = 0x400, scoped, tag = 'input window, operand 2, single buffered']
    #allocation9 [shape = 'u8[8192]{0}', space=vmem, size = 0x2000, scoped, tag = 'input window, operand 3, single buffered']
    #allocation10 [shape = 's32[1]{0}', space=sflag, size = 0x4, scoped, tag = 'scoped memory for _lambda_.18']
    #allocation11 [shape = 'u8[512]{0}', space=vmem, size = 0x400, scoped, tag = 'input window, operand 4, single buffered']
    #allocation12 [shape = 'u8[8192]{0}', space=vmem, size = 0x2000, scoped, tag = 'output window, operand 0, single buffered']
    %10 = vsyncpa [#allocation4], 0
    %11 = vsyncpa [#allocation7], 0
    %12 = vsyncpa [#allocation10], 0
    %13 = vsyncpa [#allocation5], 0
    // Predicated region
    $region2: #{_lambda_.18} parent=1 // pred_check
      _
    $region3: #{_lambda_.18} parent=1 // pred_check_branch
      %15 = sbr.rel (0) target = $region5
    $region4: #{_lambda_.18} parent=1 // pred_region
      %s17 = ssub.s32 256, 256
      %18 = vsyncadd [#allocation4], %s17
      %s19 = sshll.u32 [#allocation3], 4
      %s20 = int_to_ptr.vmem [resolvable:$true] %s19
      %25 = dma.hbm_to_vmem [thread:$0]  %s0, 256, %s20, [#allocation4], 64, 64, 4
    $region5: #{_lambda_.18} parent=1 // pred_fallthru
      _
    // Predicated region
    $region6: #{_lambda_.18} parent=1 // pred_check
      _
    $region7: #{_lambda_.18} parent=1 // pred_check_branch
      %27 = sbr.rel (0) target = $region9
    $region8: #{_lambda_.18} parent=1 // pred_region
      %s29 = ssub.s32 16, 16
      %30 = vsyncadd [#allocation7], %s29
      %s32 = sshll.u32 [#allocation6], 4
      %s33 = int_to_ptr.vmem [resolvable:$true] %s32
      %35 = dma.hbm_to_vmem [thread:$0]  %s1, 16, %s33, [#allocation7]
    $region9: #{_lambda_.18} parent=1 // pred_fallthru
      _
    // Predicated region
    $region10: #{_lambda_.18} parent=1 // pred_check
      _
    $region11: #{_lambda_.18} parent=1 // pred_check_branch
      %37 = sbr.rel (0) target = $region13
    $region12: #{_lambda_.18} parent=1 // pred_region
      %s39 = ssub.s32 16, 16
      %40 = vsyncadd [#allocation7], %s39
      %s42 = sshll.u32 [#allocation8], 4
      %s43 = int_to_ptr.vmem [resolvable:$true] %s42
      %45 = dma.hbm_to_vmem [thread:$0]  %s2, 16, %s43, [#allocation7]
    $region13: #{_lambda_.18} parent=1 // pred_fallthru
      _
    // Predicated region
    $region14: #{_lambda_.18} parent=1 // pred_check
      _
    $region15: #{_lambda_.18} parent=1 // pred_check_branch
      %47 = sbr.rel (0) target = $region17
    $region16: #{_lambda_.18} parent=1 // pred_region
      %s49 = ssub.s32 256, 256
      %50 = vsyncadd [#allocation10], %s49
      %s51 = sshll.u32 [#allocation9], 4
      %s52 = int_to_ptr.vmem [resolvable:$true] %s51
      %57 = dma.hbm_to_vmem [thread:$0]  %s3, 256, %s52, [#allocation10], 64, 64, 4
    $region17: #{_lambda_.18} parent=1 // pred_fallthru
      _
    // Predicated region
    $region18: #{_lambda_.18} parent=1 // pred_check
      _
    $region19: #{_lambda_.18} parent=1 // pred_check_branch
      %59 = sbr.rel (0) target = $region21
    $region20: #{_lambda_.18} parent=1 // pred_region
      %s61 = ssub.s32 16, 16
      %62 = vsyncadd [#allocation10], %s61
      %s64 = sshll.u32 [#allocation11], 4
      %s65 = int_to_ptr.vmem [resolvable:$true] %s64
      %67 = dma.hbm_to_vmem [thread:$0]  %s4, 16, %s65, [#allocation10]
    $region21: #{_lambda_.18} parent=1 // pred_fallthru
      _
    // Predicated region
    $region22: #{_lambda_.18} parent=1 // pred_check
      _
    $region23: #{_lambda_.18} parent=1 // pred_check_branch
      %69 = sbr.rel (0) target = $region25
    $region24: #{_lambda_.18} parent=1 // pred_region
      %70 = dma.done [#allocation4], 256
    $region25: #{_lambda_.18} parent=1 // pred_fallthru
      _
    // Predicated region
    $region26: #{_lambda_.18} parent=1 // pred_check
      _
    $region27: #{_lambda_.18} parent=1 // pred_check_branch
      %72 = sbr.rel (0) target = $region29
    $region28: #{_lambda_.18} parent=1 // pred_region
      %73 = dma.done [#allocation7], 16
    $region29: #{_lambda_.18} parent=1 // pred_fallthru
      _
    // Predicated region
    $region30: #{_lambda_.18} parent=1 // pred_check
      _
    $region31: #{_lambda_.18} parent=1 // pred_check_branch
      %75 = sbr.rel (0) target = $region33
    $region32: #{_lambda_.18} parent=1 // pred_region
      %76 = dma.done [#allocation7], 16
    $region33: #{_lambda_.18} parent=1 // pred_fallthru
      _
    // Predicated region
    $region34: #{_lambda_.18} parent=1 // pred_check
      _
    $region35: #{_lambda_.18} parent=1 // pred_check_branch
      %78 = sbr.rel (0) target = $region37
    $region36: #{_lambda_.18} parent=1 // pred_region
      %79 = dma.done [#allocation10], 256
    $region37: #{_lambda_.18} parent=1 // pred_fallthru
      _
    // Predicated region
    $region38: #{_lambda_.18} parent=1 // pred_check
      _
    $region39: #{_lambda_.18} parent=1 // pred_check_branch
      %81 = sbr.rel (0) target = $region41
    $region40: #{_lambda_.18} parent=1 // pred_region
      %82 = dma.done [#allocation10], 16
    $region41: #{_lambda_.18} parent=1 // pred_fallthru
      _
    %p84 = scmp.eq.s32.totalorder 0, 0
    // Predicated region
    $region42: #{_lambda_.18} parent=1 // pred_check
      %p85 = pneg %p84
    $region43: #{_lambda_.18} parent=1 // pred_check_branch
      %87 = sbr.rel (%p85) target = $region45
    $region44: #{_lambda_.18} parent=1 // pred_region
      %v88 = vld [vmem:[#allocation3] sm:$0xf]
      %v89 = vld [vmem:[#allocation3 + $0x4] sm:$0xf]
      %v90 = vld [vmem:[#allocation3 + $0x8] sm:$0xf]
      %v91 = vld [vmem:[#allocation3 + $0xc] sm:$0xf]
      %v92 = vunpack.c.l.bf16 %v88
      %v93 = vunpack.c.l.bf16 %v89
      %v94 = vunpack.c.l.bf16 %v90
      %v95 = vunpack.c.l.bf16 %v91
      %v96 = vld [vmem:[#allocation6] sm:$0x1]
      %v97 = vld [vmem:[#allocation8] sm:$0x1]
      %vm98 = vcmask 261120
      %v99 = vsel %vm98, %v92, 0.0
      %100 = vadd.xlane.f32.xlu0 %v99
      %v101 = vpop.xlane.xlu0 %100
      %v102 = vsel %vm98, %v93, 0.0
      %103 = vadd.xlane.f32.xlu0 %v102
      %v104 = vpop.xlane.xlu0 %103
      %v105 = vsel %vm98, %v94, 0.0
      %106 = vadd.xlane.f32.xlu0 %v105
      %v107 = vpop.xlane.xlu0 %106
      %v108 = vsel %vm98, %v95, 0.0
      %109 = vadd.xlane.f32.xlu0 %v108
      %v110 = vpop.xlane.xlu0 %109
      %v111 = vrcp.pop 32.0
      %v112 = vmul.f32 %v101, %v111
      %v113 = vmul.f32 %v104, %v111
      %v114 = vmul.f32 %v107, %v111
      %v115 = vmul.f32 %v110, %v111
      %v116 = vsub.f32 %v92, %v112
      %v117 = vsub.f32 %v93, %v113
      %v118 = vsub.f32 %v94, %v114
      %v119 = vsub.f32 %v95, %v115
      %v120 = vmul.f32 %v116, %v116
      %v121 = vmul.f32 %v117, %v117
      %v122 = vmul.f32 %v118, %v118
      %v123 = vmul.f32 %v119, %v119
      %v124 = vsel %vm98, %v120, 0.0
      %125 = vadd.xlane.f32.xlu0 %v124
      %v126 = vpop.xlane.xlu0 %125
      %v127 = vsel %vm98, %v121, 0.0
      %128 = vadd.xlane.f32.xlu0 %v127
      %v129 = vpop.xlane.xlu0 %128
      %v130 = vsel %vm98, %v122, 0.0
      %131 = vadd.xlane.f32.xlu0 %v130
      %v132 = vpop.xlane.xlu0 %131
      %v133 = vsel %vm98, %v123, 0.0
      %134 = vadd.xlane.f32.xlu0 %v133
      %v135 = vpop.xlane.xlu0 %134
      %v136 = vmul.f32 %v126, %v111
      %v137 = vmul.f32 %v129, %v111
      %v138 = vmul.f32 %v132, %v111
      %v139 = vmul.f32 %v135, %v111
      %v140 = vadd.f32 %v136, 1e-05
      %v141 = vadd.f32 %v137, 1e-05
      %v142 = vadd.f32 %v138, 1e-05
      %v143 = vadd.f32 %v139, 1e-05
      %v144 = vrsqrt.pop %v140
      %v145 = vrsqrt.pop %v141
      %v146 = vrsqrt.pop %v142
      %v147 = vrsqrt.pop %v143
      %v148 = vmul.f32 %v116, %v144
      %v149 = vmul.f32 %v117, %v145
      %v150 = vmul.f32 %v118, %v146
      %v151 = vmul.f32 %v119, %v147
      %v153 = vlaneseq
      %v154 = vshrl.u32 %v153, 7
      %v155 = vsub.s32 0, %v154
      %v156 = vrot.slane %v96, %v155
      %v158 = vmul.f32 %v148, %v156
      %v159 = vmul.f32 %v149, %v156
      %v160 = vmul.f32 %v150, %v156
      %v161 = vmul.f32 %v151, %v156
      %v163 = vlaneseq
      %v164 = vshrl.u32 %v163, 7
      %v165 = vsub.s32 0, %v164
      %v166 = vrot.slane %v97, %v165
      %v168 = vadd.f32 %v158, %v166
      %v169 = vadd.f32 %v159, %v166
      %v170 = vadd.f32 %v160, %v166
      %v171 = vadd.f32 %v161, %v166
      %v172 = vpack.c.bf16 %v169, %v168
      %v173 = vpack.c.bf16 %v171, %v170
      %174 = vst.msk [vmem:[#allocation2] sm:$0xff] %vm98, %v172
      %175 = vst.msk [vmem:[#allocation2 + $0x8] sm:$0xff] %vm98, %v173
    $region45: #{_lambda_.18} parent=1 // pred_fallthru
      _
    %v176 = vld [vmem:[#allocation2] sm:$0xff]
    %v177 = vld [vmem:[#allocation2 + $0x8] sm:$0xff]
    %v178 = vld [vmem:[#allocation9] sm:$0xf]
    %v179 = vld [vmem:[#allocation9 + $0x4] sm:$0xf]
    %v180 = vld [vmem:[#allocation9 + $0x8] sm:$0xf]
    %v181 = vld [vmem:[#allocation9 + $0xc] sm:$0xf]
    %v182 = vld [vmem:[#allocation11] sm:$0x1]
    %v184 = vlaneseq
    %v185 = vshrl.u32 %v184, 7
    %v186 = vsub.s32 0, %v185
    %v187 = vrot.slane %v182, %v186
    %v193 = vunpack.c.l.b16 %v178
    %v194 = vunpack.c.l.b16 %v179
    %v195 = vunpack.c.l.b16 %v180
    %v196 = vunpack.c.l.b16 %v181
    %v197 = vpack.c.b16 %v194, %v193
    %v198 = vpack.c.b16 %v196, %v195
    %vm201 = vcmask 261120
    %v203 = vsel %vm201, %v176, 0
    %v206 = vsel %vm201, %v177, 0
    %208 = vmatprep.subr.bf16.mxu0 0
    %209 = vmatpush1.bf16.msra.mxu0 %v197
    %210 = vmatprep.subr.bf16.mxu0 0
    %211 = vmatpush1.bf16.msra.mxu0 %v198
    %212 = vmatprep.subr.bf16.mxu0 0
    %213 = vmatpush1.bf16.msra.mxu0 0
    %214 = vmatprep.subr.bf16.mxu0 0
    %215 = vmatpush1.bf16.msra.mxu0 0
    %216 = vmatprep.subr.bf16.mxu0 0
    %217 = vmatpush1.bf16.msra.mxu0 0
    %218 = vmatprep.subr.bf16.mxu0 0
    %219 = vmatpush1.bf16.msra.mxu0 0
    %220 = vmatprep.subr.bf16.mxu0 0
    %221 = vmatpush1.bf16.msra.mxu0 0
    %222 = vmatprep.subr.bf16.mxu0 0
    %223 = vmatpush1.bf16.msra.mxu0 0
    %224 = vmatprep.subr.bf16.mxu0 0
    %225 = vmatpush1.bf16.msra.mxu0 0
    %226 = vmatprep.subr.bf16.mxu0 0
    %227 = vmatpush1.bf16.msra.mxu0 0
    %228 = vmatprep.subr.bf16.mxu0 0
    %229 = vmatpush1.bf16.msra.mxu0 0
    %230 = vmatprep.subr.bf16.mxu0 0
    %231 = vmatpush1.bf16.msra.mxu0 0
    %232 = vmatprep.subr.bf16.mxu0 0
    %233 = vmatpush1.bf16.msra.mxu0 0
    %234 = vmatprep.subr.bf16.mxu0 0
    %235 = vmatpush1.bf16.msra.mxu0 0
    %236 = vmatprep.subr.bf16.mxu0 0
    %237 = vmatpush1.bf16.msra.mxu0 0
    %238 = vmatprep.subr.bf16.mxu0 0
    %239 = vmatpush1.bf16.msra.mxu0 0
    %240 = vmatprep.mubr.bf16.mxu0 0
    %241 = vmatmul.mubr.bf16.gmra.mrb[0].mxu0 %v203
    %v242 = vpop.f32.mrb[0].mxu0
    %v243 = vadd.f32 %v187, %v242
    %v244 = vpop.f32.mrb[0].mxu0
    %v245 = vpop.f32.mrb[0].mxu0
    %v246 = vadd.f32 %v187, %v245
    %v247 = vpop.f32.mrb[0].mxu0
    %248 = vmatprep.mubr.bf16.mxu0 0
    %249 = vmatmul.mubr.bf16.gmra.mrb[0].mxu0 %v206
    %v250 = vpop.f32.mrb[0].mxu0
    %v251 = vadd.f32 %v187, %v250
    %v252 = vpop.f32.mrb[0].mxu0
    %v253 = vpop.f32.mrb[0].mxu0
    %v254 = vadd.f32 %v187, %v253
    %v255 = vpop.f32.mrb[0].mxu0
    %256 = vdwg.mxu0
    %v257 = vpack.c.bf16 %v246, %v243
    %v258 = vpack.c.bf16 %v254, %v251
    %v261 = vunpack.c.l.b16 %v257
    %v262 = vunpack.c.h.b16 %v257
    %v263 = vunpack.c.l.b16 %v258
    %v264 = vunpack.c.h.b16 %v258
    %v265 = vpack.c.b16 %v261, %v261
    %v266 = vpack.c.b16 %v262, %v262
    %v267 = vpack.c.b16 %v263, %v263
    %v268 = vpack.c.b16 %v264, %v264
    %273 = vst [vmem:[#allocation12] sm:$0xf] %v265
    %274 = vst [vmem:[#allocation12 + $0x4] sm:$0xf] %v266
    %275 = vst [vmem:[#allocation12 + $0x8] sm:$0xf] %v267
    %276 = vst [vmem:[#allocation12 + $0xc] sm:$0xf] %v268
    // Predicated region
    $region46: #{_lambda_.18} parent=1 // pred_check
      _
    $region47: #{_lambda_.18} parent=1 // pred_check_branch
      %278 = sbr.rel (0) target = $region49
    $region48: #{_lambda_.18} parent=1 // pred_region
      %s280 = ssub.s32 256, 256
      %281 = vsyncadd [#allocation5], %s280
      %s282 = sshll.u32 [#allocation12], 4
      %s283 = int_to_ptr.vmem [resolvable:$true] %s282
      %288 = dma.vmem_to_hbm [thread:$0]  %s283, 256, %s5, [#allocation5], 64, 64, 4
    $region49: #{_lambda_.18} parent=1 // pred_fallthru
      _
    // Predicated region
    $region50: #{_lambda_.18} parent=1 // pred_check
      _
    $region51: #{_lambda_.18} parent=1 // pred_check_branch
      %290 = sbr.rel (0) target = $region53
    $region52: #{_lambda_.18} parent=1 // pred_region
      %291 = dma.done [#allocation5], 256
    $region53: #{_lambda_.18} parent=1 // pred_fallthru
      _
    %292 = vsyncpa [#allocation4], 1
    %293 = vsyncpa [#allocation7], 1
    %294 = vsyncpa [#allocation10], 1
    %295 = vsyncpa [#allocation5], 1

// kernel: _lambda_.14
$region0: #{_lambda_.14}
  #allocation0 [shape = 'u32[]', space=smem, size = 0x4, offset = 0x4, fixed_abs, tag = 'smem constant byte address 0x4 - core index']
  #allocation1 [shape = 'u32[144,128]{1,0:T(1,128)}', space=vmem, size = 0x12000, scoped, tag = 'internal scratch']
  %s0 = inlined_call_operand.hbm [shape: bf16[2,16,32], index: 0, kind: input, shape index: {}]
  %s1 = inlined_call_operand.hbm [shape: f32[1,32], index: 1, kind: input, shape index: {}]
  %s2 = inlined_call_operand.hbm [shape: f32[1,32], index: 2, kind: input, shape index: {}]
  %s3 = inlined_call_operand.hbm [shape: bf16[32,96], index: 3, kind: input, shape index: {}]
  %s4 = inlined_call_operand.hbm [shape: f32[1,96], index: 4, kind: input, shape index: {}]
  %s5 = inlined_call_operand.hbm [shape: bf16[32,32], index: 5, kind: input, shape index: {}]
  %s6 = inlined_call_operand.hbm [shape: f32[1,32], index: 6, kind: input, shape index: {}]
  %s7 = inlined_call_operand.hbm [shape: bf16[2,16,32], index: 7, kind: output, shape index: {}]
  %s8 = sld [smem:[#allocation0]]
  $region89: #{_lambda_.14} parent=0
    _
  %s10 = ssub.s32 1, %s8
  %s11 = scalar_select 0, %s10, %s8
  $region1: #{_lambda_.14} parent=0
    #allocation2 [shape = 'u8[8192]{0}', space=vmem, size = 0x2000, scoped, tag = 'input window, operand 0']
    #allocation3 [shape = 's32[2]{0}', space=sflag, size = 0x8, scoped, tag = 'scoped memory for _lambda_.14']
    #allocation4 [shape = 's32[2]{0}', space=sflag, size = 0x8, scoped, tag = 'scoped memory for _lambda_.14']
    #allocation5 [shape = 'u8[512]{0}', space=vmem, size = 0x400, scoped, tag = 'input window, operand 1, single buffered']
    #allocation6 [shape = 's32[1]{0}', space=sflag, size = 0x4, scoped, tag = 'scoped memory for _lambda_.14']
    #allocation7 [shape = 'u8[512]{0}', space=vmem, size = 0x400, scoped, tag = 'input window, operand 2, single buffered']
    #allocation8 [shape = 'u8[8192]{0}', space=vmem, size = 0x2000, scoped, tag = 'input window, operand 3, single buffered']
    #allocation9 [shape = 's32[1]{0}', space=sflag, size = 0x4, scoped, tag = 'scoped memory for _lambda_.14']
    #allocation10 [shape = 'u8[512]{0}', space=vmem, size = 0x400, scoped, tag = 'input window, operand 4, single buffered']
    #allocation11 [shape = 'u8[8192]{0}', space=vmem, size = 0x2000, scoped, tag = 'input window, operand 5, single buffered']
    #allocation12 [shape = 's32[1]{0}', space=sflag, size = 0x4, scoped, tag = 'scoped memory for _lambda_.14']
    #allocation13 [shape = 'u8[512]{0}', space=vmem, size = 0x400, scoped, tag = 'input window, operand 6, single buffered']
    #allocation14 [shape = 'u8[8192]{0}', space=vmem, size = 0x2000, scoped, tag = 'output window, operand 0']
    %12 = vsyncpa [#allocation3], 0
    %s13 = scalar_lea.sflag [#allocation3], 1
    %14 = vsyncpa %s13, 0
    %15 = vsyncpa [#allocation6], 0
    %16 = vsyncpa [#allocation9], 0
    %17 = vsyncpa [#allocation12], 0
    %18 = vsyncpa [#allocation4], 0
    %s19 = scalar_lea.sflag [#allocation4], 1
    %20 = vsyncpa %s19, 0
    loop: start=0, step=1, limit=4
    $region2: #{_lambda_.14} parent=1 // loop_pre_header
      _
    $region3: #{_lambda_.14} parent=1 // loop_header
      %s22 = sphi 0, %s26
      %p23 = scmp.ge.s32.totalorder %s22, 4
      %s32 = sphi 0, %s34
      %s35 = sphi 0, %s32
      %s36 = sphi 0, %s35
      %s52 = sphi 0, %s36
      %s56 = sphi 0, %s56
      %s58 = sphi 0, %s56
      %s59 = sphi 0, %s58
      %s73 = sphi 0, %s59
      %s77 = sphi 0, %s77
      %s79 = sphi 0, %s77
      %s80 = sphi 0, %s79
      %s94 = sphi 0, %s80
      %s98 = sphi 0, %s98
      %s100 = sphi 0, %s98
      %s101 = sphi 0, %s100
      %s115 = sphi 0, %s101
      %s119 = sphi 0, %s119
      %s121 = sphi 0, %s119
      %s122 = sphi 0, %s121
      %s136 = sphi 0, %s122
      %s140 = sphi 0, %s140
      %s142 = sphi 0, %s140
      %s143 = sphi 0, %s142
      %s157 = sphi 0, %s143
      %s161 = sphi 0, %s161
      %s163 = sphi 0, %s161
      %s164 = sphi 0, %s163
      %s178 = sphi 0, %s164
      %s184 = sphi 0, %s186
      %s187 = sphi 0, %s184
      %s188 = sphi 0, %s187
      %s204 = sphi 0, %s188
    $region4: #{_lambda_.14} parent=1 // loop_header_branch
      %25 = sbr.rel (%p23) target = $region8
    $region5: #{_lambda_.14} parent=1 // loop_body
      %s27 = ssub.s32 %s22, 1
      %s28 = ssub.s32 %s22, 2
      %s29 = sadd.s32 %s22, 1
      %s30 = ssub.s32 %s22, %s29
      %p31 = scmp.eq.s32.totalorder %s30, 0
      %s33 = sadd.s32 %s32, 1
      %s34 = scalar_select %p31, %s32, %s33
      %p37 = pneg %p31
      %p38 = scmp.eq.s32.totalorder %s22, 1
      %p39 = por %p37, %p38
      %p40 = scmp.ne.s32.totalorder %s32, %s35
      %p41 = scmp.eq.s32.totalorder %s22, 0
      %p42 = por %p40, %p41
      %p43 = scmp.ne.s32.totalorder %s32, %s35
      %p44 = scmp.eq.s32.totalorder %s27, 1
      %p45 = por %p43, %p44
      %p46 = scmp.ne.s32.totalorder %s35, %s36
      %p47 = scmp.eq.s32.totalorder %s27, 0
      %p48 = por %p46, %p47
      %p49 = scmp.ne.s32.totalorder %s35, %s36
      %p50 = scmp.eq.s32.totalorder %s28, 1
      %p51 = por %p49, %p50
      %p53 = scmp.ne.s32.totalorder %s36, %s52
      %p54 = scmp.eq.s32.totalorder %s28, 0
      %p55 = por %p53, %p54
      %s57 = sadd.s32 %s56, 1
      %p60 = scmp.eq.s32.totalorder %s22, 1
      %p61 = scmp.ne.s32.totalorder %s56, %s58
      %p62 = scmp.eq.s32.totalorder %s22, 0
      %p63 = por %p61, %p62
      %p64 = scmp.ne.s32.totalorder %s56, %s58
      %p65 = scmp.eq.s32.totalorder %s27, 1
      %p66 = por %p64, %p65
      %p67 = scmp.ne.s32.totalorder %s58, %s59
      %p68 = scmp.eq.s32.totalorder %s27, 0
      %p69 = por %p67, %p68
      %p70 = scmp.ne.s32.totalorder %s58, %s59
      %p71 = scmp.eq.s32.totalorder %s28, 1
      %p72 = por %p70, %p71
      %p74 = scmp.ne.s32.totalorder %s59, %s73
      %p75 = scmp.eq.s32.totalorder %s28, 0
      %p76 = por %p74, %p75
      %s78 = sadd.s32 %s77, 1
      %p81 = scmp.eq.s32.totalorder %s22, 1
      %p82 = scmp.ne.s32.totalorder %s77, %s79
      %p83 = scmp.eq.s32.totalorder %s22, 0
      %p84 = por %p82, %p83
      %p85 = scmp.ne.s32.totalorder %s77, %s79
      %p86 = scmp.eq.s32.totalorder %s27, 1
      %p87 = por %p85, %p86
      %p88 = scmp.ne.s32.totalorder %s79, %s80
      %p89 = scmp.eq.s32.totalorder %s27, 0
      %p90 = por %p88, %p89
      %p91 = scmp.ne.s32.totalorder %s79, %s80
      %p92 = scmp.eq.s32.totalorder %s28, 1
      %p93 = por %p91, %p92
      %p95 = scmp.ne.s32.totalorder %s80, %s94
      %p96 = scmp.eq.s32.totalorder %s28, 0
      %p97 = por %p95, %p96
      %s99 = sadd.s32 %s98, 1
      %p102 = scmp.eq.s32.totalorder %s22, 1
      %p103 = scmp.ne.s32.totalorder %s98, %s100
      %p104 = scmp.eq.s32.totalorder %s22, 0
      %p105 = por %p103, %p104
      %p106 = scmp.ne.s32.totalorder %s98, %s100
      %p107 = scmp.eq.s32.totalorder %s27, 1
      %p108 = por %p106, %p107
      %p109 = scmp.ne.s32.totalorder %s100, %s101
      %p110 = scmp.eq.s32.totalorder %s27, 0
      %p111 = por %p109, %p110
      %p112 = scmp.ne.s32.totalorder %s100, %s101
      %p113 = scmp.eq.s32.totalorder %s28, 1
      %p114 = por %p112, %p113
      %p116 = scmp.ne.s32.totalorder %s101, %s115
      %p117 = scmp.eq.s32.totalorder %s28, 0
      %p118 = por %p116, %p117
      %s120 = sadd.s32 %s119, 1
      %p123 = scmp.eq.s32.totalorder %s22, 1
      %p124 = scmp.ne.s32.totalorder %s119, %s121
      %p125 = scmp.eq.s32.totalorder %s22, 0
      %p126 = por %p124, %p125
      %p127 = scmp.ne.s32.totalorder %s119, %s121
      %p128 = scmp.eq.s32.totalorder %s27, 1
      %p129 = por %p127, %p128
      %p130 = scmp.ne.s32.totalorder %s121, %s122
      %p131 = scmp.eq.s32.totalorder %s27, 0
      %p132 = por %p130, %p131
      %p133 = scmp.ne.s32.totalorder %s121, %s122
      %p134 = scmp.eq.s32.totalorder %s28, 1
      %p135 = por %p133, %p134
      %p137 = scmp.ne.s32.totalorder %s122, %s136
      %p138 = scmp.eq.s32.totalorder %s28, 0
      %p139 = por %p137, %p138
      %s141 = sadd.s32 %s140, 1
      %p144 = scmp.eq.s32.totalorder %s22, 1
      %p145 = scmp.ne.s32.totalorder %s140, %s142
      %p146 = scmp.eq.s32.totalorder %s22, 0
      %p147 = por %p145, %p146
      %p148 = scmp.ne.s32.totalorder %s140, %s142
      %p149 = scmp.eq.s32.totalorder %s27, 1
      %p150 = por %p148, %p149
      %p151 = scmp.ne.s32.totalorder %s142, %s143
      %p152 = scmp.eq.s32.totalorder %s27, 0
      %p153 = por %p151, %p152
      %p154 = scmp.ne.s32.totalorder %s142, %s143
      %p155 = scmp.eq.s32.totalorder %s28, 1
      %p156 = por %p154, %p155
      %p158 = scmp.ne.s32.totalorder %s143, %s157
      %p159 = scmp.eq.s32.totalorder %s28, 0
      %p160 = por %p158, %p159
      %s162 = sadd.s32 %s161, 1
      %p165 = scmp.eq.s32.totalorder %s22, 1
      %p166 = scmp.ne.s32.totalorder %s161, %s163
      %p167 = scmp.eq.s32.totalorder %s22, 0
      %p168 = por %p166, %p167
      %p169 = scmp.ne.s32.totalorder %s161, %s163
      %p170 = scmp.eq.s32.totalorder %s27, 1
      %p171 = por %p169, %p170
      %p172 = scmp.ne.s32.totalorder %s163, %s164
      %p173 = scmp.eq.s32.totalorder %s27, 0
      %p174 = por %p172, %p173
      %p175 = scmp.ne.s32.totalorder %s163, %s164
      %p176 = scmp.eq.s32.totalorder %s28, 1
      %p177 = por %p175, %p176
      %p179 = scmp.ne.s32.totalorder %s164, %s178
      %p180 = scmp.eq.s32.totalorder %s28, 0
      %p181 = por %p179, %p180
      %s182 = ssub.s32 %s22, %s29
      %p183 = scmp.eq.s32.totalorder %s182, 0
      %s185 = sadd.s32 %s184, 1
      %s186 = scalar_select %p183, %s184, %s185
      %p189 = pneg %p183
      %p190 = scmp.eq.s32.totalorder %s22, 1
      %p191 = por %p189, %p190
      %p192 = scmp.ne.s32.totalorder %s184, %s187
      %p193 = scmp.eq.s32.totalorder %s22, 0
      %p194 = por %p192, %p193
      %p195 = scmp.ne.s32.totalorder %s184, %s187
      %p196 = scmp.eq.s32.totalorder %s27, 1
      %p197 = por %p195, %p196
      %p198 = scmp.ne.s32.totalorder %s187, %s188
      %p199 = scmp.eq.s32.totalorder %s27, 0
      %p200 = por %p198, %p199
      %p201 = scmp.ne.s32.totalorder %s187, %s188
      %p202 = scmp.eq.s32.totalorder %s28, 1
      %p203 = por %p201, %p202
      %p205 = scmp.ne.s32.totalorder %s188, %s204
      %p206 = scmp.eq.s32.totalorder %s28, 0
      %p207 = por %p205, %p206
      %p208 = scmp.le.s32.totalorder 1, %s22
      %p209 = scmp.lt.s32.totalorder %s22, 3
      %p210 = pnand %p208, %p209
      %p211 = pneg %p210
      // Predicated region
      $region9: #{_lambda_.14} parent=5 // pred_check
        _
      $region10: #{_lambda_.14} parent=5 // pred_check_branch
        %213 = sbr.rel (%p210) target = $region12
      $region11: #{_lambda_.14} parent=5 // pred_region
        %s214 = ssub.s32 %s22, 1
        // Predicated region
        $region13: #{_lambda_.14} parent=11 // pred_check
          %p215 = pneg %p69
        $region14: #{_lambda_.14} parent=11 // pred_check_branch
          %217 = sbr.rel (%p215) target = $region16
        $region15: #{_lambda_.14} parent=11 // pred_region
          %s219 = ssub.s32 16, 16
          %220 = vsyncadd [#allocation6], %s219
          %s222 = sshll.u32 [#allocation5], 4
          %s223 = int_to_ptr.vmem [resolvable:$true] %s222
          %225 = dma.hbm_to_vmem [thread:$0]  %s1, 16, %s223, [#allocation6]
        $region16: #{_lambda_.14} parent=11 // pred_fallthru
          _
        // Predicated region
        $region17: #{_lambda_.14} parent=11 // pred_check
          %p226 = pneg %p90
        $region18: #{_lambda_.14} parent=11 // pred_check_branch
          %228 = sbr.rel (%p226) target = $region20
        $region19: #{_lambda_.14} parent=11 // pred_region
          %s230 = ssub.s32 16, 16
          %231 = vsyncadd [#allocation6], %s230
          %s233 = sshll.u32 [#allocation7], 4
          %s234 = int_to_ptr.vmem [resolvable:$true] %s233
          %236 = dma.hbm_to_vmem [thread:$0]  %s2, 16, %s234, [#allocation6]
        $region20: #{_lambda_.14} parent=11 // pred_fallthru
          _
        // Predicated region
        $region21: #{_lambda_.14} parent=11 // pred_check
          %p237 = pneg %p111
        $region22: #{_lambda_.14} parent=11 // pred_check_branch
          %239 = sbr.rel (%p237) target = $region24
        $region23: #{_lambda_.14} parent=11 // pred_region
          %s241 = ssub.s32 256, 256
          %242 = vsyncadd [#allocation9], %s241
          %s243 = sshll.u32 [#allocation8], 4
          %s244 = int_to_ptr.vmem [resolvable:$true] %s243
          %249 = dma.hbm_to_vmem [thread:$0]  %s3, 256, %s244, [#allocation9], 64, 64, 4
        $region24: #{_lambda_.14} parent=11 // pred_fallthru
          _
        // Predicated region
        $region25: #{_lambda_.14} parent=11 // pred_check
          %p250 = pneg %p132
        $region26: #{_lambda_.14} parent=11 // pred_check_branch
          %252 = sbr.rel (%p250) target = $region28
        $region27: #{_lambda_.14} parent=11 // pred_region
          %s254 = ssub.s32 16, 16
          %255 = vsyncadd [#allocation9], %s254
          %s257 = sshll.u32 [#allocation10], 4
          %s258 = int_to_ptr.vmem [resolvable:$true] %s257
          %260 = dma.hbm_to_vmem [thread:$0]  %s4, 16, %s258, [#allocation9]
        $region28: #{_lambda_.14} parent=11 // pred_fallthru
          _
        // Predicated region
        $region29: #{_lambda_.14} parent=11 // pred_check
          %p261 = pneg %p153
        $region30: #{_lambda_.14} parent=11 // pred_check_branch
          %263 = sbr.rel (%p261) target = $region32
        $region31: #{_lambda_.14} parent=11 // pred_region
          %s265 = ssub.s32 256, 256
          %266 = vsyncadd [#allocation12], %s265
          %s267 = sshll.u32 [#allocation11], 4
          %s268 = int_to_ptr.vmem [resolvable:$true] %s267
          %273 = dma.hbm_to_vmem [thread:$0]  %s5, 256, %s268, [#allocation12], 64, 64, 4
        $region32: #{_lambda_.14} parent=11 // pred_fallthru
          _
        // Predicated region
        $region33: #{_lambda_.14} parent=11 // pred_check
          %p274 = pneg %p174
        $region34: #{_lambda_.14} parent=11 // pred_check_branch
          %276 = sbr.rel (%p274) target = $region36
        $region35: #{_lambda_.14} parent=11 // pred_region
          %s278 = ssub.s32 16, 16
          %279 = vsyncadd [#allocation12], %s278
          %s281 = sshll.u32 [#allocation13], 4
          %s282 = int_to_ptr.vmem [resolvable:$true] %s281
          %284 = dma.hbm_to_vmem [thread:$0]  %s6, 16, %s282, [#allocation12]
        $region36: #{_lambda_.14} parent=11 // pred_fallthru
          _
      $region12: #{_lambda_.14} parent=5 // pred_fallthru
        _
      %p285 = scmp.lt.s32.totalorder %s22, 2
      // Predicated region
      $region37: #{_lambda_.14} parent=5 // pred_check
        %p286 = pneg %p285
      $region38: #{_lambda_.14} parent=5 // pred_check_branch
        %288 = sbr.rel (%p286) target = $region40
      $region39: #{_lambda_.14} parent=5 // pred_region
        // Predicated region
        $region41: #{_lambda_.14} parent=39 // pred_check
          %p289 = pneg %p42
        $region42: #{_lambda_.14} parent=39 // pred_check_branch
          %291 = sbr.rel (%p289) target = $region44
        $region43: #{_lambda_.14} parent=39 // pred_region
          %s292 = sand.u32 %s32, 1
          %s293 = scalar_lea.sflag [#allocation3], %s292
          %s294 = sand.u32 %s32, 1
          %s295 = smul.addr %s294, 8
          %s296 = scalar_lea.vmem [#allocation2], %s295
          %s298 = ssub.s32 128, 128
          %299 = vsyncadd %s293, %s298
          %s300 = smul.addr %s22, 2
          %s301 = smul.addr %s300, 64
          %s302 = scalar_lea.hbm %s0, %s301
          %s303 = sshll.u32 %s296, 4
          %s304 = int_to_ptr.vmem [resolvable:$true] %s303
          %309 = dma.hbm_to_vmem [thread:$0]  %s302, 128, %s304, %s293, 64, 64, 4
        $region44: #{_lambda_.14} parent=39 // pred_fallthru
          _
      $region40: #{_lambda_.14} parent=5 // pred_fallthru
        _
      %p310 = scmp.le.s32.totalorder 1, %s22
      %p311 = scmp.lt.s32.totalorder %s22, 3
      %p312 = pnand %p310, %p311
      %p313 = pneg %p312
      // Predicated region
      $region45: #{_lambda_.14} parent=5 // pred_check
        _
      $region46: #{_lambda_.14} parent=5 // pred_check_branch
        %315 = sbr.rel (%p312) target = $region48
      $region47: #{_lambda_.14} parent=5 // pred_region
        %s316 = ssub.s32 %s22, 1
        %s317 = sand.u32 %s35, 1
        %s318 = scalar_lea.sflag [#allocation3], %s317
        %s319 = sand.u32 %s35, 1
        %s320 = smul.addr %s319, 8
        %s321 = scalar_lea.vmem [#allocation2], %s320
        // Predicated region
        $region49: #{_lambda_.14} parent=47 // pred_check
          %p322 = pneg %p48
        $region50: #{_lambda_.14} parent=47 // pred_check_branch
          %324 = sbr.rel (%p322) target = $region52
        $region51: #{_lambda_.14} parent=47 // pred_region
          %325 = dma.done %s318, 128
        $region52: #{_lambda_.14} parent=47 // pred_fallthru
          _
        // Predicated region
        $region53: #{_lambda_.14} parent=47 // pred_check
          %p326 = pneg %p69
        $region54: #{_lambda_.14} parent=47 // pred_check_branch
          %328 = sbr.rel (%p326) target = $region56
        $region55: #{_lambda_.14} parent=47 // pred_region
          %329 = dma.done [#allocation6], 16
        $region56: #{_lambda_.14} parent=47 // pred_fallthru
          _
        // Predicated region
        $region57: #{_lambda_.14} parent=47 // pred_check
          %p330 = pneg %p90
        $region58: #{_lambda_.14} parent=47 // pred_check_branch
          %332 = sbr.rel (%p330) target = $region60
        $region59: #{_lambda_.14} parent=47 // pred_region
          %333 = dma.done [#allocation6], 16
        $region60: #{_lambda_.14} parent=47 // pred_fallthru
          _
        // Predicated region
        $region61: #{_lambda_.14} parent=47 // pred_check
          %p334 = pneg %p111
        $region62: #{_lambda_.14} parent=47 // pred_check_branch
          %336 = sbr.rel (%p334) target = $region64
        $region63: #{_lambda_.14} parent=47 // pred_region
          %337 = dma.done [#allocation9], 256
        $region64: #{_lambda_.14} parent=47 // pred_fallthru
          _
        // Predicated region
        $region65: #{_lambda_.14} parent=47 // pred_check
          %p338 = pneg %p132
        $region66: #{_lambda_.14} parent=47 // pred_check_branch
          %340 = sbr.rel (%p338) target = $region68
        $region67: #{_lambda_.14} parent=47 // pred_region
          %341 = dma.done [#allocation9], 16
        $region68: #{_lambda_.14} parent=47 // pred_fallthru
          _
        // Predicated region
        $region69: #{_lambda_.14} parent=47 // pred_check
          %p342 = pneg %p153
        $region70: #{_lambda_.14} parent=47 // pred_check_branch
          %344 = sbr.rel (%p342) target = $region72
        $region71: #{_lambda_.14} parent=47 // pred_region
          %345 = dma.done [#allocation12], 256
        $region72: #{_lambda_.14} parent=47 // pred_fallthru
          _
        // Predicated region
        $region73: #{_lambda_.14} parent=47 // pred_check
          %p346 = pneg %p174
        $region74: #{_lambda_.14} parent=47 // pred_check_branch
          %348 = sbr.rel (%p346) target = $region76
        $region75: #{_lambda_.14} parent=47 // pred_region
          %349 = dma.done [#allocation12], 16
        $region76: #{_lambda_.14} parent=47 // pred_fallthru
          _
        %s350 = sand.u32 %s35, 1
        %s351 = scalar_lea.sflag [#allocation3], %s350
        %s352 = sand.u32 %s35, 1
        %s353 = smul.addr %s352, 8
        %s354 = scalar_lea.vmem [#allocation2], %s353
        %p355 = pneg %p48
        %p356 = pneg %p45
        %p357 = pneg %p69
        %p358 = pneg %p66
        %p359 = pneg %p90
        %p360 = pneg %p87
        %p361 = pneg %p111
        %p362 = pneg %p108
        %p363 = pneg %p132
        %p364 = pneg %p129
        %p365 = pneg %p153
        %p366 = pneg %p150
        %p367 = pneg %p174
        %p368 = pneg %p171
        %p369 = pneg %p200
        %p370 = pneg %p197
        %s371 = sand.u32 %s187, 1
        %s372 = scalar_lea.sflag [#allocation4], %s371
        %s373 = sand.u32 %s187, 1
        %s374 = smul.addr %s373, 8
        %s375 = scalar_lea.vmem [#allocation14], %s374
        %v377 = vld [vmem:[%s321] sm:$0xf]
        %v378 = vld [vmem:[%s321 + $0x4] sm:$0xf]
        %v379 = vunpack.c.l.bf16 %v377
        %v380 = vunpack.c.l.bf16 %v378
        %v381 = vld [vmem:[#allocation5] sm:$0x1]
        %v382 = vld [vmem:[#allocation7] sm:$0x1]
        %vm383 = vcmask 261120
        %v384 = vsel %vm383, %v379, 0.0
        %385 = vadd.xlane.f32.xlu0 %v384
        %v386 = vpop.xlane.xlu0 %385
        %v387 = vsel %vm383, %v380, 0.0
        %388 = vadd.xlane.f32.xlu0 %v387
        %v389 = vpop.xlane.xlu0 %388
        %v390 = vrcp.pop 32.0
        %v391 = vmul.f32 %v386, %v390
        %v392 = vmul.f32 %v389, %v390
        %v393 = vsub.f32 %v379, %v391
        %v394 = vsub.f32 %v380, %v392
        %v395 = vmul.f32 %v393, %v393
        %v396 = vmul.f32 %v394, %v394
        %v397 = vsel %vm383, %v395, 0.0
        %398 = vadd.xlane.f32.xlu0 %v397
        %v399 = vpop.xlane.xlu0 %398
        %v400 = vsel %vm383, %v396, 0.0
        %401 = vadd.xlane.f32.xlu0 %v400
        %v402 = vpop.xlane.xlu0 %401
        %v403 = vmul.f32 %v399, %v390
        %v404 = vmul.f32 %v402, %v390
        %v405 = vadd.f32 %v403, 1e-05
        %v406 = vadd.f32 %v404, 1e-05
        %v407 = vrsqrt.pop %v405
        %v408 = vrsqrt.pop %v406
        %v409 = vmul.f32 %v393, %v407
        %v410 = vmul.f32 %v394, %v408
        %v412 = vlaneseq
        %v413 = vshrl.u32 %v412, 7
        %v414 = vsub.s32 0, %v413
        %v415 = vrot.slane %v381, %v414
        %v417 = vmul.f32 %v409, %v415
        %v418 = vmul.f32 %v410, %v415
        %v420 = vlaneseq
        %v421 = vshrl.u32 %v420, 7
        %v422 = vsub.s32 0, %v421
        %v423 = vrot.slane %v382, %v422
        %v425 = vadd.f32 %v417, %v423
        %v426 = vadd.f32 %v418, %v423
        %v427 = vpack.c.bf16 %v426, %v425
        %v428 = vld [vmem:[#allocation8] sm:$0xf]
        %v429 = vld [vmem:[#allocation8 + $0x4] sm:$0xf]
        %v430 = vld [vmem:[#allocation8 + $0x8] sm:$0xf]
        %v431 = vld [vmem:[#allocation8 + $0xc] sm:$0xf]
        %v432 = vld [vmem:[#allocation10] sm:$0x1]
        %v434 = vlaneseq
        %v435 = vshrl.u32 %v434, 7
        %v436 = vsub.s32 0, %v435
        %v437 = vrot.slane %v432, %v436
        %v443 = vunpack.c.l.b16 %v428
        %v444 = vunpack.c.l.b16 %v429
        %v445 = vunpack.c.l.b16 %v430
        %v446 = vunpack.c.l.b16 %v431
        %v447 = vpack.c.b16 %v444, %v443
        %v448 = vpack.c.b16 %v446, %v445
        %v452 = vsel %vm383, %v427, 0
        %454 = vmatprep.subr.bf16.mxu0 0
        %455 = vmatpush1.bf16.msra.mxu0 %v447
        %456 = vmatprep.subr.bf16.mxu0 0
        %457 = vmatpush1.bf16.msra.mxu0 %v448
        %458 = vmatprep.subr.bf16.mxu0 0
        %459 = vmatpush1.bf16.msra.mxu0 0
        %460 = vmatprep.subr.bf16.mxu0 0
        %461 = vmatpush1.bf16.msra.mxu0 0
        %462 = vmatprep.subr.bf16.mxu0 0
        %463 = vmatpush1.bf16.msra.mxu0 0
        %464 = vmatprep.subr.bf16.mxu0 0
        %465 = vmatpush1.bf16.msra.mxu0 0
        %466 = vmatprep.subr.bf16.mxu0 0
        %467 = vmatpush1.bf16.msra.mxu0 0
        %468 = vmatprep.subr.bf16.mxu0 0
        %469 = vmatpush1.bf16.msra.mxu0 0
        %470 = vmatprep.subr.bf16.mxu0 0
        %471 = vmatpush1.bf16.msra.mxu0 0
        %472 = vmatprep.subr.bf16.mxu0 0
        %473 = vmatpush1.bf16.msra.mxu0 0
        %474 = vmatprep.subr.bf16.mxu0 0
        %475 = vmatpush1.bf16.msra.mxu0 0
        %476 = vmatprep.subr.bf16.mxu0 0
        %477 = vmatpush1.bf16.msra.mxu0 0
        %478 = vmatprep.subr.bf16.mxu0 0
        %479 = vmatpush1.bf16.msra.mxu0 0
        %480 = vmatprep.subr.bf16.mxu0 0
        %481 = vmatpush1.bf16.msra.mxu0 0
        %482 = vmatprep.subr.bf16.mxu0 0
        %483 = vmatpush1.bf16.msra.mxu0 0
        %484 = vmatprep.subr.bf16.mxu0 0
        %485 = vmatpush1.bf16.msra.mxu0 0
        %486 = vmatprep.mubr.bf16.mxu0 0
        %487 = vmatmul.mubr.bf16.gmra.mrb[0].mxu0 %v452
        %v488 = vpop.f32.mrb[0].mxu0
        %v489 = vadd.f32 %v437, %v488
        %v490 = vpop.f32.mrb[0].mxu0
        %v491 = vpop.f32.mrb[0].mxu0
        %v492 = vadd.f32 %v437, %v491
        %v493 = vpop.f32.mrb[0].mxu0
        %494 = vdwg.mxu0
        %v495 = vpack.c.bf16 %v492, %v489
        %497 = vrot.lane.b32.xlu0 %v495, 96
        %v498 = vpop.permute.xlu0 %497
        %vm499 = vcmask 64512
        %v501 = vsel %vm499, %v495, 0
        %v504 = vsel %vm499, %v498, 0
        %506 = vmatprep.subr.bf16.mxu0 0
        %507 = vmatpush1.bf16.xpose.msra.mxu0 %v504
        %508 = vmatprep.subr.bf16.mxu0 0
        %509 = vmatpush1.bf16.xpose.msra.mxu0 0
        %510 = vmatprep.subr.bf16.mxu0 0
        %511 = vmatpush1.bf16.xpose.msra.mxu0 0
        %512 = vmatprep.subr.bf16.mxu0 0
        %513 = vmatpush1.bf16.xpose.msra.mxu0 0
        %514 = vmatprep.subr.bf16.mxu0 0
        %515 = vmatpush1.bf16.xpose.msra.mxu0 0
        %516 = vmatprep.subr.bf16.mxu0 0
        %517 = vmatpush1.bf16.xpose.msra.mxu0 0
        %518 = vmatprep.subr.bf16.mxu0 0
        %519 = vmatpush1.bf16.xpose.msra.mxu0 0
        %520 = vmatprep.subr.bf16.mxu0 0
        %521 = vmatpush1.bf16.xpose.msra.mxu0 0
        %522 = vmatprep.subr.bf16.mxu0 0
        %523 = vmatpush1.bf16.xpose.msra.mxu0 0
        %524 = vmatprep.subr.bf16.mxu0 0
        %525 = vmatpush1.bf16.xpose.msra.mxu0 0
        %526 = vmatprep.subr.bf16.mxu0 0
        %527 = vmatpush1.bf16.xpose.msra.mxu0 0
        %528 = vmatprep.subr.bf16.mxu0 0
        %529 = vmatpush1.bf16.xpose.msra.mxu0 0
        %530 = vmatprep.subr.bf16.mxu0 0
        %531 = vmatpush1.bf16.xpose.msra.mxu0 0
        %532 = vmatprep.subr.bf16.mxu0 0
        %533 = vmatpush1.bf16.xpose.msra.mxu0 0
        %534 = vmatprep.subr.bf16.mxu0 0
        %535 = vmatpush1.bf16.xpose.msra.mxu0 0
        %536 = vmatprep.subr.bf16.mxu0 0
        %537 = vmatpush1.bf16.xpose.msra.mxu0 0
        %538 = vmatprep.mubr.bf16.mxu0 0
        %539 = vmatmul.mubr.bf16.gmra.mrb[0].mxu0 %v501
        %v540 = vpop.f32.mrb[0].mxu0
        %v541 = vadd.f32 0.0, %v540
        %v542 = vpop.f32.mrb[0].mxu0
        %v543 = vpop.f32.mrb[0].mxu0
        %v544 = vadd.f32 0.0, %v543
        %v545 = vpop.f32.mrb[0].mxu0
        %546 = vdwg.mxu0
        %v547 = vmul.f32 %v541, 0.35355338
        %v548 = vmul.f32 %v544, 0.35355338
        %vm549 = vcmask 130048
        %v550 = vsel %vm549, %v547, -inf
        %551 = vmax.xlane.f32.xlu0 %v550
        %v552 = vpop.xlane.xlu0 %551
        %v553 = vsel %vm549, %v548, -inf
        %554 = vmax.xlane.f32.xlu0 %v553
        %v555 = vpop.xlane.xlu0 %554
        %v556 = vsub.f32 %v547, %v552
        %v557 = vsub.f32 %v548, %v555
        %v558 = vmul.f32 %v556, 1.442695
        %v559 = vpow.pop %v558
        %v560 = vmul.f32 %v557, 1.442695
        %v561 = vpow.pop %v560
        %v562 = vsel %vm549, %v559, 0.0
        %563 = vadd.xlane.f32.xlu0 %v562
        %v564 = vpop.xlane.xlu0 %563
        %v565 = vsel %vm549, %v561, 0.0
        %566 = vadd.xlane.f32.xlu0 %v565
        %v567 = vpop.xlane.xlu0 %566
        %v568 = vrcp.pop %v564
        %v569 = vrcp.pop %v567
        %v570 = vmul.f32 %v559, %v568
        %v571 = vmul.f32 %v561, %v569
        %v572 = vpack.c.bf16 %v571, %v570
        %573 = vrot.lane.b32.xlu0 %v495, 64
        %v574 = vpop.permute.xlu0 %573
        %v577 = vsel %vm549, %v572, 0
        %579 = vmatprep.subr.bf16.mxu0 0
        %580 = vmatpush1.bf16.msra.mxu0 %v574
        %581 = vmatprep.subr.bf16.mxu0 0
        %582 = vmatpush1.bf16.msra.mxu0 0
        %583 = vmatprep.subr.bf16.mxu0 0
        %584 = vmatpush1.bf16.msra.mxu0 0
        %585 = vmatprep.subr.bf16.mxu0 0
        %586 = vmatpush1.bf16.msra.mxu0 0
        %587 = vmatprep.subr.bf16.mxu0 0
        %588 = vmatpush1.bf16.msra.mxu0 0
        %589 = vmatprep.subr.bf16.mxu0 0
        %590 = vmatpush1.bf16.msra.mxu0 0
        %591 = vmatprep.subr.bf16.mxu0 0
        %592 = vmatpush1.bf16.msra.mxu0 0
        %593 = vmatprep.subr.bf16.mxu0 0
        %594 = vmatpush1.bf16.msra.mxu0 0
        %595 = vmatprep.subr.bf16.mxu0 0
        %596 = vmatpush1.bf16.msra.mxu0 0
        %597 = vmatprep.subr.bf16.mxu0 0
        %598 = vmatpush1.bf16.msra.mxu0 0
        %599 = vmatprep.subr.bf16.mxu0 0
        %600 = vmatpush1.bf16.msra.mxu0 0
        %601 = vmatprep.subr.bf16.mxu0 0
        %602 = vmatpush1.bf16.msra.mxu0 0
        %603 = vmatprep.subr.bf16.mxu0 0
        %604 = vmatpush1.bf16.msra.mxu0 0
        %605 = vmatprep.subr.bf16.mxu0 0
        %606 = vmatpush1.bf16.msra.mxu0 0
        %607 = vmatprep.subr.bf16.mxu0 0
        %608 = vmatpush1.bf16.msra.mxu0 0
        %609 = vmatprep.subr.bf16.mxu0 0
        %610 = vmatpush1.bf16.msra.mxu0 0
        %611 = vmatprep.mubr.bf16.mxu0 0
        %612 = vmatmul.mubr.bf16.gmra.mrb[0].mxu0 %v577
        %v613 = vpop.f32.mrb[0].mxu0
        %v614 = vadd.f32 0.0, %v613
        %v615 = vpop.f32.mrb[0].mxu0
        %v616 = vpop.f32.mrb[0].mxu0
        %v617 = vadd.f32 0.0, %v616
        %v618 = vpop.f32.mrb[0].mxu0
        %619 = vdwg.mxu0
        %620 = vrot.lane.b32.xlu0 %v495, 120
        %v621 = vpop.permute.xlu0 %620
        %622 = vrot.lane.b32.xlu0 %v495, 88
        %v623 = vpop.permute.xlu0 %622
        %v625 = vsel %vm499, %v621, 0
        %v628 = vsel %vm499, %v623, 0
        %630 = vmatprep.subr.bf16.mxu0 0
        %631 = vmatpush1.bf16.xpose.msra.mxu0 %v628
        %632 = vmatprep.subr.bf16.mxu0 0
        %633 = vmatpush1.bf16.xpose.msra.mxu0 0
        %634 = vmatprep.subr.bf16.mxu0 0
        %635 = vmatpush1.bf16.xpose.msra.mxu0 0
        %636 = vmatprep.subr.bf16.mxu0 0
        %637 = vmatpush1.bf16.xpose.msra.mxu0 0
        %638 = vmatprep.subr.bf16.mxu0 0
        %639 = vmatpush1.bf16.xpose.msra.mxu0 0
        %640 = vmatprep.subr.bf16.mxu0 0
        %641 = vmatpush1.bf16.xpose.msra.mxu0 0
        %642 = vmatprep.subr.bf16.mxu0 0
        %643 = vmatpush1.bf16.xpose.msra.mxu0 0
        %644 = vmatprep.subr.bf16.mxu0 0
        %645 = vmatpush1.bf16.xpose.msra.mxu0 0
        %646 = vmatprep.subr.bf16.mxu0 0
        %647 = vmatpush1.bf16.xpose.msra.mxu0 0
        %648 = vmatprep.subr.bf16.mxu0 0
        %649 = vmatpush1.bf16.xpose.msra.mxu0 0
        %650 = vmatprep.subr.bf16.mxu0 0
        %651 = vmatpush1.bf16.xpose.msra.mxu0 0
        %652 = vmatprep.subr.bf16.mxu0 0
        %653 = vmatpush1.bf16.xpose.msra.mxu0 0
        %654 = vmatprep.subr.bf16.mxu0 0
        %655 = vmatpush1.bf16.xpose.msra.mxu0 0
        %656 = vmatprep.subr.bf16.mxu0 0
        %657 = vmatpush1.bf16.xpose.msra.mxu0 0
        %658 = vmatprep.subr.bf16.mxu0 0
        %659 = vmatpush1.bf16.xpose.msra.mxu0 0
        %660 = vmatprep.subr.bf16.mxu0 0
        %661 = vmatpush1.bf16.xpose.msra.mxu0 0
        %662 = vmatprep.mubr.bf16.mxu0 0
        %663 = vmatmul.mubr.bf16.gmra.mrb[0].mxu0 %v625
        %v664 = vpop.f32.mrb[0].mxu0
        %v665 = vadd.f32 0.0, %v664
        %v666 = vpop.f32.mrb[0].mxu0
        %v667 = vpop.f32.mrb[0].mxu0
        %v668 = vadd.f32 0.0, %v667
        %v669 = vpop.f32.mrb[0].mxu0
        %670 = vdwg.mxu0
        %v671 = vmul.f32 %v665, 0.35355338
        %v672 = vmul.f32 %v668, 0.35355338
        %v673 = vsel %vm549, %v671, -inf
        %674 = vmax.xlane.f32.xlu0 %v673
        %v675 = vpop.xlane.xlu0 %674
        %v676 = vsel %vm549, %v672, -inf
        %677 = vmax.xlane.f32.xlu0 %v676
        %v678 = vpop.xlane.xlu0 %677
        %v679 = vsub.f32 %v671, %v675
        %v680 = vsub.f32 %v672, %v678
        %v681 = vmul.f32 %v679, 1.442695
        %v682 = vpow.pop %v681
        %v683 = vmul.f32 %v680, 1.442695
        %v684 = vpow.pop %v683
        %v685 = vsel %vm549, %v682, 0.0
        %686 = vadd.xlane.f32.xlu0 %v685
        %v687 = vpop.xlane.xlu0 %686
        %v688 = vsel %vm549, %v684, 0.0
        %689 = vadd.xlane.f32.xlu0 %v688
        %v690 = vpop.xlane.xlu0 %689
        %v691 = vrcp.pop %v687
        %v692 = vrcp.pop %v690
        %v693 = vmul.f32 %v682, %v691
        %v694 = vmul.f32 %v684, %v692
        %v695 = vpack.c.bf16 %v694, %v693
        %696 = vrot.lane.b32.xlu0 %v495, 56
        %v697 = vpop.permute.xlu0 %696
        %v700 = vsel %vm549, %v695, 0
        %702 = vmatprep.subr.bf16.mxu0 0
        %703 = vmatpush1.bf16.msra.mxu0 %v697
        %704 = vmatprep.subr.bf16.mxu0 0
        %705 = vmatpush1.bf16.msra.mxu0 0
        %706 = vmatprep.subr.bf16.mxu0 0
        %707 = vmatpush1.bf16.msra.mxu0 0
        %708 = vmatprep.subr.bf16.mxu0 0
        %709 = vmatpush1.bf16.msra.mxu0 0
        %710 = vmatprep.subr.bf16.mxu0 0
        %711 = vmatpush1.bf16.msra.mxu0 0
        %712 = vmatprep.subr.bf16.mxu0 0
        %713 = vmatpush1.bf16.msra.mxu0 0
        %714 = vmatprep.subr.bf16.mxu0 0
        %715 = vmatpush1.bf16.msra.mxu0 0
        %716 = vmatprep.subr.bf16.mxu0 0
        %717 = vmatpush1.bf16.msra.mxu0 0
        %718 = vmatprep.subr.bf16.mxu0 0
        %719 = vmatpush1.bf16.msra.mxu0 0
        %720 = vmatprep.subr.bf16.mxu0 0
        %721 = vmatpush1.bf16.msra.mxu0 0
        %722 = vmatprep.subr.bf16.mxu0 0
        %723 = vmatpush1.bf16.msra.mxu0 0
        %724 = vmatprep.subr.bf16.mxu0 0
        %725 = vmatpush1.bf16.msra.mxu0 0
        %726 = vmatprep.subr.bf16.mxu0 0
        %727 = vmatpush1.bf16.msra.mxu0 0
        %728 = vmatprep.subr.bf16.mxu0 0
        %729 = vmatpush1.bf16.msra.mxu0 0
        %730 = vmatprep.subr.bf16.mxu0 0
        %731 = vmatpush1.bf16.msra.mxu0 0
        %732 = vmatprep.subr.bf16.mxu0 0
        %733 = vmatpush1.bf16.msra.mxu0 0
        %734 = vmatprep.mubr.bf16.mxu0 0
        %735 = vmatmul.mubr.bf16.gmra.mrb[0].mxu0 %v700
        %v736 = vpop.f32.mrb[0].mxu0
        %v737 = vadd.f32 0.0, %v736
        %v738 = vpop.f32.mrb[0].mxu0
        %v739 = vpop.f32.mrb[0].mxu0
        %v740 = vadd.f32 0.0, %v739
        %v741 = vpop.f32.mrb[0].mxu0
        %742 = vdwg.mxu0
        %743 = vrot.lane.b32.xlu0 %v495, 112
        %v744 = vpop.permute.xlu0 %743
        %745 = vrot.lane.b32.xlu0 %v495, 80
        %v746 = vpop.permute.xlu0 %745
        %v748 = vsel %vm499, %v744, 0
        %v751 = vsel %vm499, %v746, 0
        %753 = vmatprep.subr.bf16.mxu0 0
        %754 = vmatpush1.bf16.xpose.msra.mxu0 %v751
        %755 = vmatprep.subr.bf16.mxu0 0
        %756 = vmatpush1.bf16.xpose.msra.mxu0 0
        %757 = vmatprep.subr.bf16.mxu0 0
        %758 = vmatpush1.bf16.xpose.msra.mxu0 0
        %759 = vmatprep.subr.bf16.mxu0 0
        %760 = vmatpush1.bf16.xpose.msra.mxu0 0
        %761 = vmatprep.subr.bf16.mxu0 0
        %762 = vmatpush1.bf16.xpose.msra.mxu0 0
        %763 = vmatprep.subr.bf16.mxu0 0
        %764 = vmatpush1.bf16.xpose.msra.mxu0 0
        %765 = vmatprep.subr.bf16.mxu0 0
        %766 = vmatpush1.bf16.xpose.msra.mxu0 0
        %767 = vmatprep.subr.bf16.mxu0 0
        %768 = vmatpush1.bf16.xpose.msra.mxu0 0
        %769 = vmatprep.subr.bf16.mxu0 0
        %770 = vmatpush1.bf16.xpose.msra.mxu0 0
        %771 = vmatprep.subr.bf16.mxu0 0
        %772 = vmatpush1.bf16.xpose.msra.mxu0 0
        %773 = vmatprep.subr.bf16.mxu0 0
        %774 = vmatpush1.bf16.xpose.msra.mxu0 0
        %775 = vmatprep.subr.bf16.mxu0 0
        %776 = vmatpush1.bf16.xpose.msra.mxu0 0
        %777 = vmatprep.subr.bf16.mxu0 0
        %778 = vmatpush1.bf16.xpose.msra.mxu0 0
        %779 = vmatprep.subr.bf16.mxu0 0
        %780 = vmatpush1.bf16.xpose.msra.mxu0 0
        %781 = vmatprep.subr.bf16.mxu0 0
        %782 = vmatpush1.bf16.xpose.msra.mxu0 0
        %783 = vmatprep.subr.bf16.mxu0 0
        %784 = vmatpush1.bf16.xpose.msra.mxu0 0
        %785 = vmatprep.mubr.bf16.mxu0 0
        %786 = vmatmul.mubr.bf16.gmra.mrb[0].mxu0 %v748
        %v787 = vpop.f32.mrb[0].mxu0
        %v788 = vadd.f32 0.0, %v787
        %v789 = vpop.f32.mrb[0].mxu0
        %v790 = vpop.f32.mrb[0].mxu0
        %v791 = vadd.f32 0.0, %v790
        %v792 = vpop.f32.mrb[0].mxu0
        %793 = vdwg.mxu0
        %v794 = vmul.f32 %v788, 0.35355338
        %v795 = vmul.f32 %v791, 0.35355338
        %v796 = vsel %vm549, %v794, -inf
        %797 = vmax.xlane.f32.xlu0 %v796
        %v798 = vpop.xlane.xlu0 %797
        %v799 = vsel %vm549, %v795, -inf
        %800 = vmax.xlane.f32.xlu0 %v799
        %v801 = vpop.xlane.xlu0 %800
        %v802 = vsub.f32 %v794, %v798
        %v803 = vsub.f32 %v795, %v801
        %v804 = vmul.f32 %v802, 1.442695
        %v805 = vpow.pop %v804
        %v806 = vmul.f32 %v803, 1.442695
        %v807 = vpow.pop %v806
        %v808 = vsel %vm549, %v805, 0.0
        %809 = vadd.xlane.f32.xlu0 %v808
        %v810 = vpop.xlane.xlu0 %809
        %v811 = vsel %vm549, %v807, 0.0
        %812 = vadd.xlane.f32.xlu0 %v811
        %v813 = vpop.xlane.xlu0 %812
        %v814 = vrcp.pop %v810
        %v815 = vrcp.pop %v813
        %v816 = vmul.f32 %v805, %v814
        %v817 = vmul.f32 %v807, %v815
        %v818 = vpack.c.bf16 %v817, %v816
        %819 = vrot.lane.b32.xlu0 %v495, 48
        %v820 = vpop.permute.xlu0 %819
        %v823 = vsel %vm549, %v818, 0
        %825 = vmatprep.subr.bf16.mxu0 0
        %826 = vmatpush1.bf16.msra.mxu0 %v820
        %827 = vmatprep.subr.bf16.mxu0 0
        %828 = vmatpush1.bf16.msra.mxu0 0
        %829 = vmatprep.subr.bf16.mxu0 0
        %830 = vmatpush1.bf16.msra.mxu0 0
        %831 = vmatprep.subr.bf16.mxu0 0
        %832 = vmatpush1.bf16.msra.mxu0 0
        %833 = vmatprep.subr.bf16.mxu0 0
        %834 = vmatpush1.bf16.msra.mxu0 0
        %835 = vmatprep.subr.bf16.mxu0 0
        %836 = vmatpush1.bf16.msra.mxu0 0
        %837 = vmatprep.subr.bf16.mxu0 0
        %838 = vmatpush1.bf16.msra.mxu0 0
        %839 = vmatprep.subr.bf16.mxu0 0
        %840 = vmatpush1.bf16.msra.mxu0 0
        %841 = vmatprep.subr.bf16.mxu0 0
        %842 = vmatpush1.bf16.msra.mxu0 0
        %843 = vmatprep.subr.bf16.mxu0 0
        %844 = vmatpush1.bf16.msra.mxu0 0
        %845 = vmatprep.subr.bf16.mxu0 0
        %846 = vmatpush1.bf16.msra.mxu0 0
        %847 = vmatprep.subr.bf16.mxu0 0
        %848 = vmatpush1.bf16.msra.mxu0 0
        %849 = vmatprep.subr.bf16.mxu0 0
        %850 = vmatpush1.bf16.msra.mxu0 0
        %851 = vmatprep.subr.bf16.mxu0 0
        %852 = vmatpush1.bf16.msra.mxu0 0
        %853 = vmatprep.subr.bf16.mxu0 0
        %854 = vmatpush1.bf16.msra.mxu0 0
        %855 = vmatprep.subr.bf16.mxu0 0
        %856 = vmatpush1.bf16.msra.mxu0 0
        %857 = vmatprep.mubr.bf16.mxu0 0
        %858 = vmatmul.mubr.bf16.gmra.mrb[0].mxu0 %v823
        %v859 = vpop.f32.mrb[0].mxu0
        %v860 = vadd.f32 0.0, %v859
        %v861 = vpop.f32.mrb[0].mxu0
        %v862 = vpop.f32.mrb[0].mxu0
        %v863 = vadd.f32 0.0, %v862
        %v864 = vpop.f32.mrb[0].mxu0
        %865 = vdwg.mxu0
        %866 = vrot.lane.b32.xlu0 %v495, 104
        %v867 = vpop.permute.xlu0 %866
        %868 = vrot.lane.b32.xlu0 %v495, 72
        %v869 = vpop.permute.xlu0 %868
        %v871 = vsel %vm499, %v867, 0
        %v874 = vsel %vm499, %v869, 0
        %876 = vmatprep.subr.bf16.mxu0 0
        %877 = vmatpush1.bf16.xpose.msra.mxu0 %v874
        %878 = vmatprep.subr.bf16.mxu0 0
        %879 = vmatpush1.bf16.xpose.msra.mxu0 0
        %880 = vmatprep.subr.bf16.mxu0 0
        %881 = vmatpush1.bf16.xpose.msra.mxu0 0
        %882 = vmatprep.subr.bf16.mxu0 0
        %883 = vmatpush1.bf16.xpose.msra.mxu0 0
        %884 = vmatprep.subr.bf16.mxu0 0
        %885 = vmatpush1.bf16.xpose.msra.mxu0 0
        %886 = vmatprep.subr.bf16.mxu0 0
        %887 = vmatpush1.bf16.xpose.msra.mxu0 0
        %888 = vmatprep.subr.bf16.mxu0 0
        %889 = vmatpush1.bf16.xpose.msra.mxu0 0
        %890 = vmatprep.subr.bf16.mxu0 0
        %891 = vmatpush1.bf16.xpose.msra.mxu0 0
        %892 = vmatprep.subr.bf16.mxu0 0
        %893 = vmatpush1.bf16.xpose.msra.mxu0 0
        %894 = vmatprep.subr.bf16.mxu0 0
        %895 = vmatpush1.bf16.xpose.msra.mxu0 0
        %896 = vmatprep.subr.bf16.mxu0 0
        %897 = vmatpush1.bf16.xpose.msra.mxu0 0
        %898 = vmatprep.subr.bf16.mxu0 0
        %899 = vmatpush1.bf16.xpose.msra.mxu0 0
        %900 = vmatprep.subr.bf16.mxu0 0
        %901 = vmatpush1.bf16.xpose.msra.mxu0 0
        %902 = vmatprep.subr.bf16.mxu0 0
        %903 = vmatpush1.bf16.xpose.msra.mxu0 0
        %904 = vmatprep.subr.bf16.mxu0 0
        %905 = vmatpush1.bf16.xpose.msra.mxu0 0
        %906 = vmatprep.subr.bf16.mxu0 0
        %907 = vmatpush1.bf16.xpose.msra.mxu0 0
        %908 = vmatprep.mubr.bf16.mxu0 0
        %909 = vmatmul.mubr.bf16.gmra.mrb[0].mxu0 %v871
        %v910 = vpop.f32.mrb[0].mxu0
        %v911 = vadd.f32 0.0, %v910
        %v912 = vpop.f32.mrb[0].mxu0
        %v913 = vpop.f32.mrb[0].mxu0
        %v914 = vadd.f32 0.0, %v913
        %v915 = vpop.f32.mrb[0].mxu0
        %916 = vdwg.mxu0
        %v917 = vmul.f32 %v911, 0.35355338
        %v918 = vmul.f32 %v914, 0.35355338
        %v919 = vsel %vm549, %v917, -inf
        %920 = vmax.xlane.f32.xlu0 %v919
        %v921 = vpop.xlane.xlu0 %920
        %v922 = vsel %vm549, %v918, -inf
        %923 = vmax.xlane.f32.xlu0 %v922
        %v924 = vpop.xlane.xlu0 %923
        %v925 = vsub.f32 %v917, %v921
        %v926 = vsub.f32 %v918, %v924
        %v927 = vmul.f32 %v925, 1.442695
        %v928 = vpow.pop %v927
        %v929 = vmul.f32 %v926, 1.442695
        %v930 = vpow.pop %v929
        %v931 = vsel %vm549, %v928, 0.0
        %932 = vadd.xlane.f32.xlu0 %v931
        %v933 = vpop.xlane.xlu0 %932
        %v934 = vsel %vm549, %v930, 0.0
        %935 = vadd.xlane.f32.xlu0 %v934
        %v936 = vpop.xlane.xlu0 %935
        %v937 = vrcp.pop %v933
        %v938 = vrcp.pop %v936
        %v939 = vmul.f32 %v928, %v937
        %v940 = vmul.f32 %v930, %v938
        %v941 = vpack.c.bf16 %v940, %v939
        %942 = vrot.lane.b32.xlu0 %v495, 40
        %v943 = vpop.permute.xlu0 %942
        %v946 = vsel %vm549, %v941, 0
        %948 = vmatprep.subr.bf16.mxu0 0
        %949 = vmatpush1.bf16.msra.mxu0 %v943
        %950 = vmatprep.subr.bf16.mxu0 0
        %951 = vmatpush1.bf16.msra.mxu0 0
        %952 = vmatprep.subr.bf16.mxu0 0
        %953 = vmatpush1.bf16.msra.mxu0 0
        %954 = vmatprep.subr.bf16.mxu0 0
        %955 = vmatpush1.bf16.msra.mxu0 0
        %956 = vmatprep.subr.bf16.mxu0 0
        %957 = vmatpush1.bf16.msra.mxu0 0
        %958 = vmatprep.subr.bf16.mxu0 0
        %959 = vmatpush1.bf16.msra.mxu0 0
        %960 = vmatprep.subr.bf16.mxu0 0
        %961 = vmatpush1.bf16.msra.mxu0 0
        %962 = vmatprep.subr.bf16.mxu0 0
        %963 = vmatpush1.bf16.msra.mxu0 0
        %964 = vmatprep.subr.bf16.mxu0 0
        %965 = vmatpush1.bf16.msra.mxu0 0
        %966 = vmatprep.subr.bf16.mxu0 0
        %967 = vmatpush1.bf16.msra.mxu0 0
        %968 = vmatprep.subr.bf16.mxu0 0
        %969 = vmatpush1.bf16.msra.mxu0 0
        %970 = vmatprep.subr.bf16.mxu0 0
        %971 = vmatpush1.bf16.msra.mxu0 0
        %972 = vmatprep.subr.bf16.mxu0 0
        %973 = vmatpush1.bf16.msra.mxu0 0
        %974 = vmatprep.subr.bf16.mxu0 0
        %975 = vmatpush1.bf16.msra.mxu0 0
        %976 = vmatprep.subr.bf16.mxu0 0
        %977 = vmatpush1.bf16.msra.mxu0 0
        %978 = vmatprep.subr.bf16.mxu0 0
        %979 = vmatpush1.bf16.msra.mxu0 0
        %980 = vmatprep.mubr.bf16.mxu0 0
        %981 = vmatmul.mubr.bf16.gmra.mrb[0].mxu0 %v946
        %v982 = vpop.f32.mrb[0].mxu0
        %v983 = vadd.f32 0.0, %v982
        %v984 = vpop.f32.mrb[0].mxu0
        %v985 = vpop.f32.mrb[0].mxu0
        %v986 = vadd.f32 0.0, %v985
        %v987 = vpop.f32.mrb[0].mxu0
        %988 = vdwg.mxu0
        %991 = vrot.lane.b32.xlu0 %v737, 8
        %v992 = vpop.permute.xlu0 %991
        %993 = vrot.lane.b32.xlu0 %v740, 8
        %v994 = vpop.permute.xlu0 %993
        %999 = vrot.lane.b32.xlu0 %v860, 16
        %v1000 = vpop.permute.xlu0 %999
        %1001 = vrot.lane.b32.xlu0 %v863, 16
        %v1002 = vpop.permute.xlu0 %1001
        %1007 = vrot.lane.b32.xlu0 %v983, 24
        %v1008 = vpop.permute.xlu0 %1007
        %1009 = vrot.lane.b32.xlu0 %v986, 24
        %v1010 = vpop.permute.xlu0 %1009
        %v1013 = vsel %vm499, %v614, %v992
        %v1014 = vsel %vm499, %v617, %v994
        %v1015 = vsel %vm549, %v1013, %v1000
        %v1016 = vsel %vm549, %v1014, %v1002
        %vm1017 = vcmask 195584
        %v1018 = vsel %vm1017, %v1015, %v1008
        %v1019 = vsel %vm1017, %v1016, %v1010
        %v1020 = vpack.c.bf16 %v1019, %v1018
        %v1021 = vld [vmem:[#allocation11] sm:$0xf]
        %v1022 = vld [vmem:[#allocation11 + $0x4] sm:$0xf]
        %v1023 = vld [vmem:[#allocation11 + $0x8] sm:$0xf]
        %v1024 = vld [vmem:[#allocation11 + $0xc] sm:$0xf]
        %v1025 = vld [vmem:[#allocation13] sm:$0x1]
        %v1027 = vlaneseq
        %v1028 = vshrl.u32 %v1027, 7
        %v1029 = vsub.s32 0, %v1028
        %v1030 = vrot.slane %v1025, %v1029
        %v1036 = vunpack.c.l.b16 %v1021
        %v1037 = vunpack.c.l.b16 %v1022
        %v1038 = vunpack.c.l.b16 %v1023
        %v1039 = vunpack.c.l.b16 %v1024
        %v1040 = vpack.c.b16 %v1037, %v1036
        %v1041 = vpack.c.b16 %v1039, %v1038
        %v1045 = vsel %vm383, %v1020, 0
        %1047 = vmatprep.subr.bf16.mxu0 0
        %1048 = vmatpush1.bf16.msra.mxu0 %v1040
        %1049 = vmatprep.subr.bf16.mxu0 0
        %1050 = vmatpush1.bf16.msra.mxu0 %v1041
        %1051 = vmatprep.subr.bf16.mxu0 0
        %1052 = vmatpush1.bf16.msra.mxu0 0
        %1053 = vmatprep.subr.bf16.mxu0 0
        %1054 = vmatpush1.bf16.msra.mxu0 0
        %1055 = vmatprep.subr.bf16.mxu0 0
        %1056 = vmatpush1.bf16.msra.mxu0 0
        %1057 = vmatprep.subr.bf16.mxu0 0
        %1058 = vmatpush1.bf16.msra.mxu0 0
        %1059 = vmatprep.subr.bf16.mxu0 0
        %1060 = vmatpush1.bf16.msra.mxu0 0
        %1061 = vmatprep.subr.bf16.mxu0 0
        %1062 = vmatpush1.bf16.msra.mxu0 0
        %1063 = vmatprep.subr.bf16.mxu0 0
        %1064 = vmatpush1.bf16.msra.mxu0 0
        %1065 = vmatprep.subr.bf16.mxu0 0
        %1066 = vmatpush1.bf16.msra.mxu0 0
        %1067 = vmatprep.subr.bf16.mxu0 0
        %1068 = vmatpush1.bf16.msra.mxu0 0
        %1069 = vmatprep.subr.bf16.mxu0 0
        %1070 = vmatpush1.bf16.msra.mxu0 0
        %1071 = vmatprep.subr.bf16.mxu0 0
        %1072 = vmatpush1.bf16.msra.mxu0 0
        %1073 = vmatprep.subr.bf16.mxu0 0
        %1074 = vmatpush1.bf16.msra.mxu0 0
        %1075 = vmatprep.subr.bf16.mxu0 0
        %1076 = vmatpush1.bf16.msra.mxu0 0
        %1077 = vmatprep.subr.bf16.mxu0 0
        %1078 = vmatpush1.bf16.msra.mxu0 0
        %1079 = vmatprep.mubr.bf16.mxu0 0
        %1080 = vmatmul.mubr.bf16.gmra.mrb[0].mxu0 %v1045
        %v1081 = vpop.f32.mrb[0].mxu0
        %v1082 = vadd.f32 %v1030, %v1081
        %v1083 = vpop.f32.mrb[0].mxu0
        %v1084 = vpop.f32.mrb[0].mxu0
        %v1085 = vadd.f32 %v1030, %v1084
        %v1086 = vpop.f32.mrb[0].mxu0
        %1087 = vdwg.mxu0
        %v1088 = vadd.f32 %v379, %v1082
        %v1089 = vadd.f32 %v380, %v1085
        %v1090 = vpack.c.bf16 %v1089, %v1088
        %v1092 = vunpack.c.l.b16 %v1090
        %v1093 = vunpack.c.h.b16 %v1090
        %v1094 = vpack.c.b16 %v1092, %v1092
        %v1095 = vpack.c.b16 %v1093, %v1093
        %vm1098 = vcmask 257024
        %1099 = vst.msk [vmem:[%s375] sm:$0xf] %vm1098, %v1094
        %1100 = vst.msk [vmem:[%s375 + $0x4] sm:$0xf] %vm1098, %v1095
        %s1101 = sand.u32 %s187, 1
        %s1102 = scalar_lea.sflag [#allocation4], %s1101
        %s1103 = sand.u32 %s187, 1
        %s1104 = smul.addr %s1103, 8
        %s1105 = scalar_lea.vmem [#allocation14], %s1104
        // Predicated region
        $region77: #{_lambda_.14} parent=47 // pred_check
          %p1106 = pneg %p197
        $region78: #{_lambda_.14} parent=47 // pred_check_branch
          %1108 = sbr.rel (%p1106) target = $region80
        $region79: #{_lambda_.14} parent=47 // pred_region
          %s1110 = ssub.s32 128, 128
          %1111 = vsyncadd %s1102, %s1110
          %s1112 = smul.addr %s27, 2
          %s1113 = smul.addr %s1112, 64
          %s1114 = scalar_lea.hbm %s7, %s1113
          %s1115 = sshll.u32 %s1105, 4
          %s1116 = int_to_ptr.vmem [resolvable:$true] %s1115
          %1121 = dma.vmem_to_hbm [thread:$0]  %s1116, 128, %s1114, %s1102, 64, 64, 4
        $region80: #{_lambda_.14} parent=47 // pred_fallthru
          _
      $region48: #{_lambda_.14} parent=5 // pred_fallthru
        _
      %p1122 = scmp.le.s32.totalorder 2, %s22
      // Predicated region
      $region81: #{_lambda_.14} parent=5 // pred_check
        %p1123 = pneg %p1122
      $region82: #{_lambda_.14} parent=5 // pred_check_branch
        %1125 = sbr.rel (%p1123) target = $region84
      $region83: #{_lambda_.14} parent=5 // pred_region
        %s1126 = ssub.s32 %s22, 2
        // Predicated region
        $region85: #{_lambda_.14} parent=83 // pred_check
          %p1127 = pneg %p203
        $region86: #{_lambda_.14} parent=83 // pred_check_branch
          %1129 = sbr.rel (%p1127) target = $region88
        $region87: #{_lambda_.14} parent=83 // pred_region
          %s1130 = sand.u32 %s188, 1
          %s1131 = scalar_lea.sflag [#allocation4], %s1130
          %s1132 = sand.u32 %s188, 1
          %s1133 = smul.addr %s1132, 8
          %s1134 = scalar_lea.vmem [#allocation14], %s1133
          %1135 = dma.done %s1131, 128
        $region88: #{_lambda_.14} parent=83 // pred_fallthru
          _
      $region84: #{_lambda_.14} parent=5 // pred_fallthru
        _
    $region6: #{_lambda_.14} parent=1 // loop_footer
      %s26 = sadd.s32 1, %s22
    $region7: #{_lambda_.14} parent=1 // loop_footer_branch
      %21 = sbr.rel target = $region3
    $region8: #{_lambda_.14} parent=1 // loop_exit
      _
    %1136 = vsyncpa [#allocation3], 1
    %s1137 = scalar_lea.sflag [#allocation3], 1
    %1138 = vsyncpa %s1137, 1
    %1139 = vsyncpa [#allocation6], 1
    %1140 = vsyncpa [#allocation9], 1
    %1141 = vsyncpa [#allocation12], 1
    %1142 = vsyncpa [#allocation4], 1
    %s1143 = scalar_lea.sflag [#allocation4], 1
    %1144 = vsyncpa %s1143, 1

// kernel: _lambda_.25
$region0: #{_lambda_.25}
  #allocation0 [shape = 'u32[]', space=smem, size = 0x4, offset = 0x4, fixed_abs, tag = 'smem constant byte address 0x4 - core index']
  #allocation1 [shape = 'u32[144,128]{1,0:T(1,128)}', space=vmem, size = 0x12000, scoped, tag = 'internal scratch']
  #allocation2 [shape = 'bf16[16,48]{1,0:T(16,128)(2,1)}', space=vmem, size = 0x1000, scoped, tag = 'scratch operand']
  %s0 = inlined_call_operand.hbm [shape: bf16[16,48], index: 0, kind: input, shape index: {}]
  %s1 = inlined_call_operand.hbm [shape: f32[1,48], index: 1, kind: input, shape index: {}]
  %s2 = inlined_call_operand.hbm [shape: f32[1,48], index: 2, kind: input, shape index: {}]
  %s3 = inlined_call_operand.hbm [shape: bf16[48,128], index: 3, kind: input, shape index: {}]
  %s4 = inlined_call_operand.hbm [shape: f32[1,128], index: 4, kind: input, shape index: {}]
  %s5 = inlined_call_operand.hbm [shape: f32[16,128], index: 5, kind: output, shape index: {}]
  %s6 = sld [smem:[#allocation0]]
  $region54: #{_lambda_.25} parent=0
    _
  %s8 = ssub.s32 1, %s6
  %s9 = scalar_select 0, %s8, %s6
  $region1: #{_lambda_.25} parent=0
    #allocation3 [shape = 'u8[4096]{0}', space=vmem, size = 0x1000, scoped, tag = 'input window, operand 0, single buffered']
    #allocation4 [shape = 's32[1]{0}', space=sflag, size = 0x4, scoped, tag = 'scoped memory for _lambda_.25']
    #allocation5 [shape = 's32[1]{0}', space=sflag, size = 0x4, scoped, tag = 'scoped memory for _lambda_.25']
    #allocation6 [shape = 'u8[512]{0}', space=vmem, size = 0x400, scoped, tag = 'input window, operand 1, single buffered']
    #allocation7 [shape = 's32[1]{0}', space=sflag, size = 0x4, scoped, tag = 'scoped memory for _lambda_.25']
    #allocation8 [shape = 'u8[512]{0}', space=vmem, size = 0x400, scoped, tag = 'input window, operand 2, single buffered']
    #allocation9 [shape = 'u8[12288]{0}', space=vmem, size = 0x3000, scoped, tag = 'input window, operand 3, single buffered']
    #allocation10 [shape = 's32[1]{0}', space=sflag, size = 0x4, scoped, tag = 'scoped memory for _lambda_.25']
    #allocation11 [shape = 'u8[512]{0}', space=vmem, size = 0x400, scoped, tag = 'input window, operand 4, single buffered']
    #allocation12 [shape = 'u8[8192]{0}', space=vmem, size = 0x2000, scoped, tag = 'output window, operand 0, single buffered']
    %10 = vsyncpa [#allocation4], 0
    %11 = vsyncpa [#allocation7], 0
    %12 = vsyncpa [#allocation10], 0
    %13 = vsyncpa [#allocation5], 0
    // Predicated region
    $region2: #{_lambda_.25} parent=1 // pred_check
      _
    $region3: #{_lambda_.25} parent=1 // pred_check_branch
      %15 = sbr.rel (0) target = $region5
    $region4: #{_lambda_.25} parent=1 // pred_region
      %s17 = ssub.s32 128, 128
      %18 = vsyncadd [#allocation4], %s17
      %s19 = sshll.u32 [#allocation3], 4
      %s20 = int_to_ptr.vmem [resolvable:$true] %s19
      %25 = dma.hbm_to_vmem [thread:$0]  %s0, 128, %s20, [#allocation4], 64, 64, 4
    $region5: #{_lambda_.25} parent=1 // pred_fallthru
      _
    // Predicated region
    $region6: #{_lambda_.25} parent=1 // pred_check
      _
    $region7: #{_lambda_.25} parent=1 // pred_check_branch
      %27 = sbr.rel (0) target = $region9
    $region8: #{_lambda_.25} parent=1 // pred_region
      %s29 = ssub.s32 16, 16
      %30 = vsyncadd [#allocation7], %s29
      %s32 = sshll.u32 [#allocation6], 4
      %s33 = int_to_ptr.vmem [resolvable:$true] %s32
      %35 = dma.hbm_to_vmem [thread:$0]  %s1, 16, %s33, [#allocation7]
    $region9: #{_lambda_.25} parent=1 // pred_fallthru
      _
    // Predicated region
    $region10: #{_lambda_.25} parent=1 // pred_check
      _
    $region11: #{_lambda_.25} parent=1 // pred_check_branch
      %37 = sbr.rel (0) target = $region13
    $region12: #{_lambda_.25} parent=1 // pred_region
      %s39 = ssub.s32 16, 16
      %40 = vsyncadd [#allocation7], %s39
      %s42 = sshll.u32 [#allocation8], 4
      %s43 = int_to_ptr.vmem [resolvable:$true] %s42
      %45 = dma.hbm_to_vmem [thread:$0]  %s2, 16, %s43, [#allocation7]
    $region13: #{_lambda_.25} parent=1 // pred_fallthru
      _
    // Predicated region
    $region14: #{_lambda_.25} parent=1 // pred_check
      _
    $region15: #{_lambda_.25} parent=1 // pred_check_branch
      %47 = sbr.rel (0) target = $region17
    $region16: #{_lambda_.25} parent=1 // pred_region
      %s49 = ssub.s32 384, 384
      %50 = vsyncadd [#allocation10], %s49
      %s51 = sshll.u32 [#allocation9], 4
      %s52 = int_to_ptr.vmem [resolvable:$true] %s51
      %57 = dma.hbm_to_vmem [thread:$0]  %s3, 384, %s52, [#allocation10], 64, 64, 4
    $region17: #{_lambda_.25} parent=1 // pred_fallthru
      _
    // Predicated region
    $region18: #{_lambda_.25} parent=1 // pred_check
      _
    $region19: #{_lambda_.25} parent=1 // pred_check_branch
      %59 = sbr.rel (0) target = $region21
    $region20: #{_lambda_.25} parent=1 // pred_region
      %s61 = ssub.s32 16, 16
      %62 = vsyncadd [#allocation10], %s61
      %s64 = sshll.u32 [#allocation11], 4
      %s65 = int_to_ptr.vmem [resolvable:$true] %s64
      %67 = dma.hbm_to_vmem [thread:$0]  %s4, 16, %s65, [#allocation10]
    $region21: #{_lambda_.25} parent=1 // pred_fallthru
      _
    // Predicated region
    $region22: #{_lambda_.25} parent=1 // pred_check
      _
    $region23: #{_lambda_.25} parent=1 // pred_check_branch
      %69 = sbr.rel (0) target = $region25
    $region24: #{_lambda_.25} parent=1 // pred_region
      %70 = dma.done [#allocation4], 128
    $region25: #{_lambda_.25} parent=1 // pred_fallthru
      _
    // Predicated region
    $region26: #{_lambda_.25} parent=1 // pred_check
      _
    $region27: #{_lambda_.25} parent=1 // pred_check_branch
      %72 = sbr.rel (0) target = $region29
    $region28: #{_lambda_.25} parent=1 // pred_region
      %73 = dma.done [#allocation7], 16
    $region29: #{_lambda_.25} parent=1 // pred_fallthru
      _
    // Predicated region
    $region30: #{_lambda_.25} parent=1 // pred_check
      _
    $region31: #{_lambda_.25} parent=1 // pred_check_branch
      %75 = sbr.rel (0) target = $region33
    $region32: #{_lambda_.25} parent=1 // pred_region
      %76 = dma.done [#allocation7], 16
    $region33: #{_lambda_.25} parent=1 // pred_fallthru
      _
    // Predicated region
    $region34: #{_lambda_.25} parent=1 // pred_check
      _
    $region35: #{_lambda_.25} parent=1 // pred_check_branch
      %78 = sbr.rel (0) target = $region37
    $region36: #{_lambda_.25} parent=1 // pred_region
      %79 = dma.done [#allocation10], 384
    $region37: #{_lambda_.25} parent=1 // pred_fallthru
      _
    // Predicated region
    $region38: #{_lambda_.25} parent=1 // pred_check
      _
    $region39: #{_lambda_.25} parent=1 // pred_check_branch
      %81 = sbr.rel (0) target = $region41
    $region40: #{_lambda_.25} parent=1 // pred_region
      %82 = dma.done [#allocation10], 16
    $region41: #{_lambda_.25} parent=1 // pred_fallthru
      _
    %p84 = scmp.eq.s32.totalorder 0, 0
    // Predicated region
    $region42: #{_lambda_.25} parent=1 // pred_check
      %p85 = pneg %p84
    $region43: #{_lambda_.25} parent=1 // pred_check_branch
      %87 = sbr.rel (%p85) target = $region45
    $region44: #{_lambda_.25} parent=1 // pred_region
      %v88 = vld [vmem:[#allocation3] sm:$0xf]
      %v89 = vld [vmem:[#allocation3 + $0x4] sm:$0xf]
      %v90 = vunpack.c.l.bf16 %v88
      %v91 = vunpack.c.l.bf16 %v89
      %v92 = vld [vmem:[#allocation6] sm:$0x1]
      %v93 = vld [vmem:[#allocation8] sm:$0x1]
      %vm94 = vcmask 392192
      %v95 = vsel %vm94, %v90, 0.0
      %96 = vadd.xlane.f32.xlu0 %v95
      %v97 = vpop.xlane.xlu0 %96
      %v98 = vsel %vm94, %v91, 0.0
      %99 = vadd.xlane.f32.xlu0 %v98
      %v100 = vpop.xlane.xlu0 %99
      %v101 = vrcp.pop 48.0
      %v102 = vmul.f32 %v97, %v101
      %v103 = vmul.f32 %v100, %v101
      %v104 = vsub.f32 %v90, %v102
      %v105 = vsub.f32 %v91, %v103
      %v106 = vmul.f32 %v104, %v104
      %v107 = vmul.f32 %v105, %v105
      %v108 = vsel %vm94, %v106, 0.0
      %109 = vadd.xlane.f32.xlu0 %v108
      %v110 = vpop.xlane.xlu0 %109
      %v111 = vsel %vm94, %v107, 0.0
      %112 = vadd.xlane.f32.xlu0 %v111
      %v113 = vpop.xlane.xlu0 %112
      %v114 = vmul.f32 %v110, %v101
      %v115 = vmul.f32 %v113, %v101
      %v116 = vadd.f32 %v114, 1e-05
      %v117 = vadd.f32 %v115, 1e-05
      %v118 = vrsqrt.pop %v116
      %v119 = vrsqrt.pop %v117
      %v120 = vmul.f32 %v104, %v118
      %v121 = vmul.f32 %v105, %v119
      %v123 = vlaneseq
      %v124 = vshrl.u32 %v123, 7
      %v125 = vsub.s32 0, %v124
      %v126 = vrot.slane %v92, %v125
      %v128 = vmul.f32 %v120, %v126
      %v129 = vmul.f32 %v121, %v126
      %v131 = vlaneseq
      %v132 = vshrl.u32 %v131, 7
      %v133 = vsub.s32 0, %v132
      %v134 = vrot.slane %v93, %v133
      %v136 = vadd.f32 %v128, %v134
      %v137 = vadd.f32 %v129, %v134
      %v138 = vpack.c.bf16 %v137, %v136
      %139 = vst.msk [vmem:[#allocation2] sm:$0xff] %vm94, %v138
    $region45: #{_lambda_.25} parent=1 // pred_fallthru
      _
    %v140 = vld [vmem:[#allocation2] sm:$0xff]
    %v141 = vld [vmem:[#allocation9] sm:$0xf]
    %v142 = vld [vmem:[#allocation9 + $0x4] sm:$0xf]
    %v143 = vld [vmem:[#allocation9 + $0x8] sm:$0xf]
    %v144 = vld [vmem:[#allocation9 + $0xc] sm:$0xf]
    %v145 = vld [vmem:[#allocation9 + $0x10] sm:$0xf]
    %v146 = vld [vmem:[#allocation9 + $0x14] sm:$0xf]
    %v147 = vld [vmem:[#allocation11] sm:$0x1]
    %v149 = vlaneseq
    %v150 = vshrl.u32 %v149, 7
    %v151 = vsub.s32 0, %v150
    %v152 = vrot.slane %v147, %v151
    %v160 = vunpack.c.l.b16 %v141
    %v161 = vunpack.c.l.b16 %v142
    %v162 = vunpack.c.l.b16 %v143
    %v163 = vunpack.c.l.b16 %v144
    %v164 = vunpack.c.l.b16 %v145
    %v165 = vunpack.c.l.b16 %v146
    %v166 = vpack.c.b16 %v161, %v160
    %v167 = vpack.c.b16 %v163, %v162
    %v168 = vpack.c.b16 %v165, %v164
    %vm172 = vcmask 392192
    %v174 = vsel %vm172, %v140, 0
    %176 = vmatprep.subr.bf16.mxu0 0
    %177 = vmatpush1.bf16.msra.mxu0 %v166
    %178 = vmatprep.subr.bf16.mxu0 0
    %179 = vmatpush1.bf16.msra.mxu0 %v167
    %180 = vmatprep.subr.bf16.mxu0 0
    %181 = vmatpush1.bf16.msra.mxu0 %v168
    %182 = vmatprep.subr.bf16.mxu0 0
    %183 = vmatpush1.bf16.msra.mxu0 0
    %184 = vmatprep.subr.bf16.mxu0 0
    %185 = vmatpush1.bf16.msra.mxu0 0
    %186 = vmatprep.subr.bf16.mxu0 0
    %187 = vmatpush1.bf16.msra.mxu0 0
    %188 = vmatprep.subr.bf16.mxu0 0
    %189 = vmatpush1.bf16.msra.mxu0 0
    %190 = vmatprep.subr.bf16.mxu0 0
    %191 = vmatpush1.bf16.msra.mxu0 0
    %192 = vmatprep.subr.bf16.mxu0 0
    %193 = vmatpush1.bf16.msra.mxu0 0
    %194 = vmatprep.subr.bf16.mxu0 0
    %195 = vmatpush1.bf16.msra.mxu0 0
    %196 = vmatprep.subr.bf16.mxu0 0
    %197 = vmatpush1.bf16.msra.mxu0 0
    %198 = vmatprep.subr.bf16.mxu0 0
    %199 = vmatpush1.bf16.msra.mxu0 0
    %200 = vmatprep.subr.bf16.mxu0 0
    %201 = vmatpush1.bf16.msra.mxu0 0
    %202 = vmatprep.subr.bf16.mxu0 0
    %203 = vmatpush1.bf16.msra.mxu0 0
    %204 = vmatprep.subr.bf16.mxu0 0
    %205 = vmatpush1.bf16.msra.mxu0 0
    %206 = vmatprep.subr.bf16.mxu0 0
    %207 = vmatpush1.bf16.msra.mxu0 0
    %208 = vmatprep.mubr.bf16.mxu0 0
    %209 = vmatmul.mubr.bf16.gmra.mrb[0].mxu0 %v174
    %v210 = vpop.f32.mrb[0].mxu0
    %v211 = vadd.f32 %v152, %v210
    %v212 = vpop.f32.mrb[0].mxu0
    %v213 = vpop.f32.mrb[0].mxu0
    %v214 = vadd.f32 %v152, %v213
    %v215 = vpop.f32.mrb[0].mxu0
    %216 = vdwg.mxu0
    %217 = vst [vmem:[#allocation12] sm:$0xff] %v211
    %218 = vst [vmem:[#allocation12 + $0x8] sm:$0xff] %v214
    // Predicated region
    $region46: #{_lambda_.25} parent=1 // pred_check
      _
    $region47: #{_lambda_.25} parent=1 // pred_check_branch
      %220 = sbr.rel (0) target = $region49
    $region48: #{_lambda_.25} parent=1 // pred_region
      %s222 = ssub.s32 256, 256
      %223 = vsyncadd [#allocation5], %s222
      %s224 = sshll.u32 [#allocation12], 4
      %s225 = int_to_ptr.vmem [resolvable:$true] %s224
      %230 = dma.vmem_to_hbm [thread:$0]  %s225, 256, %s5, [#allocation5], 128, 128, 8
    $region49: #{_lambda_.25} parent=1 // pred_fallthru
      _
    // Predicated region
    $region50: #{_lambda_.25} parent=1 // pred_check
      _
    $region51: #{_lambda_.25} parent=1 // pred_check_branch
      %232 = sbr.rel (0) target = $region53
    $region52: #{_lambda_.25} parent=1 // pred_region
      %233 = dma.done [#allocation5], 256
    $region53: #{_lambda_.25} parent=1 // pred_fallthru
      _
    %234 = vsyncpa [#allocation4], 1
    %235 = vsyncpa [#allocation7], 1
    %236 = vsyncpa [#allocation10], 1
    %237 = vsyncpa [#allocation5], 1

// kernel: _lambda_.20
$region0: #{_lambda_.20}
  #allocation0 [shape = 'u32[]', space=smem, size = 0x4, offset = 0x4, fixed_abs, tag = 'smem constant byte address 0x4 - core index']
  #allocation1 [shape = 'u32[144,128]{1,0:T(1,128)}', space=vmem, size = 0x12000, scoped, tag = 'internal scratch']
  %s0 = inlined_call_operand.hbm [shape: bf16[2,8,48], index: 0, kind: input, shape index: {}]
  %s1 = inlined_call_operand.hbm [shape: bf16[2,16,48], index: 1, kind: input, shape index: {}]
  %s2 = inlined_call_operand.hbm [shape: f32[1,48], index: 2, kind: input, shape index: {}]
  %s3 = inlined_call_operand.hbm [shape: f32[1,48], index: 3, kind: input, shape index: {}]
  %s4 = inlined_call_operand.hbm [shape: bf16[48,48], index: 4, kind: input, shape index: {}]
  %s5 = inlined_call_operand.hbm [shape: f32[1,48], index: 5, kind: input, shape index: {}]
  %s6 = inlined_call_operand.hbm [shape: bf16[48,96], index: 6, kind: input, shape index: {}]
  %s7 = inlined_call_operand.hbm [shape: f32[1,96], index: 7, kind: input, shape index: {}]
  %s8 = inlined_call_operand.hbm [shape: bf16[48,48], index: 8, kind: input, shape index: {}]
  %s9 = inlined_call_operand.hbm [shape: f32[1,48], index: 9, kind: input, shape index: {}]
  %s10 = inlined_call_operand.hbm [shape: bf16[2,8,48], index: 10, kind: output, shape index: {}]
  %s11 = sld [smem:[#allocation0]]
  $region113: #{_lambda_.20} parent=0
    _
  %s13 = ssub.s32 1, %s11
  %s14 = scalar_select 0, %s13, %s11
  $region1: #{_lambda_.20} parent=0
    #allocation2 [shape = 'u8[4096]{0}', space=vmem, size = 0x1000, scoped, tag = 'input window, operand 0']
    #allocation3 [shape = 's32[2]{0}', space=sflag, size = 0x8, scoped, tag = 'scoped memory for _lambda_.20']
    #allocation4 [shape = 's32[2]{0}', space=sflag, size = 0x8, scoped, tag = 'scoped memory for _lambda_.20']
    #allocation5 [shape = 'u8[8192]{0}', space=vmem, size = 0x2000, scoped, tag = 'input window, operand 1']
    #allocation6 [shape = 's32[2]{0}', space=sflag, size = 0x8, scoped, tag = 'scoped memory for _lambda_.20']
    #allocation7 [shape = 'u8[512]{0}', space=vmem, size = 0x400, scoped, tag = 'input window, operand 2, single buffered']
    #allocation8 [shape = 'u8[512]{0}', space=vmem, size = 0x400, scoped, tag = 'input window, operand 3, single buffered']
    #allocation9 [shape = 's32[1]{0}', space=sflag, size = 0x4, scoped, tag = 'scoped memory for _lambda_.20']
    #allocation10 [shape = 'u8[12288]{0}', space=vmem, size = 0x3000, scoped, tag = 'input window, operand 4, single buffered']
    #allocation11 [shape = 'u8[512]{0}', space=vmem, size = 0x400, scoped, tag = 'input window, operand 5, single buffered']
    #allocation12 [shape = 's32[1]{0}', space=sflag, size = 0x4, scoped, tag = 'scoped memory for _lambda_.20']
    #allocation13 [shape = 'u8[12288]{0}', space=vmem, size = 0x3000, scoped, tag = 'input window, operand 6, single buffered']
    #allocation14 [shape = 'u8[512]{0}', space=vmem, size = 0x400, scoped, tag = 'input window, operand 7, single buffered']
    #allocation15 [shape = 's32[1]{0}', space=sflag, size = 0x4, scoped, tag = 'scoped memory for _lambda_.20']
    #allocation16 [shape = 'u8[12288]{0}', space=vmem, size = 0x3000, scoped, tag = 'input window, operand 8, single buffered']
    #allocation17 [shape = 'u8[512]{0}', space=vmem, size = 0x400, scoped, tag = 'input window, operand 9, single buffered']
    #allocation18 [shape = 's32[1]{0}', space=sflag, size = 0x4, scoped, tag = 'scoped memory for _lambda_.20']
    #allocation19 [shape = 'u8[4096]{0}', space=vmem, size = 0x1000, scoped, tag = 'output window, operand 0']
    %15 = vsyncpa [#allocation3], 0
    %s16 = scalar_lea.sflag [#allocation3], 1
    %17 = vsyncpa %s16, 0
    %18 = vsyncpa [#allocation6], 0
    %s19 = scalar_lea.sflag [#allocation6], 1
    %20 = vsyncpa %s19, 0
    %21 = vsyncpa [#allocation9], 0
    %22 = vsyncpa [#allocation12], 0
    %23 = vsyncpa [#allocation15], 0
    %24 = vsyncpa [#allocation18], 0
    %25 = vsyncpa [#allocation4], 0
    %s26 = scalar_lea.sflag [#allocation4], 1
    %27 = vsyncpa %s26, 0
    loop: start=0, step=1, limit=4
    $region2: #{_lambda_.20} parent=1 // loop_pre_header
      _
    $region3: #{_lambda_.20} parent=1 // loop_header
      %s29 = sphi 0, %s33
      %p30 = scmp.ge.s32.totalorder %s29, 4
      %s39 = sphi 0, %s41
      %s42 = sphi 0, %s39
      %s43 = sphi 0, %s42
      %s59 = sphi 0, %s43
      %s65 = sphi 0, %s67
      %s68 = sphi 0, %s65
      %s69 = sphi 0, %s68
      %s85 = sphi 0, %s69
      %s89 = sphi 0, %s89
      %s91 = sphi 0, %s89
      %s92 = sphi 0, %s91
      %s106 = sphi 0, %s92
      %s110 = sphi 0, %s110
      %s112 = sphi 0, %s110
      %s113 = sphi 0, %s112
      %s127 = sphi 0, %s113
      %s131 = sphi 0, %s131
      %s133 = sphi 0, %s131
      %s134 = sphi 0, %s133
      %s148 = sphi 0, %s134
      %s152 = sphi 0, %s152
      %s154 = sphi 0, %s152
      %s155 = sphi 0, %s154
      %s169 = sphi 0, %s155
      %s173 = sphi 0, %s173
      %s175 = sphi 0, %s173
      %s176 = sphi 0, %s175
      %s190 = sphi 0, %s176
      %s194 = sphi 0, %s194
      %s196 = sphi 0, %s194
      %s197 = sphi 0, %s196
      %s211 = sphi 0, %s197
      %s215 = sphi 0, %s215
      %s217 = sphi 0, %s215
      %s218 = sphi 0, %s217
      %s232 = sphi 0, %s218
      %s236 = sphi 0, %s236
      %s238 = sphi 0, %s236
      %s239 = sphi 0, %s238
      %s253 = sphi 0, %s239
      %s259 = sphi 0, %s261
      %s262 = sphi 0, %s259
      %s263 = sphi 0, %s262
      %s279 = sphi 0, %s263
    $region4: #{_lambda_.20} parent=1 // loop_header_branch
      %32 = sbr.rel (%p30) target = $region8
    $region5: #{_lambda_.20} parent=1 // loop_body
      %s34 = ssub.s32 %s29, 1
      %s35 = ssub.s32 %s29, 2
      %s36 = sadd.s32 %s29, 1
      %s37 = ssub.s32 %s29, %s36
      %p38 = scmp.eq.s32.totalorder %s37, 0
      %s40 = sadd.s32 %s39, 1
      %s41 = scalar_select %p38, %s39, %s40
      %p44 = pneg %p38
      %p45 = scmp.eq.s32.totalorder %s29, 1
      %p46 = por %p44, %p45
      %p47 = scmp.ne.s32.totalorder %s39, %s42
      %p48 = scmp.eq.s32.totalorder %s29, 0
      %p49 = por %p47, %p48
      %p50 = scmp.ne.s32.totalorder %s39, %s42
      %p51 = scmp.eq.s32.totalorder %s34, 1
      %p52 = por %p50, %p51
      %p53 = scmp.ne.s32.totalorder %s42, %s43
      %p54 = scmp.eq.s32.totalorder %s34, 0
      %p55 = por %p53, %p54
      %p56 = scmp.ne.s32.totalorder %s42, %s43
      %p57 = scmp.eq.s32.totalorder %s35, 1
      %p58 = por %p56, %p57
      %p60 = scmp.ne.s32.totalorder %s43, %s59
      %p61 = scmp.eq.s32.totalorder %s35, 0
      %p62 = por %p60, %p61
      %s63 = ssub.s32 %s29, %s36
      %p64 = scmp.eq.s32.totalorder %s63, 0
      %s66 = sadd.s32 %s65, 1
      %s67 = scalar_select %p64, %s65, %s66
      %p70 = pneg %p64
      %p71 = scmp.eq.s32.totalorder %s29, 1
      %p72 = por %p70, %p71
      %p73 = scmp.ne.s32.totalorder %s65, %s68
      %p74 = scmp.eq.s32.totalorder %s29, 0
      %p75 = por %p73, %p74
      %p76 = scmp.ne.s32.totalorder %s65, %s68
      %p77 = scmp.eq.s32.totalorder %s34, 1
      %p78 = por %p76, %p77
      %p79 = scmp.ne.s32.totalorder %s68, %s69
      %p80 = scmp.eq.s32.totalorder %s34, 0
      %p81 = por %p79, %p80
      %p82 = scmp.ne.s32.totalorder %s68, %s69
      %p83 = scmp.eq.s32.totalorder %s35, 1
      %p84 = por %p82, %p83
      %p86 = scmp.ne.s32.totalorder %s69, %s85
      %p87 = scmp.eq.s32.totalorder %s35, 0
      %p88 = por %p86, %p87
      %s90 = sadd.s32 %s89, 1
      %p93 = scmp.eq.s32.totalorder %s29, 1
      %p94 = scmp.ne.s32.totalorder %s89, %s91
      %p95 = scmp.eq.s32.totalorder %s29, 0
      %p96 = por %p94, %p95
      %p97 = scmp.ne.s32.totalorder %s89, %s91
      %p98 = scmp.eq.s32.totalorder %s34, 1
      %p99 = por %p97, %p98
      %p100 = scmp.ne.s32.totalorder %s91, %s92
      %p101 = scmp.eq.s32.totalorder %s34, 0
      %p102 = por %p100, %p101
      %p103 = scmp.ne.s32.totalorder %s91, %s92
      %p104 = scmp.eq.s32.totalorder %s35, 1
      %p105 = por %p103, %p104
      %p107 = scmp.ne.s32.totalorder %s92, %s106
      %p108 = scmp.eq.s32.totalorder %s35, 0
      %p109 = por %p107, %p108
      %s111 = sadd.s32 %s110, 1
      %p114 = scmp.eq.s32.totalorder %s29, 1
      %p115 = scmp.ne.s32.totalorder %s110, %s112
      %p116 = scmp.eq.s32.totalorder %s29, 0
      %p117 = por %p115, %p116
      %p118 = scmp.ne.s32.totalorder %s110, %s112
      %p119 = scmp.eq.s32.totalorder %s34, 1
      %p120 = por %p118, %p119
      %p121 = scmp.ne.s32.totalorder %s112, %s113
      %p122 = scmp.eq.s32.totalorder %s34, 0
      %p123 = por %p121, %p122
      %p124 = scmp.ne.s32.totalorder %s112, %s113
      %p125 = scmp.eq.s32.totalorder %s35, 1
      %p126 = por %p124, %p125
      %p128 = scmp.ne.s32.totalorder %s113, %s127
      %p129 = scmp.eq.s32.totalorder %s35, 0
      %p130 = por %p128, %p129
      %s132 = sadd.s32 %s131, 1
      %p135 = scmp.eq.s32.totalorder %s29, 1
      %p136 = scmp.ne.s32.totalorder %s131, %s133
      %p137 = scmp.eq.s32.totalorder %s29, 0
      %p138 = por %p136, %p137
      %p139 = scmp.ne.s32.totalorder %s131, %s133
      %p140 = scmp.eq.s32.totalorder %s34, 1
      %p141 = por %p139, %p140
      %p142 = scmp.ne.s32.totalorder %s133, %s134
      %p143 = scmp.eq.s32.totalorder %s34, 0
      %p144 = por %p142, %p143
      %p145 = scmp.ne.s32.totalorder %s133, %s134
      %p146 = scmp.eq.s32.totalorder %s35, 1
      %p147 = por %p145, %p146
      %p149 = scmp.ne.s32.totalorder %s134, %s148
      %p150 = scmp.eq.s32.totalorder %s35, 0
      %p151 = por %p149, %p150
      %s153 = sadd.s32 %s152, 1
      %p156 = scmp.eq.s32.totalorder %s29, 1
      %p157 = scmp.ne.s32.totalorder %s152, %s154
      %p158 = scmp.eq.s32.totalorder %s29, 0
      %p159 = por %p157, %p158
      %p160 = scmp.ne.s32.totalorder %s152, %s154
      %p161 = scmp.eq.s32.totalorder %s34, 1
      %p162 = por %p160, %p161
      %p163 = scmp.ne.s32.totalorder %s154, %s155
      %p164 = scmp.eq.s32.totalorder %s34, 0
      %p165 = por %p163, %p164
      %p166 = scmp.ne.s32.totalorder %s154, %s155
      %p167 = scmp.eq.s32.totalorder %s35, 1
      %p168 = por %p166, %p167
      %p170 = scmp.ne.s32.totalorder %s155, %s169
      %p171 = scmp.eq.s32.totalorder %s35, 0
      %p172 = por %p170, %p171
      %s174 = sadd.s32 %s173, 1
      %p177 = scmp.eq.s32.totalorder %s29, 1
      %p178 = scmp.ne.s32.totalorder %s173, %s175
      %p179 = scmp.eq.s32.totalorder %s29, 0
      %p180 = por %p178, %p179
      %p181 = scmp.ne.s32.totalorder %s173, %s175
      %p182 = scmp.eq.s32.totalorder %s34, 1
      %p183 = por %p181, %p182
      %p184 = scmp.ne.s32.totalorder %s175, %s176
      %p185 = scmp.eq.s32.totalorder %s34, 0
      %p186 = por %p184, %p185
      %p187 = scmp.ne.s32.totalorder %s175, %s176
      %p188 = scmp.eq.s32.totalorder %s35, 1
      %p189 = por %p187, %p188
      %p191 = scmp.ne.s32.totalorder %s176, %s190
      %p192 = scmp.eq.s32.totalorder %s35, 0
      %p193 = por %p191, %p192
      %s195 = sadd.s32 %s194, 1
      %p198 = scmp.eq.s32.totalorder %s29, 1
      %p199 = scmp.ne.s32.totalorder %s194, %s196
      %p200 = scmp.eq.s32.totalorder %s29, 0
      %p201 = por %p199, %p200
      %p202 = scmp.ne.s32.totalorder %s194, %s196
      %p203 = scmp.eq.s32.totalorder %s34, 1
      %p204 = por %p202, %p203
      %p205 = scmp.ne.s32.totalorder %s196, %s197
      %p206 = scmp.eq.s32.totalorder %s34, 0
      %p207 = por %p205, %p206
      %p208 = scmp.ne.s32.totalorder %s196, %s197
      %p209 = scmp.eq.s32.totalorder %s35, 1
      %p210 = por %p208, %p209
      %p212 = scmp.ne.s32.totalorder %s197, %s211
      %p213 = scmp.eq.s32.totalorder %s35, 0
      %p214 = por %p212, %p213
      %s216 = sadd.s32 %s215, 1
      %p219 = scmp.eq.s32.totalorder %s29, 1
      %p220 = scmp.ne.s32.totalorder %s215, %s217
      %p221 = scmp.eq.s32.totalorder %s29, 0
      %p222 = por %p220, %p221
      %p223 = scmp.ne.s32.totalorder %s215, %s217
      %p224 = scmp.eq.s32.totalorder %s34, 1
      %p225 = por %p223, %p224
      %p226 = scmp.ne.s32.totalorder %s217, %s218
      %p227 = scmp.eq.s32.totalorder %s34, 0
      %p228 = por %p226, %p227
      %p229 = scmp.ne.s32.totalorder %s217, %s218
      %p230 = scmp.eq.s32.totalorder %s35, 1
      %p231 = por %p229, %p230
      %p233 = scmp.ne.s32.totalorder %s218, %s232
      %p234 = scmp.eq.s32.totalorder %s35, 0
      %p235 = por %p233, %p234
      %s237 = sadd.s32 %s236, 1
      %p240 = scmp.eq.s32.totalorder %s29, 1
      %p241 = scmp.ne.s32.totalorder %s236, %s238
      %p242 = scmp.eq.s32.totalorder %s29, 0
      %p243 = por %p241, %p242
      %p244 = scmp.ne.s32.totalorder %s236, %s238
      %p245 = scmp.eq.s32.totalorder %s34, 1
      %p246 = por %p244, %p245
      %p247 = scmp.ne.s32.totalorder %s238, %s239
      %p248 = scmp.eq.s32.totalorder %s34, 0
      %p249 = por %p247, %p248
      %p250 = scmp.ne.s32.totalorder %s238, %s239
      %p251 = scmp.eq.s32.totalorder %s35, 1
      %p252 = por %p250, %p251
      %p254 = scmp.ne.s32.totalorder %s239, %s253
      %p255 = scmp.eq.s32.totalorder %s35, 0
      %p256 = por %p254, %p255
      %s257 = ssub.s32 %s29, %s36
      %p258 = scmp.eq.s32.totalorder %s257, 0
      %s260 = sadd.s32 %s259, 1
      %s261 = scalar_select %p258, %s259, %s260
      %p264 = pneg %p258
      %p265 = scmp.eq.s32.totalorder %s29, 1
      %p266 = por %p264, %p265
      %p267 = scmp.ne.s32.totalorder %s259, %s262
      %p268 = scmp.eq.s32.totalorder %s29, 0
      %p269 = por %p267, %p268
      %p270 = scmp.ne.s32.totalorder %s259, %s262
      %p271 = scmp.eq.s32.totalorder %s34, 1
      %p272 = por %p270, %p271
      %p273 = scmp.ne.s32.totalorder %s262, %s263
      %p274 = scmp.eq.s32.totalorder %s34, 0
      %p275 = por %p273, %p274
      %p276 = scmp.ne.s32.totalorder %s262, %s263
      %p277 = scmp.eq.s32.totalorder %s35, 1
      %p278 = por %p276, %p277
      %p280 = scmp.ne.s32.totalorder %s263, %s279
      %p281 = scmp.eq.s32.totalorder %s35, 0
      %p282 = por %p280, %p281
      %p283 = scmp.le.s32.totalorder 1, %s29
      %p284 = scmp.lt.s32.totalorder %s29, 3
      %p285 = pnand %p283, %p284
      %p286 = pneg %p285
      // Predicated region
      $region9: #{_lambda_.20} parent=5 // pred_check
        _
      $region10: #{_lambda_.20} parent=5 // pred_check_branch
        %288 = sbr.rel (%p285) target = $region12
      $region11: #{_lambda_.20} parent=5 // pred_region
        %s289 = ssub.s32 %s29, 1
        // Predicated region
        $region13: #{_lambda_.20} parent=11 // pred_check
          %p290 = pneg %p102
        $region14: #{_lambda_.20} parent=11 // pred_check_branch
          %292 = sbr.rel (%p290) target = $region16
        $region15: #{_lambda_.20} parent=11 // pred_region
          %s294 = ssub.s32 16, 16
          %295 = vsyncadd [#allocation6], %s294
          %s297 = sshll.u32 [#allocation7], 4
          %s298 = int_to_ptr.vmem [resolvable:$true] %s297
          %300 = dma.hbm_to_vmem [thread:$0]  %s2, 16, %s298, [#allocation6]
        $region16: #{_lambda_.20} parent=11 // pred_fallthru
          _
        // Predicated region
        $region17: #{_lambda_.20} parent=11 // pred_check
          %p301 = pneg %p123
        $region18: #{_lambda_.20} parent=11 // pred_check_branch
          %303 = sbr.rel (%p301) target = $region20
        $region19: #{_lambda_.20} parent=11 // pred_region
          %s305 = ssub.s32 16, 16
          %306 = vsyncadd [#allocation9], %s305
          %s308 = sshll.u32 [#allocation8], 4
          %s309 = int_to_ptr.vmem [resolvable:$true] %s308
          %311 = dma.hbm_to_vmem [thread:$0]  %s3, 16, %s309, [#allocation9]
        $region20: #{_lambda_.20} parent=11 // pred_fallthru
          _
        // Predicated region
        $region21: #{_lambda_.20} parent=11 // pred_check
          %p312 = pneg %p144
        $region22: #{_lambda_.20} parent=11 // pred_check_branch
          %314 = sbr.rel (%p312) target = $region24
        $region23: #{_lambda_.20} parent=11 // pred_region
          %s316 = ssub.s32 384, 384
          %317 = vsyncadd [#allocation9], %s316
          %s318 = sshll.u32 [#allocation10], 4
          %s319 = int_to_ptr.vmem [resolvable:$true] %s318
          %324 = dma.hbm_to_vmem [thread:$0]  %s4, 384, %s319, [#allocation9], 64, 64, 4
        $region24: #{_lambda_.20} parent=11 // pred_fallthru
          _
        // Predicated region
        $region25: #{_lambda_.20} parent=11 // pred_check
          %p325 = pneg %p165
        $region26: #{_lambda_.20} parent=11 // pred_check_branch
          %327 = sbr.rel (%p325) target = $region28
        $region27: #{_lambda_.20} parent=11 // pred_region
          %s329 = ssub.s32 16, 16
          %330 = vsyncadd [#allocation12], %s329
          %s332 = sshll.u32 [#allocation11], 4
          %s333 = int_to_ptr.vmem [resolvable:$true] %s332
          %335 = dma.hbm_to_vmem [thread:$0]  %s5, 16, %s333, [#allocation12]
        $region28: #{_lambda_.20} parent=11 // pred_fallthru
          _
        // Predicated region
        $region29: #{_lambda_.20} parent=11 // pred_check
          %p336 = pneg %p186
        $region30: #{_lambda_.20} parent=11 // pred_check_branch
          %338 = sbr.rel (%p336) target = $region32
        $region31: #{_lambda_.20} parent=11 // pred_region
          %s340 = ssub.s32 384, 384
          %341 = vsyncadd [#allocation12], %s340
          %s342 = sshll.u32 [#allocation13], 4
          %s343 = int_to_ptr.vmem [resolvable:$true] %s342
          %348 = dma.hbm_to_vmem [thread:$0]  %s6, 384, %s343, [#allocation12], 64, 64, 4
        $region32: #{_lambda_.20} parent=11 // pred_fallthru
          _
        // Predicated region
        $region33: #{_lambda_.20} parent=11 // pred_check
          %p349 = pneg %p207
        $region34: #{_lambda_.20} parent=11 // pred_check_branch
          %351 = sbr.rel (%p349) target = $region36
        $region35: #{_lambda_.20} parent=11 // pred_region
          %s353 = ssub.s32 16, 16
          %354 = vsyncadd [#allocation15], %s353
          %s356 = sshll.u32 [#allocation14], 4
          %s357 = int_to_ptr.vmem [resolvable:$true] %s356
          %359 = dma.hbm_to_vmem [thread:$0]  %s7, 16, %s357, [#allocation15]
        $region36: #{_lambda_.20} parent=11 // pred_fallthru
          _
        // Predicated region
        $region37: #{_lambda_.20} parent=11 // pred_check
          %p360 = pneg %p228
        $region38: #{_lambda_.20} parent=11 // pred_check_branch
          %362 = sbr.rel (%p360) target = $region40
        $region39: #{_lambda_.20} parent=11 // pred_region
          %s364 = ssub.s32 384, 384
          %365 = vsyncadd [#allocation15], %s364
          %s366 = sshll.u32 [#allocation16], 4
          %s367 = int_to_ptr.vmem [resolvable:$true] %s366
          %372 = dma.hbm_to_vmem [thread:$0]  %s8, 384, %s367, [#allocation15], 64, 64, 4
        $region40: #{_lambda_.20} parent=11 // pred_fallthru
          _
        // Predicated region
        $region41: #{_lambda_.20} parent=11 // pred_check
          %p373 = pneg %p249
        $region42: #{_lambda_.20} parent=11 // pred_check_branch
          %375 = sbr.rel (%p373) target = $region44
        $region43: #{_lambda_.20} parent=11 // pred_region
          %s377 = ssub.s32 16, 16
          %378 = vsyncadd [#allocation18], %s377
          %s380 = sshll.u32 [#allocation17], 4
          %s381 = int_to_ptr.vmem [resolvable:$true] %s380
          %383 = dma.hbm_to_vmem [thread:$0]  %s9, 16, %s381, [#allocation18]
        $region44: #{_lambda_.20} parent=11 // pred_fallthru
          _
      $region12: #{_lambda_.20} parent=5 // pred_fallthru
        _
      %p384 = scmp.lt.s32.totalorder %s29, 2
      // Predicated region
      $region45: #{_lambda_.20} parent=5 // pred_check
        %p385 = pneg %p384
      $region46: #{_lambda_.20} parent=5 // pred_check_branch
        %387 = sbr.rel (%p385) target = $region48
      $region47: #{_lambda_.20} parent=5 // pred_region
        // Predicated region
        $region49: #{_lambda_.20} parent=47 // pred_check
          %p388 = pneg %p49
        $region50: #{_lambda_.20} parent=47 // pred_check_branch
          %390 = sbr.rel (%p388) target = $region52
        $region51: #{_lambda_.20} parent=47 // pred_region
          %s391 = sand.u32 %s39, 1
          %s392 = scalar_lea.sflag [#allocation3], %s391
          %s393 = sand.u32 %s39, 1
          %s394 = smul.addr %s393, 4
          %s395 = scalar_lea.vmem [#allocation2], %s394
          %s397 = ssub.s32 64, 64
          %398 = vsyncadd %s392, %s397
          %s399 = smul.addr %s29, 64
          %s400 = scalar_lea.hbm %s0, %s399
          %s402 = sshll.u32 %s395, 4
          %s403 = int_to_ptr.vmem [resolvable:$true] %s402
          %405 = dma.hbm_to_vmem [thread:$0]  %s400, 64, %s403, %s392
        $region52: #{_lambda_.20} parent=47 // pred_fallthru
          _
        // Predicated region
        $region53: #{_lambda_.20} parent=47 // pred_check
          %p406 = pneg %p75
        $region54: #{_lambda_.20} parent=47 // pred_check_branch
          %408 = sbr.rel (%p406) target = $region56
        $region55: #{_lambda_.20} parent=47 // pred_region
          %s409 = sand.u32 %s29, 1
          %s410 = scalar_lea.sflag [#allocation6], %s409
          %s411 = sand.u32 %s65, 1
          %s412 = smul.addr %s411, 8
          %s413 = scalar_lea.vmem [#allocation5], %s412
          %s415 = ssub.s32 128, 128
          %416 = vsyncadd %s410, %s415
          %s417 = smul.addr %s29, 2
          %s418 = smul.addr %s417, 64
          %s419 = scalar_lea.hbm %s1, %s418
          %s420 = sshll.u32 %s413, 4
          %s421 = int_to_ptr.vmem [resolvable:$true] %s420
          %426 = dma.hbm_to_vmem [thread:$0]  %s419, 128, %s421, %s410, 64, 64, 4
        $region56: #{_lambda_.20} parent=47 // pred_fallthru
          _
      $region48: #{_lambda_.20} parent=5 // pred_fallthru
        _
      %p427 = scmp.le.s32.totalorder 1, %s29
      %p428 = scmp.lt.s32.totalorder %s29, 3
      %p429 = pnand %p427, %p428
      %p430 = pneg %p429
      // Predicated region
      $region57: #{_lambda_.20} parent=5 // pred_check
        _
      $region58: #{_lambda_.20} parent=5 // pred_check_branch
        %432 = sbr.rel (%p429) target = $region60
      $region59: #{_lambda_.20} parent=5 // pred_region
        %s433 = ssub.s32 %s29, 1
        %s434 = sand.u32 %s42, 1
        %s435 = scalar_lea.sflag [#allocation3], %s434
        %s436 = sand.u32 %s42, 1
        %s437 = smul.addr %s436, 4
        %s438 = scalar_lea.vmem [#allocation2], %s437
        // Predicated region
        $region61: #{_lambda_.20} parent=59 // pred_check
          %p439 = pneg %p55
        $region62: #{_lambda_.20} parent=59 // pred_check_branch
          %441 = sbr.rel (%p439) target = $region64
        $region63: #{_lambda_.20} parent=59 // pred_region
          %442 = dma.done %s435, 64
        $region64: #{_lambda_.20} parent=59 // pred_fallthru
          _
        %s443 = sand.u32 %s34, 1
        %s444 = scalar_lea.sflag [#allocation6], %s443
        %s445 = sand.u32 %s68, 1
        %s446 = smul.addr %s445, 8
        %s447 = scalar_lea.vmem [#allocation5], %s446
        // Predicated region
        $region65: #{_lambda_.20} parent=59 // pred_check
          %p448 = pneg %p81
        $region66: #{_lambda_.20} parent=59 // pred_check_branch
          %450 = sbr.rel (%p448) target = $region68
        $region67: #{_lambda_.20} parent=59 // pred_region
          %451 = dma.done %s444, 128
        $region68: #{_lambda_.20} parent=59 // pred_fallthru
          _
        // Predicated region
        $region69: #{_lambda_.20} parent=59 // pred_check
          %p452 = pneg %p102
        $region70: #{_lambda_.20} parent=59 // pred_check_branch
          %454 = sbr.rel (%p452) target = $region72
        $region71: #{_lambda_.20} parent=59 // pred_region
          %455 = dma.done [#allocation6], 16
        $region72: #{_lambda_.20} parent=59 // pred_fallthru
          _
        // Predicated region
        $region73: #{_lambda_.20} parent=59 // pred_check
          %p456 = pneg %p123
        $region74: #{_lambda_.20} parent=59 // pred_check_branch
          %458 = sbr.rel (%p456) target = $region76
        $region75: #{_lambda_.20} parent=59 // pred_region
          %459 = dma.done [#allocation9], 16
        $region76: #{_lambda_.20} parent=59 // pred_fallthru
          _
        // Predicated region
        $region77: #{_lambda_.20} parent=59 // pred_check
          %p460 = pneg %p144
        $region78: #{_lambda_.20} parent=59 // pred_check_branch
          %462 = sbr.rel (%p460) target = $region80
        $region79: #{_lambda_.20} parent=59 // pred_region
          %463 = dma.done [#allocation9], 384
        $region80: #{_lambda_.20} parent=59 // pred_fallthru
          _
        // Predicated region
        $region81: #{_lambda_.20} parent=59 // pred_check
          %p464 = pneg %p165
        $region82: #{_lambda_.20} parent=59 // pred_check_branch
          %466 = sbr.rel (%p464) target = $region84
        $region83: #{_lambda_.20} parent=59 // pred_region
          %467 = dma.done [#allocation12], 16
        $region84: #{_lambda_.20} parent=59 // pred_fallthru
          _
        // Predicated region
        $region85: #{_lambda_.20} parent=59 // pred_check
          %p468 = pneg %p186
        $region86: #{_lambda_.20} parent=59 // pred_check_branch
          %470 = sbr.rel (%p468) target = $region88
        $region87: #{_lambda_.20} parent=59 // pred_region
          %471 = dma.done [#allocation12], 384
        $region88: #{_lambda_.20} parent=59 // pred_fallthru
          _
        // Predicated region
        $region89: #{_lambda_.20} parent=59 // pred_check
          %p472 = pneg %p207
        $region90: #{_lambda_.20} parent=59 // pred_check_branch
          %474 = sbr.rel (%p472) target = $region92
        $region91: #{_lambda_.20} parent=59 // pred_region
          %475 = dma.done [#allocation15], 16
        $region92: #{_lambda_.20} parent=59 // pred_fallthru
          _
        // Predicated region
        $region93: #{_lambda_.20} parent=59 // pred_check
          %p476 = pneg %p228
        $region94: #{_lambda_.20} parent=59 // pred_check_branch
          %478 = sbr.rel (%p476) target = $region96
        $region95: #{_lambda_.20} parent=59 // pred_region
          %479 = dma.done [#allocation15], 384
        $region96: #{_lambda_.20} parent=59 // pred_fallthru
          _
        // Predicated region
        $region97: #{_lambda_.20} parent=59 // pred_check
          %p480 = pneg %p249
        $region98: #{_lambda_.20} parent=59 // pred_check_branch
          %482 = sbr.rel (%p480) target = $region100
        $region99: #{_lambda_.20} parent=59 // pred_region
          %483 = dma.done [#allocation18], 16
        $region100: #{_lambda_.20} parent=59 // pred_fallthru
          _
        %s484 = sand.u32 %s42, 1
        %s485 = scalar_lea.sflag [#allocation3], %s484
        %s486 = sand.u32 %s42, 1
        %s487 = smul.addr %s486, 4
        %s488 = scalar_lea.vmem [#allocation2], %s487
        %p489 = pneg %p55
        %p490 = pneg %p52
        %s491 = sand.u32 %s34, 1
        %s492 = scalar_lea.sflag [#allocation6], %s491
        %s493 = sand.u32 %s68, 1
        %s494 = smul.addr %s493, 8
        %s495 = scalar_lea.vmem [#allocation5], %s494
        %p496 = pneg %p81
        %p497 = pneg %p78
        %p498 = pneg %p102
        %p499 = pneg %p99
        %p500 = pneg %p123
        %p501 = pneg %p120
        %p502 = pneg %p144
        %p503 = pneg %p141
        %p504 = pneg %p165
        %p505 = pneg %p162
        %p506 = pneg %p186
        %p507 = pneg %p183
        %p508 = pneg %p207
        %p509 = pneg %p204
        %p510 = pneg %p228
        %p511 = pneg %p225
        %p512 = pneg %p249
        %p513 = pneg %p246
        %p514 = pneg %p275
        %p515 = pneg %p272
        %s516 = sand.u32 %s262, 1
        %s517 = scalar_lea.sflag [#allocation4], %s516
        %s518 = sand.u32 %s262, 1
        %s519 = smul.addr %s518, 4
        %s520 = scalar_lea.vmem [#allocation19], %s519
        %v522 = vld [vmem:[%s438] sm:$0xf]
        %v523 = vunpack.c.l.bf16 %v522
        %v524 = vld [vmem:[%s447] sm:$0xf]
        %v525 = vld [vmem:[%s447 + $0x4] sm:$0xf]
        %v526 = vld [vmem:[#allocation7] sm:$0x1]
        %v527 = vld [vmem:[#allocation8] sm:$0x1]
        %vm528 = vcmask 392192
        %v529 = vsel %vm528, %v523, 0.0
        %530 = vadd.xlane.f32.xlu0 %v529
        %v531 = vpop.xlane.xlu0 %530
        %v532 = vrcp.pop 48.0
        %v533 = vmul.f32 %v531, %v532
        %v534 = vsub.f32 %v523, %v533
        %v535 = vmul.f32 %v534, %v534
        %v536 = vsel %vm528, %v535, 0.0
        %537 = vadd.xlane.f32.xlu0 %v536
        %v538 = vpop.xlane.xlu0 %537
        %v539 = vmul.f32 %v538, %v532
        %v540 = vadd.f32 %v539, 1e-05
        %v541 = vrsqrt.pop %v540
        %v542 = vmul.f32 %v534, %v541
        %v544 = vlaneseq
        %v545 = vshrl.u32 %v544, 7
        %v546 = vsub.s32 0, %v545
        %v547 = vrot.slane %v526, %v546
        %v549 = vmul.f32 %v542, %v547
        %v551 = vlaneseq
        %v552 = vshrl.u32 %v551, 7
        %v553 = vsub.s32 0, %v552
        %v554 = vrot.slane %v527, %v553
        %v556 = vadd.f32 %v549, %v554
        %v557 = vpack.c.bf16 %v556, %v556
        %v558 = vld [vmem:[#allocation10] sm:$0xf]
        %v559 = vld [vmem:[#allocation10 + $0x4] sm:$0xf]
        %v560 = vld [vmem:[#allocation10 + $0x8] sm:$0xf]
        %v561 = vld [vmem:[#allocation10 + $0xc] sm:$0xf]
        %v562 = vld [vmem:[#allocation10 + $0x10] sm:$0xf]
        %v563 = vld [vmem:[#allocation10 + $0x14] sm:$0xf]
        %v564 = vld [vmem:[#allocation11] sm:$0x1]
        %v566 = vlaneseq
        %v567 = vshrl.u32 %v566, 7
        %v568 = vsub.s32 0, %v567
        %v569 = vrot.slane %v564, %v568
        %v577 = vunpack.c.l.b16 %v558
        %v578 = vunpack.c.l.b16 %v559
        %v579 = vunpack.c.l.b16 %v560
        %v580 = vunpack.c.l.b16 %v561
        %v581 = vunpack.c.l.b16 %v562
        %v582 = vunpack.c.l.b16 %v563
        %v583 = vpack.c.b16 %v578, %v577
        %v584 = vpack.c.b16 %v580, %v579
        %v585 = vpack.c.b16 %v582, %v581
        %v590 = vsel %vm528, %v557, 0
        %592 = vmatprep.subr.bf16.mxu0 0
        %593 = vmatpush1.bf16.msra.mxu0 %v583
        %594 = vmatprep.subr.bf16.mxu0 0
        %595 = vmatpush1.bf16.msra.mxu0 %v584
        %596 = vmatprep.subr.bf16.mxu0 0
        %597 = vmatpush1.bf16.msra.mxu0 %v585
        %598 = vmatprep.subr.bf16.mxu0 0
        %599 = vmatpush1.bf16.msra.mxu0 0
        %600 = vmatprep.subr.bf16.mxu0 0
        %601 = vmatpush1.bf16.msra.mxu0 0
        %602 = vmatprep.subr.bf16.mxu0 0
        %603 = vmatpush1.bf16.msra.mxu0 0
        %604 = vmatprep.subr.bf16.mxu0 0
        %605 = vmatpush1.bf16.msra.mxu0 0
        %606 = vmatprep.subr.bf16.mxu0 0
        %607 = vmatpush1.bf16.msra.mxu0 0
        %608 = vmatprep.subr.bf16.mxu0 0
        %609 = vmatpush1.bf16.msra.mxu0 0
        %610 = vmatprep.subr.bf16.mxu0 0
        %611 = vmatpush1.bf16.msra.mxu0 0
        %612 = vmatprep.subr.bf16.mxu0 0
        %613 = vmatpush1.bf16.msra.mxu0 0
        %614 = vmatprep.subr.bf16.mxu0 0
        %615 = vmatpush1.bf16.msra.mxu0 0
        %616 = vmatprep.subr.bf16.mxu0 0
        %617 = vmatpush1.bf16.msra.mxu0 0
        %618 = vmatprep.subr.bf16.mxu0 0
        %619 = vmatpush1.bf16.msra.mxu0 0
        %620 = vmatprep.subr.bf16.mxu0 0
        %621 = vmatpush1.bf16.msra.mxu0 0
        %622 = vmatprep.subr.bf16.mxu0 0
        %623 = vmatpush1.bf16.msra.mxu0 0
        %624 = vmatprep.mubr.bf16.mxu0 0
        %625 = vmatmul.mubr.bf16.gmra.mrb[0].mxu0 %v590
        %v626 = vpop.f32.mrb[0].mxu0
        %v627 = vadd.f32 %v569, %v626
        %v628 = vpop.f32.mrb[0].mxu0
        %v629 = vpop.f32.mrb[0].mxu0
        %v630 = vpop.f32.mrb[0].mxu0
        %631 = vdwg.mxu0
        %v632 = vld [vmem:[#allocation13] sm:$0xf]
        %v633 = vld [vmem:[#allocation13 + $0x4] sm:$0xf]
        %v634 = vld [vmem:[#allocation13 + $0x8] sm:$0xf]
        %v635 = vld [vmem:[#allocation13 + $0xc] sm:$0xf]
        %v636 = vld [vmem:[#allocation13 + $0x10] sm:$0xf]
        %v637 = vld [vmem:[#allocation13 + $0x14] sm:$0xf]
        %v638 = vld [vmem:[#allocation14] sm:$0x1]
        %v640 = vlaneseq
        %v641 = vshrl.u32 %v640, 7
        %v642 = vsub.s32 0, %v641
        %v643 = vrot.slane %v638, %v642
        %v647 = vunpack.c.l.b16 %v524
        %v648 = vunpack.c.l.b16 %v525
        %v649 = vpack.c.b16 %v648, %v647
        %v656 = vunpack.c.l.b16 %v632
        %v657 = vunpack.c.l.b16 %v633
        %v658 = vunpack.c.l.b16 %v634
        %v659 = vunpack.c.l.b16 %v635
        %v660 = vunpack.c.l.b16 %v636
        %v661 = vunpack.c.l.b16 %v637
        %v662 = vpack.c.b16 %v657, %v656
        %v663 = vpack.c.b16 %v659, %v658
        %v664 = vpack.c.b16 %v661, %v660
        %v669 = vsel %vm528, %v649, 0
        %671 = vmatprep.subr.bf16.mxu0 0
        %672 = vmatpush1.bf16.msra.mxu0 %v662
        %673 = vmatprep.subr.bf16.mxu0 0
        %674 = vmatpush1.bf16.msra.mxu0 %v663
        %675 = vmatprep.subr.bf16.mxu0 0
        %676 = vmatpush1.bf16.msra.mxu0 %v664
        %677 = vmatprep.subr.bf16.mxu0 0
        %678 = vmatpush1.bf16.msra.mxu0 0
        %679 = vmatprep.subr.bf16.mxu0 0
        %680 = vmatpush1.bf16.msra.mxu0 0
        %681 = vmatprep.subr.bf16.mxu0 0
        %682 = vmatpush1.bf16.msra.mxu0 0
        %683 = vmatprep.subr.bf16.mxu0 0
        %684 = vmatpush1.bf16.msra.mxu0 0
        %685 = vmatprep.subr.bf16.mxu0 0
        %686 = vmatpush1.bf16.msra.mxu0 0
        %687 = vmatprep.subr.bf16.mxu0 0
        %688 = vmatpush1.bf16.msra.mxu0 0
        %689 = vmatprep.subr.bf16.mxu0 0
        %690 = vmatpush1.bf16.msra.mxu0 0
        %691 = vmatprep.subr.bf16.mxu0 0
        %692 = vmatpush1.bf16.msra.mxu0 0
        %693 = vmatprep.subr.bf16.mxu0 0
        %694 = vmatpush1.bf16.msra.mxu0 0
        %695 = vmatprep.subr.bf16.mxu0 0
        %696 = vmatpush1.bf16.msra.mxu0 0
        %697 = vmatprep.subr.bf16.mxu0 0
        %698 = vmatpush1.bf16.msra.mxu0 0
        %699 = vmatprep.subr.bf16.mxu0 0
        %700 = vmatpush1.bf16.msra.mxu0 0
        %701 = vmatprep.subr.bf16.mxu0 0
        %702 = vmatpush1.bf16.msra.mxu0 0
        %703 = vmatprep.mubr.bf16.mxu0 0
        %704 = vmatmul.mubr.bf16.gmra.mrb[0].mxu0 %v669
        %v705 = vpop.f32.mrb[0].mxu0
        %v706 = vadd.f32 %v643, %v705
        %v707 = vpop.f32.mrb[0].mxu0
        %v708 = vpop.f32.mrb[0].mxu0
        %v709 = vadd.f32 %v643, %v708
        %v710 = vpop.f32.mrb[0].mxu0
        %711 = vdwg.mxu0
        %v712 = vpack.c.bf16 %v627, %v627
        %v713 = vpack.c.bf16 %v709, %v706
        %vm714 = vcmask 97280
        %v716 = vsel %vm714, %v712, 0
        %v719 = vsel %vm714, %v713, 0
        %721 = vmatprep.subr.bf16.mxu0 0
        %722 = vmatpush1.bf16.xpose.msra.mxu0 %v719
        %723 = vmatprep.subr.bf16.mxu0 0
        %724 = vmatpush1.bf16.xpose.msra.mxu0 0
        %725 = vmatprep.subr.bf16.mxu0 0
        %726 = vmatpush1.bf16.xpose.msra.mxu0 0
        %727 = vmatprep.subr.bf16.mxu0 0
        %728 = vmatpush1.bf16.xpose.msra.mxu0 0
        %729 = vmatprep.subr.bf16.mxu0 0
        %730 = vmatpush1.bf16.xpose.msra.mxu0 0
        %731 = vmatprep.subr.bf16.mxu0 0
        %732 = vmatpush1.bf16.xpose.msra.mxu0 0
        %733 = vmatprep.subr.bf16.mxu0 0
        %734 = vmatpush1.bf16.xpose.msra.mxu0 0
        %735 = vmatprep.subr.bf16.mxu0 0
        %736 = vmatpush1.bf16.xpose.msra.mxu0 0
        %737 = vmatprep.subr.bf16.mxu0 0
        %738 = vmatpush1.bf16.xpose.msra.mxu0 0
        %739 = vmatprep.subr.bf16.mxu0 0
        %740 = vmatpush1.bf16.xpose.msra.mxu0 0
        %741 = vmatprep.subr.bf16.mxu0 0
        %742 = vmatpush1.bf16.xpose.msra.mxu0 0
        %743 = vmatprep.subr.bf16.mxu0 0
        %744 = vmatpush1.bf16.xpose.msra.mxu0 0
        %745 = vmatprep.subr.bf16.mxu0 0
        %746 = vmatpush1.bf16.xpose.msra.mxu0 0
        %747 = vmatprep.subr.bf16.mxu0 0
        %748 = vmatpush1.bf16.xpose.msra.mxu0 0
        %749 = vmatprep.subr.bf16.mxu0 0
        %750 = vmatpush1.bf16.xpose.msra.mxu0 0
        %751 = vmatprep.subr.bf16.mxu0 0
        %752 = vmatpush1.bf16.xpose.msra.mxu0 0
        %753 = vmatprep.mubr.bf16.mxu0 0
        %754 = vmatmul.mubr.bf16.gmra.mrb[0].mxu0 %v716
        %v755 = vpop.f32.mrb[0].mxu0
        %v756 = vadd.f32 0.0, %v755
        %v757 = vpop.f32.mrb[0].mxu0
        %v758 = vpop.f32.mrb[0].mxu0
        %v759 = vpop.f32.mrb[0].mxu0
        %760 = vdwg.mxu0
        %v761 = vmul.f32 %v756, 0.28867513
        %vm762 = vcmask 130048
        %v763 = vsel %vm762, %v761, -inf
        %764 = vmax.xlane.f32.xlu0 %v763
        %v765 = vpop.xlane.xlu0 %764
        %v766 = vsub.f32 %v761, %v765
        %v767 = vmul.f32 %v766, 1.442695
        %v768 = vpow.pop %v767
        %v769 = vsel %vm762, %v768, 0.0
        %770 = vadd.xlane.f32.xlu0 %v769
        %v771 = vpop.xlane.xlu0 %770
        %v772 = vrcp.pop %v771
        %v773 = vmul.f32 %v768, %v772
        %v774 = vpack.c.bf16 %v773, %v773
        %776 = vrot.lane.b32.xlu0 %v713, 80
        %v777 = vpop.permute.xlu0 %776
        %v780 = vsel %vm762, %v774, 0
        %782 = vmatprep.subr.bf16.mxu0 0
        %783 = vmatpush1.bf16.msra.mxu0 %v777
        %784 = vmatprep.subr.bf16.mxu0 0
        %785 = vmatpush1.bf16.msra.mxu0 0
        %786 = vmatprep.subr.bf16.mxu0 0
        %787 = vmatpush1.bf16.msra.mxu0 0
        %788 = vmatprep.subr.bf16.mxu0 0
        %789 = vmatpush1.bf16.msra.mxu0 0
        %790 = vmatprep.subr.bf16.mxu0 0
        %791 = vmatpush1.bf16.msra.mxu0 0
        %792 = vmatprep.subr.bf16.mxu0 0
        %793 = vmatpush1.bf16.msra.mxu0 0
        %794 = vmatprep.subr.bf16.mxu0 0
        %795 = vmatpush1.bf16.msra.mxu0 0
        %796 = vmatprep.subr.bf16.mxu0 0
        %797 = vmatpush1.bf16.msra.mxu0 0
        %798 = vmatprep.subr.bf16.mxu0 0
        %799 = vmatpush1.bf16.msra.mxu0 0
        %800 = vmatprep.subr.bf16.mxu0 0
        %801 = vmatpush1.bf16.msra.mxu0 0
        %802 = vmatprep.subr.bf16.mxu0 0
        %803 = vmatpush1.bf16.msra.mxu0 0
        %804 = vmatprep.subr.bf16.mxu0 0
        %805 = vmatpush1.bf16.msra.mxu0 0
        %806 = vmatprep.subr.bf16.mxu0 0
        %807 = vmatpush1.bf16.msra.mxu0 0
        %808 = vmatprep.subr.bf16.mxu0 0
        %809 = vmatpush1.bf16.msra.mxu0 0
        %810 = vmatprep.subr.bf16.mxu0 0
        %811 = vmatpush1.bf16.msra.mxu0 0
        %812 = vmatprep.subr.bf16.mxu0 0
        %813 = vmatpush1.bf16.msra.mxu0 0
        %814 = vmatprep.mubr.bf16.mxu0 0
        %815 = vmatmul.mubr.bf16.gmra.mrb[0].mxu0 %v780
        %v816 = vpop.f32.mrb[0].mxu0
        %v817 = vadd.f32 0.0, %v816
        %v818 = vpop.f32.mrb[0].mxu0
        %v819 = vpop.f32.mrb[0].mxu0
        %v820 = vpop.f32.mrb[0].mxu0
        %821 = vdwg.mxu0
        %823 = vrot.lane.b32.xlu0 %v712, 116
        %v824 = vpop.permute.xlu0 %823
        %825 = vrot.lane.b32.xlu0 %v713, 116
        %v826 = vpop.permute.xlu0 %825
        %v828 = vsel %vm714, %v824, 0
        %v831 = vsel %vm714, %v826, 0
        %833 = vmatprep.subr.bf16.mxu0 0
        %834 = vmatpush1.bf16.xpose.msra.mxu0 %v831
        %835 = vmatprep.subr.bf16.mxu0 0
        %836 = vmatpush1.bf16.xpose.msra.mxu0 0
        %837 = vmatprep.subr.bf16.mxu0 0
        %838 = vmatpush1.bf16.xpose.msra.mxu0 0
        %839 = vmatprep.subr.bf16.mxu0 0
        %840 = vmatpush1.bf16.xpose.msra.mxu0 0
        %841 = vmatprep.subr.bf16.mxu0 0
        %842 = vmatpush1.bf16.xpose.msra.mxu0 0
        %843 = vmatprep.subr.bf16.mxu0 0
        %844 = vmatpush1.bf16.xpose.msra.mxu0 0
        %845 = vmatprep.subr.bf16.mxu0 0
        %846 = vmatpush1.bf16.xpose.msra.mxu0 0
        %847 = vmatprep.subr.bf16.mxu0 0
        %848 = vmatpush1.bf16.xpose.msra.mxu0 0
        %849 = vmatprep.subr.bf16.mxu0 0
        %850 = vmatpush1.bf16.xpose.msra.mxu0 0
        %851 = vmatprep.subr.bf16.mxu0 0
        %852 = vmatpush1.bf16.xpose.msra.mxu0 0
        %853 = vmatprep.subr.bf16.mxu0 0
        %854 = vmatpush1.bf16.xpose.msra.mxu0 0
        %855 = vmatprep.subr.bf16.mxu0 0
        %856 = vmatpush1.bf16.xpose.msra.mxu0 0
        %857 = vmatprep.subr.bf16.mxu0 0
        %858 = vmatpush1.bf16.xpose.msra.mxu0 0
        %859 = vmatprep.subr.bf16.mxu0 0
        %860 = vmatpush1.bf16.xpose.msra.mxu0 0
        %861 = vmatprep.subr.bf16.mxu0 0
        %862 = vmatpush1.bf16.xpose.msra.mxu0 0
        %863 = vmatprep.subr.bf16.mxu0 0
        %864 = vmatpush1.bf16.xpose.msra.mxu0 0
        %865 = vmatprep.mubr.bf16.mxu0 0
        %866 = vmatmul.mubr.bf16.gmra.mrb[0].mxu0 %v828
        %v867 = vpop.f32.mrb[0].mxu0
        %v868 = vadd.f32 0.0, %v867
        %v869 = vpop.f32.mrb[0].mxu0
        %v870 = vpop.f32.mrb[0].mxu0
        %v871 = vpop.f32.mrb[0].mxu0
        %872 = vdwg.mxu0
        %v873 = vmul.f32 %v868, 0.28867513
        %v874 = vsel %vm762, %v873, -inf
        %875 = vmax.xlane.f32.xlu0 %v874
        %v876 = vpop.xlane.xlu0 %875
        %v877 = vsub.f32 %v873, %v876
        %v878 = vmul.f32 %v877, 1.442695
        %v879 = vpow.pop %v878
        %v880 = vsel %vm762, %v879, 0.0
        %881 = vadd.xlane.f32.xlu0 %v880
        %v882 = vpop.xlane.xlu0 %881
        %v883 = vrcp.pop %v882
        %v884 = vmul.f32 %v879, %v883
        %v885 = vpack.c.bf16 %v884, %v884
        %886 = vrot.lane.b32.xlu0 %v713, 68
        %v887 = vpop.permute.xlu0 %886
        %v890 = vsel %vm762, %v885, 0
        %892 = vmatprep.subr.bf16.mxu0 0
        %893 = vmatpush1.bf16.msra.mxu0 %v887
        %894 = vmatprep.subr.bf16.mxu0 0
        %895 = vmatpush1.bf16.msra.mxu0 0
        %896 = vmatprep.subr.bf16.mxu0 0
        %897 = vmatpush1.bf16.msra.mxu0 0
        %898 = vmatprep.subr.bf16.mxu0 0
        %899 = vmatpush1.bf16.msra.mxu0 0
        %900 = vmatprep.subr.bf16.mxu0 0
        %901 = vmatpush1.bf16.msra.mxu0 0
        %902 = vmatprep.subr.bf16.mxu0 0
        %903 = vmatpush1.bf16.msra.mxu0 0
        %904 = vmatprep.subr.bf16.mxu0 0
        %905 = vmatpush1.bf16.msra.mxu0 0
        %906 = vmatprep.subr.bf16.mxu0 0
        %907 = vmatpush1.bf16.msra.mxu0 0
        %908 = vmatprep.subr.bf16.mxu0 0
        %909 = vmatpush1.bf16.msra.mxu0 0
        %910 = vmatprep.subr.bf16.mxu0 0
        %911 = vmatpush1.bf16.msra.mxu0 0
        %912 = vmatprep.subr.bf16.mxu0 0
        %913 = vmatpush1.bf16.msra.mxu0 0
        %914 = vmatprep.subr.bf16.mxu0 0
        %915 = vmatpush1.bf16.msra.mxu0 0
        %916 = vmatprep.subr.bf16.mxu0 0
        %917 = vmatpush1.bf16.msra.mxu0 0
        %918 = vmatprep.subr.bf16.mxu0 0
        %919 = vmatpush1.bf16.msra.mxu0 0
        %920 = vmatprep.subr.bf16.mxu0 0
        %921 = vmatpush1.bf16.msra.mxu0 0
        %922 = vmatprep.subr.bf16.mxu0 0
        %923 = vmatpush1.bf16.msra.mxu0 0
        %924 = vmatprep.mubr.bf16.mxu0 0
        %925 = vmatmul.mubr.bf16.gmra.mrb[0].mxu0 %v890
        %v926 = vpop.f32.mrb[0].mxu0
        %v927 = vadd.f32 0.0, %v926
        %v928 = vpop.f32.mrb[0].mxu0
        %v929 = vpop.f32.mrb[0].mxu0
        %v930 = vpop.f32.mrb[0].mxu0
        %931 = vdwg.mxu0
        %932 = vrot.lane.b32.xlu0 %v712, 104
        %v933 = vpop.permute.xlu0 %932
        %934 = vrot.lane.b32.xlu0 %v713, 104
        %v935 = vpop.permute.xlu0 %934
        %v937 = vsel %vm714, %v933, 0
        %v940 = vsel %vm714, %v935, 0
        %942 = vmatprep.subr.bf16.mxu0 0
        %943 = vmatpush1.bf16.xpose.msra.mxu0 %v940
        %944 = vmatprep.subr.bf16.mxu0 0
        %945 = vmatpush1.bf16.xpose.msra.mxu0 0
        %946 = vmatprep.subr.bf16.mxu0 0
        %947 = vmatpush1.bf16.xpose.msra.mxu0 0
        %948 = vmatprep.subr.bf16.mxu0 0
        %949 = vmatpush1.bf16.xpose.msra.mxu0 0
        %950 = vmatprep.subr.bf16.mxu0 0
        %951 = vmatpush1.bf16.xpose.msra.mxu0 0
        %952 = vmatprep.subr.bf16.mxu0 0
        %953 = vmatpush1.bf16.xpose.msra.mxu0 0
        %954 = vmatprep.subr.bf16.mxu0 0
        %955 = vmatpush1.bf16.xpose.msra.mxu0 0
        %956 = vmatprep.subr.bf16.mxu0 0
        %957 = vmatpush1.bf16.xpose.msra.mxu0 0
        %958 = vmatprep.subr.bf16.mxu0 0
        %959 = vmatpush1.bf16.xpose.msra.mxu0 0
        %960 = vmatprep.subr.bf16.mxu0 0
        %961 = vmatpush1.bf16.xpose.msra.mxu0 0
        %962 = vmatprep.subr.bf16.mxu0 0
        %963 = vmatpush1.bf16.xpose.msra.mxu0 0
        %964 = vmatprep.subr.bf16.mxu0 0
        %965 = vmatpush1.bf16.xpose.msra.mxu0 0
        %966 = vmatprep.subr.bf16.mxu0 0
        %967 = vmatpush1.bf16.xpose.msra.mxu0 0
        %968 = vmatprep.subr.bf16.mxu0 0
        %969 = vmatpush1.bf16.xpose.msra.mxu0 0
        %970 = vmatprep.subr.bf16.mxu0 0
        %971 = vmatpush1.bf16.xpose.msra.mxu0 0
        %972 = vmatprep.subr.bf16.mxu0 0
        %973 = vmatpush1.bf16.xpose.msra.mxu0 0
        %974 = vmatprep.mubr.bf16.mxu0 0
        %975 = vmatmul.mubr.bf16.gmra.mrb[0].mxu0 %v937
        %v976 = vpop.f32.mrb[0].mxu0
        %v977 = vadd.f32 0.0, %v976
        %v978 = vpop.f32.mrb[0].mxu0
        %v979 = vpop.f32.mrb[0].mxu0
        %v980 = vpop.f32.mrb[0].mxu0
        %981 = vdwg.mxu0
        %v982 = vmul.f32 %v977, 0.28867513
        %v983 = vsel %vm762, %v982, -inf
        %984 = vmax.xlane.f32.xlu0 %v983
        %v985 = vpop.xlane.xlu0 %984
        %v986 = vsub.f32 %v982, %v985
        %v987 = vmul.f32 %v986, 1.442695
        %v988 = vpow.pop %v987
        %v989 = vsel %vm762, %v988, 0.0
        %990 = vadd.xlane.f32.xlu0 %v989
        %v991 = vpop.xlane.xlu0 %990
        %v992 = vrcp.pop %v991
        %v993 = vmul.f32 %v988, %v992
        %v994 = vpack.c.bf16 %v993, %v993
        %995 = vrot.lane.b32.xlu0 %v713, 56
        %v996 = vpop.permute.xlu0 %995
        %v999 = vsel %vm762, %v994, 0
        %1001 = vmatprep.subr.bf16.mxu0 0
        %1002 = vmatpush1.bf16.msra.mxu0 %v996
        %1003 = vmatprep.subr.bf16.mxu0 0
        %1004 = vmatpush1.bf16.msra.mxu0 0
        %1005 = vmatprep.subr.bf16.mxu0 0
        %1006 = vmatpush1.bf16.msra.mxu0 0
        %1007 = vmatprep.subr.bf16.mxu0 0
        %1008 = vmatpush1.bf16.msra.mxu0 0
        %1009 = vmatprep.subr.bf16.mxu0 0
        %1010 = vmatpush1.bf16.msra.mxu0 0
        %1011 = vmatprep.subr.bf16.mxu0 0
        %1012 = vmatpush1.bf16.msra.mxu0 0
        %1013 = vmatprep.subr.bf16.mxu0 0
        %1014 = vmatpush1.bf16.msra.mxu0 0
        %1015 = vmatprep.subr.bf16.mxu0 0
        %1016 = vmatpush1.bf16.msra.mxu0 0
        %1017 = vmatprep.subr.bf16.mxu0 0
        %1018 = vmatpush1.bf16.msra.mxu0 0
        %1019 = vmatprep.subr.bf16.mxu0 0
        %1020 = vmatpush1.bf16.msra.mxu0 0
        %1021 = vmatprep.subr.bf16.mxu0 0
        %1022 = vmatpush1.bf16.msra.mxu0 0
        %1023 = vmatprep.subr.bf16.mxu0 0
        %1024 = vmatpush1.bf16.msra.mxu0 0
        %1025 = vmatprep.subr.bf16.mxu0 0
        %1026 = vmatpush1.bf16.msra.mxu0 0
        %1027 = vmatprep.subr.bf16.mxu0 0
        %1028 = vmatpush1.bf16.msra.mxu0 0
        %1029 = vmatprep.subr.bf16.mxu0 0
        %1030 = vmatpush1.bf16.msra.mxu0 0
        %1031 = vmatprep.subr.bf16.mxu0 0
        %1032 = vmatpush1.bf16.msra.mxu0 0
        %1033 = vmatprep.mubr.bf16.mxu0 0
        %1034 = vmatmul.mubr.bf16.gmra.mrb[0].mxu0 %v999
        %v1035 = vpop.f32.mrb[0].mxu0
        %v1036 = vadd.f32 0.0, %v1035
        %v1037 = vpop.f32.mrb[0].mxu0
        %v1038 = vpop.f32.mrb[0].mxu0
        %v1039 = vpop.f32.mrb[0].mxu0
        %1040 = vdwg.mxu0
        %1041 = vrot.lane.b32.xlu0 %v712, 92
        %v1042 = vpop.permute.xlu0 %1041
        %1043 = vrot.lane.b32.xlu0 %v713, 92
        %v1044 = vpop.permute.xlu0 %1043
        %v1046 = vsel %vm714, %v1042, 0
        %v1049 = vsel %vm714, %v1044, 0
        %1051 = vmatprep.subr.bf16.mxu0 0
        %1052 = vmatpush1.bf16.xpose.msra.mxu0 %v1049
        %1053 = vmatprep.subr.bf16.mxu0 0
        %1054 = vmatpush1.bf16.xpose.msra.mxu0 0
        %1055 = vmatprep.subr.bf16.mxu0 0
        %1056 = vmatpush1.bf16.xpose.msra.mxu0 0
        %1057 = vmatprep.subr.bf16.mxu0 0
        %1058 = vmatpush1.bf16.xpose.msra.mxu0 0
        %1059 = vmatprep.subr.bf16.mxu0 0
        %1060 = vmatpush1.bf16.xpose.msra.mxu0 0
        %1061 = vmatprep.subr.bf16.mxu0 0
        %1062 = vmatpush1.bf16.xpose.msra.mxu0 0
        %1063 = vmatprep.subr.bf16.mxu0 0
        %1064 = vmatpush1.bf16.xpose.msra.mxu0 0
        %1065 = vmatprep.subr.bf16.mxu0 0
        %1066 = vmatpush1.bf16.xpose.msra.mxu0 0
        %1067 = vmatprep.subr.bf16.mxu0 0
        %1068 = vmatpush1.bf16.xpose.msra.mxu0 0
        %1069 = vmatprep.subr.bf16.mxu0 0
        %1070 = vmatpush1.bf16.xpose.msra.mxu0 0
        %1071 = vmatprep.subr.bf16.mxu0 0
        %1072 = vmatpush1.bf16.xpose.msra.mxu0 0
        %1073 = vmatprep.subr.bf16.mxu0 0
        %1074 = vmatpush1.bf16.xpose.msra.mxu0 0
        %1075 = vmatprep.subr.bf16.mxu0 0
        %1076 = vmatpush1.bf16.xpose.msra.mxu0 0
        %1077 = vmatprep.subr.bf16.mxu0 0
        %1078 = vmatpush1.bf16.xpose.msra.mxu0 0
        %1079 = vmatprep.subr.bf16.mxu0 0
        %1080 = vmatpush1.bf16.xpose.msra.mxu0 0
        %1081 = vmatprep.subr.bf16.mxu0 0
        %1082 = vmatpush1.bf16.xpose.msra.mxu0 0
        %1083 = vmatprep.mubr.bf16.mxu0 0
        %1084 = vmatmul.mubr.bf16.gmra.mrb[0].mxu0 %v1046
        %v1085 = vpop.f32.mrb[0].mxu0
        %v1086 = vadd.f32 0.0, %v1085
        %v1087 = vpop.f32.mrb[0].mxu0
        %v1088 = vpop.f32.mrb[0].mxu0
        %v1089 = vpop.f32.mrb[0].mxu0
        %1090 = vdwg.mxu0
        %v1091 = vmul.f32 %v1086, 0.28867513
        %v1092 = vsel %vm762, %v1091, -inf
        %1093 = vmax.xlane.f32.xlu0 %v1092
        %v1094 = vpop.xlane.xlu0 %1093
        %v1095 = vsub.f32 %v1091, %v1094
        %v1096 = vmul.f32 %v1095, 1.442695
        %v1097 = vpow.pop %v1096
        %v1098 = vsel %vm762, %v1097, 0.0
        %1099 = vadd.xlane.f32.xlu0 %v1098
        %v1100 = vpop.xlane.xlu0 %1099
        %v1101 = vrcp.pop %v1100
        %v1102 = vmul.f32 %v1097, %v1101
        %v1103 = vpack.c.bf16 %v1102, %v1102
        %1104 = vrot.lane.b32.xlu0 %v713, 44
        %v1105 = vpop.permute.xlu0 %1104
        %v1108 = vsel %vm762, %v1103, 0
        %1110 = vmatprep.subr.bf16.mxu0 0
        %1111 = vmatpush1.bf16.msra.mxu0 %v1105
        %1112 = vmatprep.subr.bf16.mxu0 0
        %1113 = vmatpush1.bf16.msra.mxu0 0
        %1114 = vmatprep.subr.bf16.mxu0 0
        %1115 = vmatpush1.bf16.msra.mxu0 0
        %1116 = vmatprep.subr.bf16.mxu0 0
        %1117 = vmatpush1.bf16.msra.mxu0 0
        %1118 = vmatprep.subr.bf16.mxu0 0
        %1119 = vmatpush1.bf16.msra.mxu0 0
        %1120 = vmatprep.subr.bf16.mxu0 0
        %1121 = vmatpush1.bf16.msra.mxu0 0
        %1122 = vmatprep.subr.bf16.mxu0 0
        %1123 = vmatpush1.bf16.msra.mxu0 0
        %1124 = vmatprep.subr.bf16.mxu0 0
        %1125 = vmatpush1.bf16.msra.mxu0 0
        %1126 = vmatprep.subr.bf16.mxu0 0
        %1127 = vmatpush1.bf16.msra.mxu0 0
        %1128 = vmatprep.subr.bf16.mxu0 0
        %1129 = vmatpush1.bf16.msra.mxu0 0
        %1130 = vmatprep.subr.bf16.mxu0 0
        %1131 = vmatpush1.bf16.msra.mxu0 0
        %1132 = vmatprep.subr.bf16.mxu0 0
        %1133 = vmatpush1.bf16.msra.mxu0 0
        %1134 = vmatprep.subr.bf16.mxu0 0
        %1135 = vmatpush1.bf16.msra.mxu0 0
        %1136 = vmatprep.subr.bf16.mxu0 0
        %1137 = vmatpush1.bf16.msra.mxu0 0
        %1138 = vmatprep.subr.bf16.mxu0 0
        %1139 = vmatpush1.bf16.msra.mxu0 0
        %1140 = vmatprep.subr.bf16.mxu0 0
        %1141 = vmatpush1.bf16.msra.mxu0 0
        %1142 = vmatprep.mubr.bf16.mxu0 0
        %1143 = vmatmul.mubr.bf16.gmra.mrb[0].mxu0 %v1108
        %v1144 = vpop.f32.mrb[0].mxu0
        %v1145 = vadd.f32 0.0, %v1144
        %v1146 = vpop.f32.mrb[0].mxu0
        %v1147 = vpop.f32.mrb[0].mxu0
        %v1148 = vpop.f32.mrb[0].mxu0
        %1149 = vdwg.mxu0
        %1151 = vrot.lane.b32.xlu0 %v927, 12
        %v1152 = vpop.permute.xlu0 %1151
        %1155 = vrot.lane.b32.xlu0 %v1036, 24
        %v1156 = vpop.permute.xlu0 %1155
        %1159 = vrot.lane.b32.xlu0 %v1145, 36
        %v1160 = vpop.permute.xlu0 %1159
        %v1162 = vsel %vm714, %v817, %v1152
        %vm1163 = vcmask 195584
        %v1164 = vsel %vm1163, %v1162, %v1156
        %vm1165 = vcmask 293888
        %v1166 = vsel %vm1165, %v1164, %v1160
        %v1167 = vpack.c.bf16 %v1166, %v1166
        %v1168 = vld [vmem:[#allocation16] sm:$0xf]
        %v1169 = vld [vmem:[#allocation16 + $0x4] sm:$0xf]
        %v1170 = vld [vmem:[#allocation16 + $0x8] sm:$0xf]
        %v1171 = vld [vmem:[#allocation16 + $0xc] sm:$0xf]
        %v1172 = vld [vmem:[#allocation16 + $0x10] sm:$0xf]
        %v1173 = vld [vmem:[#allocation16 + $0x14] sm:$0xf]
        %v1174 = vld [vmem:[#allocation17] sm:$0x1]
        %v1176 = vlaneseq
        %v1177 = vshrl.u32 %v1176, 7
        %v1178 = vsub.s32 0, %v1177
        %v1179 = vrot.slane %v1174, %v1178
        %v1187 = vunpack.c.l.b16 %v1168
        %v1188 = vunpack.c.l.b16 %v1169
        %v1189 = vunpack.c.l.b16 %v1170
        %v1190 = vunpack.c.l.b16 %v1171
        %v1191 = vunpack.c.l.b16 %v1172
        %v1192 = vunpack.c.l.b16 %v1173
        %v1193 = vpack.c.b16 %v1188, %v1187
        %v1194 = vpack.c.b16 %v1190, %v1189
        %v1195 = vpack.c.b16 %v1192, %v1191
        %v1200 = vsel %vm528, %v1167, 0
        %1202 = vmatprep.subr.bf16.mxu0 0
        %1203 = vmatpush1.bf16.msra.mxu0 %v1193
        %1204 = vmatprep.subr.bf16.mxu0 0
        %1205 = vmatpush1.bf16.msra.mxu0 %v1194
        %1206 = vmatprep.subr.bf16.mxu0 0
        %1207 = vmatpush1.bf16.msra.mxu0 %v1195
        %1208 = vmatprep.subr.bf16.mxu0 0
        %1209 = vmatpush1.bf16.msra.mxu0 0
        %1210 = vmatprep.subr.bf16.mxu0 0
        %1211 = vmatpush1.bf16.msra.mxu0 0
        %1212 = vmatprep.subr.bf16.mxu0 0
        %1213 = vmatpush1.bf16.msra.mxu0 0
        %1214 = vmatprep.subr.bf16.mxu0 0
        %1215 = vmatpush1.bf16.msra.mxu0 0
        %1216 = vmatprep.subr.bf16.mxu0 0
        %1217 = vmatpush1.bf16.msra.mxu0 0
        %1218 = vmatprep.subr.bf16.mxu0 0
        %1219 = vmatpush1.bf16.msra.mxu0 0
        %1220 = vmatprep.subr.bf16.mxu0 0
        %1221 = vmatpush1.bf16.msra.mxu0 0
        %1222 = vmatprep.subr.bf16.mxu0 0
        %1223 = vmatpush1.bf16.msra.mxu0 0
        %1224 = vmatprep.subr.bf16.mxu0 0
        %1225 = vmatpush1.bf16.msra.mxu0 0
        %1226 = vmatprep.subr.bf16.mxu0 0
        %1227 = vmatpush1.bf16.msra.mxu0 0
        %1228 = vmatprep.subr.bf16.mxu0 0
        %1229 = vmatpush1.bf16.msra.mxu0 0
        %1230 = vmatprep.subr.bf16.mxu0 0
        %1231 = vmatpush1.bf16.msra.mxu0 0
        %1232 = vmatprep.subr.bf16.mxu0 0
        %1233 = vmatpush1.bf16.msra.mxu0 0
        %1234 = vmatprep.mubr.bf16.mxu0 0
        %1235 = vmatmul.mubr.bf16.gmra.mrb[0].mxu0 %v1200
        %v1236 = vpop.f32.mrb[0].mxu0
        %v1237 = vadd.f32 %v1179, %v1236
        %v1238 = vpop.f32.mrb[0].mxu0
        %v1239 = vpop.f32.mrb[0].mxu0
        %v1240 = vpop.f32.mrb[0].mxu0
        %1241 = vdwg.mxu0
        %v1242 = vadd.f32 %v523, %v1237
        %v1243 = vpack.c.bf16 %v1242, %v1242
        %vm1244 = vcmask 388096
        %1245 = vst.msk [vmem:[%s520] sm:$0xf] %vm1244, %v1243
        %s1246 = sand.u32 %s262, 1
        %s1247 = scalar_lea.sflag [#allocation4], %s1246
        %s1248 = sand.u32 %s262, 1
        %s1249 = smul.addr %s1248, 4
        %s1250 = scalar_lea.vmem [#allocation19], %s1249
        // Predicated region
        $region101: #{_lambda_.20} parent=59 // pred_check
          %p1251 = pneg %p272
        $region102: #{_lambda_.20} parent=59 // pred_check_branch
          %1253 = sbr.rel (%p1251) target = $region104
        $region103: #{_lambda_.20} parent=59 // pred_region
          %s1255 = ssub.s32 64, 64
          %1256 = vsyncadd %s1247, %s1255
          %s1257 = smul.addr %s34, 64
          %s1258 = scalar_lea.hbm %s10, %s1257
          %s1260 = sshll.u32 %s1250, 4
          %s1261 = int_to_ptr.vmem [resolvable:$true] %s1260
          %1263 = dma.vmem_to_hbm [thread:$0]  %s1261, 64, %s1258, %s1247
        $region104: #{_lambda_.20} parent=59 // pred_fallthru
          _
      $region60: #{_lambda_.20} parent=5 // pred_fallthru
        _
      %p1264 = scmp.le.s32.totalorder 2, %s29
      // Predicated region
      $region105: #{_lambda_.20} parent=5 // pred_check
        %p1265 = pneg %p1264
      $region106: #{_lambda_.20} parent=5 // pred_check_branch
        %1267 = sbr.rel (%p1265) target = $region108
      $region107: #{_lambda_.20} parent=5 // pred_region
        %s1268 = ssub.s32 %s29, 2
        // Predicated region
        $region109: #{_lambda_.20} parent=107 // pred_check
          %p1269 = pneg %p278
        $region110: #{_lambda_.20} parent=107 // pred_check_branch
          %1271 = sbr.rel (%p1269) target = $region112
        $region111: #{_lambda_.20} parent=107 // pred_region
          %s1272 = sand.u32 %s263, 1
          %s1273 = scalar_lea.sflag [#allocation4], %s1272
          %s1274 = sand.u32 %s263, 1
          %s1275 = smul.addr %s1274, 4
          %s1276 = scalar_lea.vmem [#allocation19], %s1275
          %1277 = dma.done %s1273, 64
        $region112: #{_lambda_.20} parent=107 // pred_fallthru
          _
      $region108: #{_lambda_.20} parent=5 // pred_fallthru
        _
    $region6: #{_lambda_.20} parent=1 // loop_footer
      %s33 = sadd.s32 1, %s29
    $region7: #{_lambda_.20} parent=1 // loop_footer_branch
      %28 = sbr.rel target = $region3
    $region8: #{_lambda_.20} parent=1 // loop_exit
      _
    %1278 = vsyncpa [#allocation3], 1
    %s1279 = scalar_lea.sflag [#allocation3], 1
    %1280 = vsyncpa %s1279, 1
    %1281 = vsyncpa [#allocation6], 1
    %s1282 = scalar_lea.sflag [#allocation6], 1
    %1283 = vsyncpa %s1282, 1
    %1284 = vsyncpa [#allocation9], 1
    %1285 = vsyncpa [#allocation12], 1
    %1286 = vsyncpa [#allocation15], 1
    %1287 = vsyncpa [#allocation18], 1
    %1288 = vsyncpa [#allocation4], 1
    %s1289 = scalar_lea.sflag [#allocation4], 1
    %1290 = vsyncpa %s1289, 1

// kernel: _lambda_.21
$region0: #{_lambda_.21}
  #allocation0 [shape = 'u32[]', space=smem, size = 0x4, offset = 0x4, fixed_abs, tag = 'smem constant byte address 0x4 - core index']
  #allocation1 [shape = 'u32[144,128]{1,0:T(1,128)}', space=vmem, size = 0x12000, scoped, tag = 'internal scratch']
  %s0 = inlined_call_operand.hbm [shape: bf16[16,48], index: 0, kind: input, shape index: {}]
  %s1 = inlined_call_operand.hbm [shape: f32[1,48], index: 1, kind: input, shape index: {}]
  %s2 = inlined_call_operand.hbm [shape: f32[1,48], index: 2, kind: input, shape index: {}]
  %s3 = inlined_call_operand.hbm [shape: bf16[48,192], index: 3, kind: input, shape index: {}]
  %s4 = inlined_call_operand.hbm [shape: f32[1,192], index: 4, kind: input, shape index: {}]
  %s5 = inlined_call_operand.hbm [shape: bf16[192,48], index: 5, kind: input, shape index: {}]
  %s6 = inlined_call_operand.hbm [shape: f32[1,48], index: 6, kind: input, shape index: {}]
  %s7 = inlined_call_operand.hbm [shape: bf16[16,48], index: 7, kind: output, shape index: {}]
  %s8 = sld [smem:[#allocation0]]
  $region66: #{_lambda_.21} parent=0
    _
  %s10 = ssub.s32 1, %s8
  %s11 = scalar_select 0, %s10, %s8
  $region1: #{_lambda_.21} parent=0
    #allocation2 [shape = 'u8[4096]{0}', space=vmem, size = 0x1000, scoped, tag = 'input window, operand 0, single buffered']
    #allocation3 [shape = 's32[1]{0}', space=sflag, size = 0x4, scoped, tag = 'scoped memory for _lambda_.21']
    #allocation4 [shape = 's32[1]{0}', space=sflag, size = 0x4, scoped, tag = 'scoped memory for _lambda_.21']
    #allocation5 [shape = 'u8[512]{0}', space=vmem, size = 0x400, scoped, tag = 'input window, operand 1, single buffered']
    #allocation6 [shape = 's32[1]{0}', space=sflag, size = 0x4, scoped, tag = 'scoped memory for _lambda_.21']
    #allocation7 [shape = 'u8[512]{0}', space=vmem, size = 0x400, scoped, tag = 'input window, operand 2, single buffered']
    #allocation8 [shape = 'u8[24576]{0}', space=vmem, size = 0x6000, scoped, tag = 'input window, operand 3, single buffered']
    #allocation9 [shape = 's32[1]{0}', space=sflag, size = 0x4, scoped, tag = 'scoped memory for _lambda_.21']
    #allocation10 [shape = 'u8[1024]{0}', space=vmem, size = 0x400, scoped, tag = 'input window, operand 4, single buffered']
    #allocation11 [shape = 'u8[49152]{0}', space=vmem, size = 0xc000, scoped, tag = 'input window, operand 5, single buffered']
    #allocation12 [shape = 's32[1]{0}', space=sflag, size = 0x4, scoped, tag = 'scoped memory for _lambda_.21']
    #allocation13 [shape = 'u8[512]{0}', space=vmem, size = 0x400, scoped, tag = 'input window, operand 6, single buffered']
    #allocation14 [shape = 'u8[4096]{0}', space=vmem, size = 0x1000, scoped, tag = 'output window, operand 0, single buffered']
    %12 = vsyncpa [#allocation3], 0
    %13 = vsyncpa [#allocation6], 0
    %14 = vsyncpa [#allocation9], 0
    %15 = vsyncpa [#allocation12], 0
    %16 = vsyncpa [#allocation4], 0
    // Predicated region
    $region2: #{_lambda_.21} parent=1 // pred_check
      _
    $region3: #{_lambda_.21} parent=1 // pred_check_branch
      %18 = sbr.rel (0) target = $region5
    $region4: #{_lambda_.21} parent=1 // pred_region
      %s20 = ssub.s32 128, 128
      %21 = vsyncadd [#allocation3], %s20
      %s22 = sshll.u32 [#allocation2], 4
      %s23 = int_to_ptr.vmem [resolvable:$true] %s22
      %28 = dma.hbm_to_vmem [thread:$0]  %s0, 128, %s23, [#allocation3], 64, 64, 4
    $region5: #{_lambda_.21} parent=1 // pred_fallthru
      _
    // Predicated region
    $region6: #{_lambda_.21} parent=1 // pred_check
      _
    $region7: #{_lambda_.21} parent=1 // pred_check_branch
      %30 = sbr.rel (0) target = $region9
    $region8: #{_lambda_.21} parent=1 // pred_region
      %s32 = ssub.s32 16, 16
      %33 = vsyncadd [#allocation6], %s32
      %s35 = sshll.u32 [#allocation5], 4
      %s36 = int_to_ptr.vmem [resolvable:$true] %s35
      %38 = dma.hbm_to_vmem [thread:$0]  %s1, 16, %s36, [#allocation6]
    $region9: #{_lambda_.21} parent=1 // pred_fallthru
      _
    // Predicated region
    $region10: #{_lambda_.21} parent=1 // pred_check
      _
    $region11: #{_lambda_.21} parent=1 // pred_check_branch
      %40 = sbr.rel (0) target = $region13
    $region12: #{_lambda_.21} parent=1 // pred_region
      %s42 = ssub.s32 16, 16
      %43 = vsyncadd [#allocation6], %s42
      %s45 = sshll.u32 [#allocation7], 4
      %s46 = int_to_ptr.vmem [resolvable:$true] %s45
      %48 = dma.hbm_to_vmem [thread:$0]  %s2, 16, %s46, [#allocation6]
    $region13: #{_lambda_.21} parent=1 // pred_fallthru
      _
    // Predicated region
    $region14: #{_lambda_.21} parent=1 // pred_check
      _
    $region15: #{_lambda_.21} parent=1 // pred_check_branch
      %50 = sbr.rel (0) target = $region17
    $region16: #{_lambda_.21} parent=1 // pred_region
      %s52 = ssub.s32 768, 768
      %53 = vsyncadd [#allocation9], %s52
      %s54 = sshll.u32 [#allocation8], 4
      %s55 = int_to_ptr.vmem [resolvable:$true] %s54
      %60 = dma.hbm_to_vmem [thread:$0]  %s3, 768, %s55, [#allocation9], 128, 128, 8
    $region17: #{_lambda_.21} parent=1 // pred_fallthru
      _
    // Predicated region
    $region18: #{_lambda_.21} parent=1 // pred_check
      _
    $region19: #{_lambda_.21} parent=1 // pred_check_branch
      %62 = sbr.rel (0) target = $region21
    $region20: #{_lambda_.21} parent=1 // pred_region
      %s64 = ssub.s32 32, 32
      %65 = vsyncadd [#allocation9], %s64
      %s67 = sshll.u32 [#allocation10], 4
      %s68 = int_to_ptr.vmem [resolvable:$true] %s67
      %70 = dma.hbm_to_vmem [thread:$0]  %s4, 32, %s68, [#allocation9]
    $region21: #{_lambda_.21} parent=1 // pred_fallthru
      _
    // Predicated region
    $region22: #{_lambda_.21} parent=1 // pred_check
      _
    $region23: #{_lambda_.21} parent=1 // pred_check_branch
      %72 = sbr.rel (0) target = $region25
    $region24: #{_lambda_.21} parent=1 // pred_region
      %s74 = ssub.s32 1536, 1536
      %75 = vsyncadd [#allocation12], %s74
      %s76 = sshll.u32 [#allocation11], 4
      %s77 = int_to_ptr.vmem [resolvable:$true] %s76
      %82 = dma.hbm_to_vmem [thread:$0]  %s5, 1536, %s77, [#allocation12], 64, 64, 4
    $region25: #{_lambda_.21} parent=1 // pred_fallthru
      _
    // Predicated region
    $region26: #{_lambda_.21} parent=1 // pred_check
      _
    $region27: #{_lambda_.21} parent=1 // pred_check_branch
      %84 = sbr.rel (0) target = $region29
    $region28: #{_lambda_.21} parent=1 // pred_region
      %s86 = ssub.s32 16, 16
      %87 = vsyncadd [#allocation12], %s86
      %s89 = sshll.u32 [#allocation13], 4
      %s90 = int_to_ptr.vmem [resolvable:$true] %s89
      %92 = dma.hbm_to_vmem [thread:$0]  %s6, 16, %s90, [#allocation12]
    $region29: #{_lambda_.21} parent=1 // pred_fallthru
      _
    // Predicated region
    $region30: #{_lambda_.21} parent=1 // pred_check
      _
    $region31: #{_lambda_.21} parent=1 // pred_check_branch
      %94 = sbr.rel (0) target = $region33
    $region32: #{_lambda_.21} parent=1 // pred_region
      %95 = dma.done [#allocation3], 128
    $region33: #{_lambda_.21} parent=1 // pred_fallthru
      _
    // Predicated region
    $region34: #{_lambda_.21} parent=1 // pred_check
      _
    $region35: #{_lambda_.21} parent=1 // pred_check_branch
      %97 = sbr.rel (0) target = $region37
    $region36: #{_lambda_.21} parent=1 // pred_region
      %98 = dma.done [#allocation6], 16
    $region37: #{_lambda_.21} parent=1 // pred_fallthru
      _
    // Predicated region
    $region38: #{_lambda_.21} parent=1 // pred_check
      _
    $region39: #{_lambda_.21} parent=1 // pred_check_branch
      %100 = sbr.rel (0) target = $region41
    $region40: #{_lambda_.21} parent=1 // pred_region
      %101 = dma.done [#allocation6], 16
    $region41: #{_lambda_.21} parent=1 // pred_fallthru
      _
    // Predicated region
    $region42: #{_lambda_.21} parent=1 // pred_check
      _
    $region43: #{_lambda_.21} parent=1 // pred_check_branch
      %103 = sbr.rel (0) target = $region45
    $region44: #{_lambda_.21} parent=1 // pred_region
      %104 = dma.done [#allocation9], 768
    $region45: #{_lambda_.21} parent=1 // pred_fallthru
      _
    // Predicated region
    $region46: #{_lambda_.21} parent=1 // pred_check
      _
    $region47: #{_lambda_.21} parent=1 // pred_check_branch
      %106 = sbr.rel (0) target = $region49
    $region48: #{_lambda_.21} parent=1 // pred_region
      %107 = dma.done [#allocation9], 32
    $region49: #{_lambda_.21} parent=1 // pred_fallthru
      _
    // Predicated region
    $region50: #{_lambda_.21} parent=1 // pred_check
      _
    $region51: #{_lambda_.21} parent=1 // pred_check_branch
      %109 = sbr.rel (0) target = $region53
    $region52: #{_lambda_.21} parent=1 // pred_region
      %110 = dma.done [#allocation12], 1536
    $region53: #{_lambda_.21} parent=1 // pred_fallthru
      _
    // Predicated region
    $region54: #{_lambda_.21} parent=1 // pred_check
      _
    $region55: #{_lambda_.21} parent=1 // pred_check_branch
      %112 = sbr.rel (0) target = $region57
    $region56: #{_lambda_.21} parent=1 // pred_region
      %113 = dma.done [#allocation12], 16
    $region57: #{_lambda_.21} parent=1 // pred_fallthru
      _
    %v115 = vld [vmem:[#allocation2] sm:$0xf]
    %v116 = vld [vmem:[#allocation2 + $0x4] sm:$0xf]
    %v117 = vunpack.c.l.bf16 %v115
    %v118 = vunpack.c.l.bf16 %v116
    %v119 = vld [vmem:[#allocation5] sm:$0x1]
    %v120 = vld [vmem:[#allocation7] sm:$0x1]
    %vm121 = vcmask 392192
    %v122 = vsel %vm121, %v117, 0.0
    %123 = vadd.xlane.f32.xlu0 %v122
    %v124 = vpop.xlane.xlu0 %123
    %v125 = vsel %vm121, %v118, 0.0
    %126 = vadd.xlane.f32.xlu0 %v125
    %v127 = vpop.xlane.xlu0 %126
    %v128 = vrcp.pop 48.0
    %v129 = vmul.f32 %v124, %v128
    %v130 = vmul.f32 %v127, %v128
    %v131 = vsub.f32 %v117, %v129
    %v132 = vsub.f32 %v118, %v130
    %v133 = vmul.f32 %v131, %v131
    %v134 = vmul.f32 %v132, %v132
    %v135 = vsel %vm121, %v133, 0.0
    %136 = vadd.xlane.f32.xlu0 %v135
    %v137 = vpop.xlane.xlu0 %136
    %v138 = vsel %vm121, %v134, 0.0
    %139 = vadd.xlane.f32.xlu0 %v138
    %v140 = vpop.xlane.xlu0 %139
    %v141 = vmul.f32 %v137, %v128
    %v142 = vmul.f32 %v140, %v128
    %v143 = vadd.f32 %v141, 1e-05
    %v144 = vadd.f32 %v142, 1e-05
    %v145 = vrsqrt.pop %v143
    %v146 = vrsqrt.pop %v144
    %v147 = vmul.f32 %v131, %v145
    %v148 = vmul.f32 %v132, %v146
    %v150 = vlaneseq
    %v151 = vshrl.u32 %v150, 7
    %v152 = vsub.s32 0, %v151
    %v153 = vrot.slane %v119, %v152
    %v155 = vmul.f32 %v147, %v153
    %v156 = vmul.f32 %v148, %v153
    %v158 = vlaneseq
    %v159 = vshrl.u32 %v158, 7
    %v160 = vsub.s32 0, %v159
    %v161 = vrot.slane %v120, %v160
    %v163 = vadd.f32 %v155, %v161
    %v164 = vadd.f32 %v156, %v161
    %v165 = vpack.c.bf16 %v164, %v163
    %v166 = vld [vmem:[#allocation8] sm:$0xff]
    %v167 = vld [vmem:[#allocation8 + $0x8] sm:$0xff]
    %v168 = vld [vmem:[#allocation8 + $0x10] sm:$0xff]
    %v169 = vld [vmem:[#allocation8 + $0x18] sm:$0xff]
    %v170 = vld [vmem:[#allocation8 + $0x20] sm:$0xff]
    %v171 = vld [vmem:[#allocation8 + $0x28] sm:$0xff]
    %v172 = vld [vmem:[#allocation10] sm:$0x3]
    %v174 = vlaneseq
    %v175 = vshrl.u32 %v174, 7
    %v176 = vsub.s32 0, %v175
    %v177 = vrot.slane %v172, %v176
    %v178 = vlaneseq
    %v179 = vshrl.u32 %v178, 7
    %v180 = vsub.s32 1, %v179
    %v181 = vrot.slane %v172, %v180
    %v190 = vunpack.c.l.b16 %v166
    %v191 = vunpack.c.h.b16 %v166
    %v192 = vunpack.c.l.b16 %v167
    %v193 = vunpack.c.h.b16 %v167
    %v194 = vunpack.c.l.b16 %v168
    %v195 = vunpack.c.h.b16 %v168
    %v196 = vunpack.c.l.b16 %v169
    %v197 = vunpack.c.h.b16 %v169
    %v198 = vunpack.c.l.b16 %v170
    %v199 = vunpack.c.h.b16 %v170
    %v200 = vunpack.c.l.b16 %v171
    %v201 = vunpack.c.h.b16 %v171
    %v202 = vpack.c.b16 %v192, %v190
    %v203 = vpack.c.b16 %v193, %v191
    %v204 = vpack.c.b16 %v196, %v194
    %v205 = vpack.c.b16 %v197, %v195
    %v206 = vpack.c.b16 %v200, %v198
    %v207 = vpack.c.b16 %v201, %v199
    %v215 = vsel %vm121, %v165, 0
    %217 = vmatprep.subr.bf16.mxu0 %v203
    %218 = vmatpush1.bf16.msra.mxu0 %v202
    %219 = vmatprep.subr.bf16.mxu0 %v205
    %220 = vmatpush1.bf16.msra.mxu0 %v204
    %221 = vmatprep.subr.bf16.mxu0 %v207
    %222 = vmatpush1.bf16.msra.mxu0 %v206
    %223 = vmatprep.subr.bf16.mxu0 0
    %224 = vmatpush1.bf16.msra.mxu0 0
    %225 = vmatprep.subr.bf16.mxu0 0
    %226 = vmatpush1.bf16.msra.mxu0 0
    %227 = vmatprep.subr.bf16.mxu0 0
    %228 = vmatpush1.bf16.msra.mxu0 0
    %229 = vmatprep.subr.bf16.mxu0 0
    %230 = vmatpush1.bf16.msra.mxu0 0
    %231 = vmatprep.subr.bf16.mxu0 0
    %232 = vmatpush1.bf16.msra.mxu0 0
    %233 = vmatprep.subr.bf16.mxu0 0
    %234 = vmatpush1.bf16.msra.mxu0 0
    %235 = vmatprep.subr.bf16.mxu0 0
    %236 = vmatpush1.bf16.msra.mxu0 0
    %237 = vmatprep.subr.bf16.mxu0 0
    %238 = vmatpush1.bf16.msra.mxu0 0
    %239 = vmatprep.subr.bf16.mxu0 0
    %240 = vmatpush1.bf16.msra.mxu0 0
    %241 = vmatprep.subr.bf16.mxu0 0
    %242 = vmatpush1.bf16.msra.mxu0 0
    %243 = vmatprep.subr.bf16.mxu0 0
    %244 = vmatpush1.bf16.msra.mxu0 0
    %245 = vmatprep.subr.bf16.mxu0 0
    %246 = vmatpush1.bf16.msra.mxu0 0
    %247 = vmatprep.subr.bf16.mxu0 0
    %248 = vmatpush1.bf16.msra.mxu0 0
    %249 = vmatprep.mubr.bf16.mxu0 0
    %250 = vmatmul.mubr.bf16.gmra.mrb[0].mxu0 %v215
    %v251 = vpop.f32.mrb[0].mxu0
    %v252 = vadd.f32 %v177, %v251
    %v253 = vpop.f32.mrb[0].mxu0
    %v254 = vadd.f32 %v181, %v253
    %v255 = vpop.f32.mrb[0].mxu0
    %v256 = vadd.f32 %v177, %v255
    %v257 = vpop.f32.mrb[0].mxu0
    %v258 = vadd.f32 %v181, %v257
    %259 = vdwg.mxu0
    %v260 = vmul.f32 %v252, %v252
    %v261 = vmul.f32 %v254, %v254
    %v262 = vmul.f32 %v256, %v256
    %v263 = vmul.f32 %v258, %v258
    %v264 = vmul.f32 %v252, %v260
    %v265 = vmul.f32 %v254, %v261
    %v266 = vmul.f32 %v256, %v262
    %v267 = vmul.f32 %v258, %v263
    %v268 = vmul.f32 %v264, 0.044715
    %v269 = vmul.f32 %v265, 0.044715
    %v270 = vmul.f32 %v266, 0.044715
    %v271 = vmul.f32 %v267, 0.044715
    %v272 = vadd.f32 %v252, %v268
    %v273 = vadd.f32 %v254, %v269
    %v274 = vadd.f32 %v256, %v270
    %v275 = vadd.f32 %v258, %v271
    %v276 = vmul.f32 %v272, 0.7978846
    %v277 = vmul.f32 %v273, 0.7978846
    %v278 = vmul.f32 %v274, 0.7978846
    %v279 = vmul.f32 %v275, 0.7978846
    %v280 = vtanh.pop %v276
    %v281 = vtanh.pop %v277
    %v282 = vtanh.pop %v278
    %v283 = vtanh.pop %v279
    %v284 = vadd.f32 %v280, 1.0
    %v285 = vadd.f32 %v281, 1.0
    %v286 = vadd.f32 %v282, 1.0
    %v287 = vadd.f32 %v283, 1.0
    %v288 = vmul.f32 %v284, 0.5
    %v289 = vmul.f32 %v285, 0.5
    %v290 = vmul.f32 %v286, 0.5
    %v291 = vmul.f32 %v287, 0.5
    %v292 = vmul.f32 %v252, %v288
    %v293 = vmul.f32 %v254, %v289
    %v294 = vmul.f32 %v256, %v290
    %v295 = vmul.f32 %v258, %v291
    %v296 = vpack.c.bf16 %v294, %v292
    %v297 = vpack.c.bf16 %v295, %v293
    %v298 = vld [vmem:[#allocation11] sm:$0xf]
    %v299 = vld [vmem:[#allocation11 + $0x4] sm:$0xf]
    %v300 = vld [vmem:[#allocation11 + $0x8] sm:$0xf]
    %v301 = vld [vmem:[#allocation11 + $0xc] sm:$0xf]
    %v302 = vld [vmem:[#allocation11 + $0x10] sm:$0xf]
    %v303 = vld [vmem:[#allocation11 + $0x14] sm:$0xf]
    %v304 = vld [vmem:[#allocation11 + $0x18] sm:$0xf]
    %v305 = vld [vmem:[#allocation11 + $0x1c] sm:$0xf]
    %v306 = vld [vmem:[#allocation11 + $0x20] sm:$0xf]
    %v307 = vld [vmem:[#allocation11 + $0x24] sm:$0xf]
    %v308 = vld [vmem:[#allocation11 + $0x28] sm:$0xf]
    %v309 = vld [vmem:[#allocation11 + $0x2c] sm:$0xf]
    %v310 = vld [vmem:[#allocation11 + $0x30] sm:$0xf]
    %v311 = vld [vmem:[#allocation11 + $0x34] sm:$0xf]
    %v312 = vld [vmem:[#allocation11 + $0x38] sm:$0xf]
    %v313 = vld [vmem:[#allocation11 + $0x3c] sm:$0xf]
    %v314 = vld [vmem:[#allocation11 + $0x40] sm:$0xf]
    %v315 = vld [vmem:[#allocation11 + $0x44] sm:$0xf]
    %v316 = vld [vmem:[#allocation11 + $0x48] sm:$0xf]
    %v317 = vld [vmem:[#allocation11 + $0x4c] sm:$0xf]
    %v318 = vld [vmem:[#allocation11 + $0x50] sm:$0xf]
    %v319 = vld [vmem:[#allocation11 + $0x54] sm:$0xf]
    %v320 = vld [vmem:[#allocation11 + $0x58] sm:$0xf]
    %v321 = vld [vmem:[#allocation11 + $0x5c] sm:$0xf]
    %v322 = vld [vmem:[#allocation13] sm:$0x1]
    %v324 = vlaneseq
    %v325 = vshrl.u32 %v324, 7
    %v326 = vsub.s32 0, %v325
    %v327 = vrot.slane %v322, %v326
    %v353 = vunpack.c.l.b16 %v298
    %v354 = vunpack.c.l.b16 %v299
    %v355 = vunpack.c.l.b16 %v300
    %v356 = vunpack.c.l.b16 %v301
    %v357 = vunpack.c.l.b16 %v302
    %v358 = vunpack.c.l.b16 %v303
    %v359 = vunpack.c.l.b16 %v304
    %v360 = vunpack.c.l.b16 %v305
    %v361 = vunpack.c.l.b16 %v306
    %v362 = vunpack.c.l.b16 %v307
    %v363 = vunpack.c.l.b16 %v308
    %v364 = vunpack.c.l.b16 %v309
    %v365 = vunpack.c.l.b16 %v310
    %v366 = vunpack.c.l.b16 %v311
    %v367 = vunpack.c.l.b16 %v312
    %v368 = vunpack.c.l.b16 %v313
    %v369 = vunpack.c.l.b16 %v314
    %v370 = vunpack.c.l.b16 %v315
    %v371 = vunpack.c.l.b16 %v316
    %v372 = vunpack.c.l.b16 %v317
    %v373 = vunpack.c.l.b16 %v318
    %v374 = vunpack.c.l.b16 %v319
    %v375 = vunpack.c.l.b16 %v320
    %v376 = vunpack.c.l.b16 %v321
    %v377 = vpack.c.b16 %v354, %v353
    %v378 = vpack.c.b16 %v356, %v355
    %v379 = vpack.c.b16 %v358, %v357
    %v380 = vpack.c.b16 %v360, %v359
    %v381 = vpack.c.b16 %v362, %v361
    %v382 = vpack.c.b16 %v364, %v363
    %v383 = vpack.c.b16 %v366, %v365
    %v384 = vpack.c.b16 %v368, %v367
    %v385 = vpack.c.b16 %v370, %v369
    %v386 = vpack.c.b16 %v372, %v371
    %v387 = vpack.c.b16 %v374, %v373
    %v388 = vpack.c.b16 %v376, %v375
    %vm401 = vcmask 523264
    %v403 = vsel %vm401, %v297, 0
    %405 = vmatprep.subr.bf16.mxu0 0
    %406 = vmatpush1.bf16.msra.mxu0 %v377
    %407 = vmatprep.subr.bf16.mxu0 0
    %408 = vmatpush1.bf16.msra.mxu0 %v378
    %409 = vmatprep.subr.bf16.mxu0 0
    %410 = vmatpush1.bf16.msra.mxu0 %v379
    %411 = vmatprep.subr.bf16.mxu0 0
    %412 = vmatpush1.bf16.msra.mxu0 %v380
    %413 = vmatprep.subr.bf16.mxu0 0
    %414 = vmatpush1.bf16.msra.mxu0 %v381
    %415 = vmatprep.subr.bf16.mxu0 0
    %416 = vmatpush1.bf16.msra.mxu0 %v382
    %417 = vmatprep.subr.bf16.mxu0 0
    %418 = vmatpush1.bf16.msra.mxu0 %v383
    %419 = vmatprep.subr.bf16.mxu0 0
    %420 = vmatpush1.bf16.msra.mxu0 %v384
    %421 = vmatprep.subr.bf16.mxu0 0
    %422 = vmatpush1.bf16.msra.mxu0 %v385
    %423 = vmatprep.subr.bf16.mxu0 0
    %424 = vmatpush1.bf16.msra.mxu0 %v386
    %425 = vmatprep.subr.bf16.mxu0 0
    %426 = vmatpush1.bf16.msra.mxu0 %v387
    %427 = vmatprep.subr.bf16.mxu0 0
    %428 = vmatpush1.bf16.msra.mxu0 %v388
    %429 = vmatprep.subr.bf16.mxu0 0
    %430 = vmatpush1.bf16.msra.mxu0 0
    %431 = vmatprep.subr.bf16.mxu0 0
    %432 = vmatpush1.bf16.msra.mxu0 0
    %433 = vmatprep.subr.bf16.mxu0 0
    %434 = vmatpush1.bf16.msra.mxu0 0
    %435 = vmatprep.subr.bf16.mxu0 0
    %436 = vmatpush1.bf16.msra.mxu0 0
    %437 = vmatprep.mubr.bf16.mxu0 %v403
    %438 = vmatmul.mubr.bf16.gmra.mrb[0].mxu0 %v296
    %v439 = vpop.f32.mrb[0].mxu0
    %v440 = vadd.f32 %v327, %v439
    %v441 = vpop.f32.mrb[0].mxu0
    %v442 = vpop.f32.mrb[0].mxu0
    %v443 = vadd.f32 %v327, %v442
    %v444 = vpop.f32.mrb[0].mxu0
    %445 = vdwg.mxu0
    %v446 = vadd.f32 %v117, %v440
    %v447 = vadd.f32 %v118, %v443
    %v448 = vpack.c.bf16 %v447, %v446
    %v450 = vunpack.c.l.b16 %v448
    %v451 = vunpack.c.h.b16 %v448
    %v452 = vpack.c.b16 %v450, %v450
    %v453 = vpack.c.b16 %v451, %v451
    %vm456 = vcmask 388096
    %457 = vst.msk [vmem:[#allocation14] sm:$0xf] %vm456, %v452
    %458 = vst.msk [vmem:[#allocation14 + $0x4] sm:$0xf] %vm456, %v453
    // Predicated region
    $region58: #{_lambda_.21} parent=1 // pred_check
      _
    $region59: #{_lambda_.21} parent=1 // pred_check_branch
      %460 = sbr.rel (0) target = $region61
    $region60: #{_lambda_.21} parent=1 // pred_region
      %s462 = ssub.s32 128, 128
      %463 = vsyncadd [#allocation4], %s462
      %s464 = sshll.u32 [#allocation14], 4
      %s465 = int_to_ptr.vmem [resolvable:$true] %s464
      %470 = dma.vmem_to_hbm [thread:$0]  %s465, 128, %s7, [#allocation4], 64, 64, 4
    $region61: #{_lambda_.21} parent=1 // pred_fallthru
      _
    // Predicated region
    $region62: #{_lambda_.21} parent=1 // pred_check
      _
    $region63: #{_lambda_.21} parent=1 // pred_check_branch
      %472 = sbr.rel (0) target = $region65
    $region64: #{_lambda_.21} parent=1 // pred_region
      %473 = dma.done [#allocation4], 128
    $region65: #{_lambda_.21} parent=1 // pred_fallthru
      _
    %474 = vsyncpa [#allocation3], 1
    %475 = vsyncpa [#allocation6], 1
    %476 = vsyncpa [#allocation9], 1
    %477 = vsyncpa [#allocation12], 1
    %478 = vsyncpa [#allocation4], 1

// kernel: _lambda_.19
$region0: #{_lambda_.19}
  #allocation0 [shape = 'u32[]', space=smem, size = 0x4, offset = 0x4, fixed_abs, tag = 'smem constant byte address 0x4 - core index']
  #allocation1 [shape = 'u32[144,128]{1,0:T(1,128)}', space=vmem, size = 0x12000, scoped, tag = 'internal scratch']
  %s0 = inlined_call_operand.hbm [shape: bf16[2,8,48], index: 0, kind: input, shape index: {}]
  %s1 = inlined_call_operand.hbm [shape: f32[1,48], index: 1, kind: input, shape index: {}]
  %s2 = inlined_call_operand.hbm [shape: f32[1,48], index: 2, kind: input, shape index: {}]
  %s3 = inlined_call_operand.hbm [shape: bf16[48,144], index: 3, kind: input, shape index: {}]
  %s4 = inlined_call_operand.hbm [shape: f32[1,144], index: 4, kind: input, shape index: {}]
  %s5 = inlined_call_operand.hbm [shape: bf16[48,48], index: 5, kind: input, shape index: {}]
  %s6 = inlined_call_operand.hbm [shape: f32[1,48], index: 6, kind: input, shape index: {}]
  %s7 = inlined_call_operand.hbm [shape: f32[2,1,8], index: 7, kind: input, shape index: {}]
  %s8 = inlined_call_operand.hbm [shape: bf16[2,8,48], index: 8, kind: output, shape index: {}]
  %s9 = sld [smem:[#allocation0]]
  $region97: #{_lambda_.19} parent=0
    _
  %s11 = ssub.s32 1, %s9
  %s12 = scalar_select 0, %s11, %s9
  $region1: #{_lambda_.19} parent=0
    #allocation2 [shape = 'u8[4096]{0}', space=vmem, size = 0x1000, scoped, tag = 'input window, operand 0']
    #allocation3 [shape = 's32[2]{0}', space=sflag, size = 0x8, scoped, tag = 'scoped memory for _lambda_.19']
    #allocation4 [shape = 's32[2]{0}', space=sflag, size = 0x8, scoped, tag = 'scoped memory for _lambda_.19']
    #allocation5 [shape = 'u8[512]{0}', space=vmem, size = 0x400, scoped, tag = 'input window, operand 1, single buffered']
    #allocation6 [shape = 's32[1]{0}', space=sflag, size = 0x4, scoped, tag = 'scoped memory for _lambda_.19']
    #allocation7 [shape = 'u8[512]{0}', space=vmem, size = 0x400, scoped, tag = 'input window, operand 2, single buffered']
    #allocation8 [shape = 'u8[24576]{0}', space=vmem, size = 0x6000, scoped, tag = 'input window, operand 3, single buffered']
    #allocation9 [shape = 's32[1]{0}', space=sflag, size = 0x4, scoped, tag = 'scoped memory for _lambda_.19']
    #allocation10 [shape = 'u8[1024]{0}', space=vmem, size = 0x400, scoped, tag = 'input window, operand 4, single buffered']
    #allocation11 [shape = 'u8[12288]{0}', space=vmem, size = 0x3000, scoped, tag = 'input window, operand 5, single buffered']
    #allocation12 [shape = 's32[1]{0}', space=sflag, size = 0x4, scoped, tag = 'scoped memory for _lambda_.19']
    #allocation13 [shape = 'u8[512]{0}', space=vmem, size = 0x400, scoped, tag = 'input window, operand 6, single buffered']
    #allocation14 [shape = 'u8[1024]{0}', space=vmem, size = 0x400, scoped, tag = 'input window, operand 7']
    #allocation15 [shape = 's32[2]{0}', space=sflag, size = 0x8, scoped, tag = 'scoped memory for _lambda_.19']
    #allocation16 [shape = 'u8[4096]{0}', space=vmem, size = 0x1000, scoped, tag = 'output window, operand 0']
    %13 = vsyncpa [#allocation3], 0
    %s14 = scalar_lea.sflag [#allocation3], 1
    %15 = vsyncpa %s14, 0
    %16 = vsyncpa [#allocation6], 0
    %17 = vsyncpa [#allocation9], 0
    %18 = vsyncpa [#allocation12], 0
    %19 = vsyncpa [#allocation15], 0
    %s20 = scalar_lea.sflag [#allocation15], 1
    %21 = vsyncpa %s20, 0
    %22 = vsyncpa [#allocation4], 0
    %s23 = scalar_lea.sflag [#allocation4], 1
    %24 = vsyncpa %s23, 0
    loop: start=0, step=1, limit=4
    $region2: #{_lambda_.19} parent=1 // loop_pre_header
      _
    $region3: #{_lambda_.19} parent=1 // loop_header
      %s26 = sphi 0, %s30
      %p27 = scmp.ge.s32.totalorder %s26, 4
      %s36 = sphi 0, %s38
      %s39 = sphi 0, %s36
      %s40 = sphi 0, %s39
      %s56 = sphi 0, %s40
      %s60 = sphi 0, %s60
      %s62 = sphi 0, %s60
      %s63 = sphi 0, %s62
      %s77 = sphi 0, %s63
      %s81 = sphi 0, %s81
      %s83 = sphi 0, %s81
      %s84 = sphi 0, %s83
      %s98 = sphi 0, %s84
      %s102 = sphi 0, %s102
      %s104 = sphi 0, %s102
      %s105 = sphi 0, %s104
      %s119 = sphi 0, %s105
      %s123 = sphi 0, %s123
      %s125 = sphi 0, %s123
      %s126 = sphi 0, %s125
      %s140 = sphi 0, %s126
      %s144 = sphi 0, %s144
      %s146 = sphi 0, %s144
      %s147 = sphi 0, %s146
      %s161 = sphi 0, %s147
      %s165 = sphi 0, %s165
      %s167 = sphi 0, %s165
      %s168 = sphi 0, %s167
      %s182 = sphi 0, %s168
      %s188 = sphi 0, %s190
      %s191 = sphi 0, %s188
      %s192 = sphi 0, %s191
      %s208 = sphi 0, %s192
      %s214 = sphi 0, %s216
      %s217 = sphi 0, %s214
      %s218 = sphi 0, %s217
      %s234 = sphi 0, %s218
    $region4: #{_lambda_.19} parent=1 // loop_header_branch
      %29 = sbr.rel (%p27) target = $region8
    $region5: #{_lambda_.19} parent=1 // loop_body
      %s31 = ssub.s32 %s26, 1
      %s32 = ssub.s32 %s26, 2
      %s33 = sadd.s32 %s26, 1
      %s34 = ssub.s32 %s26, %s33
      %p35 = scmp.eq.s32.totalorder %s34, 0
      %s37 = sadd.s32 %s36, 1
      %s38 = scalar_select %p35, %s36, %s37
      %p41 = pneg %p35
      %p42 = scmp.eq.s32.totalorder %s26, 1
      %p43 = por %p41, %p42
      %p44 = scmp.ne.s32.totalorder %s36, %s39
      %p45 = scmp.eq.s32.totalorder %s26, 0
      %p46 = por %p44, %p45
      %p47 = scmp.ne.s32.totalorder %s36, %s39
      %p48 = scmp.eq.s32.totalorder %s31, 1
      %p49 = por %p47, %p48
      %p50 = scmp.ne.s32.totalorder %s39, %s40
      %p51 = scmp.eq.s32.totalorder %s31, 0
      %p52 = por %p50, %p51
      %p53 = scmp.ne.s32.totalorder %s39, %s40
      %p54 = scmp.eq.s32.totalorder %s32, 1
      %p55 = por %p53, %p54
      %p57 = scmp.ne.s32.totalorder %s40, %s56
      %p58 = scmp.eq.s32.totalorder %s32, 0
      %p59 = por %p57, %p58
      %s61 = sadd.s32 %s60, 1
      %p64 = scmp.eq.s32.totalorder %s26, 1
      %p65 = scmp.ne.s32.totalorder %s60, %s62
      %p66 = scmp.eq.s32.totalorder %s26, 0
      %p67 = por %p65, %p66
      %p68 = scmp.ne.s32.totalorder %s60, %s62
      %p69 = scmp.eq.s32.totalorder %s31, 1
      %p70 = por %p68, %p69
      %p71 = scmp.ne.s32.totalorder %s62, %s63
      %p72 = scmp.eq.s32.totalorder %s31, 0
      %p73 = por %p71, %p72
      %p74 = scmp.ne.s32.totalorder %s62, %s63
      %p75 = scmp.eq.s32.totalorder %s32, 1
      %p76 = por %p74, %p75
      %p78 = scmp.ne.s32.totalorder %s63, %s77
      %p79 = scmp.eq.s32.totalorder %s32, 0
      %p80 = por %p78, %p79
      %s82 = sadd.s32 %s81, 1
      %p85 = scmp.eq.s32.totalorder %s26, 1
      %p86 = scmp.ne.s32.totalorder %s81, %s83
      %p87 = scmp.eq.s32.totalorder %s26, 0
      %p88 = por %p86, %p87
      %p89 = scmp.ne.s32.totalorder %s81, %s83
      %p90 = scmp.eq.s32.totalorder %s31, 1
      %p91 = por %p89, %p90
      %p92 = scmp.ne.s32.totalorder %s83, %s84
      %p93 = scmp.eq.s32.totalorder %s31, 0
      %p94 = por %p92, %p93
      %p95 = scmp.ne.s32.totalorder %s83, %s84
      %p96 = scmp.eq.s32.totalorder %s32, 1
      %p97 = por %p95, %p96
      %p99 = scmp.ne.s32.totalorder %s84, %s98
      %p100 = scmp.eq.s32.totalorder %s32, 0
      %p101 = por %p99, %p100
      %s103 = sadd.s32 %s102, 1
      %p106 = scmp.eq.s32.totalorder %s26, 1
      %p107 = scmp.ne.s32.totalorder %s102, %s104
      %p108 = scmp.eq.s32.totalorder %s26, 0
      %p109 = por %p107, %p108
      %p110 = scmp.ne.s32.totalorder %s102, %s104
      %p111 = scmp.eq.s32.totalorder %s31, 1
      %p112 = por %p110, %p111
      %p113 = scmp.ne.s32.totalorder %s104, %s105
      %p114 = scmp.eq.s32.totalorder %s31, 0
      %p115 = por %p113, %p114
      %p116 = scmp.ne.s32.totalorder %s104, %s105
      %p117 = scmp.eq.s32.totalorder %s32, 1
      %p118 = por %p116, %p117
      %p120 = scmp.ne.s32.totalorder %s105, %s119
      %p121 = scmp.eq.s32.totalorder %s32, 0
      %p122 = por %p120, %p121
      %s124 = sadd.s32 %s123, 1
      %p127 = scmp.eq.s32.totalorder %s26, 1
      %p128 = scmp.ne.s32.totalorder %s123, %s125
      %p129 = scmp.eq.s32.totalorder %s26, 0
      %p130 = por %p128, %p129
      %p131 = scmp.ne.s32.totalorder %s123, %s125
      %p132 = scmp.eq.s32.totalorder %s31, 1
      %p133 = por %p131, %p132
      %p134 = scmp.ne.s32.totalorder %s125, %s126
      %p135 = scmp.eq.s32.totalorder %s31, 0
      %p136 = por %p134, %p135
      %p137 = scmp.ne.s32.totalorder %s125, %s126
      %p138 = scmp.eq.s32.totalorder %s32, 1
      %p139 = por %p137, %p138
      %p141 = scmp.ne.s32.totalorder %s126, %s140
      %p142 = scmp.eq.s32.totalorder %s32, 0
      %p143 = por %p141, %p142
      %s145 = sadd.s32 %s144, 1
      %p148 = scmp.eq.s32.totalorder %s26, 1
      %p149 = scmp.ne.s32.totalorder %s144, %s146
      %p150 = scmp.eq.s32.totalorder %s26, 0
      %p151 = por %p149, %p150
      %p152 = scmp.ne.s32.totalorder %s144, %s146
      %p153 = scmp.eq.s32.totalorder %s31, 1
      %p154 = por %p152, %p153
      %p155 = scmp.ne.s32.totalorder %s146, %s147
      %p156 = scmp.eq.s32.totalorder %s31, 0
      %p157 = por %p155, %p156
      %p158 = scmp.ne.s32.totalorder %s146, %s147
      %p159 = scmp.eq.s32.totalorder %s32, 1
      %p160 = por %p158, %p159
      %p162 = scmp.ne.s32.totalorder %s147, %s161
      %p163 = scmp.eq.s32.totalorder %s32, 0
      %p164 = por %p162, %p163
      %s166 = sadd.s32 %s165, 1
      %p169 = scmp.eq.s32.totalorder %s26, 1
      %p170 = scmp.ne.s32.totalorder %s165, %s167
      %p171 = scmp.eq.s32.totalorder %s26, 0
      %p172 = por %p170, %p171
      %p173 = scmp.ne.s32.totalorder %s165, %s167
      %p174 = scmp.eq.s32.totalorder %s31, 1
      %p175 = por %p173, %p174
      %p176 = scmp.ne.s32.totalorder %s167, %s168
      %p177 = scmp.eq.s32.totalorder %s31, 0
      %p178 = por %p176, %p177
      %p179 = scmp.ne.s32.totalorder %s167, %s168
      %p180 = scmp.eq.s32.totalorder %s32, 1
      %p181 = por %p179, %p180
      %p183 = scmp.ne.s32.totalorder %s168, %s182
      %p184 = scmp.eq.s32.totalorder %s32, 0
      %p185 = por %p183, %p184
      %s186 = ssub.s32 %s26, %s33
      %p187 = scmp.eq.s32.totalorder %s186, 0
      %s189 = sadd.s32 %s188, 1
      %s190 = scalar_select %p187, %s188, %s189
      %p193 = pneg %p187
      %p194 = scmp.eq.s32.totalorder %s26, 1
      %p195 = por %p193, %p194
      %p196 = scmp.ne.s32.totalorder %s188, %s191
      %p197 = scmp.eq.s32.totalorder %s26, 0
      %p198 = por %p196, %p197
      %p199 = scmp.ne.s32.totalorder %s188, %s191
      %p200 = scmp.eq.s32.totalorder %s31, 1
      %p201 = por %p199, %p200
      %p202 = scmp.ne.s32.totalorder %s191, %s192
      %p203 = scmp.eq.s32.totalorder %s31, 0
      %p204 = por %p202, %p203
      %p205 = scmp.ne.s32.totalorder %s191, %s192
      %p206 = scmp.eq.s32.totalorder %s32, 1
      %p207 = por %p205, %p206
      %p209 = scmp.ne.s32.totalorder %s192, %s208
      %p210 = scmp.eq.s32.totalorder %s32, 0
      %p211 = por %p209, %p210
      %s212 = ssub.s32 %s26, %s33
      %p213 = scmp.eq.s32.totalorder %s212, 0
      %s215 = sadd.s32 %s214, 1
      %s216 = scalar_select %p213, %s214, %s215
      %p219 = pneg %p213
      %p220 = scmp.eq.s32.totalorder %s26, 1
      %p221 = por %p219, %p220
      %p222 = scmp.ne.s32.totalorder %s214, %s217
      %p223 = scmp.eq.s32.totalorder %s26, 0
      %p224 = por %p222, %p223
      %p225 = scmp.ne.s32.totalorder %s214, %s217
      %p226 = scmp.eq.s32.totalorder %s31, 1
      %p227 = por %p225, %p226
      %p228 = scmp.ne.s32.totalorder %s217, %s218
      %p229 = scmp.eq.s32.totalorder %s31, 0
      %p230 = por %p228, %p229
      %p231 = scmp.ne.s32.totalorder %s217, %s218
      %p232 = scmp.eq.s32.totalorder %s32, 1
      %p233 = por %p231, %p232
      %p235 = scmp.ne.s32.totalorder %s218, %s234
      %p236 = scmp.eq.s32.totalorder %s32, 0
      %p237 = por %p235, %p236
      %p238 = scmp.le.s32.totalorder 1, %s26
      %p239 = scmp.lt.s32.totalorder %s26, 3
      %p240 = pnand %p238, %p239
      %p241 = pneg %p240
      // Predicated region
      $region9: #{_lambda_.19} parent=5 // pred_check
        _
      $region10: #{_lambda_.19} parent=5 // pred_check_branch
        %243 = sbr.rel (%p240) target = $region12
      $region11: #{_lambda_.19} parent=5 // pred_region
        %s244 = ssub.s32 %s26, 1
        // Predicated region
        $region13: #{_lambda_.19} parent=11 // pred_check
          %p245 = pneg %p73
        $region14: #{_lambda_.19} parent=11 // pred_check_branch
          %247 = sbr.rel (%p245) target = $region16
        $region15: #{_lambda_.19} parent=11 // pred_region
          %s249 = ssub.s32 16, 16
          %250 = vsyncadd [#allocation6], %s249
          %s252 = sshll.u32 [#allocation5], 4
          %s253 = int_to_ptr.vmem [resolvable:$true] %s252
          %255 = dma.hbm_to_vmem [thread:$0]  %s1, 16, %s253, [#allocation6]
        $region16: #{_lambda_.19} parent=11 // pred_fallthru
          _
        // Predicated region
        $region17: #{_lambda_.19} parent=11 // pred_check
          %p256 = pneg %p94
        $region18: #{_lambda_.19} parent=11 // pred_check_branch
          %258 = sbr.rel (%p256) target = $region20
        $region19: #{_lambda_.19} parent=11 // pred_region
          %s260 = ssub.s32 16, 16
          %261 = vsyncadd [#allocation6], %s260
          %s263 = sshll.u32 [#allocation7], 4
          %s264 = int_to_ptr.vmem [resolvable:$true] %s263
          %266 = dma.hbm_to_vmem [thread:$0]  %s2, 16, %s264, [#allocation6]
        $region20: #{_lambda_.19} parent=11 // pred_fallthru
          _
        // Predicated region
        $region21: #{_lambda_.19} parent=11 // pred_check
          %p267 = pneg %p115
        $region22: #{_lambda_.19} parent=11 // pred_check_branch
          %269 = sbr.rel (%p267) target = $region24
        $region23: #{_lambda_.19} parent=11 // pred_region
          %s271 = ssub.s32 768, 768
          %272 = vsyncadd [#allocation9], %s271
          %s273 = sshll.u32 [#allocation8], 4
          %s274 = int_to_ptr.vmem [resolvable:$true] %s273
          %279 = dma.hbm_to_vmem [thread:$0]  %s3, 768, %s274, [#allocation9], 128, 128, 8
        $region24: #{_lambda_.19} parent=11 // pred_fallthru
          _
        // Predicated region
        $region25: #{_lambda_.19} parent=11 // pred_check
          %p280 = pneg %p136
        $region26: #{_lambda_.19} parent=11 // pred_check_branch
          %282 = sbr.rel (%p280) target = $region28
        $region27: #{_lambda_.19} parent=11 // pred_region
          %s284 = ssub.s32 32, 32
          %285 = vsyncadd [#allocation9], %s284
          %s287 = sshll.u32 [#allocation10], 4
          %s288 = int_to_ptr.vmem [resolvable:$true] %s287
          %290 = dma.hbm_to_vmem [thread:$0]  %s4, 32, %s288, [#allocation9]
        $region28: #{_lambda_.19} parent=11 // pred_fallthru
          _
        // Predicated region
        $region29: #{_lambda_.19} parent=11 // pred_check
          %p291 = pneg %p157
        $region30: #{_lambda_.19} parent=11 // pred_check_branch
          %293 = sbr.rel (%p291) target = $region32
        $region31: #{_lambda_.19} parent=11 // pred_region
          %s295 = ssub.s32 384, 384
          %296 = vsyncadd [#allocation12], %s295
          %s297 = sshll.u32 [#allocation11], 4
          %s298 = int_to_ptr.vmem [resolvable:$true] %s297
          %303 = dma.hbm_to_vmem [thread:$0]  %s5, 384, %s298, [#allocation12], 64, 64, 4
        $region32: #{_lambda_.19} parent=11 // pred_fallthru
          _
        // Predicated region
        $region33: #{_lambda_.19} parent=11 // pred_check
          %p304 = pneg %p178
        $region34: #{_lambda_.19} parent=11 // pred_check_branch
          %306 = sbr.rel (%p304) target = $region36
        $region35: #{_lambda_.19} parent=11 // pred_region
          %s308 = ssub.s32 16, 16
          %309 = vsyncadd [#allocation12], %s308
          %s311 = sshll.u32 [#allocation13], 4
          %s312 = int_to_ptr.vmem [resolvable:$true] %s311
          %314 = dma.hbm_to_vmem [thread:$0]  %s6, 16, %s312, [#allocation12]
        $region36: #{_lambda_.19} parent=11 // pred_fallthru
          _
      $region12: #{_lambda_.19} parent=5 // pred_fallthru
        _
      %p315 = scmp.lt.s32.totalorder %s26, 2
      // Predicated region
      $region37: #{_lambda_.19} parent=5 // pred_check
        %p316 = pneg %p315
      $region38: #{_lambda_.19} parent=5 // pred_check_branch
        %318 = sbr.rel (%p316) target = $region40
      $region39: #{_lambda_.19} parent=5 // pred_region
        // Predicated region
        $region41: #{_lambda_.19} parent=39 // pred_check
          %p319 = pneg %p46
        $region42: #{_lambda_.19} parent=39 // pred_check_branch
          %321 = sbr.rel (%p319) target = $region44
        $region43: #{_lambda_.19} parent=39 // pred_region
          %s322 = sand.u32 %s36, 1
          %s323 = scalar_lea.sflag [#allocation3], %s322
          %s324 = sand.u32 %s36, 1
          %s325 = smul.addr %s324, 4
          %s326 = scalar_lea.vmem [#allocation2], %s325
          %s328 = ssub.s32 64, 64
          %329 = vsyncadd %s323, %s328
          %s330 = smul.addr %s26, 64
          %s331 = scalar_lea.hbm %s0, %s330
          %s333 = sshll.u32 %s326, 4
          %s334 = int_to_ptr.vmem [resolvable:$true] %s333
          %336 = dma.hbm_to_vmem [thread:$0]  %s331, 64, %s334, %s323
        $region44: #{_lambda_.19} parent=39 // pred_fallthru
          _
        // Predicated region
        $region45: #{_lambda_.19} parent=39 // pred_check
          %p337 = pneg %p198
        $region46: #{_lambda_.19} parent=39 // pred_check_branch
          %339 = sbr.rel (%p337) target = $region48
        $region47: #{_lambda_.19} parent=39 // pred_region
          %s340 = sand.u32 %s188, 1
          %s341 = scalar_lea.sflag [#allocation15], %s340
          %s342 = sand.u32 %s188, 1
          %s343 = scalar_lea.vmem [#allocation14], %s342
          %s345 = ssub.s32 16, 16
          %346 = vsyncadd %s341, %s345
          %s347 = smul.addr %s26, 16
          %s348 = scalar_lea.hbm %s7, %s347
          %s350 = sshll.u32 %s343, 4
          %s351 = int_to_ptr.vmem [resolvable:$true] %s350
          %353 = dma.hbm_to_vmem [thread:$0]  %s348, 16, %s351, %s341
        $region48: #{_lambda_.19} parent=39 // pred_fallthru
          _
      $region40: #{_lambda_.19} parent=5 // pred_fallthru
        _
      %p354 = scmp.le.s32.totalorder 1, %s26
      %p355 = scmp.lt.s32.totalorder %s26, 3
      %p356 = pnand %p354, %p355
      %p357 = pneg %p356
      // Predicated region
      $region49: #{_lambda_.19} parent=5 // pred_check
        _
      $region50: #{_lambda_.19} parent=5 // pred_check_branch
        %359 = sbr.rel (%p356) target = $region52
      $region51: #{_lambda_.19} parent=5 // pred_region
        %s360 = ssub.s32 %s26, 1
        %s361 = sand.u32 %s39, 1
        %s362 = scalar_lea.sflag [#allocation3], %s361
        %s363 = sand.u32 %s39, 1
        %s364 = smul.addr %s363, 4
        %s365 = scalar_lea.vmem [#allocation2], %s364
        // Predicated region
        $region53: #{_lambda_.19} parent=51 // pred_check
          %p366 = pneg %p52
        $region54: #{_lambda_.19} parent=51 // pred_check_branch
          %368 = sbr.rel (%p366) target = $region56
        $region55: #{_lambda_.19} parent=51 // pred_region
          %369 = dma.done %s362, 64
        $region56: #{_lambda_.19} parent=51 // pred_fallthru
          _
        // Predicated region
        $region57: #{_lambda_.19} parent=51 // pred_check
          %p370 = pneg %p73
        $region58: #{_lambda_.19} parent=51 // pred_check_branch
          %372 = sbr.rel (%p370) target = $region60
        $region59: #{_lambda_.19} parent=51 // pred_region
          %373 = dma.done [#allocation6], 16
        $region60: #{_lambda_.19} parent=51 // pred_fallthru
          _
        // Predicated region
        $region61: #{_lambda_.19} parent=51 // pred_check
          %p374 = pneg %p94
        $region62: #{_lambda_.19} parent=51 // pred_check_branch
          %376 = sbr.rel (%p374) target = $region64
        $region63: #{_lambda_.19} parent=51 // pred_region
          %377 = dma.done [#allocation6], 16
        $region64: #{_lambda_.19} parent=51 // pred_fallthru
          _
        // Predicated region
        $region65: #{_lambda_.19} parent=51 // pred_check
          %p378 = pneg %p115
        $region66: #{_lambda_.19} parent=51 // pred_check_branch
          %380 = sbr.rel (%p378) target = $region68
        $region67: #{_lambda_.19} parent=51 // pred_region
          %381 = dma.done [#allocation9], 768
        $region68: #{_lambda_.19} parent=51 // pred_fallthru
          _
        // Predicated region
        $region69: #{_lambda_.19} parent=51 // pred_check
          %p382 = pneg %p136
        $region70: #{_lambda_.19} parent=51 // pred_check_branch
          %384 = sbr.rel (%p382) target = $region72
        $region71: #{_lambda_.19} parent=51 // pred_region
          %385 = dma.done [#allocation9], 32
        $region72: #{_lambda_.19} parent=51 // pred_fallthru
          _
        // Predicated region
        $region73: #{_lambda_.19} parent=51 // pred_check
          %p386 = pneg %p157
        $region74: #{_lambda_.19} parent=51 // pred_check_branch
          %388 = sbr.rel (%p386) target = $region76
        $region75: #{_lambda_.19} parent=51 // pred_region
          %389 = dma.done [#allocation12], 384
        $region76: #{_lambda_.19} parent=51 // pred_fallthru
          _
        // Predicated region
        $region77: #{_lambda_.19} parent=51 // pred_check
          %p390 = pneg %p178
        $region78: #{_lambda_.19} parent=51 // pred_check_branch
          %392 = sbr.rel (%p390) target = $region80
        $region79: #{_lambda_.19} parent=51 // pred_region
          %393 = dma.done [#allocation12], 16
        $region80: #{_lambda_.19} parent=51 // pred_fallthru
          _
        %s394 = sand.u32 %s191, 1
        %s395 = scalar_lea.sflag [#allocation15], %s394
        %s396 = sand.u32 %s191, 1
        %s397 = scalar_lea.vmem [#allocation14], %s396
        // Predicated region
        $region81: #{_lambda_.19} parent=51 // pred_check
          %p398 = pneg %p204
        $region82: #{_lambda_.19} parent=51 // pred_check_branch
          %400 = sbr.rel (%p398) target = $region84
        $region83: #{_lambda_.19} parent=51 // pred_region
          %401 = dma.done %s395, 16
        $region84: #{_lambda_.19} parent=51 // pred_fallthru
          _
        %s402 = sand.u32 %s39, 1
        %s403 = scalar_lea.sflag [#allocation3], %s402
        %s404 = sand.u32 %s39, 1
        %s405 = smul.addr %s404, 4
        %s406 = scalar_lea.vmem [#allocation2], %s405
        %p407 = pneg %p52
        %p408 = pneg %p49
        %p409 = pneg %p73
        %p410 = pneg %p70
        %p411 = pneg %p94
        %p412 = pneg %p91
        %p413 = pneg %p115
        %p414 = pneg %p112
        %p415 = pneg %p136
        %p416 = pneg %p133
        %p417 = pneg %p157
        %p418 = pneg %p154
        %p419 = pneg %p178
        %p420 = pneg %p175
        %s421 = sand.u32 %s191, 1
        %s422 = scalar_lea.sflag [#allocation15], %s421
        %s423 = sand.u32 %s191, 1
        %s424 = scalar_lea.vmem [#allocation14], %s423
        %p425 = pneg %p204
        %p426 = pneg %p201
        %p427 = pneg %p230
        %p428 = pneg %p227
        %s429 = sand.u32 %s217, 1
        %s430 = scalar_lea.sflag [#allocation4], %s429
        %s431 = sand.u32 %s217, 1
        %s432 = smul.addr %s431, 4
        %s433 = scalar_lea.vmem [#allocation16], %s432
        %v435 = vld [vmem:[%s365] sm:$0xf]
        %v436 = vunpack.c.l.bf16 %v435
        %v437 = vld [vmem:[#allocation5] sm:$0x1]
        %v438 = vld [vmem:[#allocation7] sm:$0x1]
        %vm439 = vcmask 392192
        %v440 = vsel %vm439, %v436, 0.0
        %441 = vadd.xlane.f32.xlu0 %v440
        %v442 = vpop.xlane.xlu0 %441
        %v443 = vrcp.pop 48.0
        %v444 = vmul.f32 %v442, %v443
        %v445 = vsub.f32 %v436, %v444
        %v446 = vmul.f32 %v445, %v445
        %v447 = vsel %vm439, %v446, 0.0
        %448 = vadd.xlane.f32.xlu0 %v447
        %v449 = vpop.xlane.xlu0 %448
        %v450 = vmul.f32 %v449, %v443
        %v451 = vadd.f32 %v450, 1e-05
        %v452 = vrsqrt.pop %v451
        %v453 = vmul.f32 %v445, %v452
        %v455 = vlaneseq
        %v456 = vshrl.u32 %v455, 7
        %v457 = vsub.s32 0, %v456
        %v458 = vrot.slane %v437, %v457
        %v460 = vmul.f32 %v453, %v458
        %v462 = vlaneseq
        %v463 = vshrl.u32 %v462, 7
        %v464 = vsub.s32 0, %v463
        %v465 = vrot.slane %v438, %v464
        %v467 = vadd.f32 %v460, %v465
        %v468 = vpack.c.bf16 %v467, %v467
        %v469 = vld [vmem:[#allocation8] sm:$0xff]
        %v470 = vld [vmem:[#allocation8 + $0x8] sm:$0xff]
        %v471 = vld [vmem:[#allocation8 + $0x10] sm:$0xff]
        %v472 = vld [vmem:[#allocation8 + $0x18] sm:$0xff]
        %v473 = vld [vmem:[#allocation8 + $0x20] sm:$0xff]
        %v474 = vld [vmem:[#allocation8 + $0x28] sm:$0xff]
        %v475 = vld [vmem:[#allocation10] sm:$0x3]
        %v477 = vlaneseq
        %v478 = vshrl.u32 %v477, 7
        %v479 = vsub.s32 0, %v478
        %v480 = vrot.slane %v475, %v479
        %v481 = vlaneseq
        %v482 = vshrl.u32 %v481, 7
        %v483 = vsub.s32 1, %v482
        %v484 = vrot.slane %v475, %v483
        %v493 = vunpack.c.l.b16 %v469
        %v494 = vunpack.c.h.b16 %v469
        %v495 = vunpack.c.l.b16 %v470
        %v496 = vunpack.c.h.b16 %v470
        %v497 = vunpack.c.l.b16 %v471
        %v498 = vunpack.c.h.b16 %v471
        %v499 = vunpack.c.l.b16 %v472
        %v500 = vunpack.c.h.b16 %v472
        %v501 = vunpack.c.l.b16 %v473
        %v502 = vunpack.c.h.b16 %v473
        %v503 = vunpack.c.l.b16 %v474
        %v504 = vunpack.c.h.b16 %v474
        %v505 = vpack.c.b16 %v495, %v493
        %v506 = vpack.c.b16 %v496, %v494
        %v507 = vpack.c.b16 %v499, %v497
        %v508 = vpack.c.b16 %v500, %v498
        %v509 = vpack.c.b16 %v503, %v501
        %v510 = vpack.c.b16 %v504, %v502
        %v518 = vsel %vm439, %v468, 0
        %520 = vmatprep.subr.bf16.mxu0 %v506
        %521 = vmatpush1.bf16.msra.mxu0 %v505
        %522 = vmatprep.subr.bf16.mxu0 %v508
        %523 = vmatpush1.bf16.msra.mxu0 %v507
        %524 = vmatprep.subr.bf16.mxu0 %v510
        %525 = vmatpush1.bf16.msra.mxu0 %v509
        %526 = vmatprep.subr.bf16.mxu0 0
        %527 = vmatpush1.bf16.msra.mxu0 0
        %528 = vmatprep.subr.bf16.mxu0 0
        %529 = vmatpush1.bf16.msra.mxu0 0
        %530 = vmatprep.subr.bf16.mxu0 0
        %531 = vmatpush1.bf16.msra.mxu0 0
        %532 = vmatprep.subr.bf16.mxu0 0
        %533 = vmatpush1.bf16.msra.mxu0 0
        %534 = vmatprep.subr.bf16.mxu0 0
        %535 = vmatpush1.bf16.msra.mxu0 0
        %536 = vmatprep.subr.bf16.mxu0 0
        %537 = vmatpush1.bf16.msra.mxu0 0
        %538 = vmatprep.subr.bf16.mxu0 0
        %539 = vmatpush1.bf16.msra.mxu0 0
        %540 = vmatprep.subr.bf16.mxu0 0
        %541 = vmatpush1.bf16.msra.mxu0 0
        %542 = vmatprep.subr.bf16.mxu0 0
        %543 = vmatpush1.bf16.msra.mxu0 0
        %544 = vmatprep.subr.bf16.mxu0 0
        %545 = vmatpush1.bf16.msra.mxu0 0
        %546 = vmatprep.subr.bf16.mxu0 0
        %547 = vmatpush1.bf16.msra.mxu0 0
        %548 = vmatprep.subr.bf16.mxu0 0
        %549 = vmatpush1.bf16.msra.mxu0 0
        %550 = vmatprep.subr.bf16.mxu0 0
        %551 = vmatpush1.bf16.msra.mxu0 0
        %552 = vmatprep.mubr.bf16.mxu0 0
        %553 = vmatmul.mubr.bf16.gmra.mrb[0].mxu0 %v518
        %v554 = vpop.f32.mrb[0].mxu0
        %v555 = vadd.f32 %v480, %v554
        %v556 = vpop.f32.mrb[0].mxu0
        %v557 = vadd.f32 %v484, %v556
        %v558 = vpop.f32.mrb[0].mxu0
        %v559 = vpop.f32.mrb[0].mxu0
        %560 = vdwg.mxu0
        %v561 = vld [vmem:[%s397] sm:$0x1]
        %v562 = vlaneseq
        %v563 = vshrl.u32 %v562, 7
        %v564 = vlaneseq
        %v565 = vand.u32 %v564, 127
        %vm566 = vcmp.ge.s32.totalorder %v563, %v565
        %v567 = vsel %vm566, 0.0, -1e+09
        %v569 = vlaneseq
        %v570 = vshrl.u32 %v569, 7
        %v571 = vsub.s32 0, %v570
        %v572 = vrot.slane %v561, %v571
        %v574 = vadd.f32 %v572, %v567
        %v575 = vpack.c.bf16 %v555, %v555
        %577 = vrot.lane.b32.xlu0 %v575, 80
        %v578 = vpop.permute.xlu0 %577
        %vm579 = vcmask 97280
        %v581 = vsel %vm579, %v575, 0
        %v584 = vsel %vm579, %v578, 0
        %586 = vmatprep.subr.bf16.mxu0 0
        %587 = vmatpush1.bf16.xpose.msra.mxu0 %v584
        %588 = vmatprep.subr.bf16.mxu0 0
        %589 = vmatpush1.bf16.xpose.msra.mxu0 0
        %590 = vmatprep.subr.bf16.mxu0 0
        %591 = vmatpush1.bf16.xpose.msra.mxu0 0
        %592 = vmatprep.subr.bf16.mxu0 0
        %593 = vmatpush1.bf16.xpose.msra.mxu0 0
        %594 = vmatprep.subr.bf16.mxu0 0
        %595 = vmatpush1.bf16.xpose.msra.mxu0 0
        %596 = vmatprep.subr.bf16.mxu0 0
        %597 = vmatpush1.bf16.xpose.msra.mxu0 0
        %598 = vmatprep.subr.bf16.mxu0 0
        %599 = vmatpush1.bf16.xpose.msra.mxu0 0
        %600 = vmatprep.subr.bf16.mxu0 0
        %601 = vmatpush1.bf16.xpose.msra.mxu0 0
        %602 = vmatprep.subr.bf16.mxu0 0
        %603 = vmatpush1.bf16.xpose.msra.mxu0 0
        %604 = vmatprep.subr.bf16.mxu0 0
        %605 = vmatpush1.bf16.xpose.msra.mxu0 0
        %606 = vmatprep.subr.bf16.mxu0 0
        %607 = vmatpush1.bf16.xpose.msra.mxu0 0
        %608 = vmatprep.subr.bf16.mxu0 0
        %609 = vmatpush1.bf16.xpose.msra.mxu0 0
        %610 = vmatprep.subr.bf16.mxu0 0
        %611 = vmatpush1.bf16.xpose.msra.mxu0 0
        %612 = vmatprep.subr.bf16.mxu0 0
        %613 = vmatpush1.bf16.xpose.msra.mxu0 0
        %614 = vmatprep.subr.bf16.mxu0 0
        %615 = vmatpush1.bf16.xpose.msra.mxu0 0
        %616 = vmatprep.subr.bf16.mxu0 0
        %617 = vmatpush1.bf16.xpose.msra.mxu0 0
        %618 = vmatprep.mubr.bf16.mxu0 0
        %619 = vmatmul.mubr.bf16.gmra.mrb[0].mxu0 %v581
        %v620 = vpop.f32.mrb[0].mxu0
        %v621 = vadd.f32 0.0, %v620
        %v622 = vpop.f32.mrb[0].mxu0
        %v623 = vpop.f32.mrb[0].mxu0
        %v624 = vpop.f32.mrb[0].mxu0
        %625 = vdwg.mxu0
        %v626 = vmul.f32 %v621, 0.28867513
        %v627 = vadd.f32 %v626, %v574
        %vm628 = vcmask 64512
        %v629 = vsel %vm628, %v627, -inf
        %630 = vmax.xlane.f32.xlu0 %v629
        %v631 = vpop.xlane.xlu0 %630
        %v632 = vsub.f32 %v627, %v631
        %v633 = vmul.f32 %v632, 1.442695
        %v634 = vpow.pop %v633
        %v635 = vsel %vm628, %v634, 0.0
        %636 = vadd.xlane.f32.xlu0 %v635
        %v637 = vpop.xlane.xlu0 %636
        %v638 = vrcp.pop %v637
        %v639 = vmul.f32 %v634, %v638
        %v640 = vpack.c.bf16 %v639, %v639
        %641 = vrot.lane.b32.xlu0 %v575, 32
        %v642 = vpop.permute.xlu0 %641
        %v644 = vsel %vm628, %v640, 0
        %vm646 = vcmask 1043456
        %v648 = vsel %vm646, %v642, 0
        %650 = vmatprep.subr.bf16.mxu0 0
        %651 = vmatpush1.bf16.msra.mxu0 %v648
        %652 = vmatprep.subr.bf16.mxu0 0
        %653 = vmatpush1.bf16.msra.mxu0 0
        %654 = vmatprep.subr.bf16.mxu0 0
        %655 = vmatpush1.bf16.msra.mxu0 0
        %656 = vmatprep.subr.bf16.mxu0 0
        %657 = vmatpush1.bf16.msra.mxu0 0
        %658 = vmatprep.subr.bf16.mxu0 0
        %659 = vmatpush1.bf16.msra.mxu0 0
        %660 = vmatprep.subr.bf16.mxu0 0
        %661 = vmatpush1.bf16.msra.mxu0 0
        %662 = vmatprep.subr.bf16.mxu0 0
        %663 = vmatpush1.bf16.msra.mxu0 0
        %664 = vmatprep.subr.bf16.mxu0 0
        %665 = vmatpush1.bf16.msra.mxu0 0
        %666 = vmatprep.subr.bf16.mxu0 0
        %667 = vmatpush1.bf16.msra.mxu0 0
        %668 = vmatprep.subr.bf16.mxu0 0
        %669 = vmatpush1.bf16.msra.mxu0 0
        %670 = vmatprep.subr.bf16.mxu0 0
        %671 = vmatpush1.bf16.msra.mxu0 0
        %672 = vmatprep.subr.bf16.mxu0 0
        %673 = vmatpush1.bf16.msra.mxu0 0
        %674 = vmatprep.subr.bf16.mxu0 0
        %675 = vmatpush1.bf16.msra.mxu0 0
        %676 = vmatprep.subr.bf16.mxu0 0
        %677 = vmatpush1.bf16.msra.mxu0 0
        %678 = vmatprep.subr.bf16.mxu0 0
        %679 = vmatpush1.bf16.msra.mxu0 0
        %680 = vmatprep.subr.bf16.mxu0 0
        %681 = vmatpush1.bf16.msra.mxu0 0
        %682 = vmatprep.mubr.bf16.mxu0 0
        %683 = vmatmul.mubr.bf16.gmra.mrb[0].mxu0 %v644
        %v684 = vpop.f32.mrb[0].mxu0
        %v685 = vadd.f32 0.0, %v684
        %v686 = vpop.f32.mrb[0].mxu0
        %v687 = vpop.f32.mrb[0].mxu0
        %v688 = vpop.f32.mrb[0].mxu0
        %689 = vdwg.mxu0
        %690 = vrot.lane.b32.xlu0 %v575, 116
        %v691 = vpop.permute.xlu0 %690
        %692 = vrot.lane.b32.xlu0 %v575, 68
        %v693 = vpop.permute.xlu0 %692
        %v695 = vsel %vm579, %v691, 0
        %v698 = vsel %vm579, %v693, 0
        %700 = vmatprep.subr.bf16.mxu0 0
        %701 = vmatpush1.bf16.xpose.msra.mxu0 %v698
        %702 = vmatprep.subr.bf16.mxu0 0
        %703 = vmatpush1.bf16.xpose.msra.mxu0 0
        %704 = vmatprep.subr.bf16.mxu0 0
        %705 = vmatpush1.bf16.xpose.msra.mxu0 0
        %706 = vmatprep.subr.bf16.mxu0 0
        %707 = vmatpush1.bf16.xpose.msra.mxu0 0
        %708 = vmatprep.subr.bf16.mxu0 0
        %709 = vmatpush1.bf16.xpose.msra.mxu0 0
        %710 = vmatprep.subr.bf16.mxu0 0
        %711 = vmatpush1.bf16.xpose.msra.mxu0 0
        %712 = vmatprep.subr.bf16.mxu0 0
        %713 = vmatpush1.bf16.xpose.msra.mxu0 0
        %714 = vmatprep.subr.bf16.mxu0 0
        %715 = vmatpush1.bf16.xpose.msra.mxu0 0
        %716 = vmatprep.subr.bf16.mxu0 0
        %717 = vmatpush1.bf16.xpose.msra.mxu0 0
        %718 = vmatprep.subr.bf16.mxu0 0
        %719 = vmatpush1.bf16.xpose.msra.mxu0 0
        %720 = vmatprep.subr.bf16.mxu0 0
        %721 = vmatpush1.bf16.xpose.msra.mxu0 0
        %722 = vmatprep.subr.bf16.mxu0 0
        %723 = vmatpush1.bf16.xpose.msra.mxu0 0
        %724 = vmatprep.subr.bf16.mxu0 0
        %725 = vmatpush1.bf16.xpose.msra.mxu0 0
        %726 = vmatprep.subr.bf16.mxu0 0
        %727 = vmatpush1.bf16.xpose.msra.mxu0 0
        %728 = vmatprep.subr.bf16.mxu0 0
        %729 = vmatpush1.bf16.xpose.msra.mxu0 0
        %730 = vmatprep.subr.bf16.mxu0 0
        %731 = vmatpush1.bf16.xpose.msra.mxu0 0
        %732 = vmatprep.mubr.bf16.mxu0 0
        %733 = vmatmul.mubr.bf16.gmra.mrb[0].mxu0 %v695
        %v734 = vpop.f32.mrb[0].mxu0
        %v735 = vadd.f32 0.0, %v734
        %v736 = vpop.f32.mrb[0].mxu0
        %v737 = vpop.f32.mrb[0].mxu0
        %v738 = vpop.f32.mrb[0].mxu0
        %739 = vdwg.mxu0
        %v740 = vmul.f32 %v735, 0.28867513
        %v741 = vadd.f32 %v740, %v574
        %v742 = vsel %vm628, %v741, -inf
        %743 = vmax.xlane.f32.xlu0 %v742
        %v744 = vpop.xlane.xlu0 %743
        %v745 = vsub.f32 %v741, %v744
        %v746 = vmul.f32 %v745, 1.442695
        %v747 = vpow.pop %v746
        %v748 = vsel %vm628, %v747, 0.0
        %749 = vadd.xlane.f32.xlu0 %v748
        %v750 = vpop.xlane.xlu0 %749
        %v751 = vrcp.pop %v750
        %v752 = vmul.f32 %v747, %v751
        %v753 = vpack.c.bf16 %v752, %v752
        %754 = vrot.lane.b32.xlu0 %v575, 20
        %v755 = vpop.permute.xlu0 %754
        %v757 = vsel %vm628, %v753, 0
        %v760 = vsel %vm646, %v755, 0
        %762 = vmatprep.subr.bf16.mxu0 0
        %763 = vmatpush1.bf16.msra.mxu0 %v760
        %764 = vmatprep.subr.bf16.mxu0 0
        %765 = vmatpush1.bf16.msra.mxu0 0
        %766 = vmatprep.subr.bf16.mxu0 0
        %767 = vmatpush1.bf16.msra.mxu0 0
        %768 = vmatprep.subr.bf16.mxu0 0
        %769 = vmatpush1.bf16.msra.mxu0 0
        %770 = vmatprep.subr.bf16.mxu0 0
        %771 = vmatpush1.bf16.msra.mxu0 0
        %772 = vmatprep.subr.bf16.mxu0 0
        %773 = vmatpush1.bf16.msra.mxu0 0
        %774 = vmatprep.subr.bf16.mxu0 0
        %775 = vmatpush1.bf16.msra.mxu0 0
        %776 = vmatprep.subr.bf16.mxu0 0
        %777 = vmatpush1.bf16.msra.mxu0 0
        %778 = vmatprep.subr.bf16.mxu0 0
        %779 = vmatpush1.bf16.msra.mxu0 0
        %780 = vmatprep.subr.bf16.mxu0 0
        %781 = vmatpush1.bf16.msra.mxu0 0
        %782 = vmatprep.subr.bf16.mxu0 0
        %783 = vmatpush1.bf16.msra.mxu0 0
        %784 = vmatprep.subr.bf16.mxu0 0
        %785 = vmatpush1.bf16.msra.mxu0 0
        %786 = vmatprep.subr.bf16.mxu0 0
        %787 = vmatpush1.bf16.msra.mxu0 0
        %788 = vmatprep.subr.bf16.mxu0 0
        %789 = vmatpush1.bf16.msra.mxu0 0
        %790 = vmatprep.subr.bf16.mxu0 0
        %791 = vmatpush1.bf16.msra.mxu0 0
        %792 = vmatprep.subr.bf16.mxu0 0
        %793 = vmatpush1.bf16.msra.mxu0 0
        %794 = vmatprep.mubr.bf16.mxu0 0
        %795 = vmatmul.mubr.bf16.gmra.mrb[0].mxu0 %v757
        %v796 = vpop.f32.mrb[0].mxu0
        %v797 = vadd.f32 0.0, %v796
        %v798 = vpop.f32.mrb[0].mxu0
        %v799 = vpop.f32.mrb[0].mxu0
        %v800 = vpop.f32.mrb[0].mxu0
        %801 = vdwg.mxu0
        %v802 = vpack.c.bf16 %v557, %v557
        %803 = vrot.lane.b32.xlu0 %v575, 104
        %v804 = vpop.permute.xlu0 %803
        %805 = vrot.lane.b32.xlu0 %v575, 56
        %v806 = vpop.permute.xlu0 %805
        %v808 = vsel %vm579, %v804, 0
        %v811 = vsel %vm579, %v806, 0
        %813 = vmatprep.subr.bf16.mxu0 0
        %814 = vmatpush1.bf16.xpose.msra.mxu0 %v811
        %815 = vmatprep.subr.bf16.mxu0 0
        %816 = vmatpush1.bf16.xpose.msra.mxu0 0
        %817 = vmatprep.subr.bf16.mxu0 0
        %818 = vmatpush1.bf16.xpose.msra.mxu0 0
        %819 = vmatprep.subr.bf16.mxu0 0
        %820 = vmatpush1.bf16.xpose.msra.mxu0 0
        %821 = vmatprep.subr.bf16.mxu0 0
        %822 = vmatpush1.bf16.xpose.msra.mxu0 0
        %823 = vmatprep.subr.bf16.mxu0 0
        %824 = vmatpush1.bf16.xpose.msra.mxu0 0
        %825 = vmatprep.subr.bf16.mxu0 0
        %826 = vmatpush1.bf16.xpose.msra.mxu0 0
        %827 = vmatprep.subr.bf16.mxu0 0
        %828 = vmatpush1.bf16.xpose.msra.mxu0 0
        %829 = vmatprep.subr.bf16.mxu0 0
        %830 = vmatpush1.bf16.xpose.msra.mxu0 0
        %831 = vmatprep.subr.bf16.mxu0 0
        %832 = vmatpush1.bf16.xpose.msra.mxu0 0
        %833 = vmatprep.subr.bf16.mxu0 0
        %834 = vmatpush1.bf16.xpose.msra.mxu0 0
        %835 = vmatprep.subr.bf16.mxu0 0
        %836 = vmatpush1.bf16.xpose.msra.mxu0 0
        %837 = vmatprep.subr.bf16.mxu0 0
        %838 = vmatpush1.bf16.xpose.msra.mxu0 0
        %839 = vmatprep.subr.bf16.mxu0 0
        %840 = vmatpush1.bf16.xpose.msra.mxu0 0
        %841 = vmatprep.subr.bf16.mxu0 0
        %842 = vmatpush1.bf16.xpose.msra.mxu0 0
        %843 = vmatprep.subr.bf16.mxu0 0
        %844 = vmatpush1.bf16.xpose.msra.mxu0 0
        %845 = vmatprep.mubr.bf16.mxu0 0
        %846 = vmatmul.mubr.bf16.gmra.mrb[0].mxu0 %v808
        %v847 = vpop.f32.mrb[0].mxu0
        %v848 = vadd.f32 0.0, %v847
        %v849 = vpop.f32.mrb[0].mxu0
        %v850 = vpop.f32.mrb[0].mxu0
        %v851 = vpop.f32.mrb[0].mxu0
        %852 = vdwg.mxu0
        %v853 = vmul.f32 %v848, 0.28867513
        %v854 = vadd.f32 %v853, %v574
        %v855 = vsel %vm628, %v854, -inf
        %856 = vmax.xlane.f32.xlu0 %v855
        %v857 = vpop.xlane.xlu0 %856
        %v858 = vsub.f32 %v854, %v857
        %v859 = vmul.f32 %v858, 1.442695
        %v860 = vpow.pop %v859
        %v861 = vsel %vm628, %v860, 0.0
        %862 = vadd.xlane.f32.xlu0 %v861
        %v863 = vpop.xlane.xlu0 %862
        %v864 = vrcp.pop %v863
        %v865 = vmul.f32 %v860, %v864
        %v866 = vpack.c.bf16 %v865, %v865
        %868 = vrot.lane.b32.xlu0 %v575, 8
        %v869 = vpop.permute.xlu0 %868
        %870 = vrot.lane.b32.xlu0 %v802, 8
        %v871 = vpop.permute.xlu0 %870
        %vm872 = vcmask 64512
        %v873 = vsel %vm872, %v869, %v871
        %v875 = vsel %vm628, %v866, 0
        %v878 = vsel %vm646, %v873, 0
        %880 = vmatprep.subr.bf16.mxu0 0
        %881 = vmatpush1.bf16.msra.mxu0 %v878
        %882 = vmatprep.subr.bf16.mxu0 0
        %883 = vmatpush1.bf16.msra.mxu0 0
        %884 = vmatprep.subr.bf16.mxu0 0
        %885 = vmatpush1.bf16.msra.mxu0 0
        %886 = vmatprep.subr.bf16.mxu0 0
        %887 = vmatpush1.bf16.msra.mxu0 0
        %888 = vmatprep.subr.bf16.mxu0 0
        %889 = vmatpush1.bf16.msra.mxu0 0
        %890 = vmatprep.subr.bf16.mxu0 0
        %891 = vmatpush1.bf16.msra.mxu0 0
        %892 = vmatprep.subr.bf16.mxu0 0
        %893 = vmatpush1.bf16.msra.mxu0 0
        %894 = vmatprep.subr.bf16.mxu0 0
        %895 = vmatpush1.bf16.msra.mxu0 0
        %896 = vmatprep.subr.bf16.mxu0 0
        %897 = vmatpush1.bf16.msra.mxu0 0
        %898 = vmatprep.subr.bf16.mxu0 0
        %899 = vmatpush1.bf16.msra.mxu0 0
        %900 = vmatprep.subr.bf16.mxu0 0
        %901 = vmatpush1.bf16.msra.mxu0 0
        %902 = vmatprep.subr.bf16.mxu0 0
        %903 = vmatpush1.bf16.msra.mxu0 0
        %904 = vmatprep.subr.bf16.mxu0 0
        %905 = vmatpush1.bf16.msra.mxu0 0
        %906 = vmatprep.subr.bf16.mxu0 0
        %907 = vmatpush1.bf16.msra.mxu0 0
        %908 = vmatprep.subr.bf16.mxu0 0
        %909 = vmatpush1.bf16.msra.mxu0 0
        %910 = vmatprep.subr.bf16.mxu0 0
        %911 = vmatpush1.bf16.msra.mxu0 0
        %912 = vmatprep.mubr.bf16.mxu0 0
        %913 = vmatmul.mubr.bf16.gmra.mrb[0].mxu0 %v875
        %v914 = vpop.f32.mrb[0].mxu0
        %v915 = vadd.f32 0.0, %v914
        %v916 = vpop.f32.mrb[0].mxu0
        %v917 = vpop.f32.mrb[0].mxu0
        %v918 = vpop.f32.mrb[0].mxu0
        %919 = vdwg.mxu0
        %920 = vrot.lane.b32.xlu0 %v575, 92
        %v921 = vpop.permute.xlu0 %920
        %922 = vrot.lane.b32.xlu0 %v575, 44
        %v923 = vpop.permute.xlu0 %922
        %v925 = vsel %vm579, %v921, 0
        %v928 = vsel %vm579, %v923, 0
        %930 = vmatprep.subr.bf16.mxu0 0
        %931 = vmatpush1.bf16.xpose.msra.mxu0 %v928
        %932 = vmatprep.subr.bf16.mxu0 0
        %933 = vmatpush1.bf16.xpose.msra.mxu0 0
        %934 = vmatprep.subr.bf16.mxu0 0
        %935 = vmatpush1.bf16.xpose.msra.mxu0 0
        %936 = vmatprep.subr.bf16.mxu0 0
        %937 = vmatpush1.bf16.xpose.msra.mxu0 0
        %938 = vmatprep.subr.bf16.mxu0 0
        %939 = vmatpush1.bf16.xpose.msra.mxu0 0
        %940 = vmatprep.subr.bf16.mxu0 0
        %941 = vmatpush1.bf16.xpose.msra.mxu0 0
        %942 = vmatprep.subr.bf16.mxu0 0
        %943 = vmatpush1.bf16.xpose.msra.mxu0 0
        %944 = vmatprep.subr.bf16.mxu0 0
        %945 = vmatpush1.bf16.xpose.msra.mxu0 0
        %946 = vmatprep.subr.bf16.mxu0 0
        %947 = vmatpush1.bf16.xpose.msra.mxu0 0
        %948 = vmatprep.subr.bf16.mxu0 0
        %949 = vmatpush1.bf16.xpose.msra.mxu0 0
        %950 = vmatprep.subr.bf16.mxu0 0
        %951 = vmatpush1.bf16.xpose.msra.mxu0 0
        %952 = vmatprep.subr.bf16.mxu0 0
        %953 = vmatpush1.bf16.xpose.msra.mxu0 0
        %954 = vmatprep.subr.bf16.mxu0 0
        %955 = vmatpush1.bf16.xpose.msra.mxu0 0
        %956 = vmatprep.subr.bf16.mxu0 0
        %957 = vmatpush1.bf16.xpose.msra.mxu0 0
        %958 = vmatprep.subr.bf16.mxu0 0
        %959 = vmatpush1.bf16.xpose.msra.mxu0 0
        %960 = vmatprep.subr.bf16.mxu0 0
        %961 = vmatpush1.bf16.xpose.msra.mxu0 0
        %962 = vmatprep.mubr.bf16.mxu0 0
        %963 = vmatmul.mubr.bf16.gmra.mrb[0].mxu0 %v925
        %v964 = vpop.f32.mrb[0].mxu0
        %v965 = vadd.f32 0.0, %v964
        %v966 = vpop.f32.mrb[0].mxu0
        %v967 = vpop.f32.mrb[0].mxu0
        %v968 = vpop.f32.mrb[0].mxu0
        %969 = vdwg.mxu0
        %v970 = vmul.f32 %v965, 0.28867513
        %v971 = vadd.f32 %v970, %v574
        %v972 = vsel %vm628, %v971, -inf
        %973 = vmax.xlane.f32.xlu0 %v972
        %v974 = vpop.xlane.xlu0 %973
        %v975 = vsub.f32 %v971, %v974
        %v976 = vmul.f32 %v975, 1.442695
        %v977 = vpow.pop %v976
        %v978 = vsel %vm628, %v977, 0.0
        %979 = vadd.xlane.f32.xlu0 %v978
        %v980 = vpop.xlane.xlu0 %979
        %v981 = vrcp.pop %v980
        %v982 = vmul.f32 %v977, %v981
        %v983 = vpack.c.bf16 %v982, %v982
        %984 = vrot.lane.b32.xlu0 %v802, 124
        %v985 = vpop.permute.xlu0 %984
        %v987 = vsel %vm628, %v983, 0
        %v990 = vsel %vm646, %v985, 0
        %992 = vmatprep.subr.bf16.mxu0 0
        %993 = vmatpush1.bf16.msra.mxu0 %v990
        %994 = vmatprep.subr.bf16.mxu0 0
        %995 = vmatpush1.bf16.msra.mxu0 0
        %996 = vmatprep.subr.bf16.mxu0 0
        %997 = vmatpush1.bf16.msra.mxu0 0
        %998 = vmatprep.subr.bf16.mxu0 0
        %999 = vmatpush1.bf16.msra.mxu0 0
        %1000 = vmatprep.subr.bf16.mxu0 0
        %1001 = vmatpush1.bf16.msra.mxu0 0
        %1002 = vmatprep.subr.bf16.mxu0 0
        %1003 = vmatpush1.bf16.msra.mxu0 0
        %1004 = vmatprep.subr.bf16.mxu0 0
        %1005 = vmatpush1.bf16.msra.mxu0 0
        %1006 = vmatprep.subr.bf16.mxu0 0
        %1007 = vmatpush1.bf16.msra.mxu0 0
        %1008 = vmatprep.subr.bf16.mxu0 0
        %1009 = vmatpush1.bf16.msra.mxu0 0
        %1010 = vmatprep.subr.bf16.mxu0 0
        %1011 = vmatpush1.bf16.msra.mxu0 0
        %1012 = vmatprep.subr.bf16.mxu0 0
        %1013 = vmatpush1.bf16.msra.mxu0 0
        %1014 = vmatprep.subr.bf16.mxu0 0
        %1015 = vmatpush1.bf16.msra.mxu0 0
        %1016 = vmatprep.subr.bf16.mxu0 0
        %1017 = vmatpush1.bf16.msra.mxu0 0
        %1018 = vmatprep.subr.bf16.mxu0 0
        %1019 = vmatpush1.bf16.msra.mxu0 0
        %1020 = vmatprep.subr.bf16.mxu0 0
        %1021 = vmatpush1.bf16.msra.mxu0 0
        %1022 = vmatprep.subr.bf16.mxu0 0
        %1023 = vmatpush1.bf16.msra.mxu0 0
        %1024 = vmatprep.mubr.bf16.mxu0 0
        %1025 = vmatmul.mubr.bf16.gmra.mrb[0].mxu0 %v987
        %v1026 = vpop.f32.mrb[0].mxu0
        %v1027 = vadd.f32 0.0, %v1026
        %v1028 = vpop.f32.mrb[0].mxu0
        %v1029 = vpop.f32.mrb[0].mxu0
        %v1030 = vpop.f32.mrb[0].mxu0
        %1031 = vdwg.mxu0
        %1033 = vrot.lane.b32.xlu0 %v797, 12
        %v1034 = vpop.permute.xlu0 %1033
        %1037 = vrot.lane.b32.xlu0 %v915, 24
        %v1038 = vpop.permute.xlu0 %1037
        %1041 = vrot.lane.b32.xlu0 %v1027, 36
        %v1042 = vpop.permute.xlu0 %1041
        %v1044 = vsel %vm579, %v685, %v1034
        %vm1045 = vcmask 195584
        %v1046 = vsel %vm1045, %v1044, %v1038
        %vm1047 = vcmask 293888
        %v1048 = vsel %vm1047, %v1046, %v1042
        %v1049 = vpack.c.bf16 %v1048, %v1048
        %v1050 = vld [vmem:[#allocation11] sm:$0xf]
        %v1051 = vld [vmem:[#allocation11 + $0x4] sm:$0xf]
        %v1052 = vld [vmem:[#allocation11 + $0x8] sm:$0xf]
        %v1053 = vld [vmem:[#allocation11 + $0xc] sm:$0xf]
        %v1054 = vld [vmem:[#allocation11 + $0x10] sm:$0xf]
        %v1055 = vld [vmem:[#allocation11 + $0x14] sm:$0xf]
        %v1056 = vld [vmem:[#allocation13] sm:$0x1]
        %v1058 = vlaneseq
        %v1059 = vshrl.u32 %v1058, 7
        %v1060 = vsub.s32 0, %v1059
        %v1061 = vrot.slane %v1056, %v1060
        %v1069 = vunpack.c.l.b16 %v1050
        %v1070 = vunpack.c.l.b16 %v1051
        %v1071 = vunpack.c.l.b16 %v1052
        %v1072 = vunpack.c.l.b16 %v1053
        %v1073 = vunpack.c.l.b16 %v1054
        %v1074 = vunpack.c.l.b16 %v1055
        %v1075 = vpack.c.b16 %v1070, %v1069
        %v1076 = vpack.c.b16 %v1072, %v1071
        %v1077 = vpack.c.b16 %v1074, %v1073
        %v1082 = vsel %vm439, %v1049, 0
        %1084 = vmatprep.subr.bf16.mxu0 0
        %1085 = vmatpush1.bf16.msra.mxu0 %v1075
        %1086 = vmatprep.subr.bf16.mxu0 0
        %1087 = vmatpush1.bf16.msra.mxu0 %v1076
        %1088 = vmatprep.subr.bf16.mxu0 0
        %1089 = vmatpush1.bf16.msra.mxu0 %v1077
        %1090 = vmatprep.subr.bf16.mxu0 0
        %1091 = vmatpush1.bf16.msra.mxu0 0
        %1092 = vmatprep.subr.bf16.mxu0 0
        %1093 = vmatpush1.bf16.msra.mxu0 0
        %1094 = vmatprep.subr.bf16.mxu0 0
        %1095 = vmatpush1.bf16.msra.mxu0 0
        %1096 = vmatprep.subr.bf16.mxu0 0
        %1097 = vmatpush1.bf16.msra.mxu0 0
        %1098 = vmatprep.subr.bf16.mxu0 0
        %1099 = vmatpush1.bf16.msra.mxu0 0
        %1100 = vmatprep.subr.bf16.mxu0 0
        %1101 = vmatpush1.bf16.msra.mxu0 0
        %1102 = vmatprep.subr.bf16.mxu0 0
        %1103 = vmatpush1.bf16.msra.mxu0 0
        %1104 = vmatprep.subr.bf16.mxu0 0
        %1105 = vmatpush1.bf16.msra.mxu0 0
        %1106 = vmatprep.subr.bf16.mxu0 0
        %1107 = vmatpush1.bf16.msra.mxu0 0
        %1108 = vmatprep.subr.bf16.mxu0 0
        %1109 = vmatpush1.bf16.msra.mxu0 0
        %1110 = vmatprep.subr.bf16.mxu0 0
        %1111 = vmatpush1.bf16.msra.mxu0 0
        %1112 = vmatprep.subr.bf16.mxu0 0
        %1113 = vmatpush1.bf16.msra.mxu0 0
        %1114 = vmatprep.subr.bf16.mxu0 0
        %1115 = vmatpush1.bf16.msra.mxu0 0
        %1116 = vmatprep.mubr.bf16.mxu0 0
        %1117 = vmatmul.mubr.bf16.gmra.mrb[0].mxu0 %v1082
        %v1118 = vpop.f32.mrb[0].mxu0
        %v1119 = vadd.f32 %v1061, %v1118
        %v1120 = vpop.f32.mrb[0].mxu0
        %v1121 = vpop.f32.mrb[0].mxu0
        %v1122 = vpop.f32.mrb[0].mxu0
        %1123 = vdwg.mxu0
        %v1124 = vadd.f32 %v436, %v1119
        %v1125 = vpack.c.bf16 %v1124, %v1124
        %vm1126 = vcmask 388096
        %1127 = vst.msk [vmem:[%s433] sm:$0xf] %vm1126, %v1125
        %s1128 = sand.u32 %s217, 1
        %s1129 = scalar_lea.sflag [#allocation4], %s1128
        %s1130 = sand.u32 %s217, 1
        %s1131 = smul.addr %s1130, 4
        %s1132 = scalar_lea.vmem [#allocation16], %s1131
        // Predicated region
        $region85: #{_lambda_.19} parent=51 // pred_check
          %p1133 = pneg %p227
        $region86: #{_lambda_.19} parent=51 // pred_check_branch
          %1135 = sbr.rel (%p1133) target = $region88
        $region87: #{_lambda_.19} parent=51 // pred_region
          %s1137 = ssub.s32 64, 64
          %1138 = vsyncadd %s1129, %s1137
          %s1139 = smul.addr %s31, 64
          %s1140 = scalar_lea.hbm %s8, %s1139
          %s1142 = sshll.u32 %s1132, 4
          %s1143 = int_to_ptr.vmem [resolvable:$true] %s1142
          %1145 = dma.vmem_to_hbm [thread:$0]  %s1143, 64, %s1140, %s1129
        $region88: #{_lambda_.19} parent=51 // pred_fallthru
          _
      $region52: #{_lambda_.19} parent=5 // pred_fallthru
        _
      %p1146 = scmp.le.s32.totalorder 2, %s26
      // Predicated region
      $region89: #{_lambda_.19} parent=5 // pred_check
        %p1147 = pneg %p1146
      $region90: #{_lambda_.19} parent=5 // pred_check_branch
        %1149 = sbr.rel (%p1147) target = $region92
      $region91: #{_lambda_.19} parent=5 // pred_region
        %s1150 = ssub.s32 %s26, 2
        // Predicated region
        $region93: #{_lambda_.19} parent=91 // pred_check
          %p1151 = pneg %p233
        $region94: #{_lambda_.19} parent=91 // pred_check_branch
          %1153 = sbr.rel (%p1151) target = $region96
        $region95: #{_lambda_.19} parent=91 // pred_region
          %s1154 = sand.u32 %s218, 1
          %s1155 = scalar_lea.sflag [#allocation4], %s1154
          %s1156 = sand.u32 %s218, 1
          %s1157 = smul.addr %s1156, 4
          %s1158 = scalar_lea.vmem [#allocation16], %s1157
          %1159 = dma.done %s1155, 64
        $region96: #{_lambda_.19} parent=91 // pred_fallthru
          _
      $region92: #{_lambda_.19} parent=5 // pred_fallthru
        _
    $region6: #{_lambda_.19} parent=1 // loop_footer
      %s30 = sadd.s32 1, %s26
    $region7: #{_lambda_.19} parent=1 // loop_footer_branch
      %25 = sbr.rel target = $region3
    $region8: #{_lambda_.19} parent=1 // loop_exit
      _
    %1160 = vsyncpa [#allocation3], 1
    %s1161 = scalar_lea.sflag [#allocation3], 1
    %1162 = vsyncpa %s1161, 1
    %1163 = vsyncpa [#allocation6], 1
    %1164 = vsyncpa [#allocation9], 1
    %1165 = vsyncpa [#allocation12], 1
    %1166 = vsyncpa [#allocation15], 1
    %s1167 = scalar_lea.sflag [#allocation15], 1
    %1168 = vsyncpa %s1167, 1
    %1169 = vsyncpa [#allocation4], 1
    %s1170 = scalar_lea.sflag [#allocation4], 1
    %1171 = vsyncpa %s1170, 1

</llo_original>
